<compile_context>
chip_gen: v7x
topology: tpu7x:2x2x1
jax: 0.10.0
libtpu: 0.0.40
codegen_flags: <defaults>
</compile_context>

<pallas_src>
import functools

import jax
import jax.numpy as jnp
from jax import lax
from jax.experimental import pallas as pl
from jax.experimental.pallas import tpu as pltpu

PAD = 3  # max dilation; one shared pad for all three branches


def _tap_offsets():
    """(od, oh) padded-index offsets for each of the 27 (branch, kd, kh) combos."""
    taps = []
    for b in range(3):
        dil = b + 1
        for kd in range(3):
            for kh in range(3):
                taps.append((PAD + (kd - 1) * dil, PAD + (kh - 1) * dil))
    return tuple(taps)


def sac_kernel(xp_ref, wb_ref, bias_ref, o_ref, acc_ref, *, d_tile, H, taps):
    """One (batch, D-tile) grid step.

    xp_ref  : (Dp, Hp, Wp*Cin)      bf16  padded input, channels folded into lanes
    wb_ref  : (27, Wp*Cin, W*Cout)  bf16  banded weights (softmax alpha folded in)
    bias_ref: (1, W*Cout)           f32   alpha-weighted bias, tiled over W
    o_ref   : (d_tile*H, W*Cout)    f32
    acc_ref : (d_tile*H, W*Cout)    f32   VMEM scratch accumulator
    """
    dt = pl.program_id(1)
    wp_cin = xp_ref.shape[-1]

    acc_ref[...] = jnp.zeros_like(acc_ref)

    # 27 matmuls: one per (branch, kd, kh); the kw taps live inside the banded
    # weight, so K = Wp*Cin and N = W*Cout are both reasonably MXU-sized.
    for idx, (od, oh) in enumerate(taps):
        slab = xp_ref[pl.ds(dt * d_tile + od, d_tile), pl.ds(oh, H), :]
        slab = slab.reshape(d_tile * H, wp_cin)          # leading-dim merge only
        acc_ref[...] += jnp.dot(slab, wb_ref[idx],
                                preferred_element_type=jnp.float32)

    o_ref[...] = acc_ref[...] + bias_ref[...]


def _build_banded_weights(params, alpha, Cin, Cout, W, Wp):
    """(27, Wp*Cin, W*Cout) bf16: per-(branch, kd, kh) banded matrices with the
    kw taps, the W shift structure and the softmax mixing weight folded in."""
    ws = (params["w1"], params["w2"], params["w3"])      # each (Cout, Cin, 3, 3, 3)
    w_idx = jnp.arange(W)
    mats = []
    for b in range(3):
        dil = b + 1
        w = ws[b].astype(jnp.float32)
        for kd in range(3):
            for kh in range(3):
                band = jnp.zeros((Wp, Cin, W, Cout), jnp.float32)
                for kw in range(3):
                    off = PAD + (kw - 1) * dil
                    shift = jnp.zeros((Wp, W), jnp.float32)
                    shift = shift.at[w_idx + off, w_idx].set(1.0)
                    tap = w[:, :, kd, kh, kw]            # (Cout, Cin)
                    band = band + jnp.einsum("pw,oc->pcwo", shift, tap)
                mats.append((band * alpha[b]).reshape(Wp * Cin, W * Cout))
    return jnp.stack(mats, axis=0).astype(jnp.bfloat16)


def sac_forward(x_ncdhw, params, *, d_tile=None):
    """x_ncdhw: (N, Cin, D, H, W) float32, PyTorch layout. Returns NCDHW f32."""
    N, Cin, D, H, W = x_ncdhw.shape
    Cout = params["w1"].shape[0]
    Dp, Hp, Wp = D + 2 * PAD, H + 2 * PAD, W + 2 * PAD

    if d_tile is None:
        # largest D divisor whose f32 accumulator tile stays modest (<= 2 MiB)
        d_tile = D
        for cand in (16, 8, 4, 2, 1):
            if D % cand == 0 and cand * H * W * Cout * 4 <= (2 << 20):
                d_tile = cand
                break
    assert D % d_tile == 0, (D, d_tile)
    n_dt = D // d_tile

    alpha = jax.nn.softmax(params["mix"].astype(jnp.float32))

    # channels-last, single pad=3, channels folded into the lane dim (Wp*Cin)
    x_cl = jnp.transpose(x_ncdhw, (0, 2, 3, 4, 1))
    xp = jnp.pad(x_cl, ((0, 0), (PAD, PAD), (PAD, PAD), (PAD, PAD), (0, 0)))
    xp = xp.reshape(N, Dp, Hp, Wp * Cin).astype(jnp.bfloat16)

    wb = _build_banded_weights(params, alpha, Cin, Cout, W, Wp)
    bias = (alpha[0] * params["b1"] + alpha[1] * params["b2"]
            + alpha[2] * params["b3"]).astype(jnp.float32)
    bias = jnp.tile(bias, W).reshape(1, W * Cout)        # column index = w*Cout + o

    kernel = functools.partial(sac_kernel, d_tile=d_tile, H=H, taps=_tap_offsets())

    out2d = pl.pallas_call(
        kernel,
        out_shape=jax.ShapeDtypeStruct((N, D * H, W * Cout), jnp.float32),
        grid=(N, n_dt),
        in_specs=[
            pl.BlockSpec((None, Dp, Hp, Wp * Cin), lambda n, dt: (n, 0, 0, 0)),
            pl.BlockSpec((27, Wp * Cin, W * Cout), lambda n, dt: (0, 0, 0)),
            pl.BlockSpec((1, W * Cout), lambda n, dt: (0, 0)),
        ],
        out_specs=pl.BlockSpec((None, d_tile * H, W * Cout),
                               lambda n, dt: (n, dt, 0)),
        scratch_shapes=[pltpu.VMEM((d_tile * H, W * Cout), jnp.float32)],
        compiler_params=pltpu.CompilerParams(
            dimension_semantics=("parallel", "parallel"),
            vmem_limit_bytes=64 * 1024 * 1024),
    )(xp, wb, bias)

    out = out2d.reshape(N, D, H, W, Cout)
    return jnp.transpose(out, (0, 4, 1, 2, 3))           # back to NCDHW


def sac_reference(x_ncdhw, params):
    """Pure-JAX reference mirroring the PyTorch forward (f32 throughout)."""
    def conv(w, b, dil):
        y = lax.conv_general_dilated(
            x_ncdhw, w, window_strides=(1, 1, 1),
            padding=[(dil, dil)] * 3, rhs_dilation=(dil, dil, dil),
            dimension_numbers=("NCDHW", "OIDHW", "NCDHW"))
        return y + b.reshape(1, -1, 1, 1, 1)

    f1 = conv(params["w1"], params["b1"], 1)
    f3 = conv(params["w2"], params["b2"], 2)
    f5 = conv(params["w3"], params["b3"], 3)
    a = jax.nn.softmax(params["mix"])
    return f1 * a[0] + f3 * a[1] + f5 * a[2]


def init_params(key, input_channel, out_channel):
    ks = jax.random.split(key, 6)
    scale = 1.0 / (input_channel * 27) ** 0.5
    shape_w = (out_channel, input_channel, 3, 3, 3)      # PyTorch OIDHW
    return {
        "w1": jax.random.uniform(ks[0], shape_w, jnp.float32, -scale, scale),
        "b1": jax.random.uniform(ks[1], (out_channel,), jnp.float32, -scale, scale),
        "w2": jax.random.uniform(ks[2], shape_w, jnp.float32, -scale, scale),
        "b2": jax.random.uniform(ks[3], (out_channel,), jnp.float32, -scale, scale),
        "w3": jax.random.uniform(ks[4], shape_w, jnp.float32, -scale, scale),
        "b3": jax.random.uniform(ks[5], (out_channel,), jnp.float32, -scale, scale),
        "mix": jnp.ones((3,), jnp.float32),              # nn.Parameter(torch.ones(3))
    }


if __name__ == "__main__":
    key = jax.random.PRNGKey(0)
    k_x, k_p = jax.random.split(key)

    N, Cin, Cout, D, H, W = 2, 4, 8, 8, 8, 8
    x = jax.random.normal(k_x, (N, Cin, D, H, W), jnp.float32)
    params = init_params(k_p, Cin, Cout)

    ref = jax.block_until_ready(sac_reference(x, params))

    # run with the default single D-tile and with an explicit 2-way D split
    for dt in (None, 4):
        out = jax.block_until_ready(sac_forward(x, params, d_tile=dt))
        assert out.shape == (N, Cout, D, H, W), out.shape
        err = float(jnp.max(jnp.abs(out - ref)))
        # bf16 matmul operands with f32 accumulation -> relaxed tolerance
        assert err < 3e-2, err

    print("KERNEL_OK")
</pallas_src>

<mosaic_0001>
module attributes {stable_mosaic.version = 11 : i64} {
  func.func @sac_kernel(%arg0: i32, %arg1: i32, %arg2: memref<1x14x14x56xbf16, #tpu.memory_space<vmem>>, %arg3: memref<27x56x64xbf16, #tpu.memory_space<vmem>>, %arg4: memref<1x64xf32, #tpu.memory_space<vmem>>, %arg5: memref<1x64x64xf32, #tpu.memory_space<vmem>>, %arg6: memref<64x64xf32, #tpu.memory_space<vmem>>) attributes {dimension_semantics = [#tpu.dimension_semantics<parallel>, #tpu.dimension_semantics<parallel>], iteration_bounds = array<i64: 2, 1>, scalar_prefetch = 0 : i64, scratch_operands = 1 : i64, tpu.core_type = #tpu.core_type<tc>, window_params = [{transform_indices = @transform_0, window_bounds = array<i64: 1, 14, 14, 56>}, {pipeline_mode = #tpu.pipeline_mode<synchronous>, transform_indices = @transform_1, window_bounds = array<i64: 27, 56, 64>}, {pipeline_mode = #tpu.pipeline_mode<synchronous>, transform_indices = @transform_2, window_bounds = array<i64: 1, 64>}, {transform_indices = @transform_3, window_bounds = array<i64: 1, 64, 64>}]} {
    %cst = arith.constant 0.000000e+00 : f32
    %0 = vector.broadcast %cst : f32 to vector<64x64xf32>
    %c0 = arith.constant 0 : index
    %c0_0 = arith.constant 0 : index
    %1 = vector.load %arg6[%c0, %c0_0] : memref<64x64xf32, #tpu.memory_space<vmem>>, vector<64x64xf32>
    tpu.vector_store %arg6[%c0, %c0_0], %0 {strides = array<i32>} : memref<64x64xf32, #tpu.memory_space<vmem>>, vector<64x64xf32>,
    %c8_i32 = arith.constant 8 : i32
    %2 = arith.muli %arg1, %c8_i32 : i32
    %c2_i32 = arith.constant 2 : i32
    %3 = arith.addi %2, %c2_i32 : i32
    %c0_1 = arith.constant 0 : index
    %4 = arith.index_cast %3 : i32 to index
    %c2 = arith.constant 2 : index
    %c0_2 = arith.constant 0 : index
    %5 = vector.load %arg2[%c0_1, %4, %c2, %c0_2] : memref<1x14x14x56xbf16, #tpu.memory_space<vmem>>, vector<1x8x8x56xbf16>
    %6 = vector.shape_cast %5 : vector<1x8x8x56xbf16> to vector<8x8x56xbf16>
    %7 = vector.shape_cast %6 : vector<8x8x56xbf16> to vector<64x56xbf16>
    %c0_3 = arith.constant 0 : index
    %c0_4 = arith.constant 0 : index
    %8 = vector.load %arg6[%c0_3, %c0_4] : memref<64x64xf32, #tpu.memory_space<vmem>>, vector<64x64xf32>
    %c0_5 = arith.constant 0 : index
    %c0_6 = arith.constant 0 : index
    %c0_7 = arith.constant 0 : index
    %9 = vector.load %arg3[%c0_5, %c0_6, %c0_7] : memref<27x56x64xbf16, #tpu.memory_space<vmem>>, vector<1x56x64xbf16>
    %10 = vector.shape_cast %9 : vector<1x56x64xbf16> to vector<56x64xbf16>
    %cst_8 = arith.constant dense<0.000000e+00> : vector<64x64xf32>
    %11 = tpu.matmul %7, %10, %cst_8 {dimension_numbers = #tpu.dot_dimension_numbers<[1], [0], [0], [1], [0, 0, 1, 1], [], []>} : vector<64x56xbf16>, vector<56x64xbf16>, vector<64x64xf32> -> vector<64x64xf32>
    %12 = arith.addf %8, %11 : vector<64x64xf32>
    %c0_9 = arith.constant 0 : index
    %c0_10 = arith.constant 0 : index
    %13 = vector.load %arg6[%c0_9, %c0_10] : memref<64x64xf32, #tpu.memory_space<vmem>>, vector<64x64xf32>
    tpu.vector_store %arg6[%c0_9, %c0_10], %12 {strides = array<i32>} : memref<64x64xf32, #tpu.memory_space<vmem>>, vector<64x64xf32>,
    %c8_i32_11 = arith.constant 8 : i32
    %14 = arith.muli %arg1, %c8_i32_11 : i32
    %c2_i32_12 = arith.constant 2 : i32
    %15 = arith.addi %14, %c2_i32_12 : i32
    %c0_13 = arith.constant 0 : index
    %16 = arith.index_cast %15 : i32 to index
    %c3 = arith.constant 3 : index
    %c0_14 = arith.constant 0 : index
    %17 = vector.load %arg2[%c0_13, %16, %c3, %c0_14] : memref<1x14x14x56xbf16, #tpu.memory_space<vmem>>, vector<1x8x8x56xbf16>
    %18 = vector.shape_cast %17 : vector<1x8x8x56xbf16> to vector<8x8x56xbf16>
    %19 = vector.shape_cast %18 : vector<8x8x56xbf16> to vector<64x56xbf16>
    %c0_15 = arith.constant 0 : index
    %c0_16 = arith.constant 0 : index
    %20 = vector.load %arg6[%c0_15, %c0_16] : memref<64x64xf32, #tpu.memory_space<vmem>>, vector<64x64xf32>
    %c1 = arith.constant 1 : index
    %c0_17 = arith.constant 0 : index
    %c0_18 = arith.constant 0 : index
    %21 = vector.load %arg3[%c1, %c0_17, %c0_18] : memref<27x56x64xbf16, #tpu.memory_space<vmem>>, vector<1x56x64xbf16>
    %22 = vector.shape_cast %21 : vector<1x56x64xbf16> to vector<56x64xbf16>
    %cst_19 = arith.constant dense<0.000000e+00> : vector<64x64xf32>
    %23 = tpu.matmul %19, %22, %cst_19 {dimension_numbers = #tpu.dot_dimension_numbers<[1], [0], [0], [1], [0, 0, 1, 1], [], []>} : vector<64x56xbf16>, vector<56x64xbf16>, vector<64x64xf32> -> vector<64x64xf32>
    %24 = arith.addf %20, %23 : vector<64x64xf32>
    %c0_20 = arith.constant 0 : index
    %c0_21 = arith.constant 0 : index
    %25 = vector.load %arg6[%c0_20, %c0_21] : memref<64x64xf32, #tpu.memory_space<vmem>>, vector<64x64xf32>
    tpu.vector_store %arg6[%c0_20, %c0_21], %24 {strides = array<i32>} : memref<64x64xf32, #tpu.memory_space<vmem>>, vector<64x64xf32>,
    %c8_i32_22 = arith.constant 8 : i32
    %26 = arith.muli %arg1, %c8_i32_22 : i32
    %c2_i32_23 = arith.constant 2 : i32
    %27 = arith.addi %26, %c2_i32_23 : i32
    %c0_24 = arith.constant 0 : index
    %28 = arith.index_cast %27 : i32 to index
    %c4 = arith.constant 4 : index
    %c0_25 = arith.constant 0 : index
    %29 = vector.load %arg2[%c0_24, %28, %c4, %c0_25] : memref<1x14x14x56xbf16, #tpu.memory_space<vmem>>, vector<1x8x8x56xbf16>
    %30 = vector.shape_cast %29 : vector<1x8x8x56xbf16> to vector<8x8x56xbf16>
    %31 = vector.shape_cast %30 : vector<8x8x56xbf16> to vector<64x56xbf16>
    %c0_26 = arith.constant 0 : index
    %c0_27 = arith.constant 0 : index
    %32 = vector.load %arg6[%c0_26, %c0_27] : memref<64x64xf32, #tpu.memory_space<vmem>>, vector<64x64xf32>
    %c2_28 = arith.constant 2 : index
    %c0_29 = arith.constant 0 : index
    %c0_30 = arith.constant 0 : index
    %33 = vector.load %arg3[%c2_28, %c0_29, %c0_30] : memref<27x56x64xbf16, #tpu.memory_space<vmem>>, vector<1x56x64xbf16>
    %34 = vector.shape_cast %33 : vector<1x56x64xbf16> to vector<56x64xbf16>
    %cst_31 = arith.constant dense<0.000000e+00> : vector<64x64xf32>
    %35 = tpu.matmul %31, %34, %cst_31 {dimension_numbers = #tpu.dot_dimension_numbers<[1], [0], [0], [1], [0, 0, 1, 1], [], []>} : vector<64x56xbf16>, vector<56x64xbf16>, vector<64x64xf32> -> vector<64x64xf32>
    %36 = arith.addf %32, %35 : vector<64x64xf32>
    %c0_32 = arith.constant 0 : index
    %c0_33 = arith.constant 0 : index
    %37 = vector.load %arg6[%c0_32, %c0_33] : memref<64x64xf32, #tpu.memory_space<vmem>>, vector<64x64xf32>
    tpu.vector_store %arg6[%c0_32, %c0_33], %36 {strides = array<i32>} : memref<64x64xf32, #tpu.memory_space<vmem>>, vector<64x64xf32>,
    %c8_i32_34 = arith.constant 8 : i32
    %38 = arith.muli %arg1, %c8_i32_34 : i32
    %c3_i32 = arith.constant 3 : i32
    %39 = arith.addi %38, %c3_i32 : i32
    %c0_35 = arith.constant 0 : index
    %40 = arith.index_cast %39 : i32 to index
    %c2_36 = arith.constant 2 : index
    %c0_37 = arith.constant 0 : index
    %41 = vector.load %arg2[%c0_35, %40, %c2_36, %c0_37] : memref<1x14x14x56xbf16, #tpu.memory_space<vmem>>, vector<1x8x8x56xbf16>
    %42 = vector.shape_cast %41 : vector<1x8x8x56xbf16> to vector<8x8x56xbf16>
    %43 = vector.shape_cast %42 : vector<8x8x56xbf16> to vector<64x56xbf16>
    %c0_38 = arith.constant 0 : index
    %c0_39 = arith.constant 0 : index
    %44 = vector.load %arg6[%c0_38, %c0_39] : memref<64x64xf32, #tpu.memory_space<vmem>>, vector<64x64xf32>
    %c3_40 = arith.constant 3 : index
    %c0_41 = arith.constant 0 : index
    %c0_42 = arith.constant 0 : index
    %45 = vector.load %arg3[%c3_40, %c0_41, %c0_42] : memref<27x56x64xbf16, #tpu.memory_space<vmem>>, vector<1x56x64xbf16>
    %46 = vector.shape_cast %45 : vector<1x56x64xbf16> to vector<56x64xbf16>
    %cst_43 = arith.constant dense<0.000000e+00> : vector<64x64xf32>
    %47 = tpu.matmul %43, %46, %cst_43 {dimension_numbers = #tpu.dot_dimension_numbers<[1], [0], [0], [1], [0, 0, 1, 1], [], []>} : vector<64x56xbf16>, vector<56x64xbf16>, vector<64x64xf32> -> vector<64x64xf32>
    %48 = arith.addf %44, %47 : vector<64x64xf32>
    %c0_44 = arith.constant 0 : index
    %c0_45 = arith.constant 0 : index
    %49 = vector.load %arg6[%c0_44, %c0_45] : memref<64x64xf32, #tpu.memory_space<vmem>>, vector<64x64xf32>
    tpu.vector_store %arg6[%c0_44, %c0_45], %48 {strides = array<i32>} : memref<64x64xf32, #tpu.memory_space<vmem>>, vector<64x64xf32>,
    %c8_i32_46 = arith.constant 8 : i32
    %50 = arith.muli %arg1, %c8_i32_46 : i32
    %c3_i32_47 = arith.constant 3 : i32
    %51 = arith.addi %50, %c3_i32_47 : i32
    %c0_48 = arith.constant 0 : index
    %52 = arith.index_cast %51 : i32 to index
    %c3_49 = arith.constant 3 : index
    %c0_50 = arith.constant 0 : index
    %53 = vector.load %arg2[%c0_48, %52, %c3_49, %c0_50] : memref<1x14x14x56xbf16, #tpu.memory_space<vmem>>, vector<1x8x8x56xbf16>
    %54 = vector.shape_cast %53 : vector<1x8x8x56xbf16> to vector<8x8x56xbf16>
    %55 = vector.shape_cast %54 : vector<8x8x56xbf16> to vector<64x56xbf16>
    %c0_51 = arith.constant 0 : index
    %c0_52 = arith.constant 0 : index
    %56 = vector.load %arg6[%c0_51, %c0_52] : memref<64x64xf32, #tpu.memory_space<vmem>>, vector<64x64xf32>
    %c4_53 = arith.constant 4 : index
    %c0_54 = arith.constant 0 : index
    %c0_55 = arith.constant 0 : index
    %57 = vector.load %arg3[%c4_53, %c0_54, %c0_55] : memref<27x56x64xbf16, #tpu.memory_space<vmem>>, vector<1x56x64xbf16>
    %58 = vector.shape_cast %57 : vector<1x56x64xbf16> to vector<56x64xbf16>
    %cst_56 = arith.constant dense<0.000000e+00> : vector<64x64xf32>
    %59 = tpu.matmul %55, %58, %cst_56 {dimension_numbers = #tpu.dot_dimension_numbers<[1], [0], [0], [1], [0, 0, 1, 1], [], []>} : vector<64x56xbf16>, vector<56x64xbf16>, vector<64x64xf32> -> vector<64x64xf32>
    %60 = arith.addf %56, %59 : vector<64x64xf32>
    %c0_57 = arith.constant 0 : index
    %c0_58 = arith.constant 0 : index
    %61 = vector.load %arg6[%c0_57, %c0_58] : memref<64x64xf32, #tpu.memory_space<vmem>>, vector<64x64xf32>
    tpu.vector_store %arg6[%c0_57, %c0_58], %60 {strides = array<i32>} : memref<64x64xf32, #tpu.memory_space<vmem>>, vector<64x64xf32>,
    %c8_i32_59 = arith.constant 8 : i32
    %62 = arith.muli %arg1, %c8_i32_59 : i32
    %c3_i32_60 = arith.constant 3 : i32
    %63 = arith.addi %62, %c3_i32_60 : i32
    %c0_61 = arith.constant 0 : index
    %64 = arith.index_cast %63 : i32 to index
    %c4_62 = arith.constant 4 : index
    %c0_63 = arith.constant 0 : index
    %65 = vector.load %arg2[%c0_61, %64, %c4_62, %c0_63] : memref<1x14x14x56xbf16, #tpu.memory_space<vmem>>, vector<1x8x8x56xbf16>
    %66 = vector.shape_cast %65 : vector<1x8x8x56xbf16> to vector<8x8x56xbf16>
    %67 = vector.shape_cast %66 : vector<8x8x56xbf16> to vector<64x56xbf16>
    %c0_64 = arith.constant 0 : index
    %c0_65 = arith.constant 0 : index
    %68 = vector.load %arg6[%c0_64, %c0_65] : memref<64x64xf32, #tpu.memory_space<vmem>>, vector<64x64xf32>
    %c5 = arith.constant 5 : index
    %c0_66 = arith.constant 0 : index
    %c0_67 = arith.constant 0 : index
    %69 = vector.load %arg3[%c5, %c0_66, %c0_67] : memref<27x56x64xbf16, #tpu.memory_space<vmem>>, vector<1x56x64xbf16>
    %70 = vector.shape_cast %69 : vector<1x56x64xbf16> to vector<56x64xbf16>
    %cst_68 = arith.constant dense<0.000000e+00> : vector<64x64xf32>
    %71 = tpu.matmul %67, %70, %cst_68 {dimension_numbers = #tpu.dot_dimension_numbers<[1], [0], [0], [1], [0, 0, 1, 1], [], []>} : vector<64x56xbf16>, vector<56x64xbf16>, vector<64x64xf32> -> vector<64x64xf32>
    %72 = arith.addf %68, %71 : vector<64x64xf32>
    %c0_69 = arith.constant 0 : index
    %c0_70 = arith.constant 0 : index
    %73 = vector.load %arg6[%c0_69, %c0_70] : memref<64x64xf32, #tpu.memory_space<vmem>>, vector<64x64xf32>
    tpu.vector_store %arg6[%c0_69, %c0_70], %72 {strides = array<i32>} : memref<64x64xf32, #tpu.memory_space<vmem>>, vector<64x64xf32>,
    %c8_i32_71 = arith.constant 8 : i32
    %74 = arith.muli %arg1, %c8_i32_71 : i32
    %c4_i32 = arith.constant 4 : i32
    %75 = arith.addi %74, %c4_i32 : i32
    %c0_72 = arith.constant 0 : index
    %76 = arith.index_cast %75 : i32 to index
    %c2_73 = arith.constant 2 : index
    %c0_74 = arith.constant 0 : index
    %77 = vector.load %arg2[%c0_72, %76, %c2_73, %c0_74] : memref<1x14x14x56xbf16, #tpu.memory_space<vmem>>, vector<1x8x8x56xbf16>
    %78 = vector.shape_cast %77 : vector<1x8x8x56xbf16> to vector<8x8x56xbf16>
    %79 = vector.shape_cast %78 : vector<8x8x56xbf16> to vector<64x56xbf16>
    %c0_75 = arith.constant 0 : index
    %c0_76 = arith.constant 0 : index
    %80 = vector.load %arg6[%c0_75, %c0_76] : memref<64x64xf32, #tpu.memory_space<vmem>>, vector<64x64xf32>
    %c6 = arith.constant 6 : index
    %c0_77 = arith.constant 0 : index
    %c0_78 = arith.constant 0 : index
    %81 = vector.load %arg3[%c6, %c0_77, %c0_78] : memref<27x56x64xbf16, #tpu.memory_space<vmem>>, vector<1x56x64xbf16>
    %82 = vector.shape_cast %81 : vector<1x56x64xbf16> to vector<56x64xbf16>
    %cst_79 = arith.constant dense<0.000000e+00> : vector<64x64xf32>
    %83 = tpu.matmul %79, %82, %cst_79 {dimension_numbers = #tpu.dot_dimension_numbers<[1], [0], [0], [1], [0, 0, 1, 1], [], []>} : vector<64x56xbf16>, vector<56x64xbf16>, vector<64x64xf32> -> vector<64x64xf32>
    %84 = arith.addf %80, %83 : vector<64x64xf32>
    %c0_80 = arith.constant 0 : index
    %c0_81 = arith.constant 0 : index
    %85 = vector.load %arg6[%c0_80, %c0_81] : memref<64x64xf32, #tpu.memory_space<vmem>>, vector<64x64xf32>
    tpu.vector_store %arg6[%c0_80, %c0_81], %84 {strides = array<i32>} : memref<64x64xf32, #tpu.memory_space<vmem>>, vector<64x64xf32>,
    %c8_i32_82 = arith.constant 8 : i32
    %86 = arith.muli %arg1, %c8_i32_82 : i32
    %c4_i32_83 = arith.constant 4 : i32
    %87 = arith.addi %86, %c4_i32_83 : i32
    %c0_84 = arith.constant 0 : index
    %88 = arith.index_cast %87 : i32 to index
    %c3_85 = arith.constant 3 : index
    %c0_86 = arith.constant 0 : index
    %89 = vector.load %arg2[%c0_84, %88, %c3_85, %c0_86] : memref<1x14x14x56xbf16, #tpu.memory_space<vmem>>, vector<1x8x8x56xbf16>
    %90 = vector.shape_cast %89 : vector<1x8x8x56xbf16> to vector<8x8x56xbf16>
    %91 = vector.shape_cast %90 : vector<8x8x56xbf16> to vector<64x56xbf16>
    %c0_87 = arith.constant 0 : index
    %c0_88 = arith.constant 0 : index
    %92 = vector.load %arg6[%c0_87, %c0_88] : memref<64x64xf32, #tpu.memory_space<vmem>>, vector<64x64xf32>
    %c7 = arith.constant 7 : index
    %c0_89 = arith.constant 0 : index
    %c0_90 = arith.constant 0 : index
    %93 = vector.load %arg3[%c7, %c0_89, %c0_90] : memref<27x56x64xbf16, #tpu.memory_space<vmem>>, vector<1x56x64xbf16>
    %94 = vector.shape_cast %93 : vector<1x56x64xbf16> to vector<56x64xbf16>
    %cst_91 = arith.constant dense<0.000000e+00> : vector<64x64xf32>
    %95 = tpu.matmul %91, %94, %cst_91 {dimension_numbers = #tpu.dot_dimension_numbers<[1], [0], [0], [1], [0, 0, 1, 1], [], []>} : vector<64x56xbf16>, vector<56x64xbf16>, vector<64x64xf32> -> vector<64x64xf32>
    %96 = arith.addf %92, %95 : vector<64x64xf32>
    %c0_92 = arith.constant 0 : index
    %c0_93 = arith.constant 0 : index
    %97 = vector.load %arg6[%c0_92, %c0_93] : memref<64x64xf32, #tpu.memory_space<vmem>>, vector<64x64xf32>
    tpu.vector_store %arg6[%c0_92, %c0_93], %96 {strides = array<i32>} : memref<64x64xf32, #tpu.memory_space<vmem>>, vector<64x64xf32>,
    %c8_i32_94 = arith.constant 8 : i32
    %98 = arith.muli %arg1, %c8_i32_94 : i32
    %c4_i32_95 = arith.constant 4 : i32
    %99 = arith.addi %98, %c4_i32_95 : i32
    %c0_96 = arith.constant 0 : index
    %100 = arith.index_cast %99 : i32 to index
    %c4_97 = arith.constant 4 : index
    %c0_98 = arith.constant 0 : index
    %101 = vector.load %arg2[%c0_96, %100, %c4_97, %c0_98] : memref<1x14x14x56xbf16, #tpu.memory_space<vmem>>, vector<1x8x8x56xbf16>
    %102 = vector.shape_cast %101 : vector<1x8x8x56xbf16> to vector<8x8x56xbf16>
    %103 = vector.shape_cast %102 : vector<8x8x56xbf16> to vector<64x56xbf16>
    %c0_99 = arith.constant 0 : index
    %c0_100 = arith.constant 0 : index
    %104 = vector.load %arg6[%c0_99, %c0_100] : memref<64x64xf32, #tpu.memory_space<vmem>>, vector<64x64xf32>
    %c8 = arith.constant 8 : index
    %c0_101 = arith.constant 0 : index
    %c0_102 = arith.constant 0 : index
    %105 = vector.load %arg3[%c8, %c0_101, %c0_102] : memref<27x56x64xbf16, #tpu.memory_space<vmem>>, vector<1x56x64xbf16>
    %106 = vector.shape_cast %105 : vector<1x56x64xbf16> to vector<56x64xbf16>
    %cst_103 = arith.constant dense<0.000000e+00> : vector<64x64xf32>
    %107 = tpu.matmul %103, %106, %cst_103 {dimension_numbers = #tpu.dot_dimension_numbers<[1], [0], [0], [1], [0, 0, 1, 1], [], []>} : vector<64x56xbf16>, vector<56x64xbf16>, vector<64x64xf32> -> vector<64x64xf32>
    %108 = arith.addf %104, %107 : vector<64x64xf32>
    %c0_104 = arith.constant 0 : index
    %c0_105 = arith.constant 0 : index
    %109 = vector.load %arg6[%c0_104, %c0_105] : memref<64x64xf32, #tpu.memory_space<vmem>>, vector<64x64xf32>
    tpu.vector_store %arg6[%c0_104, %c0_105], %108 {strides = array<i32>} : memref<64x64xf32, #tpu.memory_space<vmem>>, vector<64x64xf32>,
    %c8_i32_106 = arith.constant 8 : i32
    %110 = arith.muli %arg1, %c8_i32_106 : i32
    %c1_i32 = arith.constant 1 : i32
    %111 = arith.addi %110, %c1_i32 : i32
    %c0_107 = arith.constant 0 : index
    %112 = arith.index_cast %111 : i32 to index
    %c1_108 = arith.constant 1 : index
    %c0_109 = arith.constant 0 : index
    %113 = vector.load %arg2[%c0_107, %112, %c1_108, %c0_109] : memref<1x14x14x56xbf16, #tpu.memory_space<vmem>>, vector<1x8x8x56xbf16>
    %114 = vector.shape_cast %113 : vector<1x8x8x56xbf16> to vector<8x8x56xbf16>
    %115 = vector.shape_cast %114 : vector<8x8x56xbf16> to vector<64x56xbf16>
    %c0_110 = arith.constant 0 : index
    %c0_111 = arith.constant 0 : index
    %116 = vector.load %arg6[%c0_110, %c0_111] : memref<64x64xf32, #tpu.memory_space<vmem>>, vector<64x64xf32>
    %c9 = arith.constant 9 : index
    %c0_112 = arith.constant 0 : index
    %c0_113 = arith.constant 0 : index
    %117 = vector.load %arg3[%c9, %c0_112, %c0_113] : memref<27x56x64xbf16, #tpu.memory_space<vmem>>, vector<1x56x64xbf16>
    %118 = vector.shape_cast %117 : vector<1x56x64xbf16> to vector<56x64xbf16>
    %cst_114 = arith.constant dense<0.000000e+00> : vector<64x64xf32>
    %119 = tpu.matmul %115, %118, %cst_114 {dimension_numbers = #tpu.dot_dimension_numbers<[1], [0], [0], [1], [0, 0, 1, 1], [], []>} : vector<64x56xbf16>, vector<56x64xbf16>, vector<64x64xf32> -> vector<64x64xf32>
    %120 = arith.addf %116, %119 : vector<64x64xf32>
    %c0_115 = arith.constant 0 : index
    %c0_116 = arith.constant 0 : index
    %121 = vector.load %arg6[%c0_115, %c0_116] : memref<64x64xf32, #tpu.memory_space<vmem>>, vector<64x64xf32>
    tpu.vector_store %arg6[%c0_115, %c0_116], %120 {strides = array<i32>} : memref<64x64xf32, #tpu.memory_space<vmem>>, vector<64x64xf32>,
    %c8_i32_117 = arith.constant 8 : i32
    %122 = arith.muli %arg1, %c8_i32_117 : i32
    %c1_i32_118 = arith.constant 1 : i32
    %123 = arith.addi %122, %c1_i32_118 : i32
    %c0_119 = arith.constant 0 : index
    %124 = arith.index_cast %123 : i32 to index
    %c3_120 = arith.constant 3 : index
    %c0_121 = arith.constant 0 : index
    %125 = vector.load %arg2[%c0_119, %124, %c3_120, %c0_121] : memref<1x14x14x56xbf16, #tpu.memory_space<vmem>>, vector<1x8x8x56xbf16>
    %126 = vector.shape_cast %125 : vector<1x8x8x56xbf16> to vector<8x8x56xbf16>
    %127 = vector.shape_cast %126 : vector<8x8x56xbf16> to vector<64x56xbf16>
    %c0_122 = arith.constant 0 : index
    %c0_123 = arith.constant 0 : index
    %128 = vector.load %arg6[%c0_122, %c0_123] : memref<64x64xf32, #tpu.memory_space<vmem>>, vector<64x64xf32>
    %c10 = arith.constant 10 : index
    %c0_124 = arith.constant 0 : index
    %c0_125 = arith.constant 0 : index
    %129 = vector.load %arg3[%c10, %c0_124, %c0_125] : memref<27x56x64xbf16, #tpu.memory_space<vmem>>, vector<1x56x64xbf16>
    %130 = vector.shape_cast %129 : vector<1x56x64xbf16> to vector<56x64xbf16>
    %cst_126 = arith.constant dense<0.000000e+00> : vector<64x64xf32>
    %131 = tpu.matmul %127, %130, %cst_126 {dimension_numbers = #tpu.dot_dimension_numbers<[1], [0], [0], [1], [0, 0, 1, 1], [], []>} : vector<64x56xbf16>, vector<56x64xbf16>, vector<64x64xf32> -> vector<64x64xf32>
    %132 = arith.addf %128, %131 : vector<64x64xf32>
    %c0_127 = arith.constant 0 : index
    %c0_128 = arith.constant 0 : index
    %133 = vector.load %arg6[%c0_127, %c0_128] : memref<64x64xf32, #tpu.memory_space<vmem>>, vector<64x64xf32>
    tpu.vector_store %arg6[%c0_127, %c0_128], %132 {strides = array<i32>} : memref<64x64xf32, #tpu.memory_space<vmem>>, vector<64x64xf32>,
    %c8_i32_129 = arith.constant 8 : i32
    %134 = arith.muli %arg1, %c8_i32_129 : i32
    %c1_i32_130 = arith.constant 1 : i32
    %135 = arith.addi %134, %c1_i32_130 : i32
    %c0_131 = arith.constant 0 : index
    %136 = arith.index_cast %135 : i32 to index
    %c5_132 = arith.constant 5 : index
    %c0_133 = arith.constant 0 : index
    %137 = vector.load %arg2[%c0_131, %136, %c5_132, %c0_133] : memref<1x14x14x56xbf16, #tpu.memory_space<vmem>>, vector<1x8x8x56xbf16>
    %138 = vector.shape_cast %137 : vector<1x8x8x56xbf16> to vector<8x8x56xbf16>
    %139 = vector.shape_cast %138 : vector<8x8x56xbf16> to vector<64x56xbf16>
    %c0_134 = arith.constant 0 : index
    %c0_135 = arith.constant 0 : index
    %140 = vector.load %arg6[%c0_134, %c0_135] : memref<64x64xf32, #tpu.memory_space<vmem>>, vector<64x64xf32>
    %c11 = arith.constant 11 : index
    %c0_136 = arith.constant 0 : index
    %c0_137 = arith.constant 0 : index
    %141 = vector.load %arg3[%c11, %c0_136, %c0_137] : memref<27x56x64xbf16, #tpu.memory_space<vmem>>, vector<1x56x64xbf16>
    %142 = vector.shape_cast %141 : vector<1x56x64xbf16> to vector<56x64xbf16>
    %cst_138 = arith.constant dense<0.000000e+00> : vector<64x64xf32>
    %143 = tpu.matmul %139, %142, %cst_138 {dimension_numbers = #tpu.dot_dimension_numbers<[1], [0], [0], [1], [0, 0, 1, 1], [], []>} : vector<64x56xbf16>, vector<56x64xbf16>, vector<64x64xf32> -> vector<64x64xf32>
    %144 = arith.addf %140, %143 : vector<64x64xf32>
    %c0_139 = arith.constant 0 : index
    %c0_140 = arith.constant 0 : index
    %145 = vector.load %arg6[%c0_139, %c0_140] : memref<64x64xf32, #tpu.memory_space<vmem>>, vector<64x64xf32>
    tpu.vector_store %arg6[%c0_139, %c0_140], %144 {strides = array<i32>} : memref<64x64xf32, #tpu.memory_space<vmem>>, vector<64x64xf32>,
    %c8_i32_141 = arith.constant 8 : i32
    %146 = arith.muli %arg1, %c8_i32_141 : i32
    %c3_i32_142 = arith.constant 3 : i32
    %147 = arith.addi %146, %c3_i32_142 : i32
    %c0_143 = arith.constant 0 : index
    %148 = arith.index_cast %147 : i32 to index
    %c1_144 = arith.constant 1 : index
    %c0_145 = arith.constant 0 : index
    %149 = vector.load %arg2[%c0_143, %148, %c1_144, %c0_145] : memref<1x14x14x56xbf16, #tpu.memory_space<vmem>>, vector<1x8x8x56xbf16>
    %150 = vector.shape_cast %149 : vector<1x8x8x56xbf16> to vector<8x8x56xbf16>
    %151 = vector.shape_cast %150 : vector<8x8x56xbf16> to vector<64x56xbf16>
    %c0_146 = arith.constant 0 : index
    %c0_147 = arith.constant 0 : index
    %152 = vector.load %arg6[%c0_146, %c0_147] : memref<64x64xf32, #tpu.memory_space<vmem>>, vector<64x64xf32>
    %c12 = arith.constant 12 : index
    %c0_148 = arith.constant 0 : index
    %c0_149 = arith.constant 0 : index
    %153 = vector.load %arg3[%c12, %c0_148, %c0_149] : memref<27x56x64xbf16, #tpu.memory_space<vmem>>, vector<1x56x64xbf16>
    %154 = vector.shape_cast %153 : vector<1x56x64xbf16> to vector<56x64xbf16>
    %cst_150 = arith.constant dense<0.000000e+00> : vector<64x64xf32>
    %155 = tpu.matmul %151, %154, %cst_150 {dimension_numbers = #tpu.dot_dimension_numbers<[1], [0], [0], [1], [0, 0, 1, 1], [], []>} : vector<64x56xbf16>, vector<56x64xbf16>, vector<64x64xf32> -> vector<64x64xf32>
    %156 = arith.addf %152, %155 : vector<64x64xf32>
    %c0_151 = arith.constant 0 : index
    %c0_152 = arith.constant 0 : index
    %157 = vector.load %arg6[%c0_151, %c0_152] : memref<64x64xf32, #tpu.memory_space<vmem>>, vector<64x64xf32>
    tpu.vector_store %arg6[%c0_151, %c0_152], %156 {strides = array<i32>} : memref<64x64xf32, #tpu.memory_space<vmem>>, vector<64x64xf32>,
    %c8_i32_153 = arith.constant 8 : i32
    %158 = arith.muli %arg1, %c8_i32_153 : i32
    %c3_i32_154 = arith.constant 3 : i32
    %159 = arith.addi %158, %c3_i32_154 : i32
    %c0_155 = arith.constant 0 : index
    %160 = arith.index_cast %159 : i32 to index
    %c3_156 = arith.constant 3 : index
    %c0_157 = arith.constant 0 : index
    %161 = vector.load %arg2[%c0_155, %160, %c3_156, %c0_157] : memref<1x14x14x56xbf16, #tpu.memory_space<vmem>>, vector<1x8x8x56xbf16>
    %162 = vector.shape_cast %161 : vector<1x8x8x56xbf16> to vector<8x8x56xbf16>
    %163 = vector.shape_cast %162 : vector<8x8x56xbf16> to vector<64x56xbf16>
    %c0_158 = arith.constant 0 : index
    %c0_159 = arith.constant 0 : index
    %164 = vector.load %arg6[%c0_158, %c0_159] : memref<64x64xf32, #tpu.memory_space<vmem>>, vector<64x64xf32>
    %c13 = arith.constant 13 : index
    %c0_160 = arith.constant 0 : index
    %c0_161 = arith.constant 0 : index
    %165 = vector.load %arg3[%c13, %c0_160, %c0_161] : memref<27x56x64xbf16, #tpu.memory_space<vmem>>, vector<1x56x64xbf16>
    %166 = vector.shape_cast %165 : vector<1x56x64xbf16> to vector<56x64xbf16>
    %cst_162 = arith.constant dense<0.000000e+00> : vector<64x64xf32>
    %167 = tpu.matmul %163, %166, %cst_162 {dimension_numbers = #tpu.dot_dimension_numbers<[1], [0], [0], [1], [0, 0, 1, 1], [], []>} : vector<64x56xbf16>, vector<56x64xbf16>, vector<64x64xf32> -> vector<64x64xf32>
    %168 = arith.addf %164, %167 : vector<64x64xf32>
    %c0_163 = arith.constant 0 : index
    %c0_164 = arith.constant 0 : index
    %169 = vector.load %arg6[%c0_163, %c0_164] : memref<64x64xf32, #tpu.memory_space<vmem>>, vector<64x64xf32>
    tpu.vector_store %arg6[%c0_163, %c0_164], %168 {strides = array<i32>} : memref<64x64xf32, #tpu.memory_space<vmem>>, vector<64x64xf32>,
    %c8_i32_165 = arith.constant 8 : i32
    %170 = arith.muli %arg1, %c8_i32_165 : i32
    %c3_i32_166 = arith.constant 3 : i32
    %171 = arith.addi %170, %c3_i32_166 : i32
    %c0_167 = arith.constant 0 : index
    %172 = arith.index_cast %171 : i32 to index
    %c5_168 = arith.constant 5 : index
    %c0_169 = arith.constant 0 : index
    %173 = vector.load %arg2[%c0_167, %172, %c5_168, %c0_169] : memref<1x14x14x56xbf16, #tpu.memory_space<vmem>>, vector<1x8x8x56xbf16>
    %174 = vector.shape_cast %173 : vector<1x8x8x56xbf16> to vector<8x8x56xbf16>
    %175 = vector.shape_cast %174 : vector<8x8x56xbf16> to vector<64x56xbf16>
    %c0_170 = arith.constant 0 : index
    %c0_171 = arith.constant 0 : index
    %176 = vector.load %arg6[%c0_170, %c0_171] : memref<64x64xf32, #tpu.memory_space<vmem>>, vector<64x64xf32>
    %c14 = arith.constant 14 : index
    %c0_172 = arith.constant 0 : index
    %c0_173 = arith.constant 0 : index
    %177 = vector.load %arg3[%c14, %c0_172, %c0_173] : memref<27x56x64xbf16, #tpu.memory_space<vmem>>, vector<1x56x64xbf16>
    %178 = vector.shape_cast %177 : vector<1x56x64xbf16> to vector<56x64xbf16>
    %cst_174 = arith.constant dense<0.000000e+00> : vector<64x64xf32>
    %179 = tpu.matmul %175, %178, %cst_174 {dimension_numbers = #tpu.dot_dimension_numbers<[1], [0], [0], [1], [0, 0, 1, 1], [], []>} : vector<64x56xbf16>, vector<56x64xbf16>, vector<64x64xf32> -> vector<64x64xf32>
    %180 = arith.addf %176, %179 : vector<64x64xf32>
    %c0_175 = arith.constant 0 : index
    %c0_176 = arith.constant 0 : index
    %181 = vector.load %arg6[%c0_175, %c0_176] : memref<64x64xf32, #tpu.memory_space<vmem>>, vector<64x64xf32>
    tpu.vector_store %arg6[%c0_175, %c0_176], %180 {strides = array<i32>} : memref<64x64xf32, #tpu.memory_space<vmem>>, vector<64x64xf32>,
    %c8_i32_177 = arith.constant 8 : i32
    %182 = arith.muli %arg1, %c8_i32_177 : i32
    %c5_i32 = arith.constant 5 : i32
    %183 = arith.addi %182, %c5_i32 : i32
    %c0_178 = arith.constant 0 : index
    %184 = arith.index_cast %183 : i32 to index
    %c1_179 = arith.constant 1 : index
    %c0_180 = arith.constant 0 : index
    %185 = vector.load %arg2[%c0_178, %184, %c1_179, %c0_180] : memref<1x14x14x56xbf16, #tpu.memory_space<vmem>>, vector<1x8x8x56xbf16>
    %186 = vector.shape_cast %185 : vector<1x8x8x56xbf16> to vector<8x8x56xbf16>
    %187 = vector.shape_cast %186 : vector<8x8x56xbf16> to vector<64x56xbf16>
    %c0_181 = arith.constant 0 : index
    %c0_182 = arith.constant 0 : index
    %188 = vector.load %arg6[%c0_181, %c0_182] : memref<64x64xf32, #tpu.memory_space<vmem>>, vector<64x64xf32>
    %c15 = arith.constant 15 : index
    %c0_183 = arith.constant 0 : index
    %c0_184 = arith.constant 0 : index
    %189 = vector.load %arg3[%c15, %c0_183, %c0_184] : memref<27x56x64xbf16, #tpu.memory_space<vmem>>, vector<1x56x64xbf16>
    %190 = vector.shape_cast %189 : vector<1x56x64xbf16> to vector<56x64xbf16>
    %cst_185 = arith.constant dense<0.000000e+00> : vector<64x64xf32>
    %191 = tpu.matmul %187, %190, %cst_185 {dimension_numbers = #tpu.dot_dimension_numbers<[1], [0], [0], [1], [0, 0, 1, 1], [], []>} : vector<64x56xbf16>, vector<56x64xbf16>, vector<64x64xf32> -> vector<64x64xf32>
    %192 = arith.addf %188, %191 : vector<64x64xf32>
    %c0_186 = arith.constant 0 : index
    %c0_187 = arith.constant 0 : index
    %193 = vector.load %arg6[%c0_186, %c0_187] : memref<64x64xf32, #tpu.memory_space<vmem>>, vector<64x64xf32>
    tpu.vector_store %arg6[%c0_186, %c0_187], %192 {strides = array<i32>} : memref<64x64xf32, #tpu.memory_space<vmem>>, vector<64x64xf32>,
    %c8_i32_188 = arith.constant 8 : i32
    %194 = arith.muli %arg1, %c8_i32_188 : i32
    %c5_i32_189 = arith.constant 5 : i32
    %195 = arith.addi %194, %c5_i32_189 : i32
    %c0_190 = arith.constant 0 : index
    %196 = arith.index_cast %195 : i32 to index
    %c3_191 = arith.constant 3 : index
    %c0_192 = arith.constant 0 : index
    %197 = vector.load %arg2[%c0_190, %196, %c3_191, %c0_192] : memref<1x14x14x56xbf16, #tpu.memory_space<vmem>>, vector<1x8x8x56xbf16>
    %198 = vector.shape_cast %197 : vector<1x8x8x56xbf16> to vector<8x8x56xbf16>
    %199 = vector.shape_cast %198 : vector<8x8x56xbf16> to vector<64x56xbf16>
    %c0_193 = arith.constant 0 : index
    %c0_194 = arith.constant 0 : index
    %200 = vector.load %arg6[%c0_193, %c0_194] : memref<64x64xf32, #tpu.memory_space<vmem>>, vector<64x64xf32>
    %c16 = arith.constant 16 : index
    %c0_195 = arith.constant 0 : index
    %c0_196 = arith.constant 0 : index
    %201 = vector.load %arg3[%c16, %c0_195, %c0_196] : memref<27x56x64xbf16, #tpu.memory_space<vmem>>, vector<1x56x64xbf16>
    %202 = vector.shape_cast %201 : vector<1x56x64xbf16> to vector<56x64xbf16>
    %cst_197 = arith.constant dense<0.000000e+00> : vector<64x64xf32>
    %203 = tpu.matmul %199, %202, %cst_197 {dimension_numbers = #tpu.dot_dimension_numbers<[1], [0], [0], [1], [0, 0, 1, 1], [], []>} : vector<64x56xbf16>, vector<56x64xbf16>, vector<64x64xf32> -> vector<64x64xf32>
    %204 = arith.addf %200, %203 : vector<64x64xf32>
    %c0_198 = arith.constant 0 : index
    %c0_199 = arith.constant 0 : index
    %205 = vector.load %arg6[%c0_198, %c0_199] : memref<64x64xf32, #tpu.memory_space<vmem>>, vector<64x64xf32>
    tpu.vector_store %arg6[%c0_198, %c0_199], %204 {strides = array<i32>} : memref<64x64xf32, #tpu.memory_space<vmem>>, vector<64x64xf32>,
    %c8_i32_200 = arith.constant 8 : i32
    %206 = arith.muli %arg1, %c8_i32_200 : i32
    %c5_i32_201 = arith.constant 5 : i32
    %207 = arith.addi %206, %c5_i32_201 : i32
    %c0_202 = arith.constant 0 : index
    %208 = arith.index_cast %207 : i32 to index
    %c5_203 = arith.constant 5 : index
    %c0_204 = arith.constant 0 : index
    %209 = vector.load %arg2[%c0_202, %208, %c5_203, %c0_204] : memref<1x14x14x56xbf16, #tpu.memory_space<vmem>>, vector<1x8x8x56xbf16>
    %210 = vector.shape_cast %209 : vector<1x8x8x56xbf16> to vector<8x8x56xbf16>
    %211 = vector.shape_cast %210 : vector<8x8x56xbf16> to vector<64x56xbf16>
    %c0_205 = arith.constant 0 : index
    %c0_206 = arith.constant 0 : index
    %212 = vector.load %arg6[%c0_205, %c0_206] : memref<64x64xf32, #tpu.memory_space<vmem>>, vector<64x64xf32>
    %c17 = arith.constant 17 : index
    %c0_207 = arith.constant 0 : index
    %c0_208 = arith.constant 0 : index
    %213 = vector.load %arg3[%c17, %c0_207, %c0_208] : memref<27x56x64xbf16, #tpu.memory_space<vmem>>, vector<1x56x64xbf16>
    %214 = vector.shape_cast %213 : vector<1x56x64xbf16> to vector<56x64xbf16>
    %cst_209 = arith.constant dense<0.000000e+00> : vector<64x64xf32>
    %215 = tpu.matmul %211, %214, %cst_209 {dimension_numbers = #tpu.dot_dimension_numbers<[1], [0], [0], [1], [0, 0, 1, 1], [], []>} : vector<64x56xbf16>, vector<56x64xbf16>, vector<64x64xf32> -> vector<64x64xf32>
    %216 = arith.addf %212, %215 : vector<64x64xf32>
    %c0_210 = arith.constant 0 : index
    %c0_211 = arith.constant 0 : index
    %217 = vector.load %arg6[%c0_210, %c0_211] : memref<64x64xf32, #tpu.memory_space<vmem>>, vector<64x64xf32>
    tpu.vector_store %arg6[%c0_210, %c0_211], %216 {strides = array<i32>} : memref<64x64xf32, #tpu.memory_space<vmem>>, vector<64x64xf32>,
    %c8_i32_212 = arith.constant 8 : i32
    %218 = arith.muli %arg1, %c8_i32_212 : i32
    %c0_i32 = arith.constant 0 : i32
    %219 = arith.addi %218, %c0_i32 : i32
    %c0_213 = arith.constant 0 : index
    %220 = arith.index_cast %219 : i32 to index
    %c0_214 = arith.constant 0 : index
    %c0_215 = arith.constant 0 : index
    %221 = vector.load %arg2[%c0_213, %220, %c0_214, %c0_215] : memref<1x14x14x56xbf16, #tpu.memory_space<vmem>>, vector<1x8x8x56xbf16>
    %222 = vector.shape_cast %221 : vector<1x8x8x56xbf16> to vector<8x8x56xbf16>
    %223 = vector.shape_cast %222 : vector<8x8x56xbf16> to vector<64x56xbf16>
    %c0_216 = arith.constant 0 : index
    %c0_217 = arith.constant 0 : index
    %224 = vector.load %arg6[%c0_216, %c0_217] : memref<64x64xf32, #tpu.memory_space<vmem>>, vector<64x64xf32>
    %c18 = arith.constant 18 : index
    %c0_218 = arith.constant 0 : index
    %c0_219 = arith.constant 0 : index
    %225 = vector.load %arg3[%c18, %c0_218, %c0_219] : memref<27x56x64xbf16, #tpu.memory_space<vmem>>, vector<1x56x64xbf16>
    %226 = vector.shape_cast %225 : vector<1x56x64xbf16> to vector<56x64xbf16>
    %cst_220 = arith.constant dense<0.000000e+00> : vector<64x64xf32>
    %227 = tpu.matmul %223, %226, %cst_220 {dimension_numbers = #tpu.dot_dimension_numbers<[1], [0], [0], [1], [0, 0, 1, 1], [], []>} : vector<64x56xbf16>, vector<56x64xbf16>, vector<64x64xf32> -> vector<64x64xf32>
    %228 = arith.addf %224, %227 : vector<64x64xf32>
    %c0_221 = arith.constant 0 : index
    %c0_222 = arith.constant 0 : index
    %229 = vector.load %arg6[%c0_221, %c0_222] : memref<64x64xf32, #tpu.memory_space<vmem>>, vector<64x64xf32>
    tpu.vector_store %arg6[%c0_221, %c0_222], %228 {strides = array<i32>} : memref<64x64xf32, #tpu.memory_space<vmem>>, vector<64x64xf32>,
    %c8_i32_223 = arith.constant 8 : i32
    %230 = arith.muli %arg1, %c8_i32_223 : i32
    %c0_i32_224 = arith.constant 0 : i32
    %231 = arith.addi %230, %c0_i32_224 : i32
    %c0_225 = arith.constant 0 : index
    %232 = arith.index_cast %231 : i32 to index
    %c3_226 = arith.constant 3 : index
    %c0_227 = arith.constant 0 : index
    %233 = vector.load %arg2[%c0_225, %232, %c3_226, %c0_227] : memref<1x14x14x56xbf16, #tpu.memory_space<vmem>>, vector<1x8x8x56xbf16>
    %234 = vector.shape_cast %233 : vector<1x8x8x56xbf16> to vector<8x8x56xbf16>
    %235 = vector.shape_cast %234 : vector<8x8x56xbf16> to vector<64x56xbf16>
    %c0_228 = arith.constant 0 : index
    %c0_229 = arith.constant 0 : index
    %236 = vector.load %arg6[%c0_228, %c0_229] : memref<64x64xf32, #tpu.memory_space<vmem>>, vector<64x64xf32>
    %c19 = arith.constant 19 : index
    %c0_230 = arith.constant 0 : index
    %c0_231 = arith.constant 0 : index
    %237 = vector.load %arg3[%c19, %c0_230, %c0_231] : memref<27x56x64xbf16, #tpu.memory_space<vmem>>, vector<1x56x64xbf16>
    %238 = vector.shape_cast %237 : vector<1x56x64xbf16> to vector<56x64xbf16>
    %cst_232 = arith.constant dense<0.000000e+00> : vector<64x64xf32>
    %239 = tpu.matmul %235, %238, %cst_232 {dimension_numbers = #tpu.dot_dimension_numbers<[1], [0], [0], [1], [0, 0, 1, 1], [], []>} : vector<64x56xbf16>, vector<56x64xbf16>, vector<64x64xf32> -> vector<64x64xf32>
    %240 = arith.addf %236, %239 : vector<64x64xf32>
    %c0_233 = arith.constant 0 : index
    %c0_234 = arith.constant 0 : index
    %241 = vector.load %arg6[%c0_233, %c0_234] : memref<64x64xf32, #tpu.memory_space<vmem>>, vector<64x64xf32>
    tpu.vector_store %arg6[%c0_233, %c0_234], %240 {strides = array<i32>} : memref<64x64xf32, #tpu.memory_space<vmem>>, vector<64x64xf32>,
    %c8_i32_235 = arith.constant 8 : i32
    %242 = arith.muli %arg1, %c8_i32_235 : i32
    %c0_i32_236 = arith.constant 0 : i32
    %243 = arith.addi %242, %c0_i32_236 : i32
    %c0_237 = arith.constant 0 : index
    %244 = arith.index_cast %243 : i32 to index
    %c6_238 = arith.constant 6 : index
    %c0_239 = arith.constant 0 : index
    %245 = vector.load %arg2[%c0_237, %244, %c6_238, %c0_239] : memref<1x14x14x56xbf16, #tpu.memory_space<vmem>>, vector<1x8x8x56xbf16>
    %246 = vector.shape_cast %245 : vector<1x8x8x56xbf16> to vector<8x8x56xbf16>
    %247 = vector.shape_cast %246 : vector<8x8x56xbf16> to vector<64x56xbf16>
    %c0_240 = arith.constant 0 : index
    %c0_241 = arith.constant 0 : index
    %248 = vector.load %arg6[%c0_240, %c0_241] : memref<64x64xf32, #tpu.memory_space<vmem>>, vector<64x64xf32>
    %c20 = arith.constant 20 : index
    %c0_242 = arith.constant 0 : index
    %c0_243 = arith.constant 0 : index
    %249 = vector.load %arg3[%c20, %c0_242, %c0_243] : memref<27x56x64xbf16, #tpu.memory_space<vmem>>, vector<1x56x64xbf16>
    %250 = vector.shape_cast %249 : vector<1x56x64xbf16> to vector<56x64xbf16>
    %cst_244 = arith.constant dense<0.000000e+00> : vector<64x64xf32>
    %251 = tpu.matmul %247, %250, %cst_244 {dimension_numbers = #tpu.dot_dimension_numbers<[1], [0], [0], [1], [0, 0, 1, 1], [], []>} : vector<64x56xbf16>, vector<56x64xbf16>, vector<64x64xf32> -> vector<64x64xf32>
    %252 = arith.addf %248, %251 : vector<64x64xf32>
    %c0_245 = arith.constant 0 : index
    %c0_246 = arith.constant 0 : index
    %253 = vector.load %arg6[%c0_245, %c0_246] : memref<64x64xf32, #tpu.memory_space<vmem>>, vector<64x64xf32>
    tpu.vector_store %arg6[%c0_245, %c0_246], %252 {strides = array<i32>} : memref<64x64xf32, #tpu.memory_space<vmem>>, vector<64x64xf32>,
    %c8_i32_247 = arith.constant 8 : i32
    %254 = arith.muli %arg1, %c8_i32_247 : i32
    %c3_i32_248 = arith.constant 3 : i32
    %255 = arith.addi %254, %c3_i32_248 : i32
    %c0_249 = arith.constant 0 : index
    %256 = arith.index_cast %255 : i32 to index
    %c0_250 = arith.constant 0 : index
    %c0_251 = arith.constant 0 : index
    %257 = vector.load %arg2[%c0_249, %256, %c0_250, %c0_251] : memref<1x14x14x56xbf16, #tpu.memory_space<vmem>>, vector<1x8x8x56xbf16>
    %258 = vector.shape_cast %257 : vector<1x8x8x56xbf16> to vector<8x8x56xbf16>
    %259 = vector.shape_cast %258 : vector<8x8x56xbf16> to vector<64x56xbf16>
    %c0_252 = arith.constant 0 : index
    %c0_253 = arith.constant 0 : index
    %260 = vector.load %arg6[%c0_252, %c0_253] : memref<64x64xf32, #tpu.memory_space<vmem>>, vector<64x64xf32>
    %c21 = arith.constant 21 : index
    %c0_254 = arith.constant 0 : index
    %c0_255 = arith.constant 0 : index
    %261 = vector.load %arg3[%c21, %c0_254, %c0_255] : memref<27x56x64xbf16, #tpu.memory_space<vmem>>, vector<1x56x64xbf16>
    %262 = vector.shape_cast %261 : vector<1x56x64xbf16> to vector<56x64xbf16>
    %cst_256 = arith.constant dense<0.000000e+00> : vector<64x64xf32>
    %263 = tpu.matmul %259, %262, %cst_256 {dimension_numbers = #tpu.dot_dimension_numbers<[1], [0], [0], [1], [0, 0, 1, 1], [], []>} : vector<64x56xbf16>, vector<56x64xbf16>, vector<64x64xf32> -> vector<64x64xf32>
    %264 = arith.addf %260, %263 : vector<64x64xf32>
    %c0_257 = arith.constant 0 : index
    %c0_258 = arith.constant 0 : index
    %265 = vector.load %arg6[%c0_257, %c0_258] : memref<64x64xf32, #tpu.memory_space<vmem>>, vector<64x64xf32>
    tpu.vector_store %arg6[%c0_257, %c0_258], %264 {strides = array<i32>} : memref<64x64xf32, #tpu.memory_space<vmem>>, vector<64x64xf32>,
    %c8_i32_259 = arith.constant 8 : i32
    %266 = arith.muli %arg1, %c8_i32_259 : i32
    %c3_i32_260 = arith.constant 3 : i32
    %267 = arith.addi %266, %c3_i32_260 : i32
    %c0_261 = arith.constant 0 : index
    %268 = arith.index_cast %267 : i32 to index
    %c3_262 = arith.constant 3 : index
    %c0_263 = arith.constant 0 : index
    %269 = vector.load %arg2[%c0_261, %268, %c3_262, %c0_263] : memref<1x14x14x56xbf16, #tpu.memory_space<vmem>>, vector<1x8x8x56xbf16>
    %270 = vector.shape_cast %269 : vector<1x8x8x56xbf16> to vector<8x8x56xbf16>
    %271 = vector.shape_cast %270 : vector<8x8x56xbf16> to vector<64x56xbf16>
    %c0_264 = arith.constant 0 : index
    %c0_265 = arith.constant 0 : index
    %272 = vector.load %arg6[%c0_264, %c0_265] : memref<64x64xf32, #tpu.memory_space<vmem>>, vector<64x64xf32>
    %c22 = arith.constant 22 : index
    %c0_266 = arith.constant 0 : index
    %c0_267 = arith.constant 0 : index
    %273 = vector.load %arg3[%c22, %c0_266, %c0_267] : memref<27x56x64xbf16, #tpu.memory_space<vmem>>, vector<1x56x64xbf16>
    %274 = vector.shape_cast %273 : vector<1x56x64xbf16> to vector<56x64xbf16>
    %cst_268 = arith.constant dense<0.000000e+00> : vector<64x64xf32>
    %275 = tpu.matmul %271, %274, %cst_268 {dimension_numbers = #tpu.dot_dimension_numbers<[1], [0], [0], [1], [0, 0, 1, 1], [], []>} : vector<64x56xbf16>, vector<56x64xbf16>, vector<64x64xf32> -> vector<64x64xf32>
    %276 = arith.addf %272, %275 : vector<64x64xf32>
    %c0_269 = arith.constant 0 : index
    %c0_270 = arith.constant 0 : index
    %277 = vector.load %arg6[%c0_269, %c0_270] : memref<64x64xf32, #tpu.memory_space<vmem>>, vector<64x64xf32>
    tpu.vector_store %arg6[%c0_269, %c0_270], %276 {strides = array<i32>} : memref<64x64xf32, #tpu.memory_space<vmem>>, vector<64x64xf32>,
    %c8_i32_271 = arith.constant 8 : i32
    %278 = arith.muli %arg1, %c8_i32_271 : i32
    %c3_i32_272 = arith.constant 3 : i32
    %279 = arith.addi %278, %c3_i32_272 : i32
    %c0_273 = arith.constant 0 : index
    %280 = arith.index_cast %279 : i32 to index
    %c6_274 = arith.constant 6 : index
    %c0_275 = arith.constant 0 : index
    %281 = vector.load %arg2[%c0_273, %280, %c6_274, %c0_275] : memref<1x14x14x56xbf16, #tpu.memory_space<vmem>>, vector<1x8x8x56xbf16>
    %282 = vector.shape_cast %281 : vector<1x8x8x56xbf16> to vector<8x8x56xbf16>
    %283 = vector.shape_cast %282 : vector<8x8x56xbf16> to vector<64x56xbf16>
    %c0_276 = arith.constant 0 : index
    %c0_277 = arith.constant 0 : index
    %284 = vector.load %arg6[%c0_276, %c0_277] : memref<64x64xf32, #tpu.memory_space<vmem>>, vector<64x64xf32>
    %c23 = arith.constant 23 : index
    %c0_278 = arith.constant 0 : index
    %c0_279 = arith.constant 0 : index
    %285 = vector.load %arg3[%c23, %c0_278, %c0_279] : memref<27x56x64xbf16, #tpu.memory_space<vmem>>, vector<1x56x64xbf16>
    %286 = vector.shape_cast %285 : vector<1x56x64xbf16> to vector<56x64xbf16>
    %cst_280 = arith.constant dense<0.000000e+00> : vector<64x64xf32>
    %287 = tpu.matmul %283, %286, %cst_280 {dimension_numbers = #tpu.dot_dimension_numbers<[1], [0], [0], [1], [0, 0, 1, 1], [], []>} : vector<64x56xbf16>, vector<56x64xbf16>, vector<64x64xf32> -> vector<64x64xf32>
    %288 = arith.addf %284, %287 : vector<64x64xf32>
    %c0_281 = arith.constant 0 : index
    %c0_282 = arith.constant 0 : index
    %289 = vector.load %arg6[%c0_281, %c0_282] : memref<64x64xf32, #tpu.memory_space<vmem>>, vector<64x64xf32>
    tpu.vector_store %arg6[%c0_281, %c0_282], %288 {strides = array<i32>} : memref<64x64xf32, #tpu.memory_space<vmem>>, vector<64x64xf32>,
    %c8_i32_283 = arith.constant 8 : i32
    %290 = arith.muli %arg1, %c8_i32_283 : i32
    %c6_i32 = arith.constant 6 : i32
    %291 = arith.addi %290, %c6_i32 : i32
    %c0_284 = arith.constant 0 : index
    %292 = arith.index_cast %291 : i32 to index
    %c0_285 = arith.constant 0 : index
    %c0_286 = arith.constant 0 : index
    %293 = vector.load %arg2[%c0_284, %292, %c0_285, %c0_286] : memref<1x14x14x56xbf16, #tpu.memory_space<vmem>>, vector<1x8x8x56xbf16>
    %294 = vector.shape_cast %293 : vector<1x8x8x56xbf16> to vector<8x8x56xbf16>
    %295 = vector.shape_cast %294 : vector<8x8x56xbf16> to vector<64x56xbf16>
    %c0_287 = arith.constant 0 : index
    %c0_288 = arith.constant 0 : index
    %296 = vector.load %arg6[%c0_287, %c0_288] : memref<64x64xf32, #tpu.memory_space<vmem>>, vector<64x64xf32>
    %c24 = arith.constant 24 : index
    %c0_289 = arith.constant 0 : index
    %c0_290 = arith.constant 0 : index
    %297 = vector.load %arg3[%c24, %c0_289, %c0_290] : memref<27x56x64xbf16, #tpu.memory_space<vmem>>, vector<1x56x64xbf16>
    %298 = vector.shape_cast %297 : vector<1x56x64xbf16> to vector<56x64xbf16>
    %cst_291 = arith.constant dense<0.000000e+00> : vector<64x64xf32>
    %299 = tpu.matmul %295, %298, %cst_291 {dimension_numbers = #tpu.dot_dimension_numbers<[1], [0], [0], [1], [0, 0, 1, 1], [], []>} : vector<64x56xbf16>, vector<56x64xbf16>, vector<64x64xf32> -> vector<64x64xf32>
    %300 = arith.addf %296, %299 : vector<64x64xf32>
    %c0_292 = arith.constant 0 : index
    %c0_293 = arith.constant 0 : index
    %301 = vector.load %arg6[%c0_292, %c0_293] : memref<64x64xf32, #tpu.memory_space<vmem>>, vector<64x64xf32>
    tpu.vector_store %arg6[%c0_292, %c0_293], %300 {strides = array<i32>} : memref<64x64xf32, #tpu.memory_space<vmem>>, vector<64x64xf32>,
    %c8_i32_294 = arith.constant 8 : i32
    %302 = arith.muli %arg1, %c8_i32_294 : i32
    %c6_i32_295 = arith.constant 6 : i32
    %303 = arith.addi %302, %c6_i32_295 : i32
    %c0_296 = arith.constant 0 : index
    %304 = arith.index_cast %303 : i32 to index
    %c3_297 = arith.constant 3 : index
    %c0_298 = arith.constant 0 : index
    %305 = vector.load %arg2[%c0_296, %304, %c3_297, %c0_298] : memref<1x14x14x56xbf16, #tpu.memory_space<vmem>>, vector<1x8x8x56xbf16>
    %306 = vector.shape_cast %305 : vector<1x8x8x56xbf16> to vector<8x8x56xbf16>
    %307 = vector.shape_cast %306 : vector<8x8x56xbf16> to vector<64x56xbf16>
    %c0_299 = arith.constant 0 : index
    %c0_300 = arith.constant 0 : index
    %308 = vector.load %arg6[%c0_299, %c0_300] : memref<64x64xf32, #tpu.memory_space<vmem>>, vector<64x64xf32>
    %c25 = arith.constant 25 : index
    %c0_301 = arith.constant 0 : index
    %c0_302 = arith.constant 0 : index
    %309 = vector.load %arg3[%c25, %c0_301, %c0_302] : memref<27x56x64xbf16, #tpu.memory_space<vmem>>, vector<1x56x64xbf16>
    %310 = vector.shape_cast %309 : vector<1x56x64xbf16> to vector<56x64xbf16>
    %cst_303 = arith.constant dense<0.000000e+00> : vector<64x64xf32>
    %311 = tpu.matmul %307, %310, %cst_303 {dimension_numbers = #tpu.dot_dimension_numbers<[1], [0], [0], [1], [0, 0, 1, 1], [], []>} : vector<64x56xbf16>, vector<56x64xbf16>, vector<64x64xf32> -> vector<64x64xf32>
    %312 = arith.addf %308, %311 : vector<64x64xf32>
    %c0_304 = arith.constant 0 : index
    %c0_305 = arith.constant 0 : index
    %313 = vector.load %arg6[%c0_304, %c0_305] : memref<64x64xf32, #tpu.memory_space<vmem>>, vector<64x64xf32>
    tpu.vector_store %arg6[%c0_304, %c0_305], %312 {strides = array<i32>} : memref<64x64xf32, #tpu.memory_space<vmem>>, vector<64x64xf32>,
    %c8_i32_306 = arith.constant 8 : i32
    %314 = arith.muli %arg1, %c8_i32_306 : i32
    %c6_i32_307 = arith.constant 6 : i32
    %315 = arith.addi %314, %c6_i32_307 : i32
    %c0_308 = arith.constant 0 : index
    %316 = arith.index_cast %315 : i32 to index
    %c6_309 = arith.constant 6 : index
    %c0_310 = arith.constant 0 : index
    %317 = vector.load %arg2[%c0_308, %316, %c6_309, %c0_310] : memref<1x14x14x56xbf16, #tpu.memory_space<vmem>>, vector<1x8x8x56xbf16>
    %318 = vector.shape_cast %317 : vector<1x8x8x56xbf16> to vector<8x8x56xbf16>
    %319 = vector.shape_cast %318 : vector<8x8x56xbf16> to vector<64x56xbf16>
    %c0_311 = arith.constant 0 : index
    %c0_312 = arith.constant 0 : index
    %320 = vector.load %arg6[%c0_311, %c0_312] : memref<64x64xf32, #tpu.memory_space<vmem>>, vector<64x64xf32>
    %c26 = arith.constant 26 : index
    %c0_313 = arith.constant 0 : index
    %c0_314 = arith.constant 0 : index
    %321 = vector.load %arg3[%c26, %c0_313, %c0_314] : memref<27x56x64xbf16, #tpu.memory_space<vmem>>, vector<1x56x64xbf16>
    %322 = vector.shape_cast %321 : vector<1x56x64xbf16> to vector<56x64xbf16>
    %cst_315 = arith.constant dense<0.000000e+00> : vector<64x64xf32>
    %323 = tpu.matmul %319, %322, %cst_315 {dimension_numbers = #tpu.dot_dimension_numbers<[1], [0], [0], [1], [0, 0, 1, 1], [], []>} : vector<64x56xbf16>, vector<56x64xbf16>, vector<64x64xf32> -> vector<64x64xf32>
    %324 = arith.addf %320, %323 : vector<64x64xf32>
    %c0_316 = arith.constant 0 : index
    %c0_317 = arith.constant 0 : index
    %325 = vector.load %arg6[%c0_316, %c0_317] : memref<64x64xf32, #tpu.memory_space<vmem>>, vector<64x64xf32>
    tpu.vector_store %arg6[%c0_316, %c0_317], %324 {strides = array<i32>} : memref<64x64xf32, #tpu.memory_space<vmem>>, vector<64x64xf32>,
    %c0_318 = arith.constant 0 : index
    %c0_319 = arith.constant 0 : index
    %326 = vector.load %arg6[%c0_318, %c0_319] : memref<64x64xf32, #tpu.memory_space<vmem>>, vector<64x64xf32>
    %c0_320 = arith.constant 0 : index
    %c0_321 = arith.constant 0 : index
    %327 = vector.load %arg4[%c0_320, %c0_321] : memref<1x64xf32, #tpu.memory_space<vmem>>, vector<1x64xf32>
    %328 = vector.broadcast %327 : vector<1x64xf32> to vector<64x64xf32>
    %329 = arith.addf %326, %328 : vector<64x64xf32>
    %c0_322 = arith.constant 0 : index
    %c0_323 = arith.constant 0 : index
    %c0_324 = arith.constant 0 : index
    %330 = vector.load %arg5[%c0_322, %c0_323, %c0_324] : memref<1x64x64xf32, #tpu.memory_space<vmem>>, vector<1x64x64xf32>
    %331 = vector.shape_cast %330 : vector<1x64x64xf32> to vector<64x64xf32>
    %332 = vector.shape_cast %329 : vector<64x64xf32> to vector<1x64x64xf32>
    tpu.vector_store %arg5[%c0_322, %c0_323, %c0_324], %332 {strides = array<i32>} : memref<1x64x64xf32, #tpu.memory_space<vmem>>, vector<1x64x64xf32>,
    return
  }
  func.func @transform_0(%arg0: i32, %arg1: i32) -> (i32, i32, i32, i32) {
    %c0_i32 = arith.constant 0 : i32
    %c0_i32_0 = arith.constant 0 : i32
    %c0_i32_1 = arith.constant 0 : i32
    %c0_i32_2 = arith.constant 0 : i32
    return %arg0, %c0_i32, %c0_i32_0, %c0_i32_1 : i32, i32, i32, i32
  }
  func.func @transform_1(%arg0: i32, %arg1: i32) -> (i32, i32, i32) {
    %c0_i32 = arith.constant 0 : i32
    %c0_i32_0 = arith.constant 0 : i32
    %c0_i32_1 = arith.constant 0 : i32
    %c0_i32_2 = arith.constant 0 : i32
    return %c0_i32, %c0_i32_0, %c0_i32_1 : i32, i32, i32
  }
  func.func @transform_2(%arg0: i32, %arg1: i32) -> (i32, i32) {
    %c0_i32 = arith.constant 0 : i32
    %c0_i32_0 = arith.constant 0 : i32
    %c0_i32_1 = arith.constant 0 : i32
    return %c0_i32, %c0_i32_0 : i32, i32
  }
  func.func @transform_3(%arg0: i32, %arg1: i32) -> (i32, i32, i32) {
    %c0_i32 = arith.constant 0 : i32
    %c0_i32_0 = arith.constant 0 : i32
    return %arg0, %arg1, %c0_i32 : i32, i32, i32
  }
}

</mosaic_0001>

<llo_original>
// kernel: tpu_custom_call.1
$region0: #{tpu_custom_call.1}
  #allocation0 [shape = 'u32[]', space=smem, size = 0x4, offset = 0x4, fixed_abs, tag = 'smem constant byte address 0x4 - core index']
  #allocation1 [shape = 'u32[144,128]{1,0:T(1,128)}', space=vmem, size = 0x12000, scoped, tag = 'internal scratch']
  #allocation2 [shape = 'f32[64,64]{1,0:T(8,128)}', space=vmem, size = 0x8000, scoped, tag = 'scratch operand']
  %s0 = inlined_call_operand.hbm [shape: bf16[2,14,14,56], index: 0, kind: input, shape index: {}]
  %s1 = inlined_call_operand.hbm [shape: bf16[27,56,64], index: 1, kind: input, shape index: {}]
  %s2 = inlined_call_operand.hbm [shape: f32[1,64], index: 2, kind: input, shape index: {}]
  %s3 = inlined_call_operand.hbm [shape: f32[2,64,64], index: 3, kind: output, shape index: {}]
  %s4 = sld [smem:[#allocation0]]
  $region57: #{tpu_custom_call.1} parent=0
    _
  %s6 = ssub.s32 1, %s4
  %s7 = scalar_select 0, %s6, %s4
  $region1: #{tpu_custom_call.1} parent=0
    #allocation3 [shape = 'u8[114688]{0}', space=vmem, size = 0x1c000, scoped, tag = 'input window, operand 0']
    #allocation4 [shape = 's32[2]{0}', space=sflag, size = 0x8, scoped, tag = 'scoped memory for tpu_custom_call.1']
    #allocation5 [shape = 's32[2]{0}', space=sflag, size = 0x8, scoped, tag = 'scoped memory for tpu_custom_call.1']
    #allocation6 [shape = 'u8[387072]{0}', space=vmem, size = 0x5e800, scoped, tag = 'input window, operand 1, single buffered']
    #allocation7 [shape = 's32[1]{0}', space=sflag, size = 0x4, scoped, tag = 'scoped memory for tpu_custom_call.1']
    #allocation8 [shape = 'u8[512]{0}', space=vmem, size = 0x400, scoped, tag = 'input window, operand 2, single buffered']
    #allocation9 [shape = 'u8[65536]{0}', space=vmem, size = 0x10000, scoped, tag = 'output window, operand 0']
    %8 = vsyncpa [#allocation4], 0
    %s9 = scalar_lea.sflag [#allocation4], 1
    %10 = vsyncpa %s9, 0
    %11 = vsyncpa [#allocation7], 0
    %12 = vsyncpa [#allocation5], 0
    %s13 = scalar_lea.sflag [#allocation5], 1
    %14 = vsyncpa %s13, 0
    loop: start=0, step=1, limit=4
    $region2: #{tpu_custom_call.1} parent=1 // loop_pre_header
      _
    $region3: #{tpu_custom_call.1} parent=1 // loop_header
      %s16 = sphi 0, %s20
      %p17 = scmp.ge.s32.totalorder %s16, 4
      %s23 = sphi 0, %s35
      %s24 = sphi 0, %s31
      %s25 = sphi 0, %s23
      %s26 = sphi 0, %s24
      %s27 = sphi 0, %s25
      %s28 = sphi 0, %s26
      %s38 = sphi 0, %s40
      %s41 = sphi 0, %s38
      %s42 = sphi 0, %s41
      %s58 = sphi 0, %s42
      %s62 = sphi 0, %s62
      %s64 = sphi 0, %s62
      %s65 = sphi 0, %s64
      %s79 = sphi 0, %s65
      %s83 = sphi 0, %s83
      %s85 = sphi 0, %s83
      %s86 = sphi 0, %s85
      %s100 = sphi 0, %s86
      %s108 = sphi 0, %s110
      %s111 = sphi 0, %s108
      %s112 = sphi 0, %s111
      %s128 = sphi 0, %s112
    $region4: #{tpu_custom_call.1} parent=1 // loop_header_branch
      %19 = sbr.rel (%p17) target = $region8
    $region5: #{tpu_custom_call.1} parent=1 // loop_body
      %s21 = ssub.s32 %s16, 1
      %s22 = ssub.s32 %s16, 2
      %s29 = sadd.s32 1, %s24
      %p30 = scmp.ge.s32.totalorder %s29, 1
      %s31 = scalar_select %p30, 0, %s29
      %s32 = sadd.s32 1, %s23
      %s33 = scalar_select %p30, %s32, %s23
      %p34 = scmp.ge.s32.totalorder %s33, 2
      %s35 = scalar_select %p34, 0, %s33
      %s36 = ssub.s32 %s23, %s35
      %p37 = scmp.eq.s32.totalorder %s36, 0
      %s39 = sadd.s32 %s38, 1
      %s40 = scalar_select %p37, %s38, %s39
      %p43 = pneg %p37
      %p44 = scmp.eq.s32.totalorder %s16, 1
      %p45 = por %p43, %p44
      %p46 = scmp.ne.s32.totalorder %s38, %s41
      %p47 = scmp.eq.s32.totalorder %s16, 0
      %p48 = por %p46, %p47
      %p49 = scmp.ne.s32.totalorder %s38, %s41
      %p50 = scmp.eq.s32.totalorder %s21, 1
      %p51 = por %p49, %p50
      %p52 = scmp.ne.s32.totalorder %s41, %s42
      %p53 = scmp.eq.s32.totalorder %s21, 0
      %p54 = por %p52, %p53
      %p55 = scmp.ne.s32.totalorder %s41, %s42
      %p56 = scmp.eq.s32.totalorder %s22, 1
      %p57 = por %p55, %p56
      %p59 = scmp.ne.s32.totalorder %s42, %s58
      %p60 = scmp.eq.s32.totalorder %s22, 0
      %p61 = por %p59, %p60
      %s63 = sadd.s32 %s62, 1
      %p66 = scmp.eq.s32.totalorder %s16, 1
      %p67 = scmp.ne.s32.totalorder %s62, %s64
      %p68 = scmp.eq.s32.totalorder %s16, 0
      %p69 = por %p67, %p68
      %p70 = scmp.ne.s32.totalorder %s62, %s64
      %p71 = scmp.eq.s32.totalorder %s21, 1
      %p72 = por %p70, %p71
      %p73 = scmp.ne.s32.totalorder %s64, %s65
      %p74 = scmp.eq.s32.totalorder %s21, 0
      %p75 = por %p73, %p74
      %p76 = scmp.ne.s32.totalorder %s64, %s65
      %p77 = scmp.eq.s32.totalorder %s22, 1
      %p78 = por %p76, %p77
      %p80 = scmp.ne.s32.totalorder %s65, %s79
      %p81 = scmp.eq.s32.totalorder %s22, 0
      %p82 = por %p80, %p81
      %s84 = sadd.s32 %s83, 1
      %p87 = scmp.eq.s32.totalorder %s16, 1
      %p88 = scmp.ne.s32.totalorder %s83, %s85
      %p89 = scmp.eq.s32.totalorder %s16, 0
      %p90 = por %p88, %p89
      %p91 = scmp.ne.s32.totalorder %s83, %s85
      %p92 = scmp.eq.s32.totalorder %s21, 1
      %p93 = por %p91, %p92
      %p94 = scmp.ne.s32.totalorder %s85, %s86
      %p95 = scmp.eq.s32.totalorder %s21, 0
      %p96 = por %p94, %p95
      %p97 = scmp.ne.s32.totalorder %s85, %s86
      %p98 = scmp.eq.s32.totalorder %s22, 1
      %p99 = por %p97, %p98
      %p101 = scmp.ne.s32.totalorder %s86, %s100
      %p102 = scmp.eq.s32.totalorder %s22, 0
      %p103 = por %p101, %p102
      %s104 = ssub.s32 %s23, %s35
      %s105 = ssub.s32 %s24, %s31
      %s106 = sor.u32 %s104, %s105
      %p107 = scmp.eq.s32.totalorder %s106, 0
      %s109 = sadd.s32 %s108, 1
      %s110 = scalar_select %p107, %s108, %s109
      %p113 = pneg %p107
      %p114 = scmp.eq.s32.totalorder %s16, 1
      %p115 = por %p113, %p114
      %p116 = scmp.ne.s32.totalorder %s108, %s111
      %p117 = scmp.eq.s32.totalorder %s16, 0
      %p118 = por %p116, %p117
      %p119 = scmp.ne.s32.totalorder %s108, %s111
      %p120 = scmp.eq.s32.totalorder %s21, 1
      %p121 = por %p119, %p120
      %p122 = scmp.ne.s32.totalorder %s111, %s112
      %p123 = scmp.eq.s32.totalorder %s21, 0
      %p124 = por %p122, %p123
      %p125 = scmp.ne.s32.totalorder %s111, %s112
      %p126 = scmp.eq.s32.totalorder %s22, 1
      %p127 = por %p125, %p126
      %p129 = scmp.ne.s32.totalorder %s112, %s128
      %p130 = scmp.eq.s32.totalorder %s22, 0
      %p131 = por %p129, %p130
      %p132 = scmp.le.s32.totalorder 1, %s16
      %p133 = scmp.lt.s32.totalorder %s16, 3
      %p134 = pnand %p132, %p133
      %p135 = pneg %p134
      // Predicated region
      $region9: #{tpu_custom_call.1} parent=5 // pred_check
        _
      $region10: #{tpu_custom_call.1} parent=5 // pred_check_branch
        %137 = sbr.rel (%p134) target = $region12
      $region11: #{tpu_custom_call.1} parent=5 // pred_region
        %s138 = ssub.s32 %s16, 1
        // Predicated region
        $region13: #{tpu_custom_call.1} parent=11 // pred_check
          %p139 = pneg %p75
        $region14: #{tpu_custom_call.1} parent=11 // pred_check_branch
          %141 = sbr.rel (%p139) target = $region16
        $region15: #{tpu_custom_call.1} parent=11 // pred_region
          %s143 = ssub.s32 12096, 12096
          %144 = vsyncadd [#allocation7], %s143
          %s145 = sshll.u32 [#allocation6], 4
          %s146 = int_to_ptr.vmem [resolvable:$true] %s145
          %151 = dma.hbm_to_vmem [thread:$0]  %s1, 12096, %s146, [#allocation7], 64, 64, 4
        $region16: #{tpu_custom_call.1} parent=11 // pred_fallthru
          _
        // Predicated region
        $region17: #{tpu_custom_call.1} parent=11 // pred_check
          %p152 = pneg %p96
        $region18: #{tpu_custom_call.1} parent=11 // pred_check_branch
          %154 = sbr.rel (%p152) target = $region20
        $region19: #{tpu_custom_call.1} parent=11 // pred_region
          %s156 = ssub.s32 16, 16
          %157 = vsyncadd [#allocation7], %s156
          %s159 = sshll.u32 [#allocation8], 4
          %s160 = int_to_ptr.vmem [resolvable:$true] %s159
          %162 = dma.hbm_to_vmem [thread:$0]  %s2, 16, %s160, [#allocation7]
        $region20: #{tpu_custom_call.1} parent=11 // pred_fallthru
          _
      $region12: #{tpu_custom_call.1} parent=5 // pred_fallthru
        _
      %p163 = scmp.lt.s32.totalorder %s16, 2
      // Predicated region
      $region21: #{tpu_custom_call.1} parent=5 // pred_check
        %p164 = pneg %p163
      $region22: #{tpu_custom_call.1} parent=5 // pred_check_branch
        %166 = sbr.rel (%p164) target = $region24
      $region23: #{tpu_custom_call.1} parent=5 // pred_region
        // Predicated region
        $region25: #{tpu_custom_call.1} parent=23 // pred_check
          %p167 = pneg %p48
        $region26: #{tpu_custom_call.1} parent=23 // pred_check_branch
          %169 = sbr.rel (%p167) target = $region28
        $region27: #{tpu_custom_call.1} parent=23 // pred_region
          %s170 = sand.u32 %s38, 1
          %s171 = scalar_lea.sflag [#allocation4], %s170
          %s172 = sand.u32 %s38, 1
          %s173 = smul.addr %s172, 112
          %s174 = scalar_lea.vmem [#allocation3], %s173
          %s176 = ssub.s32 1792, 1792
          %177 = vsyncadd %s171, %s176
          %s178 = smul.addr %s23, 28
          %s179 = smul.addr %s178, 64
          %s180 = scalar_lea.hbm %s0, %s179
          %s181 = sshll.u32 %s174, 4
          %s182 = int_to_ptr.vmem [resolvable:$true] %s181
          %187 = dma.hbm_to_vmem [thread:$0]  %s180, 1792, %s182, %s171, 64, 64, 4
        $region28: #{tpu_custom_call.1} parent=23 // pred_fallthru
          _
      $region24: #{tpu_custom_call.1} parent=5 // pred_fallthru
        _
      %p188 = scmp.le.s32.totalorder 1, %s16
      %p189 = scmp.lt.s32.totalorder %s16, 3
      %p190 = pnand %p188, %p189
      %p191 = pneg %p190
      // Predicated region
      $region29: #{tpu_custom_call.1} parent=5 // pred_check
        _
      $region30: #{tpu_custom_call.1} parent=5 // pred_check_branch
        %193 = sbr.rel (%p190) target = $region32
      $region31: #{tpu_custom_call.1} parent=5 // pred_region
        %s194 = ssub.s32 %s16, 1
        %s195 = sand.u32 %s41, 1
        %s196 = scalar_lea.sflag [#allocation4], %s195
        %s197 = sand.u32 %s41, 1
        %s198 = smul.addr %s197, 112
        %s199 = scalar_lea.vmem [#allocation3], %s198
        // Predicated region
        $region33: #{tpu_custom_call.1} parent=31 // pred_check
          %p200 = pneg %p54
        $region34: #{tpu_custom_call.1} parent=31 // pred_check_branch
          %202 = sbr.rel (%p200) target = $region36
        $region35: #{tpu_custom_call.1} parent=31 // pred_region
          %203 = dma.done %s196, 1792
        $region36: #{tpu_custom_call.1} parent=31 // pred_fallthru
          _
        // Predicated region
        $region37: #{tpu_custom_call.1} parent=31 // pred_check
          %p204 = pneg %p75
        $region38: #{tpu_custom_call.1} parent=31 // pred_check_branch
          %206 = sbr.rel (%p204) target = $region40
        $region39: #{tpu_custom_call.1} parent=31 // pred_region
          %207 = dma.done [#allocation7], 12096
        $region40: #{tpu_custom_call.1} parent=31 // pred_fallthru
          _
        // Predicated region
        $region41: #{tpu_custom_call.1} parent=31 // pred_check
          %p208 = pneg %p96
        $region42: #{tpu_custom_call.1} parent=31 // pred_check_branch
          %210 = sbr.rel (%p208) target = $region44
        $region43: #{tpu_custom_call.1} parent=31 // pred_region
          %211 = dma.done [#allocation7], 16
        $region44: #{tpu_custom_call.1} parent=31 // pred_fallthru
          _
        %s212 = sand.u32 %s41, 1
        %s213 = scalar_lea.sflag [#allocation4], %s212
        %s214 = sand.u32 %s41, 1
        %s215 = smul.addr %s214, 112
        %s216 = scalar_lea.vmem [#allocation3], %s215
        %p217 = pneg %p54
        %p218 = pneg %p51
        %p219 = pneg %p75
        %p220 = pneg %p72
        %p221 = pneg %p96
        %p222 = pneg %p93
        %p223 = pneg %p124
        %p224 = pneg %p121
        %s225 = sand.u32 %s111, 1
        %s226 = scalar_lea.sflag [#allocation5], %s225
        %s227 = sand.u32 %s111, 1
        %s228 = smul.addr %s227, 64
        %s229 = scalar_lea.vmem [#allocation9], %s228
        %s230 = smul.u32 8, %s26
        %vm232 = vcmask 523264
        %233 = vst.msk [vmem:[#allocation2] sm:$0xff] %vm232, 0.0
        %234 = vst.msk [vmem:[#allocation2 + $0x8] sm:$0xff] %vm232, 0.0
        %235 = vst.msk [vmem:[#allocation2 + $0x10] sm:$0xff] %vm232, 0.0
        %236 = vst.msk [vmem:[#allocation2 + $0x18] sm:$0xff] %vm232, 0.0
        %237 = vst.msk [vmem:[#allocation2 + $0x20] sm:$0xff] %vm232, 0.0
        %238 = vst.msk [vmem:[#allocation2 + $0x28] sm:$0xff] %vm232, 0.0
        %239 = vst.msk [vmem:[#allocation2 + $0x30] sm:$0xff] %vm232, 0.0
        %240 = vst.msk [vmem:[#allocation2 + $0x38] sm:$0xff] %vm232, 0.0
        %s241 = smul.u32 %s26, 8
        %s242 = sadd.s32 %s241, 2
        %s243 = smul.u32 %s242, 2
        %s244 = smul.addr %s243, 4
        %s245 = scalar_lea.vmem %s199, %s244 [#allocation3]
        %v246 = vld [vmem:[%s245] sm:$0xe]
        %v247 = vld [vmem:[%s245 + $0x4] sm:$0x1]
        %v248 = vld [vmem:[%s245 + $0x8] sm:$0xe]
        %v249 = vld [vmem:[%s245 + $0xc] sm:$0x1]
        %v250 = vld [vmem:[%s245 + $0x10] sm:$0xe]
        %v251 = vld [vmem:[%s245 + $0x14] sm:$0x1]
        %v252 = vld [vmem:[%s245 + $0x18] sm:$0xe]
        %v253 = vld [vmem:[%s245 + $0x1c] sm:$0x1]
        %v254 = vld [vmem:[%s245 + $0x20] sm:$0xe]
        %v255 = vld [vmem:[%s245 + $0x24] sm:$0x1]
        %v256 = vld [vmem:[%s245 + $0x28] sm:$0xe]
        %v257 = vld [vmem:[%s245 + $0x2c] sm:$0x1]
        %v258 = vld [vmem:[%s245 + $0x30] sm:$0xe]
        %v259 = vld [vmem:[%s245 + $0x34] sm:$0x1]
        %v260 = vld [vmem:[%s245 + $0x38] sm:$0xe]
        %v261 = vld [vmem:[%s245 + $0x3c] sm:$0x1]
        %vm278 = vcmask 1042432
        %vm279 = vcmask 1046532
        %vm280 = vmor %vm278, %vm279
        %v281 = vrot.slane %v246, 5
        %v282 = vrot.slane %v281, 4
        %v283 = vrot.slane %v247, 5
        %v284 = vsel %vm280, %v282, %v283
        %v285 = vrot.slane %v248, 5
        %v286 = vrot.slane %v285, 4
        %v287 = vrot.slane %v249, 5
        %v288 = vsel %vm280, %v286, %v287
        %v289 = vrot.slane %v250, 5
        %v290 = vrot.slane %v289, 4
        %v291 = vrot.slane %v251, 5
        %v292 = vsel %vm280, %v290, %v291
        %v293 = vrot.slane %v252, 5
        %v294 = vrot.slane %v293, 4
        %v295 = vrot.slane %v253, 5
        %v296 = vsel %vm280, %v294, %v295
        %v297 = vrot.slane %v254, 5
        %v298 = vrot.slane %v297, 4
        %v299 = vrot.slane %v255, 5
        %v300 = vsel %vm280, %v298, %v299
        %v301 = vrot.slane %v256, 5
        %v302 = vrot.slane %v301, 4
        %v303 = vrot.slane %v257, 5
        %v304 = vsel %vm280, %v302, %v303
        %v305 = vrot.slane %v258, 5
        %v306 = vrot.slane %v305, 4
        %v307 = vrot.slane %v259, 5
        %v308 = vsel %vm280, %v306, %v307
        %v309 = vrot.slane %v260, 5
        %v310 = vrot.slane %v309, 4
        %v311 = vrot.slane %v261, 5
        %v312 = vsel %vm280, %v310, %v311
        %v313 = vld [vmem:[#allocation2] sm:$0xff]
        %v314 = vld [vmem:[#allocation2 + $0x8] sm:$0xff]
        %v315 = vld [vmem:[#allocation2 + $0x10] sm:$0xff]
        %v316 = vld [vmem:[#allocation2 + $0x18] sm:$0xff]
        %v317 = vld [vmem:[#allocation2 + $0x20] sm:$0xff]
        %v318 = vld [vmem:[#allocation2 + $0x28] sm:$0xff]
        %v319 = vld [vmem:[#allocation2 + $0x30] sm:$0xff]
        %v320 = vld [vmem:[#allocation2 + $0x38] sm:$0xff]
        %v321 = vld [vmem:[#allocation6] sm:$0xf]
        %v322 = vld [vmem:[#allocation6 + $0x4] sm:$0xf]
        %v323 = vld [vmem:[#allocation6 + $0x8] sm:$0xf]
        %v324 = vld [vmem:[#allocation6 + $0xc] sm:$0xf]
        %v325 = vld [vmem:[#allocation6 + $0x10] sm:$0xf]
        %v326 = vld [vmem:[#allocation6 + $0x14] sm:$0xf]
        %v327 = vld [vmem:[#allocation6 + $0x18] sm:$0xf]
        %v328 = vunpack.c.l.b16 %v284
        %v329 = vunpack.c.l.b16 %v288
        %v330 = vunpack.c.l.b16 %v292
        %v331 = vunpack.c.l.b16 %v296
        %v332 = vunpack.c.l.b16 %v300
        %v333 = vunpack.c.l.b16 %v304
        %v334 = vunpack.c.l.b16 %v308
        %v335 = vunpack.c.l.b16 %v312
        %v336 = vpack.c.b16 %v329, %v328
        %v337 = vpack.c.b16 %v331, %v330
        %v338 = vpack.c.b16 %v333, %v332
        %v339 = vpack.c.b16 %v335, %v334
        %v347 = vunpack.c.l.b16 %v321
        %v348 = vunpack.c.l.b16 %v322
        %v349 = vunpack.c.l.b16 %v323
        %v350 = vunpack.c.l.b16 %v324
        %v351 = vunpack.c.l.b16 %v325
        %v352 = vunpack.c.l.b16 %v326
        %v353 = vunpack.c.l.b16 %v327
        %v354 = vpack.c.b16 %v348, %v347
        %v355 = vpack.c.b16 %v350, %v349
        %v356 = vpack.c.b16 %v352, %v351
        %v357 = vpack.c.b16 %v353, %v353
        %vm361 = vcmask 457728
        %v363 = vsel %vm361, %v336, 0
        %v366 = vsel %vm361, %v337, 0
        %v369 = vsel %vm361, %v338, 0
        %v372 = vsel %vm361, %v339, 0
        %vm374 = vcmask 1043456
        %v376 = vsel %vm374, %v357, 0
        %378 = vmatprep.subr.bf16.mxu0 0
        %379 = vmatpush1.bf16.msra.mxu0 %v354
        %380 = vmatprep.subr.bf16.mxu0 0
        %381 = vmatpush1.bf16.msra.mxu0 %v355
        %382 = vmatprep.subr.bf16.mxu0 0
        %383 = vmatpush1.bf16.msra.mxu0 %v356
        %384 = vmatprep.subr.bf16.mxu0 0
        %385 = vmatpush1.bf16.msra.mxu0 %v376
        %386 = vmatprep.subr.bf16.mxu0 0
        %387 = vmatpush1.bf16.msra.mxu0 0
        %388 = vmatprep.subr.bf16.mxu0 0
        %389 = vmatpush1.bf16.msra.mxu0 0
        %390 = vmatprep.subr.bf16.mxu0 0
        %391 = vmatpush1.bf16.msra.mxu0 0
        %392 = vmatprep.subr.bf16.mxu0 0
        %393 = vmatpush1.bf16.msra.mxu0 0
        %394 = vmatprep.subr.bf16.mxu0 0
        %395 = vmatpush1.bf16.msra.mxu0 0
        %396 = vmatprep.subr.bf16.mxu0 0
        %397 = vmatpush1.bf16.msra.mxu0 0
        %398 = vmatprep.subr.bf16.mxu0 0
        %399 = vmatpush1.bf16.msra.mxu0 0
        %400 = vmatprep.subr.bf16.mxu0 0
        %401 = vmatpush1.bf16.msra.mxu0 0
        %402 = vmatprep.subr.bf16.mxu0 0
        %403 = vmatpush1.bf16.msra.mxu0 0
        %404 = vmatprep.subr.bf16.mxu0 0
        %405 = vmatpush1.bf16.msra.mxu0 0
        %406 = vmatprep.subr.bf16.mxu0 0
        %407 = vmatpush1.bf16.msra.mxu0 0
        %408 = vmatprep.subr.bf16.mxu0 0
        %409 = vmatpush1.bf16.msra.mxu0 0
        %410 = vmatprep.mubr.bf16.mxu0 0
        %411 = vmatmul.mubr.bf16.gmra.mrb[0].mxu0 %v363
        %v412 = vpop.f32.mrb[0].mxu0
        %v413 = vadd.f32 0.0, %v412
        %v414 = vpop.f32.mrb[0].mxu0
        %v415 = vpop.f32.mrb[0].mxu0
        %v416 = vadd.f32 0.0, %v415
        %v417 = vpop.f32.mrb[0].mxu0
        %418 = vmatprep.mubr.bf16.mxu0 0
        %419 = vmatmul.mubr.bf16.gmra.mrb[0].mxu0 %v366
        %v420 = vpop.f32.mrb[0].mxu0
        %v421 = vadd.f32 0.0, %v420
        %v422 = vpop.f32.mrb[0].mxu0
        %v423 = vpop.f32.mrb[0].mxu0
        %v424 = vadd.f32 0.0, %v423
        %v425 = vpop.f32.mrb[0].mxu0
        %426 = vmatprep.mubr.bf16.mxu0 0
        %427 = vmatmul.mubr.bf16.gmra.mrb[0].mxu0 %v369
        %v428 = vpop.f32.mrb[0].mxu0
        %v429 = vadd.f32 0.0, %v428
        %v430 = vpop.f32.mrb[0].mxu0
        %v431 = vpop.f32.mrb[0].mxu0
        %v432 = vadd.f32 0.0, %v431
        %v433 = vpop.f32.mrb[0].mxu0
        %434 = vmatprep.mubr.bf16.mxu0 0
        %435 = vmatmul.mubr.bf16.gmra.mrb[0].mxu0 %v372
        %v436 = vpop.f32.mrb[0].mxu0
        %v437 = vadd.f32 0.0, %v436
        %v438 = vpop.f32.mrb[0].mxu0
        %v439 = vpop.f32.mrb[0].mxu0
        %v440 = vadd.f32 0.0, %v439
        %v441 = vpop.f32.mrb[0].mxu0
        %442 = vdwg.mxu0
        %v443 = vadd.f32 %v313, %v413
        %v444 = vadd.f32 %v314, %v416
        %v445 = vadd.f32 %v315, %v421
        %v446 = vadd.f32 %v316, %v424
        %v447 = vadd.f32 %v317, %v429
        %v448 = vadd.f32 %v318, %v432
        %v449 = vadd.f32 %v319, %v437
        %v450 = vadd.f32 %v320, %v440
        %451 = vst.msk [vmem:[#allocation2] sm:$0xff] %vm232, %v443
        %452 = vst.msk [vmem:[#allocation2 + $0x8] sm:$0xff] %vm232, %v444
        %453 = vst.msk [vmem:[#allocation2 + $0x10] sm:$0xff] %vm232, %v445
        %454 = vst.msk [vmem:[#allocation2 + $0x18] sm:$0xff] %vm232, %v446
        %455 = vst.msk [vmem:[#allocation2 + $0x20] sm:$0xff] %vm232, %v447
        %456 = vst.msk [vmem:[#allocation2 + $0x28] sm:$0xff] %vm232, %v448
        %457 = vst.msk [vmem:[#allocation2 + $0x30] sm:$0xff] %vm232, %v449
        %458 = vst.msk [vmem:[#allocation2 + $0x38] sm:$0xff] %vm232, %v450
        %v459 = vld [vmem:[%s245] sm:$0xe]
        %v460 = vld [vmem:[%s245 + $0x4] sm:$0x3]
        %v461 = vld [vmem:[%s245 + $0x8] sm:$0xe]
        %v462 = vld [vmem:[%s245 + $0xc] sm:$0x3]
        %v463 = vld [vmem:[%s245 + $0x10] sm:$0xe]
        %v464 = vld [vmem:[%s245 + $0x14] sm:$0x3]
        %v465 = vld [vmem:[%s245 + $0x18] sm:$0xe]
        %v466 = vld [vmem:[%s245 + $0x1c] sm:$0x3]
        %v467 = vld [vmem:[%s245 + $0x20] sm:$0xe]
        %v468 = vld [vmem:[%s245 + $0x24] sm:$0x3]
        %v469 = vld [vmem:[%s245 + $0x28] sm:$0xe]
        %v470 = vld [vmem:[%s245 + $0x2c] sm:$0x3]
        %v471 = vld [vmem:[%s245 + $0x30] sm:$0xe]
        %v472 = vld [vmem:[%s245 + $0x34] sm:$0x3]
        %v473 = vld [vmem:[%s245 + $0x38] sm:$0xe]
        %v474 = vld [vmem:[%s245 + $0x3c] sm:$0x3]
        %vm475 = vsmask.f32 2304
        %vm476 = vsmask.f32 6416
        %vm477 = vmor %vm475, %vm476
        %v479 = vshrl.u32 %v459, 16
        %v481 = vrot.slane %v479, 5
        %v482 = vshll.u32 %v459, 16
        %v484 = vrot.slane %v482, 6
        %v485 = vor.u32 %v481, %v484
        %v486 = vrot.slane %v485, 4
        %v488 = vshrl.u32 %v460, 16
        %v490 = vrot.slane %v488, 5
        %v491 = vshll.u32 %v460, 16
        %v493 = vrot.slane %v491, 6
        %v494 = vor.u32 %v490, %v493
        %v495 = vsel %vm477, %v486, %v494
        %v497 = vshrl.u32 %v461, 16
        %v499 = vrot.slane %v497, 5
        %v500 = vshll.u32 %v461, 16
        %v502 = vrot.slane %v500, 6
        %v503 = vor.u32 %v499, %v502
        %v504 = vrot.slane %v503, 4
        %v506 = vshrl.u32 %v462, 16
        %v508 = vrot.slane %v506, 5
        %v509 = vshll.u32 %v462, 16
        %v511 = vrot.slane %v509, 6
        %v512 = vor.u32 %v508, %v511
        %v513 = vsel %vm477, %v504, %v512
        %v515 = vshrl.u32 %v463, 16
        %v517 = vrot.slane %v515, 5
        %v518 = vshll.u32 %v463, 16
        %v520 = vrot.slane %v518, 6
        %v521 = vor.u32 %v517, %v520
        %v522 = vrot.slane %v521, 4
        %v524 = vshrl.u32 %v464, 16
        %v526 = vrot.slane %v524, 5
        %v527 = vshll.u32 %v464, 16
        %v529 = vrot.slane %v527, 6
        %v530 = vor.u32 %v526, %v529
        %v531 = vsel %vm477, %v522, %v530
        %v533 = vshrl.u32 %v465, 16
        %v535 = vrot.slane %v533, 5
        %v536 = vshll.u32 %v465, 16
        %v538 = vrot.slane %v536, 6
        %v539 = vor.u32 %v535, %v538
        %v540 = vrot.slane %v539, 4
        %v542 = vshrl.u32 %v466, 16
        %v544 = vrot.slane %v542, 5
        %v545 = vshll.u32 %v466, 16
        %v547 = vrot.slane %v545, 6
        %v548 = vor.u32 %v544, %v547
        %v549 = vsel %vm477, %v540, %v548
        %v551 = vshrl.u32 %v467, 16
        %v553 = vrot.slane %v551, 5
        %v554 = vshll.u32 %v467, 16
        %v556 = vrot.slane %v554, 6
        %v557 = vor.u32 %v553, %v556
        %v558 = vrot.slane %v557, 4
        %v560 = vshrl.u32 %v468, 16
        %v562 = vrot.slane %v560, 5
        %v563 = vshll.u32 %v468, 16
        %v565 = vrot.slane %v563, 6
        %v566 = vor.u32 %v562, %v565
        %v567 = vsel %vm477, %v558, %v566
        %v569 = vshrl.u32 %v469, 16
        %v571 = vrot.slane %v569, 5
        %v572 = vshll.u32 %v469, 16
        %v574 = vrot.slane %v572, 6
        %v575 = vor.u32 %v571, %v574
        %v576 = vrot.slane %v575, 4
        %v578 = vshrl.u32 %v470, 16
        %v580 = vrot.slane %v578, 5
        %v581 = vshll.u32 %v470, 16
        %v583 = vrot.slane %v581, 6
        %v584 = vor.u32 %v580, %v583
        %v585 = vsel %vm477, %v576, %v584
        %v587 = vshrl.u32 %v471, 16
        %v589 = vrot.slane %v587, 5
        %v590 = vshll.u32 %v471, 16
        %v592 = vrot.slane %v590, 6
        %v593 = vor.u32 %v589, %v592
        %v594 = vrot.slane %v593, 4
        %v596 = vshrl.u32 %v472, 16
        %v598 = vrot.slane %v596, 5
        %v599 = vshll.u32 %v472, 16
        %v601 = vrot.slane %v599, 6
        %v602 = vor.u32 %v598, %v601
        %v603 = vsel %vm477, %v594, %v602
        %v605 = vshrl.u32 %v473, 16
        %v607 = vrot.slane %v605, 5
        %v608 = vshll.u32 %v473, 16
        %v610 = vrot.slane %v608, 6
        %v611 = vor.u32 %v607, %v610
        %v612 = vrot.slane %v611, 4
        %v614 = vshrl.u32 %v474, 16
        %v616 = vrot.slane %v614, 5
        %v617 = vshll.u32 %v474, 16
        %v619 = vrot.slane %v617, 6
        %v620 = vor.u32 %v616, %v619
        %v621 = vsel %vm477, %v612, %v620
        %v622 = vld [vmem:[#allocation2] sm:$0xff]
        %v623 = vld [vmem:[#allocation2 + $0x8] sm:$0xff]
        %v624 = vld [vmem:[#allocation2 + $0x10] sm:$0xff]
        %v625 = vld [vmem:[#allocation2 + $0x18] sm:$0xff]
        %v626 = vld [vmem:[#allocation2 + $0x20] sm:$0xff]
        %v627 = vld [vmem:[#allocation2 + $0x28] sm:$0xff]
        %v628 = vld [vmem:[#allocation2 + $0x30] sm:$0xff]
        %v629 = vld [vmem:[#allocation2 + $0x38] sm:$0xff]
        %s630 = scalar_lea.vmem [#allocation6], 28
        %v631 = vld [vmem:[%s630] sm:$0xf]
        %v632 = vld [vmem:[%s630 + $0x4] sm:$0xf]
        %v633 = vld [vmem:[%s630 + $0x8] sm:$0xf]
        %v634 = vld [vmem:[%s630 + $0xc] sm:$0xf]
        %v635 = vld [vmem:[%s630 + $0x10] sm:$0xf]
        %v636 = vld [vmem:[%s630 + $0x14] sm:$0xf]
        %v637 = vld [vmem:[%s630 + $0x18] sm:$0xf]
        %v638 = vunpack.c.l.b16 %v495
        %v639 = vunpack.c.l.b16 %v513
        %v640 = vunpack.c.l.b16 %v531
        %v641 = vunpack.c.l.b16 %v549
        %v642 = vunpack.c.l.b16 %v567
        %v643 = vunpack.c.l.b16 %v585
        %v644 = vunpack.c.l.b16 %v603
        %v645 = vunpack.c.l.b16 %v621
        %v646 = vpack.c.b16 %v639, %v638
        %v647 = vpack.c.b16 %v641, %v640
        %v648 = vpack.c.b16 %v643, %v642
        %v649 = vpack.c.b16 %v645, %v644
        %v657 = vunpack.c.l.b16 %v631
        %v658 = vunpack.c.l.b16 %v632
        %v659 = vunpack.c.l.b16 %v633
        %v660 = vunpack.c.l.b16 %v634
        %v661 = vunpack.c.l.b16 %v635
        %v662 = vunpack.c.l.b16 %v636
        %v663 = vunpack.c.l.b16 %v637
        %v664 = vpack.c.b16 %v658, %v657
        %v665 = vpack.c.b16 %v660, %v659
        %v666 = vpack.c.b16 %v662, %v661
        %v667 = vpack.c.b16 %v663, %v663
        %v672 = vsel %vm361, %v646, 0
        %v675 = vsel %vm361, %v647, 0
        %v678 = vsel %vm361, %v648, 0
        %v681 = vsel %vm361, %v649, 0
        %v684 = vsel %vm374, %v667, 0
        %686 = vmatprep.subr.bf16.mxu0 0
        %687 = vmatpush1.bf16.msra.mxu0 %v664
        %688 = vmatprep.subr.bf16.mxu0 0
        %689 = vmatpush1.bf16.msra.mxu0 %v665
        %690 = vmatprep.subr.bf16.mxu0 0
        %691 = vmatpush1.bf16.msra.mxu0 %v666
        %692 = vmatprep.subr.bf16.mxu0 0
        %693 = vmatpush1.bf16.msra.mxu0 %v684
        %694 = vmatprep.subr.bf16.mxu0 0
        %695 = vmatpush1.bf16.msra.mxu0 0
        %696 = vmatprep.subr.bf16.mxu0 0
        %697 = vmatpush1.bf16.msra.mxu0 0
        %698 = vmatprep.subr.bf16.mxu0 0
        %699 = vmatpush1.bf16.msra.mxu0 0
        %700 = vmatprep.subr.bf16.mxu0 0
        %701 = vmatpush1.bf16.msra.mxu0 0
        %702 = vmatprep.subr.bf16.mxu0 0
        %703 = vmatpush1.bf16.msra.mxu0 0
        %704 = vmatprep.subr.bf16.mxu0 0
        %705 = vmatpush1.bf16.msra.mxu0 0
        %706 = vmatprep.subr.bf16.mxu0 0
        %707 = vmatpush1.bf16.msra.mxu0 0
        %708 = vmatprep.subr.bf16.mxu0 0
        %709 = vmatpush1.bf16.msra.mxu0 0
        %710 = vmatprep.subr.bf16.mxu0 0
        %711 = vmatpush1.bf16.msra.mxu0 0
        %712 = vmatprep.subr.bf16.mxu0 0
        %713 = vmatpush1.bf16.msra.mxu0 0
        %714 = vmatprep.subr.bf16.mxu0 0
        %715 = vmatpush1.bf16.msra.mxu0 0
        %716 = vmatprep.subr.bf16.mxu0 0
        %717 = vmatpush1.bf16.msra.mxu0 0
        %718 = vmatprep.mubr.bf16.mxu0 0
        %719 = vmatmul.mubr.bf16.gmra.mrb[0].mxu0 %v672
        %v720 = vpop.f32.mrb[0].mxu0
        %v721 = vadd.f32 0.0, %v720
        %v722 = vpop.f32.mrb[0].mxu0
        %v723 = vpop.f32.mrb[0].mxu0
        %v724 = vadd.f32 0.0, %v723
        %v725 = vpop.f32.mrb[0].mxu0
        %726 = vmatprep.mubr.bf16.mxu0 0
        %727 = vmatmul.mubr.bf16.gmra.mrb[0].mxu0 %v675
        %v728 = vpop.f32.mrb[0].mxu0
        %v729 = vadd.f32 0.0, %v728
        %v730 = vpop.f32.mrb[0].mxu0
        %v731 = vpop.f32.mrb[0].mxu0
        %v732 = vadd.f32 0.0, %v731
        %v733 = vpop.f32.mrb[0].mxu0
        %734 = vmatprep.mubr.bf16.mxu0 0
        %735 = vmatmul.mubr.bf16.gmra.mrb[0].mxu0 %v678
        %v736 = vpop.f32.mrb[0].mxu0
        %v737 = vadd.f32 0.0, %v736
        %v738 = vpop.f32.mrb[0].mxu0
        %v739 = vpop.f32.mrb[0].mxu0
        %v740 = vadd.f32 0.0, %v739
        %v741 = vpop.f32.mrb[0].mxu0
        %742 = vmatprep.mubr.bf16.mxu0 0
        %743 = vmatmul.mubr.bf16.gmra.mrb[0].mxu0 %v681
        %v744 = vpop.f32.mrb[0].mxu0
        %v745 = vadd.f32 0.0, %v744
        %v746 = vpop.f32.mrb[0].mxu0
        %v747 = vpop.f32.mrb[0].mxu0
        %v748 = vadd.f32 0.0, %v747
        %v749 = vpop.f32.mrb[0].mxu0
        %750 = vdwg.mxu0
        %v751 = vadd.f32 %v622, %v721
        %v752 = vadd.f32 %v623, %v724
        %v753 = vadd.f32 %v624, %v729
        %v754 = vadd.f32 %v625, %v732
        %v755 = vadd.f32 %v626, %v737
        %v756 = vadd.f32 %v627, %v740
        %v757 = vadd.f32 %v628, %v745
        %v758 = vadd.f32 %v629, %v748
        %759 = vst.msk [vmem:[#allocation2] sm:$0xff] %vm232, %v751
        %760 = vst.msk [vmem:[#allocation2 + $0x8] sm:$0xff] %vm232, %v752
        %761 = vst.msk [vmem:[#allocation2 + $0x10] sm:$0xff] %vm232, %v753
        %762 = vst.msk [vmem:[#allocation2 + $0x18] sm:$0xff] %vm232, %v754
        %763 = vst.msk [vmem:[#allocation2 + $0x20] sm:$0xff] %vm232, %v755
        %764 = vst.msk [vmem:[#allocation2 + $0x28] sm:$0xff] %vm232, %v756
        %765 = vst.msk [vmem:[#allocation2 + $0x30] sm:$0xff] %vm232, %v757
        %766 = vst.msk [vmem:[#allocation2 + $0x38] sm:$0xff] %vm232, %v758
        %v767 = vld [vmem:[%s245] sm:$0xc]
        %v768 = vld [vmem:[%s245 + $0x4] sm:$0x3]
        %v769 = vld [vmem:[%s245 + $0x8] sm:$0xc]
        %v770 = vld [vmem:[%s245 + $0xc] sm:$0x3]
        %v771 = vld [vmem:[%s245 + $0x10] sm:$0xc]
        %v772 = vld [vmem:[%s245 + $0x14] sm:$0x3]
        %v773 = vld [vmem:[%s245 + $0x18] sm:$0xc]
        %v774 = vld [vmem:[%s245 + $0x1c] sm:$0x3]
        %v775 = vld [vmem:[%s245 + $0x20] sm:$0xc]
        %v776 = vld [vmem:[%s245 + $0x24] sm:$0x3]
        %v777 = vld [vmem:[%s245 + $0x28] sm:$0xc]
        %v778 = vld [vmem:[%s245 + $0x2c] sm:$0x3]
        %v779 = vld [vmem:[%s245 + $0x30] sm:$0xc]
        %v780 = vld [vmem:[%s245 + $0x34] sm:$0x3]
        %v781 = vld [vmem:[%s245 + $0x38] sm:$0xc]
        %v782 = vld [vmem:[%s245 + $0x3c] sm:$0x3]
        %vm799 = vcmask 1041408
        %vm800 = vcmask 1045508
        %vm801 = vmor %vm799, %vm800
        %v802 = vrot.slane %v767, 6
        %v803 = vrot.slane %v802, 4
        %v804 = vrot.slane %v768, 6
        %v805 = vsel %vm801, %v803, %v804
        %v806 = vrot.slane %v769, 6
        %v807 = vrot.slane %v806, 4
        %v808 = vrot.slane %v770, 6
        %v809 = vsel %vm801, %v807, %v808
        %v810 = vrot.slane %v771, 6
        %v811 = vrot.slane %v810, 4
        %v812 = vrot.slane %v772, 6
        %v813 = vsel %vm801, %v811, %v812
        %v814 = vrot.slane %v773, 6
        %v815 = vrot.slane %v814, 4
        %v816 = vrot.slane %v774, 6
        %v817 = vsel %vm801, %v815, %v816
        %v818 = vrot.slane %v775, 6
        %v819 = vrot.slane %v818, 4
        %v820 = vrot.slane %v776, 6
        %v821 = vsel %vm801, %v819, %v820
        %v822 = vrot.slane %v777, 6
        %v823 = vrot.slane %v822, 4
        %v824 = vrot.slane %v778, 6
        %v825 = vsel %vm801, %v823, %v824
        %v826 = vrot.slane %v779, 6
        %v827 = vrot.slane %v826, 4
        %v828 = vrot.slane %v780, 6
        %v829 = vsel %vm801, %v827, %v828
        %v830 = vrot.slane %v781, 6
        %v831 = vrot.slane %v830, 4
        %v832 = vrot.slane %v782, 6
        %v833 = vsel %vm801, %v831, %v832
        %v834 = vld [vmem:[#allocation2] sm:$0xff]
        %v835 = vld [vmem:[#allocation2 + $0x8] sm:$0xff]
        %v836 = vld [vmem:[#allocation2 + $0x10] sm:$0xff]
        %v837 = vld [vmem:[#allocation2 + $0x18] sm:$0xff]
        %v838 = vld [vmem:[#allocation2 + $0x20] sm:$0xff]
        %v839 = vld [vmem:[#allocation2 + $0x28] sm:$0xff]
        %v840 = vld [vmem:[#allocation2 + $0x30] sm:$0xff]
        %v841 = vld [vmem:[#allocation2 + $0x38] sm:$0xff]
        %s842 = scalar_lea.vmem [#allocation6], 56
        %v843 = vld [vmem:[%s842] sm:$0xf]
        %v844 = vld [vmem:[%s842 + $0x4] sm:$0xf]
        %v845 = vld [vmem:[%s842 + $0x8] sm:$0xf]
        %v846 = vld [vmem:[%s842 + $0xc] sm:$0xf]
        %v847 = vld [vmem:[%s842 + $0x10] sm:$0xf]
        %v848 = vld [vmem:[%s842 + $0x14] sm:$0xf]
        %v849 = vld [vmem:[%s842 + $0x18] sm:$0xf]
        %v850 = vunpack.c.l.b16 %v805
        %v851 = vunpack.c.l.b16 %v809
        %v852 = vunpack.c.l.b16 %v813
        %v853 = vunpack.c.l.b16 %v817
        %v854 = vunpack.c.l.b16 %v821
        %v855 = vunpack.c.l.b16 %v825
        %v856 = vunpack.c.l.b16 %v829
        %v857 = vunpack.c.l.b16 %v833
        %v858 = vpack.c.b16 %v851, %v850
        %v859 = vpack.c.b16 %v853, %v852
        %v860 = vpack.c.b16 %v855, %v854
        %v861 = vpack.c.b16 %v857, %v856
        %v869 = vunpack.c.l.b16 %v843
        %v870 = vunpack.c.l.b16 %v844
        %v871 = vunpack.c.l.b16 %v845
        %v872 = vunpack.c.l.b16 %v846
        %v873 = vunpack.c.l.b16 %v847
        %v874 = vunpack.c.l.b16 %v848
        %v875 = vunpack.c.l.b16 %v849
        %v876 = vpack.c.b16 %v870, %v869
        %v877 = vpack.c.b16 %v872, %v871
        %v878 = vpack.c.b16 %v874, %v873
        %v879 = vpack.c.b16 %v875, %v875
        %v884 = vsel %vm361, %v858, 0
        %v887 = vsel %vm361, %v859, 0
        %v890 = vsel %vm361, %v860, 0
        %v893 = vsel %vm361, %v861, 0
        %v896 = vsel %vm374, %v879, 0
        %898 = vmatprep.subr.bf16.mxu0 0
        %899 = vmatpush1.bf16.msra.mxu0 %v876
        %900 = vmatprep.subr.bf16.mxu0 0
        %901 = vmatpush1.bf16.msra.mxu0 %v877
        %902 = vmatprep.subr.bf16.mxu0 0
        %903 = vmatpush1.bf16.msra.mxu0 %v878
        %904 = vmatprep.subr.bf16.mxu0 0
        %905 = vmatpush1.bf16.msra.mxu0 %v896
        %906 = vmatprep.subr.bf16.mxu0 0
        %907 = vmatpush1.bf16.msra.mxu0 0
        %908 = vmatprep.subr.bf16.mxu0 0
        %909 = vmatpush1.bf16.msra.mxu0 0
        %910 = vmatprep.subr.bf16.mxu0 0
        %911 = vmatpush1.bf16.msra.mxu0 0
        %912 = vmatprep.subr.bf16.mxu0 0
        %913 = vmatpush1.bf16.msra.mxu0 0
        %914 = vmatprep.subr.bf16.mxu0 0
        %915 = vmatpush1.bf16.msra.mxu0 0
        %916 = vmatprep.subr.bf16.mxu0 0
        %917 = vmatpush1.bf16.msra.mxu0 0
        %918 = vmatprep.subr.bf16.mxu0 0
        %919 = vmatpush1.bf16.msra.mxu0 0
        %920 = vmatprep.subr.bf16.mxu0 0
        %921 = vmatpush1.bf16.msra.mxu0 0
        %922 = vmatprep.subr.bf16.mxu0 0
        %923 = vmatpush1.bf16.msra.mxu0 0
        %924 = vmatprep.subr.bf16.mxu0 0
        %925 = vmatpush1.bf16.msra.mxu0 0
        %926 = vmatprep.subr.bf16.mxu0 0
        %927 = vmatpush1.bf16.msra.mxu0 0
        %928 = vmatprep.subr.bf16.mxu0 0
        %929 = vmatpush1.bf16.msra.mxu0 0
        %930 = vmatprep.mubr.bf16.mxu0 0
        %931 = vmatmul.mubr.bf16.gmra.mrb[0].mxu0 %v884
        %v932 = vpop.f32.mrb[0].mxu0
        %v933 = vadd.f32 0.0, %v932
        %v934 = vpop.f32.mrb[0].mxu0
        %v935 = vpop.f32.mrb[0].mxu0
        %v936 = vadd.f32 0.0, %v935
        %v937 = vpop.f32.mrb[0].mxu0
        %938 = vmatprep.mubr.bf16.mxu0 0
        %939 = vmatmul.mubr.bf16.gmra.mrb[0].mxu0 %v887
        %v940 = vpop.f32.mrb[0].mxu0
        %v941 = vadd.f32 0.0, %v940
        %v942 = vpop.f32.mrb[0].mxu0
        %v943 = vpop.f32.mrb[0].mxu0
        %v944 = vadd.f32 0.0, %v943
        %v945 = vpop.f32.mrb[0].mxu0
        %946 = vmatprep.mubr.bf16.mxu0 0
        %947 = vmatmul.mubr.bf16.gmra.mrb[0].mxu0 %v890
        %v948 = vpop.f32.mrb[0].mxu0
        %v949 = vadd.f32 0.0, %v948
        %v950 = vpop.f32.mrb[0].mxu0
        %v951 = vpop.f32.mrb[0].mxu0
        %v952 = vadd.f32 0.0, %v951
        %v953 = vpop.f32.mrb[0].mxu0
        %954 = vmatprep.mubr.bf16.mxu0 0
        %955 = vmatmul.mubr.bf16.gmra.mrb[0].mxu0 %v893
        %v956 = vpop.f32.mrb[0].mxu0
        %v957 = vadd.f32 0.0, %v956
        %v958 = vpop.f32.mrb[0].mxu0
        %v959 = vpop.f32.mrb[0].mxu0
        %v960 = vadd.f32 0.0, %v959
        %v961 = vpop.f32.mrb[0].mxu0
        %962 = vdwg.mxu0
        %v963 = vadd.f32 %v834, %v933
        %v964 = vadd.f32 %v835, %v936
        %v965 = vadd.f32 %v836, %v941
        %v966 = vadd.f32 %v837, %v944
        %v967 = vadd.f32 %v838, %v949
        %v968 = vadd.f32 %v839, %v952
        %v969 = vadd.f32 %v840, %v957
        %v970 = vadd.f32 %v841, %v960
        %971 = vst.msk [vmem:[#allocation2] sm:$0xff] %vm232, %v963
        %972 = vst.msk [vmem:[#allocation2 + $0x8] sm:$0xff] %vm232, %v964
        %973 = vst.msk [vmem:[#allocation2 + $0x10] sm:$0xff] %vm232, %v965
        %974 = vst.msk [vmem:[#allocation2 + $0x18] sm:$0xff] %vm232, %v966
        %975 = vst.msk [vmem:[#allocation2 + $0x20] sm:$0xff] %vm232, %v967
        %976 = vst.msk [vmem:[#allocation2 + $0x28] sm:$0xff] %vm232, %v968
        %977 = vst.msk [vmem:[#allocation2 + $0x30] sm:$0xff] %vm232, %v969
        %978 = vst.msk [vmem:[#allocation2 + $0x38] sm:$0xff] %vm232, %v970
        %s979 = sadd.s32 %s241, 3
        %s980 = smul.u32 %s979, 2
        %s981 = smul.addr %s980, 4
        %s982 = scalar_lea.vmem %s199, %s981 [#allocation3]
        %v983 = vld [vmem:[%s982] sm:$0xe]
        %v984 = vld [vmem:[%s982 + $0x4] sm:$0x1]
        %v985 = vld [vmem:[%s982 + $0x8] sm:$0xe]
        %v986 = vld [vmem:[%s982 + $0xc] sm:$0x1]
        %v987 = vld [vmem:[%s982 + $0x10] sm:$0xe]
        %v988 = vld [vmem:[%s982 + $0x14] sm:$0x1]
        %v989 = vld [vmem:[%s982 + $0x18] sm:$0xe]
        %v990 = vld [vmem:[%s982 + $0x1c] sm:$0x1]
        %v991 = vld [vmem:[%s982 + $0x20] sm:$0xe]
        %v992 = vld [vmem:[%s982 + $0x24] sm:$0x1]
        %v993 = vld [vmem:[%s982 + $0x28] sm:$0xe]
        %v994 = vld [vmem:[%s982 + $0x2c] sm:$0x1]
        %v995 = vld [vmem:[%s982 + $0x30] sm:$0xe]
        %v996 = vld [vmem:[%s982 + $0x34] sm:$0x1]
        %v997 = vld [vmem:[%s982 + $0x38] sm:$0xe]
        %v998 = vld [vmem:[%s982 + $0x3c] sm:$0x1]
        %v1015 = vrot.slane %v983, 5
        %v1016 = vrot.slane %v1015, 4
        %v1017 = vrot.slane %v984, 5
        %v1018 = vsel %vm280, %v1016, %v1017
        %v1019 = vrot.slane %v985, 5
        %v1020 = vrot.slane %v1019, 4
        %v1021 = vrot.slane %v986, 5
        %v1022 = vsel %vm280, %v1020, %v1021
        %v1023 = vrot.slane %v987, 5
        %v1024 = vrot.slane %v1023, 4
        %v1025 = vrot.slane %v988, 5
        %v1026 = vsel %vm280, %v1024, %v1025
        %v1027 = vrot.slane %v989, 5
        %v1028 = vrot.slane %v1027, 4
        %v1029 = vrot.slane %v990, 5
        %v1030 = vsel %vm280, %v1028, %v1029
        %v1031 = vrot.slane %v991, 5
        %v1032 = vrot.slane %v1031, 4
        %v1033 = vrot.slane %v992, 5
        %v1034 = vsel %vm280, %v1032, %v1033
        %v1035 = vrot.slane %v993, 5
        %v1036 = vrot.slane %v1035, 4
        %v1037 = vrot.slane %v994, 5
        %v1038 = vsel %vm280, %v1036, %v1037
        %v1039 = vrot.slane %v995, 5
        %v1040 = vrot.slane %v1039, 4
        %v1041 = vrot.slane %v996, 5
        %v1042 = vsel %vm280, %v1040, %v1041
        %v1043 = vrot.slane %v997, 5
        %v1044 = vrot.slane %v1043, 4
        %v1045 = vrot.slane %v998, 5
        %v1046 = vsel %vm280, %v1044, %v1045
        %v1047 = vld [vmem:[#allocation2] sm:$0xff]
        %v1048 = vld [vmem:[#allocation2 + $0x8] sm:$0xff]
        %v1049 = vld [vmem:[#allocation2 + $0x10] sm:$0xff]
        %v1050 = vld [vmem:[#allocation2 + $0x18] sm:$0xff]
        %v1051 = vld [vmem:[#allocation2 + $0x20] sm:$0xff]
        %v1052 = vld [vmem:[#allocation2 + $0x28] sm:$0xff]
        %v1053 = vld [vmem:[#allocation2 + $0x30] sm:$0xff]
        %v1054 = vld [vmem:[#allocation2 + $0x38] sm:$0xff]
        %s1055 = scalar_lea.vmem [#allocation6], 84
        %v1056 = vld [vmem:[%s1055] sm:$0xf]
        %v1057 = vld [vmem:[%s1055 + $0x4] sm:$0xf]
        %v1058 = vld [vmem:[%s1055 + $0x8] sm:$0xf]
        %v1059 = vld [vmem:[%s1055 + $0xc] sm:$0xf]
        %v1060 = vld [vmem:[%s1055 + $0x10] sm:$0xf]
        %v1061 = vld [vmem:[%s1055 + $0x14] sm:$0xf]
        %v1062 = vld [vmem:[%s1055 + $0x18] sm:$0xf]
        %v1063 = vunpack.c.l.b16 %v1018
        %v1064 = vunpack.c.l.b16 %v1022
        %v1065 = vunpack.c.l.b16 %v1026
        %v1066 = vunpack.c.l.b16 %v1030
        %v1067 = vunpack.c.l.b16 %v1034
        %v1068 = vunpack.c.l.b16 %v1038
        %v1069 = vunpack.c.l.b16 %v1042
        %v1070 = vunpack.c.l.b16 %v1046
        %v1071 = vpack.c.b16 %v1064, %v1063
        %v1072 = vpack.c.b16 %v1066, %v1065
        %v1073 = vpack.c.b16 %v1068, %v1067
        %v1074 = vpack.c.b16 %v1070, %v1069
        %v1082 = vunpack.c.l.b16 %v1056
        %v1083 = vunpack.c.l.b16 %v1057
        %v1084 = vunpack.c.l.b16 %v1058
        %v1085 = vunpack.c.l.b16 %v1059
        %v1086 = vunpack.c.l.b16 %v1060
        %v1087 = vunpack.c.l.b16 %v1061
        %v1088 = vunpack.c.l.b16 %v1062
        %v1089 = vpack.c.b16 %v1083, %v1082
        %v1090 = vpack.c.b16 %v1085, %v1084
        %v1091 = vpack.c.b16 %v1087, %v1086
        %v1092 = vpack.c.b16 %v1088, %v1088
        %v1097 = vsel %vm361, %v1071, 0
        %v1100 = vsel %vm361, %v1072, 0
        %v1103 = vsel %vm361, %v1073, 0
        %v1106 = vsel %vm361, %v1074, 0
        %v1109 = vsel %vm374, %v1092, 0
        %1111 = vmatprep.subr.bf16.mxu0 0
        %1112 = vmatpush1.bf16.msra.mxu0 %v1089
        %1113 = vmatprep.subr.bf16.mxu0 0
        %1114 = vmatpush1.bf16.msra.mxu0 %v1090
        %1115 = vmatprep.subr.bf16.mxu0 0
        %1116 = vmatpush1.bf16.msra.mxu0 %v1091
        %1117 = vmatprep.subr.bf16.mxu0 0
        %1118 = vmatpush1.bf16.msra.mxu0 %v1109
        %1119 = vmatprep.subr.bf16.mxu0 0
        %1120 = vmatpush1.bf16.msra.mxu0 0
        %1121 = vmatprep.subr.bf16.mxu0 0
        %1122 = vmatpush1.bf16.msra.mxu0 0
        %1123 = vmatprep.subr.bf16.mxu0 0
        %1124 = vmatpush1.bf16.msra.mxu0 0
        %1125 = vmatprep.subr.bf16.mxu0 0
        %1126 = vmatpush1.bf16.msra.mxu0 0
        %1127 = vmatprep.subr.bf16.mxu0 0
        %1128 = vmatpush1.bf16.msra.mxu0 0
        %1129 = vmatprep.subr.bf16.mxu0 0
        %1130 = vmatpush1.bf16.msra.mxu0 0
        %1131 = vmatprep.subr.bf16.mxu0 0
        %1132 = vmatpush1.bf16.msra.mxu0 0
        %1133 = vmatprep.subr.bf16.mxu0 0
        %1134 = vmatpush1.bf16.msra.mxu0 0
        %1135 = vmatprep.subr.bf16.mxu0 0
        %1136 = vmatpush1.bf16.msra.mxu0 0
        %1137 = vmatprep.subr.bf16.mxu0 0
        %1138 = vmatpush1.bf16.msra.mxu0 0
        %1139 = vmatprep.subr.bf16.mxu0 0
        %1140 = vmatpush1.bf16.msra.mxu0 0
        %1141 = vmatprep.subr.bf16.mxu0 0
        %1142 = vmatpush1.bf16.msra.mxu0 0
        %1143 = vmatprep.mubr.bf16.mxu0 0
        %1144 = vmatmul.mubr.bf16.gmra.mrb[0].mxu0 %v1097
        %v1145 = vpop.f32.mrb[0].mxu0
        %v1146 = vadd.f32 0.0, %v1145
        %v1147 = vpop.f32.mrb[0].mxu0
        %v1148 = vpop.f32.mrb[0].mxu0
        %v1149 = vadd.f32 0.0, %v1148
        %v1150 = vpop.f32.mrb[0].mxu0
        %1151 = vmatprep.mubr.bf16.mxu0 0
        %1152 = vmatmul.mubr.bf16.gmra.mrb[0].mxu0 %v1100
        %v1153 = vpop.f32.mrb[0].mxu0
        %v1154 = vadd.f32 0.0, %v1153
        %v1155 = vpop.f32.mrb[0].mxu0
        %v1156 = vpop.f32.mrb[0].mxu0
        %v1157 = vadd.f32 0.0, %v1156
        %v1158 = vpop.f32.mrb[0].mxu0
        %1159 = vmatprep.mubr.bf16.mxu0 0
        %1160 = vmatmul.mubr.bf16.gmra.mrb[0].mxu0 %v1103
        %v1161 = vpop.f32.mrb[0].mxu0
        %v1162 = vadd.f32 0.0, %v1161
        %v1163 = vpop.f32.mrb[0].mxu0
        %v1164 = vpop.f32.mrb[0].mxu0
        %v1165 = vadd.f32 0.0, %v1164
        %v1166 = vpop.f32.mrb[0].mxu0
        %1167 = vmatprep.mubr.bf16.mxu0 0
        %1168 = vmatmul.mubr.bf16.gmra.mrb[0].mxu0 %v1106
        %v1169 = vpop.f32.mrb[0].mxu0
        %v1170 = vadd.f32 0.0, %v1169
        %v1171 = vpop.f32.mrb[0].mxu0
        %v1172 = vpop.f32.mrb[0].mxu0
        %v1173 = vadd.f32 0.0, %v1172
        %v1174 = vpop.f32.mrb[0].mxu0
        %1175 = vdwg.mxu0
        %v1176 = vadd.f32 %v1047, %v1146
        %v1177 = vadd.f32 %v1048, %v1149
        %v1178 = vadd.f32 %v1049, %v1154
        %v1179 = vadd.f32 %v1050, %v1157
        %v1180 = vadd.f32 %v1051, %v1162
        %v1181 = vadd.f32 %v1052, %v1165
        %v1182 = vadd.f32 %v1053, %v1170
        %v1183 = vadd.f32 %v1054, %v1173
        %1184 = vst.msk [vmem:[#allocation2] sm:$0xff] %vm232, %v1176
        %1185 = vst.msk [vmem:[#allocation2 + $0x8] sm:$0xff] %vm232, %v1177
        %1186 = vst.msk [vmem:[#allocation2 + $0x10] sm:$0xff] %vm232, %v1178
        %1187 = vst.msk [vmem:[#allocation2 + $0x18] sm:$0xff] %vm232, %v1179
        %1188 = vst.msk [vmem:[#allocation2 + $0x20] sm:$0xff] %vm232, %v1180
        %1189 = vst.msk [vmem:[#allocation2 + $0x28] sm:$0xff] %vm232, %v1181
        %1190 = vst.msk [vmem:[#allocation2 + $0x30] sm:$0xff] %vm232, %v1182
        %1191 = vst.msk [vmem:[#allocation2 + $0x38] sm:$0xff] %vm232, %v1183
        %v1192 = vld [vmem:[%s982] sm:$0xe]
        %v1193 = vld [vmem:[%s982 + $0x4] sm:$0x3]
        %v1194 = vld [vmem:[%s982 + $0x8] sm:$0xe]
        %v1195 = vld [vmem:[%s982 + $0xc] sm:$0x3]
        %v1196 = vld [vmem:[%s982 + $0x10] sm:$0xe]
        %v1197 = vld [vmem:[%s982 + $0x14] sm:$0x3]
        %v1198 = vld [vmem:[%s982 + $0x18] sm:$0xe]
        %v1199 = vld [vmem:[%s982 + $0x1c] sm:$0x3]
        %v1200 = vld [vmem:[%s982 + $0x20] sm:$0xe]
        %v1201 = vld [vmem:[%s982 + $0x24] sm:$0x3]
        %v1202 = vld [vmem:[%s982 + $0x28] sm:$0xe]
        %v1203 = vld [vmem:[%s982 + $0x2c] sm:$0x3]
        %v1204 = vld [vmem:[%s982 + $0x30] sm:$0xe]
        %v1205 = vld [vmem:[%s982 + $0x34] sm:$0x3]
        %v1206 = vld [vmem:[%s982 + $0x38] sm:$0xe]
        %v1207 = vld [vmem:[%s982 + $0x3c] sm:$0x3]
        %v1209 = vshrl.u32 %v1192, 16
        %v1211 = vrot.slane %v1209, 5
        %v1212 = vshll.u32 %v1192, 16
        %v1214 = vrot.slane %v1212, 6
        %v1215 = vor.u32 %v1211, %v1214
        %v1216 = vrot.slane %v1215, 4
        %v1218 = vshrl.u32 %v1193, 16
        %v1220 = vrot.slane %v1218, 5
        %v1221 = vshll.u32 %v1193, 16
        %v1223 = vrot.slane %v1221, 6
        %v1224 = vor.u32 %v1220, %v1223
        %v1225 = vsel %vm477, %v1216, %v1224
        %v1227 = vshrl.u32 %v1194, 16
        %v1229 = vrot.slane %v1227, 5
        %v1230 = vshll.u32 %v1194, 16
        %v1232 = vrot.slane %v1230, 6
        %v1233 = vor.u32 %v1229, %v1232
        %v1234 = vrot.slane %v1233, 4
        %v1236 = vshrl.u32 %v1195, 16
        %v1238 = vrot.slane %v1236, 5
        %v1239 = vshll.u32 %v1195, 16
        %v1241 = vrot.slane %v1239, 6
        %v1242 = vor.u32 %v1238, %v1241
        %v1243 = vsel %vm477, %v1234, %v1242
        %v1245 = vshrl.u32 %v1196, 16
        %v1247 = vrot.slane %v1245, 5
        %v1248 = vshll.u32 %v1196, 16
        %v1250 = vrot.slane %v1248, 6
        %v1251 = vor.u32 %v1247, %v1250
        %v1252 = vrot.slane %v1251, 4
        %v1254 = vshrl.u32 %v1197, 16
        %v1256 = vrot.slane %v1254, 5
        %v1257 = vshll.u32 %v1197, 16
        %v1259 = vrot.slane %v1257, 6
        %v1260 = vor.u32 %v1256, %v1259
        %v1261 = vsel %vm477, %v1252, %v1260
        %v1263 = vshrl.u32 %v1198, 16
        %v1265 = vrot.slane %v1263, 5
        %v1266 = vshll.u32 %v1198, 16
        %v1268 = vrot.slane %v1266, 6
        %v1269 = vor.u32 %v1265, %v1268
        %v1270 = vrot.slane %v1269, 4
        %v1272 = vshrl.u32 %v1199, 16
        %v1274 = vrot.slane %v1272, 5
        %v1275 = vshll.u32 %v1199, 16
        %v1277 = vrot.slane %v1275, 6
        %v1278 = vor.u32 %v1274, %v1277
        %v1279 = vsel %vm477, %v1270, %v1278
        %v1281 = vshrl.u32 %v1200, 16
        %v1283 = vrot.slane %v1281, 5
        %v1284 = vshll.u32 %v1200, 16
        %v1286 = vrot.slane %v1284, 6
        %v1287 = vor.u32 %v1283, %v1286
        %v1288 = vrot.slane %v1287, 4
        %v1290 = vshrl.u32 %v1201, 16
        %v1292 = vrot.slane %v1290, 5
        %v1293 = vshll.u32 %v1201, 16
        %v1295 = vrot.slane %v1293, 6
        %v1296 = vor.u32 %v1292, %v1295
        %v1297 = vsel %vm477, %v1288, %v1296
        %v1299 = vshrl.u32 %v1202, 16
        %v1301 = vrot.slane %v1299, 5
        %v1302 = vshll.u32 %v1202, 16
        %v1304 = vrot.slane %v1302, 6
        %v1305 = vor.u32 %v1301, %v1304
        %v1306 = vrot.slane %v1305, 4
        %v1308 = vshrl.u32 %v1203, 16
        %v1310 = vrot.slane %v1308, 5
        %v1311 = vshll.u32 %v1203, 16
        %v1313 = vrot.slane %v1311, 6
        %v1314 = vor.u32 %v1310, %v1313
        %v1315 = vsel %vm477, %v1306, %v1314
        %v1317 = vshrl.u32 %v1204, 16
        %v1319 = vrot.slane %v1317, 5
        %v1320 = vshll.u32 %v1204, 16
        %v1322 = vrot.slane %v1320, 6
        %v1323 = vor.u32 %v1319, %v1322
        %v1324 = vrot.slane %v1323, 4
        %v1326 = vshrl.u32 %v1205, 16
        %v1328 = vrot.slane %v1326, 5
        %v1329 = vshll.u32 %v1205, 16
        %v1331 = vrot.slane %v1329, 6
        %v1332 = vor.u32 %v1328, %v1331
        %v1333 = vsel %vm477, %v1324, %v1332
        %v1335 = vshrl.u32 %v1206, 16
        %v1337 = vrot.slane %v1335, 5
        %v1338 = vshll.u32 %v1206, 16
        %v1340 = vrot.slane %v1338, 6
        %v1341 = vor.u32 %v1337, %v1340
        %v1342 = vrot.slane %v1341, 4
        %v1344 = vshrl.u32 %v1207, 16
        %v1346 = vrot.slane %v1344, 5
        %v1347 = vshll.u32 %v1207, 16
        %v1349 = vrot.slane %v1347, 6
        %v1350 = vor.u32 %v1346, %v1349
        %v1351 = vsel %vm477, %v1342, %v1350
        %v1352 = vld [vmem:[#allocation2] sm:$0xff]
        %v1353 = vld [vmem:[#allocation2 + $0x8] sm:$0xff]
        %v1354 = vld [vmem:[#allocation2 + $0x10] sm:$0xff]
        %v1355 = vld [vmem:[#allocation2 + $0x18] sm:$0xff]
        %v1356 = vld [vmem:[#allocation2 + $0x20] sm:$0xff]
        %v1357 = vld [vmem:[#allocation2 + $0x28] sm:$0xff]
        %v1358 = vld [vmem:[#allocation2 + $0x30] sm:$0xff]
        %v1359 = vld [vmem:[#allocation2 + $0x38] sm:$0xff]
        %s1360 = scalar_lea.vmem [#allocation6], 112
        %v1361 = vld [vmem:[%s1360] sm:$0xf]
        %v1362 = vld [vmem:[%s1360 + $0x4] sm:$0xf]
        %v1363 = vld [vmem:[%s1360 + $0x8] sm:$0xf]
        %v1364 = vld [vmem:[%s1360 + $0xc] sm:$0xf]
        %v1365 = vld [vmem:[%s1360 + $0x10] sm:$0xf]
        %v1366 = vld [vmem:[%s1360 + $0x14] sm:$0xf]
        %v1367 = vld [vmem:[%s1360 + $0x18] sm:$0xf]
        %v1368 = vunpack.c.l.b16 %v1225
        %v1369 = vunpack.c.l.b16 %v1243
        %v1370 = vunpack.c.l.b16 %v1261
        %v1371 = vunpack.c.l.b16 %v1279
        %v1372 = vunpack.c.l.b16 %v1297
        %v1373 = vunpack.c.l.b16 %v1315
        %v1374 = vunpack.c.l.b16 %v1333
        %v1375 = vunpack.c.l.b16 %v1351
        %v1376 = vpack.c.b16 %v1369, %v1368
        %v1377 = vpack.c.b16 %v1371, %v1370
        %v1378 = vpack.c.b16 %v1373, %v1372
        %v1379 = vpack.c.b16 %v1375, %v1374
        %v1387 = vunpack.c.l.b16 %v1361
        %v1388 = vunpack.c.l.b16 %v1362
        %v1389 = vunpack.c.l.b16 %v1363
        %v1390 = vunpack.c.l.b16 %v1364
        %v1391 = vunpack.c.l.b16 %v1365
        %v1392 = vunpack.c.l.b16 %v1366
        %v1393 = vunpack.c.l.b16 %v1367
        %v1394 = vpack.c.b16 %v1388, %v1387
        %v1395 = vpack.c.b16 %v1390, %v1389
        %v1396 = vpack.c.b16 %v1392, %v1391
        %v1397 = vpack.c.b16 %v1393, %v1393
        %v1402 = vsel %vm361, %v1376, 0
        %v1405 = vsel %vm361, %v1377, 0
        %v1408 = vsel %vm361, %v1378, 0
        %v1411 = vsel %vm361, %v1379, 0
        %v1414 = vsel %vm374, %v1397, 0
        %1416 = vmatprep.subr.bf16.mxu0 0
        %1417 = vmatpush1.bf16.msra.mxu0 %v1394
        %1418 = vmatprep.subr.bf16.mxu0 0
        %1419 = vmatpush1.bf16.msra.mxu0 %v1395
        %1420 = vmatprep.subr.bf16.mxu0 0
        %1421 = vmatpush1.bf16.msra.mxu0 %v1396
        %1422 = vmatprep.subr.bf16.mxu0 0
        %1423 = vmatpush1.bf16.msra.mxu0 %v1414
        %1424 = vmatprep.subr.bf16.mxu0 0
        %1425 = vmatpush1.bf16.msra.mxu0 0
        %1426 = vmatprep.subr.bf16.mxu0 0
        %1427 = vmatpush1.bf16.msra.mxu0 0
        %1428 = vmatprep.subr.bf16.mxu0 0
        %1429 = vmatpush1.bf16.msra.mxu0 0
        %1430 = vmatprep.subr.bf16.mxu0 0
        %1431 = vmatpush1.bf16.msra.mxu0 0
        %1432 = vmatprep.subr.bf16.mxu0 0
        %1433 = vmatpush1.bf16.msra.mxu0 0
        %1434 = vmatprep.subr.bf16.mxu0 0
        %1435 = vmatpush1.bf16.msra.mxu0 0
        %1436 = vmatprep.subr.bf16.mxu0 0
        %1437 = vmatpush1.bf16.msra.mxu0 0
        %1438 = vmatprep.subr.bf16.mxu0 0
        %1439 = vmatpush1.bf16.msra.mxu0 0
        %1440 = vmatprep.subr.bf16.mxu0 0
        %1441 = vmatpush1.bf16.msra.mxu0 0
        %1442 = vmatprep.subr.bf16.mxu0 0
        %1443 = vmatpush1.bf16.msra.mxu0 0
        %1444 = vmatprep.subr.bf16.mxu0 0
        %1445 = vmatpush1.bf16.msra.mxu0 0
        %1446 = vmatprep.subr.bf16.mxu0 0
        %1447 = vmatpush1.bf16.msra.mxu0 0
        %1448 = vmatprep.mubr.bf16.mxu0 0
        %1449 = vmatmul.mubr.bf16.gmra.mrb[0].mxu0 %v1402
        %v1450 = vpop.f32.mrb[0].mxu0
        %v1451 = vadd.f32 0.0, %v1450
        %v1452 = vpop.f32.mrb[0].mxu0
        %v1453 = vpop.f32.mrb[0].mxu0
        %v1454 = vadd.f32 0.0, %v1453
        %v1455 = vpop.f32.mrb[0].mxu0
        %1456 = vmatprep.mubr.bf16.mxu0 0
        %1457 = vmatmul.mubr.bf16.gmra.mrb[0].mxu0 %v1405
        %v1458 = vpop.f32.mrb[0].mxu0
        %v1459 = vadd.f32 0.0, %v1458
        %v1460 = vpop.f32.mrb[0].mxu0
        %v1461 = vpop.f32.mrb[0].mxu0
        %v1462 = vadd.f32 0.0, %v1461
        %v1463 = vpop.f32.mrb[0].mxu0
        %1464 = vmatprep.mubr.bf16.mxu0 0
        %1465 = vmatmul.mubr.bf16.gmra.mrb[0].mxu0 %v1408
        %v1466 = vpop.f32.mrb[0].mxu0
        %v1467 = vadd.f32 0.0, %v1466
        %v1468 = vpop.f32.mrb[0].mxu0
        %v1469 = vpop.f32.mrb[0].mxu0
        %v1470 = vadd.f32 0.0, %v1469
        %v1471 = vpop.f32.mrb[0].mxu0
        %1472 = vmatprep.mubr.bf16.mxu0 0
        %1473 = vmatmul.mubr.bf16.gmra.mrb[0].mxu0 %v1411
        %v1474 = vpop.f32.mrb[0].mxu0
        %v1475 = vadd.f32 0.0, %v1474
        %v1476 = vpop.f32.mrb[0].mxu0
        %v1477 = vpop.f32.mrb[0].mxu0
        %v1478 = vadd.f32 0.0, %v1477
        %v1479 = vpop.f32.mrb[0].mxu0
        %1480 = vdwg.mxu0
        %v1481 = vadd.f32 %v1352, %v1451
        %v1482 = vadd.f32 %v1353, %v1454
        %v1483 = vadd.f32 %v1354, %v1459
        %v1484 = vadd.f32 %v1355, %v1462
        %v1485 = vadd.f32 %v1356, %v1467
        %v1486 = vadd.f32 %v1357, %v1470
        %v1487 = vadd.f32 %v1358, %v1475
        %v1488 = vadd.f32 %v1359, %v1478
        %1489 = vst.msk [vmem:[#allocation2] sm:$0xff] %vm232, %v1481
        %1490 = vst.msk [vmem:[#allocation2 + $0x8] sm:$0xff] %vm232, %v1482
        %1491 = vst.msk [vmem:[#allocation2 + $0x10] sm:$0xff] %vm232, %v1483
        %1492 = vst.msk [vmem:[#allocation2 + $0x18] sm:$0xff] %vm232, %v1484
        %1493 = vst.msk [vmem:[#allocation2 + $0x20] sm:$0xff] %vm232, %v1485
        %1494 = vst.msk [vmem:[#allocation2 + $0x28] sm:$0xff] %vm232, %v1486
        %1495 = vst.msk [vmem:[#allocation2 + $0x30] sm:$0xff] %vm232, %v1487
        %1496 = vst.msk [vmem:[#allocation2 + $0x38] sm:$0xff] %vm232, %v1488
        %v1497 = vld [vmem:[%s982] sm:$0xc]
        %v1498 = vld [vmem:[%s982 + $0x4] sm:$0x3]
        %v1499 = vld [vmem:[%s982 + $0x8] sm:$0xc]
        %v1500 = vld [vmem:[%s982 + $0xc] sm:$0x3]
        %v1501 = vld [vmem:[%s982 + $0x10] sm:$0xc]
        %v1502 = vld [vmem:[%s982 + $0x14] sm:$0x3]
        %v1503 = vld [vmem:[%s982 + $0x18] sm:$0xc]
        %v1504 = vld [vmem:[%s982 + $0x1c] sm:$0x3]
        %v1505 = vld [vmem:[%s982 + $0x20] sm:$0xc]
        %v1506 = vld [vmem:[%s982 + $0x24] sm:$0x3]
        %v1507 = vld [vmem:[%s982 + $0x28] sm:$0xc]
        %v1508 = vld [vmem:[%s982 + $0x2c] sm:$0x3]
        %v1509 = vld [vmem:[%s982 + $0x30] sm:$0xc]
        %v1510 = vld [vmem:[%s982 + $0x34] sm:$0x3]
        %v1511 = vld [vmem:[%s982 + $0x38] sm:$0xc]
        %v1512 = vld [vmem:[%s982 + $0x3c] sm:$0x3]
        %v1529 = vrot.slane %v1497, 6
        %v1530 = vrot.slane %v1529, 4
        %v1531 = vrot.slane %v1498, 6
        %v1532 = vsel %vm801, %v1530, %v1531
        %v1533 = vrot.slane %v1499, 6
        %v1534 = vrot.slane %v1533, 4
        %v1535 = vrot.slane %v1500, 6
        %v1536 = vsel %vm801, %v1534, %v1535
        %v1537 = vrot.slane %v1501, 6
        %v1538 = vrot.slane %v1537, 4
        %v1539 = vrot.slane %v1502, 6
        %v1540 = vsel %vm801, %v1538, %v1539
        %v1541 = vrot.slane %v1503, 6
        %v1542 = vrot.slane %v1541, 4
        %v1543 = vrot.slane %v1504, 6
        %v1544 = vsel %vm801, %v1542, %v1543
        %v1545 = vrot.slane %v1505, 6
        %v1546 = vrot.slane %v1545, 4
        %v1547 = vrot.slane %v1506, 6
        %v1548 = vsel %vm801, %v1546, %v1547
        %v1549 = vrot.slane %v1507, 6
        %v1550 = vrot.slane %v1549, 4
        %v1551 = vrot.slane %v1508, 6
        %v1552 = vsel %vm801, %v1550, %v1551
        %v1553 = vrot.slane %v1509, 6
        %v1554 = vrot.slane %v1553, 4
        %v1555 = vrot.slane %v1510, 6
        %v1556 = vsel %vm801, %v1554, %v1555
        %v1557 = vrot.slane %v1511, 6
        %v1558 = vrot.slane %v1557, 4
        %v1559 = vrot.slane %v1512, 6
        %v1560 = vsel %vm801, %v1558, %v1559
        %v1561 = vld [vmem:[#allocation2] sm:$0xff]
        %v1562 = vld [vmem:[#allocation2 + $0x8] sm:$0xff]
        %v1563 = vld [vmem:[#allocation2 + $0x10] sm:$0xff]
        %v1564 = vld [vmem:[#allocation2 + $0x18] sm:$0xff]
        %v1565 = vld [vmem:[#allocation2 + $0x20] sm:$0xff]
        %v1566 = vld [vmem:[#allocation2 + $0x28] sm:$0xff]
        %v1567 = vld [vmem:[#allocation2 + $0x30] sm:$0xff]
        %v1568 = vld [vmem:[#allocation2 + $0x38] sm:$0xff]
        %s1569 = scalar_lea.vmem [#allocation6], 140
        %v1570 = vld [vmem:[%s1569] sm:$0xf]
        %v1571 = vld [vmem:[%s1569 + $0x4] sm:$0xf]
        %v1572 = vld [vmem:[%s1569 + $0x8] sm:$0xf]
        %v1573 = vld [vmem:[%s1569 + $0xc] sm:$0xf]
        %v1574 = vld [vmem:[%s1569 + $0x10] sm:$0xf]
        %v1575 = vld [vmem:[%s1569 + $0x14] sm:$0xf]
        %v1576 = vld [vmem:[%s1569 + $0x18] sm:$0xf]
        %v1577 = vunpack.c.l.b16 %v1532
        %v1578 = vunpack.c.l.b16 %v1536
        %v1579 = vunpack.c.l.b16 %v1540
        %v1580 = vunpack.c.l.b16 %v1544
        %v1581 = vunpack.c.l.b16 %v1548
        %v1582 = vunpack.c.l.b16 %v1552
        %v1583 = vunpack.c.l.b16 %v1556
        %v1584 = vunpack.c.l.b16 %v1560
        %v1585 = vpack.c.b16 %v1578, %v1577
        %v1586 = vpack.c.b16 %v1580, %v1579
        %v1587 = vpack.c.b16 %v1582, %v1581
        %v1588 = vpack.c.b16 %v1584, %v1583
        %v1596 = vunpack.c.l.b16 %v1570
        %v1597 = vunpack.c.l.b16 %v1571
        %v1598 = vunpack.c.l.b16 %v1572
        %v1599 = vunpack.c.l.b16 %v1573
        %v1600 = vunpack.c.l.b16 %v1574
        %v1601 = vunpack.c.l.b16 %v1575
        %v1602 = vunpack.c.l.b16 %v1576
        %v1603 = vpack.c.b16 %v1597, %v1596
        %v1604 = vpack.c.b16 %v1599, %v1598
        %v1605 = vpack.c.b16 %v1601, %v1600
        %v1606 = vpack.c.b16 %v1602, %v1602
        %v1611 = vsel %vm361, %v1585, 0
        %v1614 = vsel %vm361, %v1586, 0
        %v1617 = vsel %vm361, %v1587, 0
        %v1620 = vsel %vm361, %v1588, 0
        %v1623 = vsel %vm374, %v1606, 0
        %1625 = vmatprep.subr.bf16.mxu0 0
        %1626 = vmatpush1.bf16.msra.mxu0 %v1603
        %1627 = vmatprep.subr.bf16.mxu0 0
        %1628 = vmatpush1.bf16.msra.mxu0 %v1604
        %1629 = vmatprep.subr.bf16.mxu0 0
        %1630 = vmatpush1.bf16.msra.mxu0 %v1605
        %1631 = vmatprep.subr.bf16.mxu0 0
        %1632 = vmatpush1.bf16.msra.mxu0 %v1623
        %1633 = vmatprep.subr.bf16.mxu0 0
        %1634 = vmatpush1.bf16.msra.mxu0 0
        %1635 = vmatprep.subr.bf16.mxu0 0
        %1636 = vmatpush1.bf16.msra.mxu0 0
        %1637 = vmatprep.subr.bf16.mxu0 0
        %1638 = vmatpush1.bf16.msra.mxu0 0
        %1639 = vmatprep.subr.bf16.mxu0 0
        %1640 = vmatpush1.bf16.msra.mxu0 0
        %1641 = vmatprep.subr.bf16.mxu0 0
        %1642 = vmatpush1.bf16.msra.mxu0 0
        %1643 = vmatprep.subr.bf16.mxu0 0
        %1644 = vmatpush1.bf16.msra.mxu0 0
        %1645 = vmatprep.subr.bf16.mxu0 0
        %1646 = vmatpush1.bf16.msra.mxu0 0
        %1647 = vmatprep.subr.bf16.mxu0 0
        %1648 = vmatpush1.bf16.msra.mxu0 0
        %1649 = vmatprep.subr.bf16.mxu0 0
        %1650 = vmatpush1.bf16.msra.mxu0 0
        %1651 = vmatprep.subr.bf16.mxu0 0
        %1652 = vmatpush1.bf16.msra.mxu0 0
        %1653 = vmatprep.subr.bf16.mxu0 0
        %1654 = vmatpush1.bf16.msra.mxu0 0
        %1655 = vmatprep.subr.bf16.mxu0 0
        %1656 = vmatpush1.bf16.msra.mxu0 0
        %1657 = vmatprep.mubr.bf16.mxu0 0
        %1658 = vmatmul.mubr.bf16.gmra.mrb[0].mxu0 %v1611
        %v1659 = vpop.f32.mrb[0].mxu0
        %v1660 = vadd.f32 0.0, %v1659
        %v1661 = vpop.f32.mrb[0].mxu0
        %v1662 = vpop.f32.mrb[0].mxu0
        %v1663 = vadd.f32 0.0, %v1662
        %v1664 = vpop.f32.mrb[0].mxu0
        %1665 = vmatprep.mubr.bf16.mxu0 0
        %1666 = vmatmul.mubr.bf16.gmra.mrb[0].mxu0 %v1614
        %v1667 = vpop.f32.mrb[0].mxu0
        %v1668 = vadd.f32 0.0, %v1667
        %v1669 = vpop.f32.mrb[0].mxu0
        %v1670 = vpop.f32.mrb[0].mxu0
        %v1671 = vadd.f32 0.0, %v1670
        %v1672 = vpop.f32.mrb[0].mxu0
        %1673 = vmatprep.mubr.bf16.mxu0 0
        %1674 = vmatmul.mubr.bf16.gmra.mrb[0].mxu0 %v1617
        %v1675 = vpop.f32.mrb[0].mxu0
        %v1676 = vadd.f32 0.0, %v1675
        %v1677 = vpop.f32.mrb[0].mxu0
        %v1678 = vpop.f32.mrb[0].mxu0
        %v1679 = vadd.f32 0.0, %v1678
        %v1680 = vpop.f32.mrb[0].mxu0
        %1681 = vmatprep.mubr.bf16.mxu0 0
        %1682 = vmatmul.mubr.bf16.gmra.mrb[0].mxu0 %v1620
        %v1683 = vpop.f32.mrb[0].mxu0
        %v1684 = vadd.f32 0.0, %v1683
        %v1685 = vpop.f32.mrb[0].mxu0
        %v1686 = vpop.f32.mrb[0].mxu0
        %v1687 = vadd.f32 0.0, %v1686
        %v1688 = vpop.f32.mrb[0].mxu0
        %1689 = vdwg.mxu0
        %v1690 = vadd.f32 %v1561, %v1660
        %v1691 = vadd.f32 %v1562, %v1663
        %v1692 = vadd.f32 %v1563, %v1668
        %v1693 = vadd.f32 %v1564, %v1671
        %v1694 = vadd.f32 %v1565, %v1676
        %v1695 = vadd.f32 %v1566, %v1679
        %v1696 = vadd.f32 %v1567, %v1684
        %v1697 = vadd.f32 %v1568, %v1687
        %1698 = vst.msk [vmem:[#allocation2] sm:$0xff] %vm232, %v1690
        %1699 = vst.msk [vmem:[#allocation2 + $0x8] sm:$0xff] %vm232, %v1691
        %1700 = vst.msk [vmem:[#allocation2 + $0x10] sm:$0xff] %vm232, %v1692
        %1701 = vst.msk [vmem:[#allocation2 + $0x18] sm:$0xff] %vm232, %v1693
        %1702 = vst.msk [vmem:[#allocation2 + $0x20] sm:$0xff] %vm232, %v1694
        %1703 = vst.msk [vmem:[#allocation2 + $0x28] sm:$0xff] %vm232, %v1695
        %1704 = vst.msk [vmem:[#allocation2 + $0x30] sm:$0xff] %vm232, %v1696
        %1705 = vst.msk [vmem:[#allocation2 + $0x38] sm:$0xff] %vm232, %v1697
        %s1706 = sadd.s32 %s241, 4
        %s1707 = smul.u32 %s1706, 2
        %s1708 = smul.addr %s1707, 4
        %s1709 = scalar_lea.vmem %s199, %s1708 [#allocation3]
        %v1710 = vld [vmem:[%s1709] sm:$0xe]
        %v1711 = vld [vmem:[%s1709 + $0x4] sm:$0x1]
        %v1712 = vld [vmem:[%s1709 + $0x8] sm:$0xe]
        %v1713 = vld [vmem:[%s1709 + $0xc] sm:$0x1]
        %v1714 = vld [vmem:[%s1709 + $0x10] sm:$0xe]
        %v1715 = vld [vmem:[%s1709 + $0x14] sm:$0x1]
        %v1716 = vld [vmem:[%s1709 + $0x18] sm:$0xe]
        %v1717 = vld [vmem:[%s1709 + $0x1c] sm:$0x1]
        %v1718 = vld [vmem:[%s1709 + $0x20] sm:$0xe]
        %v1719 = vld [vmem:[%s1709 + $0x24] sm:$0x1]
        %v1720 = vld [vmem:[%s1709 + $0x28] sm:$0xe]
        %v1721 = vld [vmem:[%s1709 + $0x2c] sm:$0x1]
        %v1722 = vld [vmem:[%s1709 + $0x30] sm:$0xe]
        %v1723 = vld [vmem:[%s1709 + $0x34] sm:$0x1]
        %v1724 = vld [vmem:[%s1709 + $0x38] sm:$0xe]
        %v1725 = vld [vmem:[%s1709 + $0x3c] sm:$0x1]
        %v1742 = vrot.slane %v1710, 5
        %v1743 = vrot.slane %v1742, 4
        %v1744 = vrot.slane %v1711, 5
        %v1745 = vsel %vm280, %v1743, %v1744
        %v1746 = vrot.slane %v1712, 5
        %v1747 = vrot.slane %v1746, 4
        %v1748 = vrot.slane %v1713, 5
        %v1749 = vsel %vm280, %v1747, %v1748
        %v1750 = vrot.slane %v1714, 5
        %v1751 = vrot.slane %v1750, 4
        %v1752 = vrot.slane %v1715, 5
        %v1753 = vsel %vm280, %v1751, %v1752
        %v1754 = vrot.slane %v1716, 5
        %v1755 = vrot.slane %v1754, 4
        %v1756 = vrot.slane %v1717, 5
        %v1757 = vsel %vm280, %v1755, %v1756
        %v1758 = vrot.slane %v1718, 5
        %v1759 = vrot.slane %v1758, 4
        %v1760 = vrot.slane %v1719, 5
        %v1761 = vsel %vm280, %v1759, %v1760
        %v1762 = vrot.slane %v1720, 5
        %v1763 = vrot.slane %v1762, 4
        %v1764 = vrot.slane %v1721, 5
        %v1765 = vsel %vm280, %v1763, %v1764
        %v1766 = vrot.slane %v1722, 5
        %v1767 = vrot.slane %v1766, 4
        %v1768 = vrot.slane %v1723, 5
        %v1769 = vsel %vm280, %v1767, %v1768
        %v1770 = vrot.slane %v1724, 5
        %v1771 = vrot.slane %v1770, 4
        %v1772 = vrot.slane %v1725, 5
        %v1773 = vsel %vm280, %v1771, %v1772
        %v1774 = vld [vmem:[#allocation2] sm:$0xff]
        %v1775 = vld [vmem:[#allocation2 + $0x8] sm:$0xff]
        %v1776 = vld [vmem:[#allocation2 + $0x10] sm:$0xff]
        %v1777 = vld [vmem:[#allocation2 + $0x18] sm:$0xff]
        %v1778 = vld [vmem:[#allocation2 + $0x20] sm:$0xff]
        %v1779 = vld [vmem:[#allocation2 + $0x28] sm:$0xff]
        %v1780 = vld [vmem:[#allocation2 + $0x30] sm:$0xff]
        %v1781 = vld [vmem:[#allocation2 + $0x38] sm:$0xff]
        %s1782 = scalar_lea.vmem [#allocation6], 168
        %v1783 = vld [vmem:[%s1782] sm:$0xf]
        %v1784 = vld [vmem:[%s1782 + $0x4] sm:$0xf]
        %v1785 = vld [vmem:[%s1782 + $0x8] sm:$0xf]
        %v1786 = vld [vmem:[%s1782 + $0xc] sm:$0xf]
        %v1787 = vld [vmem:[%s1782 + $0x10] sm:$0xf]
        %v1788 = vld [vmem:[%s1782 + $0x14] sm:$0xf]
        %v1789 = vld [vmem:[%s1782 + $0x18] sm:$0xf]
        %v1790 = vunpack.c.l.b16 %v1745
        %v1791 = vunpack.c.l.b16 %v1749
        %v1792 = vunpack.c.l.b16 %v1753
        %v1793 = vunpack.c.l.b16 %v1757
        %v1794 = vunpack.c.l.b16 %v1761
        %v1795 = vunpack.c.l.b16 %v1765
        %v1796 = vunpack.c.l.b16 %v1769
        %v1797 = vunpack.c.l.b16 %v1773
        %v1798 = vpack.c.b16 %v1791, %v1790
        %v1799 = vpack.c.b16 %v1793, %v1792
        %v1800 = vpack.c.b16 %v1795, %v1794
        %v1801 = vpack.c.b16 %v1797, %v1796
        %v1809 = vunpack.c.l.b16 %v1783
        %v1810 = vunpack.c.l.b16 %v1784
        %v1811 = vunpack.c.l.b16 %v1785
        %v1812 = vunpack.c.l.b16 %v1786
        %v1813 = vunpack.c.l.b16 %v1787
        %v1814 = vunpack.c.l.b16 %v1788
        %v1815 = vunpack.c.l.b16 %v1789
        %v1816 = vpack.c.b16 %v1810, %v1809
        %v1817 = vpack.c.b16 %v1812, %v1811
        %v1818 = vpack.c.b16 %v1814, %v1813
        %v1819 = vpack.c.b16 %v1815, %v1815
        %v1824 = vsel %vm361, %v1798, 0
        %v1827 = vsel %vm361, %v1799, 0
        %v1830 = vsel %vm361, %v1800, 0
        %v1833 = vsel %vm361, %v1801, 0
        %v1836 = vsel %vm374, %v1819, 0
        %1838 = vmatprep.subr.bf16.mxu0 0
        %1839 = vmatpush1.bf16.msra.mxu0 %v1816
        %1840 = vmatprep.subr.bf16.mxu0 0
        %1841 = vmatpush1.bf16.msra.mxu0 %v1817
        %1842 = vmatprep.subr.bf16.mxu0 0
        %1843 = vmatpush1.bf16.msra.mxu0 %v1818
        %1844 = vmatprep.subr.bf16.mxu0 0
        %1845 = vmatpush1.bf16.msra.mxu0 %v1836
        %1846 = vmatprep.subr.bf16.mxu0 0
        %1847 = vmatpush1.bf16.msra.mxu0 0
        %1848 = vmatprep.subr.bf16.mxu0 0
        %1849 = vmatpush1.bf16.msra.mxu0 0
        %1850 = vmatprep.subr.bf16.mxu0 0
        %1851 = vmatpush1.bf16.msra.mxu0 0
        %1852 = vmatprep.subr.bf16.mxu0 0
        %1853 = vmatpush1.bf16.msra.mxu0 0
        %1854 = vmatprep.subr.bf16.mxu0 0
        %1855 = vmatpush1.bf16.msra.mxu0 0
        %1856 = vmatprep.subr.bf16.mxu0 0
        %1857 = vmatpush1.bf16.msra.mxu0 0
        %1858 = vmatprep.subr.bf16.mxu0 0
        %1859 = vmatpush1.bf16.msra.mxu0 0
        %1860 = vmatprep.subr.bf16.mxu0 0
        %1861 = vmatpush1.bf16.msra.mxu0 0
        %1862 = vmatprep.subr.bf16.mxu0 0
        %1863 = vmatpush1.bf16.msra.mxu0 0
        %1864 = vmatprep.subr.bf16.mxu0 0
        %1865 = vmatpush1.bf16.msra.mxu0 0
        %1866 = vmatprep.subr.bf16.mxu0 0
        %1867 = vmatpush1.bf16.msra.mxu0 0
        %1868 = vmatprep.subr.bf16.mxu0 0
        %1869 = vmatpush1.bf16.msra.mxu0 0
        %1870 = vmatprep.mubr.bf16.mxu0 0
        %1871 = vmatmul.mubr.bf16.gmra.mrb[0].mxu0 %v1824
        %v1872 = vpop.f32.mrb[0].mxu0
        %v1873 = vadd.f32 0.0, %v1872
        %v1874 = vpop.f32.mrb[0].mxu0
        %v1875 = vpop.f32.mrb[0].mxu0
        %v1876 = vadd.f32 0.0, %v1875
        %v1877 = vpop.f32.mrb[0].mxu0
        %1878 = vmatprep.mubr.bf16.mxu0 0
        %1879 = vmatmul.mubr.bf16.gmra.mrb[0].mxu0 %v1827
        %v1880 = vpop.f32.mrb[0].mxu0
        %v1881 = vadd.f32 0.0, %v1880
        %v1882 = vpop.f32.mrb[0].mxu0
        %v1883 = vpop.f32.mrb[0].mxu0
        %v1884 = vadd.f32 0.0, %v1883
        %v1885 = vpop.f32.mrb[0].mxu0
        %1886 = vmatprep.mubr.bf16.mxu0 0
        %1887 = vmatmul.mubr.bf16.gmra.mrb[0].mxu0 %v1830
        %v1888 = vpop.f32.mrb[0].mxu0
        %v1889 = vadd.f32 0.0, %v1888
        %v1890 = vpop.f32.mrb[0].mxu0
        %v1891 = vpop.f32.mrb[0].mxu0
        %v1892 = vadd.f32 0.0, %v1891
        %v1893 = vpop.f32.mrb[0].mxu0
        %1894 = vmatprep.mubr.bf16.mxu0 0
        %1895 = vmatmul.mubr.bf16.gmra.mrb[0].mxu0 %v1833
        %v1896 = vpop.f32.mrb[0].mxu0
        %v1897 = vadd.f32 0.0, %v1896
        %v1898 = vpop.f32.mrb[0].mxu0
        %v1899 = vpop.f32.mrb[0].mxu0
        %v1900 = vadd.f32 0.0, %v1899
        %v1901 = vpop.f32.mrb[0].mxu0
        %1902 = vdwg.mxu0
        %v1903 = vadd.f32 %v1774, %v1873
        %v1904 = vadd.f32 %v1775, %v1876
        %v1905 = vadd.f32 %v1776, %v1881
        %v1906 = vadd.f32 %v1777, %v1884
        %v1907 = vadd.f32 %v1778, %v1889
        %v1908 = vadd.f32 %v1779, %v1892
        %v1909 = vadd.f32 %v1780, %v1897
        %v1910 = vadd.f32 %v1781, %v1900
        %1911 = vst.msk [vmem:[#allocation2] sm:$0xff] %vm232, %v1903
        %1912 = vst.msk [vmem:[#allocation2 + $0x8] sm:$0xff] %vm232, %v1904
        %1913 = vst.msk [vmem:[#allocation2 + $0x10] sm:$0xff] %vm232, %v1905
        %1914 = vst.msk [vmem:[#allocation2 + $0x18] sm:$0xff] %vm232, %v1906
        %1915 = vst.msk [vmem:[#allocation2 + $0x20] sm:$0xff] %vm232, %v1907
        %1916 = vst.msk [vmem:[#allocation2 + $0x28] sm:$0xff] %vm232, %v1908
        %1917 = vst.msk [vmem:[#allocation2 + $0x30] sm:$0xff] %vm232, %v1909
        %1918 = vst.msk [vmem:[#allocation2 + $0x38] sm:$0xff] %vm232, %v1910
        %v1919 = vld [vmem:[%s1709] sm:$0xe]
        %v1920 = vld [vmem:[%s1709 + $0x4] sm:$0x3]
        %v1921 = vld [vmem:[%s1709 + $0x8] sm:$0xe]
        %v1922 = vld [vmem:[%s1709 + $0xc] sm:$0x3]
        %v1923 = vld [vmem:[%s1709 + $0x10] sm:$0xe]
        %v1924 = vld [vmem:[%s1709 + $0x14] sm:$0x3]
        %v1925 = vld [vmem:[%s1709 + $0x18] sm:$0xe]
        %v1926 = vld [vmem:[%s1709 + $0x1c] sm:$0x3]
        %v1927 = vld [vmem:[%s1709 + $0x20] sm:$0xe]
        %v1928 = vld [vmem:[%s1709 + $0x24] sm:$0x3]
        %v1929 = vld [vmem:[%s1709 + $0x28] sm:$0xe]
        %v1930 = vld [vmem:[%s1709 + $0x2c] sm:$0x3]
        %v1931 = vld [vmem:[%s1709 + $0x30] sm:$0xe]
        %v1932 = vld [vmem:[%s1709 + $0x34] sm:$0x3]
        %v1933 = vld [vmem:[%s1709 + $0x38] sm:$0xe]
        %v1934 = vld [vmem:[%s1709 + $0x3c] sm:$0x3]
        %v1936 = vshrl.u32 %v1919, 16
        %v1938 = vrot.slane %v1936, 5
        %v1939 = vshll.u32 %v1919, 16
        %v1941 = vrot.slane %v1939, 6
        %v1942 = vor.u32 %v1938, %v1941
        %v1943 = vrot.slane %v1942, 4
        %v1945 = vshrl.u32 %v1920, 16
        %v1947 = vrot.slane %v1945, 5
        %v1948 = vshll.u32 %v1920, 16
        %v1950 = vrot.slane %v1948, 6
        %v1951 = vor.u32 %v1947, %v1950
        %v1952 = vsel %vm477, %v1943, %v1951
        %v1954 = vshrl.u32 %v1921, 16
        %v1956 = vrot.slane %v1954, 5
        %v1957 = vshll.u32 %v1921, 16
        %v1959 = vrot.slane %v1957, 6
        %v1960 = vor.u32 %v1956, %v1959
        %v1961 = vrot.slane %v1960, 4
        %v1963 = vshrl.u32 %v1922, 16
        %v1965 = vrot.slane %v1963, 5
        %v1966 = vshll.u32 %v1922, 16
        %v1968 = vrot.slane %v1966, 6
        %v1969 = vor.u32 %v1965, %v1968
        %v1970 = vsel %vm477, %v1961, %v1969
        %v1972 = vshrl.u32 %v1923, 16
        %v1974 = vrot.slane %v1972, 5
        %v1975 = vshll.u32 %v1923, 16
        %v1977 = vrot.slane %v1975, 6
        %v1978 = vor.u32 %v1974, %v1977
        %v1979 = vrot.slane %v1978, 4
        %v1981 = vshrl.u32 %v1924, 16
        %v1983 = vrot.slane %v1981, 5
        %v1984 = vshll.u32 %v1924, 16
        %v1986 = vrot.slane %v1984, 6
        %v1987 = vor.u32 %v1983, %v1986
        %v1988 = vsel %vm477, %v1979, %v1987
        %v1990 = vshrl.u32 %v1925, 16
        %v1992 = vrot.slane %v1990, 5
        %v1993 = vshll.u32 %v1925, 16
        %v1995 = vrot.slane %v1993, 6
        %v1996 = vor.u32 %v1992, %v1995
        %v1997 = vrot.slane %v1996, 4
        %v1999 = vshrl.u32 %v1926, 16
        %v2001 = vrot.slane %v1999, 5
        %v2002 = vshll.u32 %v1926, 16
        %v2004 = vrot.slane %v2002, 6
        %v2005 = vor.u32 %v2001, %v2004
        %v2006 = vsel %vm477, %v1997, %v2005
        %v2008 = vshrl.u32 %v1927, 16
        %v2010 = vrot.slane %v2008, 5
        %v2011 = vshll.u32 %v1927, 16
        %v2013 = vrot.slane %v2011, 6
        %v2014 = vor.u32 %v2010, %v2013
        %v2015 = vrot.slane %v2014, 4
        %v2017 = vshrl.u32 %v1928, 16
        %v2019 = vrot.slane %v2017, 5
        %v2020 = vshll.u32 %v1928, 16
        %v2022 = vrot.slane %v2020, 6
        %v2023 = vor.u32 %v2019, %v2022
        %v2024 = vsel %vm477, %v2015, %v2023
        %v2026 = vshrl.u32 %v1929, 16
        %v2028 = vrot.slane %v2026, 5
        %v2029 = vshll.u32 %v1929, 16
        %v2031 = vrot.slane %v2029, 6
        %v2032 = vor.u32 %v2028, %v2031
        %v2033 = vrot.slane %v2032, 4
        %v2035 = vshrl.u32 %v1930, 16
        %v2037 = vrot.slane %v2035, 5
        %v2038 = vshll.u32 %v1930, 16
        %v2040 = vrot.slane %v2038, 6
        %v2041 = vor.u32 %v2037, %v2040
        %v2042 = vsel %vm477, %v2033, %v2041
        %v2044 = vshrl.u32 %v1931, 16
        %v2046 = vrot.slane %v2044, 5
        %v2047 = vshll.u32 %v1931, 16
        %v2049 = vrot.slane %v2047, 6
        %v2050 = vor.u32 %v2046, %v2049
        %v2051 = vrot.slane %v2050, 4
        %v2053 = vshrl.u32 %v1932, 16
        %v2055 = vrot.slane %v2053, 5
        %v2056 = vshll.u32 %v1932, 16
        %v2058 = vrot.slane %v2056, 6
        %v2059 = vor.u32 %v2055, %v2058
        %v2060 = vsel %vm477, %v2051, %v2059
        %v2062 = vshrl.u32 %v1933, 16
        %v2064 = vrot.slane %v2062, 5
        %v2065 = vshll.u32 %v1933, 16
        %v2067 = vrot.slane %v2065, 6
        %v2068 = vor.u32 %v2064, %v2067
        %v2069 = vrot.slane %v2068, 4
        %v2071 = vshrl.u32 %v1934, 16
        %v2073 = vrot.slane %v2071, 5
        %v2074 = vshll.u32 %v1934, 16
        %v2076 = vrot.slane %v2074, 6
        %v2077 = vor.u32 %v2073, %v2076
        %v2078 = vsel %vm477, %v2069, %v2077
        %v2079 = vld [vmem:[#allocation2] sm:$0xff]
        %v2080 = vld [vmem:[#allocation2 + $0x8] sm:$0xff]
        %v2081 = vld [vmem:[#allocation2 + $0x10] sm:$0xff]
        %v2082 = vld [vmem:[#allocation2 + $0x18] sm:$0xff]
        %v2083 = vld [vmem:[#allocation2 + $0x20] sm:$0xff]
        %v2084 = vld [vmem:[#allocation2 + $0x28] sm:$0xff]
        %v2085 = vld [vmem:[#allocation2 + $0x30] sm:$0xff]
        %v2086 = vld [vmem:[#allocation2 + $0x38] sm:$0xff]
        %s2087 = scalar_lea.vmem [#allocation6], 196
        %v2088 = vld [vmem:[%s2087] sm:$0xf]
        %v2089 = vld [vmem:[%s2087 + $0x4] sm:$0xf]
        %v2090 = vld [vmem:[%s2087 + $0x8] sm:$0xf]
        %v2091 = vld [vmem:[%s2087 + $0xc] sm:$0xf]
        %v2092 = vld [vmem:[%s2087 + $0x10] sm:$0xf]
        %v2093 = vld [vmem:[%s2087 + $0x14] sm:$0xf]
        %v2094 = vld [vmem:[%s2087 + $0x18] sm:$0xf]
        %v2095 = vunpack.c.l.b16 %v1952
        %v2096 = vunpack.c.l.b16 %v1970
        %v2097 = vunpack.c.l.b16 %v1988
        %v2098 = vunpack.c.l.b16 %v2006
        %v2099 = vunpack.c.l.b16 %v2024
        %v2100 = vunpack.c.l.b16 %v2042
        %v2101 = vunpack.c.l.b16 %v2060
        %v2102 = vunpack.c.l.b16 %v2078
        %v2103 = vpack.c.b16 %v2096, %v2095
        %v2104 = vpack.c.b16 %v2098, %v2097
        %v2105 = vpack.c.b16 %v2100, %v2099
        %v2106 = vpack.c.b16 %v2102, %v2101
        %v2114 = vunpack.c.l.b16 %v2088
        %v2115 = vunpack.c.l.b16 %v2089
        %v2116 = vunpack.c.l.b16 %v2090
        %v2117 = vunpack.c.l.b16 %v2091
        %v2118 = vunpack.c.l.b16 %v2092
        %v2119 = vunpack.c.l.b16 %v2093
        %v2120 = vunpack.c.l.b16 %v2094
        %v2121 = vpack.c.b16 %v2115, %v2114
        %v2122 = vpack.c.b16 %v2117, %v2116
        %v2123 = vpack.c.b16 %v2119, %v2118
        %v2124 = vpack.c.b16 %v2120, %v2120
        %v2129 = vsel %vm361, %v2103, 0
        %v2132 = vsel %vm361, %v2104, 0
        %v2135 = vsel %vm361, %v2105, 0
        %v2138 = vsel %vm361, %v2106, 0
        %v2141 = vsel %vm374, %v2124, 0
        %2143 = vmatprep.subr.bf16.mxu0 0
        %2144 = vmatpush1.bf16.msra.mxu0 %v2121
        %2145 = vmatprep.subr.bf16.mxu0 0
        %2146 = vmatpush1.bf16.msra.mxu0 %v2122
        %2147 = vmatprep.subr.bf16.mxu0 0
        %2148 = vmatpush1.bf16.msra.mxu0 %v2123
        %2149 = vmatprep.subr.bf16.mxu0 0
        %2150 = vmatpush1.bf16.msra.mxu0 %v2141
        %2151 = vmatprep.subr.bf16.mxu0 0
        %2152 = vmatpush1.bf16.msra.mxu0 0
        %2153 = vmatprep.subr.bf16.mxu0 0
        %2154 = vmatpush1.bf16.msra.mxu0 0
        %2155 = vmatprep.subr.bf16.mxu0 0
        %2156 = vmatpush1.bf16.msra.mxu0 0
        %2157 = vmatprep.subr.bf16.mxu0 0
        %2158 = vmatpush1.bf16.msra.mxu0 0
        %2159 = vmatprep.subr.bf16.mxu0 0
        %2160 = vmatpush1.bf16.msra.mxu0 0
        %2161 = vmatprep.subr.bf16.mxu0 0
        %2162 = vmatpush1.bf16.msra.mxu0 0
        %2163 = vmatprep.subr.bf16.mxu0 0
        %2164 = vmatpush1.bf16.msra.mxu0 0
        %2165 = vmatprep.subr.bf16.mxu0 0
        %2166 = vmatpush1.bf16.msra.mxu0 0
        %2167 = vmatprep.subr.bf16.mxu0 0
        %2168 = vmatpush1.bf16.msra.mxu0 0
        %2169 = vmatprep.subr.bf16.mxu0 0
        %2170 = vmatpush1.bf16.msra.mxu0 0
        %2171 = vmatprep.subr.bf16.mxu0 0
        %2172 = vmatpush1.bf16.msra.mxu0 0
        %2173 = vmatprep.subr.bf16.mxu0 0
        %2174 = vmatpush1.bf16.msra.mxu0 0
        %2175 = vmatprep.mubr.bf16.mxu0 0
        %2176 = vmatmul.mubr.bf16.gmra.mrb[0].mxu0 %v2129
        %v2177 = vpop.f32.mrb[0].mxu0
        %v2178 = vadd.f32 0.0, %v2177
        %v2179 = vpop.f32.mrb[0].mxu0
        %v2180 = vpop.f32.mrb[0].mxu0
        %v2181 = vadd.f32 0.0, %v2180
        %v2182 = vpop.f32.mrb[0].mxu0
        %2183 = vmatprep.mubr.bf16.mxu0 0
        %2184 = vmatmul.mubr.bf16.gmra.mrb[0].mxu0 %v2132
        %v2185 = vpop.f32.mrb[0].mxu0
        %v2186 = vadd.f32 0.0, %v2185
        %v2187 = vpop.f32.mrb[0].mxu0
        %v2188 = vpop.f32.mrb[0].mxu0
        %v2189 = vadd.f32 0.0, %v2188
        %v2190 = vpop.f32.mrb[0].mxu0
        %2191 = vmatprep.mubr.bf16.mxu0 0
        %2192 = vmatmul.mubr.bf16.gmra.mrb[0].mxu0 %v2135
        %v2193 = vpop.f32.mrb[0].mxu0
        %v2194 = vadd.f32 0.0, %v2193
        %v2195 = vpop.f32.mrb[0].mxu0
        %v2196 = vpop.f32.mrb[0].mxu0
        %v2197 = vadd.f32 0.0, %v2196
        %v2198 = vpop.f32.mrb[0].mxu0
        %2199 = vmatprep.mubr.bf16.mxu0 0
        %2200 = vmatmul.mubr.bf16.gmra.mrb[0].mxu0 %v2138
        %v2201 = vpop.f32.mrb[0].mxu0
        %v2202 = vadd.f32 0.0, %v2201
        %v2203 = vpop.f32.mrb[0].mxu0
        %v2204 = vpop.f32.mrb[0].mxu0
        %v2205 = vadd.f32 0.0, %v2204
        %v2206 = vpop.f32.mrb[0].mxu0
        %2207 = vdwg.mxu0
        %v2208 = vadd.f32 %v2079, %v2178
        %v2209 = vadd.f32 %v2080, %v2181
        %v2210 = vadd.f32 %v2081, %v2186
        %v2211 = vadd.f32 %v2082, %v2189
        %v2212 = vadd.f32 %v2083, %v2194
        %v2213 = vadd.f32 %v2084, %v2197
        %v2214 = vadd.f32 %v2085, %v2202
        %v2215 = vadd.f32 %v2086, %v2205
        %2216 = vst.msk [vmem:[#allocation2] sm:$0xff] %vm232, %v2208
        %2217 = vst.msk [vmem:[#allocation2 + $0x8] sm:$0xff] %vm232, %v2209
        %2218 = vst.msk [vmem:[#allocation2 + $0x10] sm:$0xff] %vm232, %v2210
        %2219 = vst.msk [vmem:[#allocation2 + $0x18] sm:$0xff] %vm232, %v2211
        %2220 = vst.msk [vmem:[#allocation2 + $0x20] sm:$0xff] %vm232, %v2212
        %2221 = vst.msk [vmem:[#allocation2 + $0x28] sm:$0xff] %vm232, %v2213
        %2222 = vst.msk [vmem:[#allocation2 + $0x30] sm:$0xff] %vm232, %v2214
        %2223 = vst.msk [vmem:[#allocation2 + $0x38] sm:$0xff] %vm232, %v2215
        %v2224 = vld [vmem:[%s1709] sm:$0xc]
        %v2225 = vld [vmem:[%s1709 + $0x4] sm:$0x3]
        %v2226 = vld [vmem:[%s1709 + $0x8] sm:$0xc]
        %v2227 = vld [vmem:[%s1709 + $0xc] sm:$0x3]
        %v2228 = vld [vmem:[%s1709 + $0x10] sm:$0xc]
        %v2229 = vld [vmem:[%s1709 + $0x14] sm:$0x3]
        %v2230 = vld [vmem:[%s1709 + $0x18] sm:$0xc]
        %v2231 = vld [vmem:[%s1709 + $0x1c] sm:$0x3]
        %v2232 = vld [vmem:[%s1709 + $0x20] sm:$0xc]
        %v2233 = vld [vmem:[%s1709 + $0x24] sm:$0x3]
        %v2234 = vld [vmem:[%s1709 + $0x28] sm:$0xc]
        %v2235 = vld [vmem:[%s1709 + $0x2c] sm:$0x3]
        %v2236 = vld [vmem:[%s1709 + $0x30] sm:$0xc]
        %v2237 = vld [vmem:[%s1709 + $0x34] sm:$0x3]
        %v2238 = vld [vmem:[%s1709 + $0x38] sm:$0xc]
        %v2239 = vld [vmem:[%s1709 + $0x3c] sm:$0x3]
        %v2256 = vrot.slane %v2224, 6
        %v2257 = vrot.slane %v2256, 4
        %v2258 = vrot.slane %v2225, 6
        %v2259 = vsel %vm801, %v2257, %v2258
        %v2260 = vrot.slane %v2226, 6
        %v2261 = vrot.slane %v2260, 4
        %v2262 = vrot.slane %v2227, 6
        %v2263 = vsel %vm801, %v2261, %v2262
        %v2264 = vrot.slane %v2228, 6
        %v2265 = vrot.slane %v2264, 4
        %v2266 = vrot.slane %v2229, 6
        %v2267 = vsel %vm801, %v2265, %v2266
        %v2268 = vrot.slane %v2230, 6
        %v2269 = vrot.slane %v2268, 4
        %v2270 = vrot.slane %v2231, 6
        %v2271 = vsel %vm801, %v2269, %v2270
        %v2272 = vrot.slane %v2232, 6
        %v2273 = vrot.slane %v2272, 4
        %v2274 = vrot.slane %v2233, 6
        %v2275 = vsel %vm801, %v2273, %v2274
        %v2276 = vrot.slane %v2234, 6
        %v2277 = vrot.slane %v2276, 4
        %v2278 = vrot.slane %v2235, 6
        %v2279 = vsel %vm801, %v2277, %v2278
        %v2280 = vrot.slane %v2236, 6
        %v2281 = vrot.slane %v2280, 4
        %v2282 = vrot.slane %v2237, 6
        %v2283 = vsel %vm801, %v2281, %v2282
        %v2284 = vrot.slane %v2238, 6
        %v2285 = vrot.slane %v2284, 4
        %v2286 = vrot.slane %v2239, 6
        %v2287 = vsel %vm801, %v2285, %v2286
        %v2288 = vld [vmem:[#allocation2] sm:$0xff]
        %v2289 = vld [vmem:[#allocation2 + $0x8] sm:$0xff]
        %v2290 = vld [vmem:[#allocation2 + $0x10] sm:$0xff]
        %v2291 = vld [vmem:[#allocation2 + $0x18] sm:$0xff]
        %v2292 = vld [vmem:[#allocation2 + $0x20] sm:$0xff]
        %v2293 = vld [vmem:[#allocation2 + $0x28] sm:$0xff]
        %v2294 = vld [vmem:[#allocation2 + $0x30] sm:$0xff]
        %v2295 = vld [vmem:[#allocation2 + $0x38] sm:$0xff]
        %s2296 = scalar_lea.vmem [#allocation6], 224
        %v2297 = vld [vmem:[%s2296] sm:$0xf]
        %v2298 = vld [vmem:[%s2296 + $0x4] sm:$0xf]
        %v2299 = vld [vmem:[%s2296 + $0x8] sm:$0xf]
        %v2300 = vld [vmem:[%s2296 + $0xc] sm:$0xf]
        %v2301 = vld [vmem:[%s2296 + $0x10] sm:$0xf]
        %v2302 = vld [vmem:[%s2296 + $0x14] sm:$0xf]
        %v2303 = vld [vmem:[%s2296 + $0x18] sm:$0xf]
        %v2304 = vunpack.c.l.b16 %v2259
        %v2305 = vunpack.c.l.b16 %v2263
        %v2306 = vunpack.c.l.b16 %v2267
        %v2307 = vunpack.c.l.b16 %v2271
        %v2308 = vunpack.c.l.b16 %v2275
        %v2309 = vunpack.c.l.b16 %v2279
        %v2310 = vunpack.c.l.b16 %v2283
        %v2311 = vunpack.c.l.b16 %v2287
        %v2312 = vpack.c.b16 %v2305, %v2304
        %v2313 = vpack.c.b16 %v2307, %v2306
        %v2314 = vpack.c.b16 %v2309, %v2308
        %v2315 = vpack.c.b16 %v2311, %v2310
        %v2323 = vunpack.c.l.b16 %v2297
        %v2324 = vunpack.c.l.b16 %v2298
        %v2325 = vunpack.c.l.b16 %v2299
        %v2326 = vunpack.c.l.b16 %v2300
        %v2327 = vunpack.c.l.b16 %v2301
        %v2328 = vunpack.c.l.b16 %v2302
        %v2329 = vunpack.c.l.b16 %v2303
        %v2330 = vpack.c.b16 %v2324, %v2323
        %v2331 = vpack.c.b16 %v2326, %v2325
        %v2332 = vpack.c.b16 %v2328, %v2327
        %v2333 = vpack.c.b16 %v2329, %v2329
        %v2338 = vsel %vm361, %v2312, 0
        %v2341 = vsel %vm361, %v2313, 0
        %v2344 = vsel %vm361, %v2314, 0
        %v2347 = vsel %vm361, %v2315, 0
        %v2350 = vsel %vm374, %v2333, 0
        %2352 = vmatprep.subr.bf16.mxu0 0
        %2353 = vmatpush1.bf16.msra.mxu0 %v2330
        %2354 = vmatprep.subr.bf16.mxu0 0
        %2355 = vmatpush1.bf16.msra.mxu0 %v2331
        %2356 = vmatprep.subr.bf16.mxu0 0
        %2357 = vmatpush1.bf16.msra.mxu0 %v2332
        %2358 = vmatprep.subr.bf16.mxu0 0
        %2359 = vmatpush1.bf16.msra.mxu0 %v2350
        %2360 = vmatprep.subr.bf16.mxu0 0
        %2361 = vmatpush1.bf16.msra.mxu0 0
        %2362 = vmatprep.subr.bf16.mxu0 0
        %2363 = vmatpush1.bf16.msra.mxu0 0
        %2364 = vmatprep.subr.bf16.mxu0 0
        %2365 = vmatpush1.bf16.msra.mxu0 0
        %2366 = vmatprep.subr.bf16.mxu0 0
        %2367 = vmatpush1.bf16.msra.mxu0 0
        %2368 = vmatprep.subr.bf16.mxu0 0
        %2369 = vmatpush1.bf16.msra.mxu0 0
        %2370 = vmatprep.subr.bf16.mxu0 0
        %2371 = vmatpush1.bf16.msra.mxu0 0
        %2372 = vmatprep.subr.bf16.mxu0 0
        %2373 = vmatpush1.bf16.msra.mxu0 0
        %2374 = vmatprep.subr.bf16.mxu0 0
        %2375 = vmatpush1.bf16.msra.mxu0 0
        %2376 = vmatprep.subr.bf16.mxu0 0
        %2377 = vmatpush1.bf16.msra.mxu0 0
        %2378 = vmatprep.subr.bf16.mxu0 0
        %2379 = vmatpush1.bf16.msra.mxu0 0
        %2380 = vmatprep.subr.bf16.mxu0 0
        %2381 = vmatpush1.bf16.msra.mxu0 0
        %2382 = vmatprep.subr.bf16.mxu0 0
        %2383 = vmatpush1.bf16.msra.mxu0 0
        %2384 = vmatprep.mubr.bf16.mxu0 0
        %2385 = vmatmul.mubr.bf16.gmra.mrb[0].mxu0 %v2338
        %v2386 = vpop.f32.mrb[0].mxu0
        %v2387 = vadd.f32 0.0, %v2386
        %v2388 = vpop.f32.mrb[0].mxu0
        %v2389 = vpop.f32.mrb[0].mxu0
        %v2390 = vadd.f32 0.0, %v2389
        %v2391 = vpop.f32.mrb[0].mxu0
        %2392 = vmatprep.mubr.bf16.mxu0 0
        %2393 = vmatmul.mubr.bf16.gmra.mrb[0].mxu0 %v2341
        %v2394 = vpop.f32.mrb[0].mxu0
        %v2395 = vadd.f32 0.0, %v2394
        %v2396 = vpop.f32.mrb[0].mxu0
        %v2397 = vpop.f32.mrb[0].mxu0
        %v2398 = vadd.f32 0.0, %v2397
        %v2399 = vpop.f32.mrb[0].mxu0
        %2400 = vmatprep.mubr.bf16.mxu0 0
        %2401 = vmatmul.mubr.bf16.gmra.mrb[0].mxu0 %v2344
        %v2402 = vpop.f32.mrb[0].mxu0
        %v2403 = vadd.f32 0.0, %v2402
        %v2404 = vpop.f32.mrb[0].mxu0
        %v2405 = vpop.f32.mrb[0].mxu0
        %v2406 = vadd.f32 0.0, %v2405
        %v2407 = vpop.f32.mrb[0].mxu0
        %2408 = vmatprep.mubr.bf16.mxu0 0
        %2409 = vmatmul.mubr.bf16.gmra.mrb[0].mxu0 %v2347
        %v2410 = vpop.f32.mrb[0].mxu0
        %v2411 = vadd.f32 0.0, %v2410
        %v2412 = vpop.f32.mrb[0].mxu0
        %v2413 = vpop.f32.mrb[0].mxu0
        %v2414 = vadd.f32 0.0, %v2413
        %v2415 = vpop.f32.mrb[0].mxu0
        %2416 = vdwg.mxu0
        %v2417 = vadd.f32 %v2288, %v2387
        %v2418 = vadd.f32 %v2289, %v2390
        %v2419 = vadd.f32 %v2290, %v2395
        %v2420 = vadd.f32 %v2291, %v2398
        %v2421 = vadd.f32 %v2292, %v2403
        %v2422 = vadd.f32 %v2293, %v2406
        %v2423 = vadd.f32 %v2294, %v2411
        %v2424 = vadd.f32 %v2295, %v2414
        %2425 = vst.msk [vmem:[#allocation2] sm:$0xff] %vm232, %v2417
        %2426 = vst.msk [vmem:[#allocation2 + $0x8] sm:$0xff] %vm232, %v2418
        %2427 = vst.msk [vmem:[#allocation2 + $0x10] sm:$0xff] %vm232, %v2419
        %2428 = vst.msk [vmem:[#allocation2 + $0x18] sm:$0xff] %vm232, %v2420
        %2429 = vst.msk [vmem:[#allocation2 + $0x20] sm:$0xff] %vm232, %v2421
        %2430 = vst.msk [vmem:[#allocation2 + $0x28] sm:$0xff] %vm232, %v2422
        %2431 = vst.msk [vmem:[#allocation2 + $0x30] sm:$0xff] %vm232, %v2423
        %2432 = vst.msk [vmem:[#allocation2 + $0x38] sm:$0xff] %vm232, %v2424
        %s2433 = sadd.s32 %s241, 1
        %s2434 = smul.u32 %s2433, 2
        %s2435 = smul.addr %s2434, 4
        %s2436 = scalar_lea.vmem %s199, %s2435 [#allocation3]
        %v2437 = vld [vmem:[%s2436] sm:$0xf]
        %v2438 = vld [vmem:[%s2436 + $0x4] sm:$0x1]
        %v2439 = vld [vmem:[%s2436 + $0x8] sm:$0xf]
        %v2440 = vld [vmem:[%s2436 + $0xc] sm:$0x1]
        %v2441 = vld [vmem:[%s2436 + $0x10] sm:$0xf]
        %v2442 = vld [vmem:[%s2436 + $0x14] sm:$0x1]
        %v2443 = vld [vmem:[%s2436 + $0x18] sm:$0xf]
        %v2444 = vld [vmem:[%s2436 + $0x1c] sm:$0x1]
        %v2445 = vld [vmem:[%s2436 + $0x20] sm:$0xf]
        %v2446 = vld [vmem:[%s2436 + $0x24] sm:$0x1]
        %v2447 = vld [vmem:[%s2436 + $0x28] sm:$0xf]
        %v2448 = vld [vmem:[%s2436 + $0x2c] sm:$0x1]
        %v2449 = vld [vmem:[%s2436 + $0x30] sm:$0xf]
        %v2450 = vld [vmem:[%s2436 + $0x34] sm:$0x1]
        %v2451 = vld [vmem:[%s2436 + $0x38] sm:$0xf]
        %v2452 = vld [vmem:[%s2436 + $0x3c] sm:$0x1]
        %vm2453 = vsmask.f32 3328
        %vm2454 = vsmask.f32 7440
        %vm2455 = vmor %vm2453, %vm2454
        %v2457 = vshrl.u32 %v2437, 16
        %v2459 = vrot.slane %v2457, 4
        %v2460 = vshll.u32 %v2437, 16
        %v2462 = vrot.slane %v2460, 5
        %v2463 = vor.u32 %v2459, %v2462
        %v2464 = vrot.slane %v2463, 4
        %v2466 = vshll.u32 %v2438, 16
        %v2468 = vrot.slane %v2466, 5
        %v2469 = vsel %vm2455, %v2464, %v2468
        %v2471 = vshrl.u32 %v2439, 16
        %v2473 = vrot.slane %v2471, 4
        %v2474 = vshll.u32 %v2439, 16
        %v2476 = vrot.slane %v2474, 5
        %v2477 = vor.u32 %v2473, %v2476
        %v2478 = vrot.slane %v2477, 4
        %v2480 = vshll.u32 %v2440, 16
        %v2482 = vrot.slane %v2480, 5
        %v2483 = vsel %vm2455, %v2478, %v2482
        %v2485 = vshrl.u32 %v2441, 16
        %v2487 = vrot.slane %v2485, 4
        %v2488 = vshll.u32 %v2441, 16
        %v2490 = vrot.slane %v2488, 5
        %v2491 = vor.u32 %v2487, %v2490
        %v2492 = vrot.slane %v2491, 4
        %v2494 = vshll.u32 %v2442, 16
        %v2496 = vrot.slane %v2494, 5
        %v2497 = vsel %vm2455, %v2492, %v2496
        %v2499 = vshrl.u32 %v2443, 16
        %v2501 = vrot.slane %v2499, 4
        %v2502 = vshll.u32 %v2443, 16
        %v2504 = vrot.slane %v2502, 5
        %v2505 = vor.u32 %v2501, %v2504
        %v2506 = vrot.slane %v2505, 4
        %v2508 = vshll.u32 %v2444, 16
        %v2510 = vrot.slane %v2508, 5
        %v2511 = vsel %vm2455, %v2506, %v2510
        %v2513 = vshrl.u32 %v2445, 16
        %v2515 = vrot.slane %v2513, 4
        %v2516 = vshll.u32 %v2445, 16
        %v2518 = vrot.slane %v2516, 5
        %v2519 = vor.u32 %v2515, %v2518
        %v2520 = vrot.slane %v2519, 4
        %v2522 = vshll.u32 %v2446, 16
        %v2524 = vrot.slane %v2522, 5
        %v2525 = vsel %vm2455, %v2520, %v2524
        %v2527 = vshrl.u32 %v2447, 16
        %v2529 = vrot.slane %v2527, 4
        %v2530 = vshll.u32 %v2447, 16
        %v2532 = vrot.slane %v2530, 5
        %v2533 = vor.u32 %v2529, %v2532
        %v2534 = vrot.slane %v2533, 4
        %v2536 = vshll.u32 %v2448, 16
        %v2538 = vrot.slane %v2536, 5
        %v2539 = vsel %vm2455, %v2534, %v2538
        %v2541 = vshrl.u32 %v2449, 16
        %v2543 = vrot.slane %v2541, 4
        %v2544 = vshll.u32 %v2449, 16
        %v2546 = vrot.slane %v2544, 5
        %v2547 = vor.u32 %v2543, %v2546
        %v2548 = vrot.slane %v2547, 4
        %v2550 = vshll.u32 %v2450, 16
        %v2552 = vrot.slane %v2550, 5
        %v2553 = vsel %vm2455, %v2548, %v2552
        %v2555 = vshrl.u32 %v2451, 16
        %v2557 = vrot.slane %v2555, 4
        %v2558 = vshll.u32 %v2451, 16
        %v2560 = vrot.slane %v2558, 5
        %v2561 = vor.u32 %v2557, %v2560
        %v2562 = vrot.slane %v2561, 4
        %v2564 = vshll.u32 %v2452, 16
        %v2566 = vrot.slane %v2564, 5
        %v2567 = vsel %vm2455, %v2562, %v2566
        %v2568 = vld [vmem:[#allocation2] sm:$0xff]
        %v2569 = vld [vmem:[#allocation2 + $0x8] sm:$0xff]
        %v2570 = vld [vmem:[#allocation2 + $0x10] sm:$0xff]
        %v2571 = vld [vmem:[#allocation2 + $0x18] sm:$0xff]
        %v2572 = vld [vmem:[#allocation2 + $0x20] sm:$0xff]
        %v2573 = vld [vmem:[#allocation2 + $0x28] sm:$0xff]
        %v2574 = vld [vmem:[#allocation2 + $0x30] sm:$0xff]
        %v2575 = vld [vmem:[#allocation2 + $0x38] sm:$0xff]
        %s2576 = scalar_lea.vmem [#allocation6], 252
        %v2577 = vld [vmem:[%s2576] sm:$0xf]
        %v2578 = vld [vmem:[%s2576 + $0x4] sm:$0xf]
        %v2579 = vld [vmem:[%s2576 + $0x8] sm:$0xf]
        %v2580 = vld [vmem:[%s2576 + $0xc] sm:$0xf]
        %v2581 = vld [vmem:[%s2576 + $0x10] sm:$0xf]
        %v2582 = vld [vmem:[%s2576 + $0x14] sm:$0xf]
        %v2583 = vld [vmem:[%s2576 + $0x18] sm:$0xf]
        %v2584 = vunpack.c.l.b16 %v2469
        %v2585 = vunpack.c.l.b16 %v2483
        %v2586 = vunpack.c.l.b16 %v2497
        %v2587 = vunpack.c.l.b16 %v2511
        %v2588 = vunpack.c.l.b16 %v2525
        %v2589 = vunpack.c.l.b16 %v2539
        %v2590 = vunpack.c.l.b16 %v2553
        %v2591 = vunpack.c.l.b16 %v2567
        %v2592 = vpack.c.b16 %v2585, %v2584
        %v2593 = vpack.c.b16 %v2587, %v2586
        %v2594 = vpack.c.b16 %v2589, %v2588
        %v2595 = vpack.c.b16 %v2591, %v2590
        %v2603 = vunpack.c.l.b16 %v2577
        %v2604 = vunpack.c.l.b16 %v2578
        %v2605 = vunpack.c.l.b16 %v2579
        %v2606 = vunpack.c.l.b16 %v2580
        %v2607 = vunpack.c.l.b16 %v2581
        %v2608 = vunpack.c.l.b16 %v2582
        %v2609 = vunpack.c.l.b16 %v2583
        %v2610 = vpack.c.b16 %v2604, %v2603
        %v2611 = vpack.c.b16 %v2606, %v2605
        %v2612 = vpack.c.b16 %v2608, %v2607
        %v2613 = vpack.c.b16 %v2609, %v2609
        %v2618 = vsel %vm361, %v2592, 0
        %v2621 = vsel %vm361, %v2593, 0
        %v2624 = vsel %vm361, %v2594, 0
        %v2627 = vsel %vm361, %v2595, 0
        %v2630 = vsel %vm374, %v2613, 0
        %2632 = vmatprep.subr.bf16.mxu0 0
        %2633 = vmatpush1.bf16.msra.mxu0 %v2610
        %2634 = vmatprep.subr.bf16.mxu0 0
        %2635 = vmatpush1.bf16.msra.mxu0 %v2611
        %2636 = vmatprep.subr.bf16.mxu0 0
        %2637 = vmatpush1.bf16.msra.mxu0 %v2612
        %2638 = vmatprep.subr.bf16.mxu0 0
        %2639 = vmatpush1.bf16.msra.mxu0 %v2630
        %2640 = vmatprep.subr.bf16.mxu0 0
        %2641 = vmatpush1.bf16.msra.mxu0 0
        %2642 = vmatprep.subr.bf16.mxu0 0
        %2643 = vmatpush1.bf16.msra.mxu0 0
        %2644 = vmatprep.subr.bf16.mxu0 0
        %2645 = vmatpush1.bf16.msra.mxu0 0
        %2646 = vmatprep.subr.bf16.mxu0 0
        %2647 = vmatpush1.bf16.msra.mxu0 0
        %2648 = vmatprep.subr.bf16.mxu0 0
        %2649 = vmatpush1.bf16.msra.mxu0 0
        %2650 = vmatprep.subr.bf16.mxu0 0
        %2651 = vmatpush1.bf16.msra.mxu0 0
        %2652 = vmatprep.subr.bf16.mxu0 0
        %2653 = vmatpush1.bf16.msra.mxu0 0
        %2654 = vmatprep.subr.bf16.mxu0 0
        %2655 = vmatpush1.bf16.msra.mxu0 0
        %2656 = vmatprep.subr.bf16.mxu0 0
        %2657 = vmatpush1.bf16.msra.mxu0 0
        %2658 = vmatprep.subr.bf16.mxu0 0
        %2659 = vmatpush1.bf16.msra.mxu0 0
        %2660 = vmatprep.subr.bf16.mxu0 0
        %2661 = vmatpush1.bf16.msra.mxu0 0
        %2662 = vmatprep.subr.bf16.mxu0 0
        %2663 = vmatpush1.bf16.msra.mxu0 0
        %2664 = vmatprep.mubr.bf16.mxu0 0
        %2665 = vmatmul.mubr.bf16.gmra.mrb[0].mxu0 %v2618
        %v2666 = vpop.f32.mrb[0].mxu0
        %v2667 = vadd.f32 0.0, %v2666
        %v2668 = vpop.f32.mrb[0].mxu0
        %v2669 = vpop.f32.mrb[0].mxu0
        %v2670 = vadd.f32 0.0, %v2669
        %v2671 = vpop.f32.mrb[0].mxu0
        %2672 = vmatprep.mubr.bf16.mxu0 0
        %2673 = vmatmul.mubr.bf16.gmra.mrb[0].mxu0 %v2621
        %v2674 = vpop.f32.mrb[0].mxu0
        %v2675 = vadd.f32 0.0, %v2674
        %v2676 = vpop.f32.mrb[0].mxu0
        %v2677 = vpop.f32.mrb[0].mxu0
        %v2678 = vadd.f32 0.0, %v2677
        %v2679 = vpop.f32.mrb[0].mxu0
        %2680 = vmatprep.mubr.bf16.mxu0 0
        %2681 = vmatmul.mubr.bf16.gmra.mrb[0].mxu0 %v2624
        %v2682 = vpop.f32.mrb[0].mxu0
        %v2683 = vadd.f32 0.0, %v2682
        %v2684 = vpop.f32.mrb[0].mxu0
        %v2685 = vpop.f32.mrb[0].mxu0
        %v2686 = vadd.f32 0.0, %v2685
        %v2687 = vpop.f32.mrb[0].mxu0
        %2688 = vmatprep.mubr.bf16.mxu0 0
        %2689 = vmatmul.mubr.bf16.gmra.mrb[0].mxu0 %v2627
        %v2690 = vpop.f32.mrb[0].mxu0
        %v2691 = vadd.f32 0.0, %v2690
        %v2692 = vpop.f32.mrb[0].mxu0
        %v2693 = vpop.f32.mrb[0].mxu0
        %v2694 = vadd.f32 0.0, %v2693
        %v2695 = vpop.f32.mrb[0].mxu0
        %2696 = vdwg.mxu0
        %v2697 = vadd.f32 %v2568, %v2667
        %v2698 = vadd.f32 %v2569, %v2670
        %v2699 = vadd.f32 %v2570, %v2675
        %v2700 = vadd.f32 %v2571, %v2678
        %v2701 = vadd.f32 %v2572, %v2683
        %v2702 = vadd.f32 %v2573, %v2686
        %v2703 = vadd.f32 %v2574, %v2691
        %v2704 = vadd.f32 %v2575, %v2694
        %2705 = vst.msk [vmem:[#allocation2] sm:$0xff] %vm232, %v2697
        %2706 = vst.msk [vmem:[#allocation2 + $0x8] sm:$0xff] %vm232, %v2698
        %2707 = vst.msk [vmem:[#allocation2 + $0x10] sm:$0xff] %vm232, %v2699
        %2708 = vst.msk [vmem:[#allocation2 + $0x18] sm:$0xff] %vm232, %v2700
        %2709 = vst.msk [vmem:[#allocation2 + $0x20] sm:$0xff] %vm232, %v2701
        %2710 = vst.msk [vmem:[#allocation2 + $0x28] sm:$0xff] %vm232, %v2702
        %2711 = vst.msk [vmem:[#allocation2 + $0x30] sm:$0xff] %vm232, %v2703
        %2712 = vst.msk [vmem:[#allocation2 + $0x38] sm:$0xff] %vm232, %v2704
        %v2713 = vld [vmem:[%s2436] sm:$0xe]
        %v2714 = vld [vmem:[%s2436 + $0x4] sm:$0x3]
        %v2715 = vld [vmem:[%s2436 + $0x8] sm:$0xe]
        %v2716 = vld [vmem:[%s2436 + $0xc] sm:$0x3]
        %v2717 = vld [vmem:[%s2436 + $0x10] sm:$0xe]
        %v2718 = vld [vmem:[%s2436 + $0x14] sm:$0x3]
        %v2719 = vld [vmem:[%s2436 + $0x18] sm:$0xe]
        %v2720 = vld [vmem:[%s2436 + $0x1c] sm:$0x3]
        %v2721 = vld [vmem:[%s2436 + $0x20] sm:$0xe]
        %v2722 = vld [vmem:[%s2436 + $0x24] sm:$0x3]
        %v2723 = vld [vmem:[%s2436 + $0x28] sm:$0xe]
        %v2724 = vld [vmem:[%s2436 + $0x2c] sm:$0x3]
        %v2725 = vld [vmem:[%s2436 + $0x30] sm:$0xe]
        %v2726 = vld [vmem:[%s2436 + $0x34] sm:$0x3]
        %v2727 = vld [vmem:[%s2436 + $0x38] sm:$0xe]
        %v2728 = vld [vmem:[%s2436 + $0x3c] sm:$0x3]
        %v2730 = vshrl.u32 %v2713, 16
        %v2732 = vrot.slane %v2730, 5
        %v2733 = vshll.u32 %v2713, 16
        %v2735 = vrot.slane %v2733, 6
        %v2736 = vor.u32 %v2732, %v2735
        %v2737 = vrot.slane %v2736, 4
        %v2739 = vshrl.u32 %v2714, 16
        %v2741 = vrot.slane %v2739, 5
        %v2742 = vshll.u32 %v2714, 16
        %v2744 = vrot.slane %v2742, 6
        %v2745 = vor.u32 %v2741, %v2744
        %v2746 = vsel %vm477, %v2737, %v2745
        %v2748 = vshrl.u32 %v2715, 16
        %v2750 = vrot.slane %v2748, 5
        %v2751 = vshll.u32 %v2715, 16
        %v2753 = vrot.slane %v2751, 6
        %v2754 = vor.u32 %v2750, %v2753
        %v2755 = vrot.slane %v2754, 4
        %v2757 = vshrl.u32 %v2716, 16
        %v2759 = vrot.slane %v2757, 5
        %v2760 = vshll.u32 %v2716, 16
        %v2762 = vrot.slane %v2760, 6
        %v2763 = vor.u32 %v2759, %v2762
        %v2764 = vsel %vm477, %v2755, %v2763
        %v2766 = vshrl.u32 %v2717, 16
        %v2768 = vrot.slane %v2766, 5
        %v2769 = vshll.u32 %v2717, 16
        %v2771 = vrot.slane %v2769, 6
        %v2772 = vor.u32 %v2768, %v2771
        %v2773 = vrot.slane %v2772, 4
        %v2775 = vshrl.u32 %v2718, 16
        %v2777 = vrot.slane %v2775, 5
        %v2778 = vshll.u32 %v2718, 16
        %v2780 = vrot.slane %v2778, 6
        %v2781 = vor.u32 %v2777, %v2780
        %v2782 = vsel %vm477, %v2773, %v2781
        %v2784 = vshrl.u32 %v2719, 16
        %v2786 = vrot.slane %v2784, 5
        %v2787 = vshll.u32 %v2719, 16
        %v2789 = vrot.slane %v2787, 6
        %v2790 = vor.u32 %v2786, %v2789
        %v2791 = vrot.slane %v2790, 4
        %v2793 = vshrl.u32 %v2720, 16
        %v2795 = vrot.slane %v2793, 5
        %v2796 = vshll.u32 %v2720, 16
        %v2798 = vrot.slane %v2796, 6
        %v2799 = vor.u32 %v2795, %v2798
        %v2800 = vsel %vm477, %v2791, %v2799
        %v2802 = vshrl.u32 %v2721, 16
        %v2804 = vrot.slane %v2802, 5
        %v2805 = vshll.u32 %v2721, 16
        %v2807 = vrot.slane %v2805, 6
        %v2808 = vor.u32 %v2804, %v2807
        %v2809 = vrot.slane %v2808, 4
        %v2811 = vshrl.u32 %v2722, 16
        %v2813 = vrot.slane %v2811, 5
        %v2814 = vshll.u32 %v2722, 16
        %v2816 = vrot.slane %v2814, 6
        %v2817 = vor.u32 %v2813, %v2816
        %v2818 = vsel %vm477, %v2809, %v2817
        %v2820 = vshrl.u32 %v2723, 16
        %v2822 = vrot.slane %v2820, 5
        %v2823 = vshll.u32 %v2723, 16
        %v2825 = vrot.slane %v2823, 6
        %v2826 = vor.u32 %v2822, %v2825
        %v2827 = vrot.slane %v2826, 4
        %v2829 = vshrl.u32 %v2724, 16
        %v2831 = vrot.slane %v2829, 5
        %v2832 = vshll.u32 %v2724, 16
        %v2834 = vrot.slane %v2832, 6
        %v2835 = vor.u32 %v2831, %v2834
        %v2836 = vsel %vm477, %v2827, %v2835
        %v2838 = vshrl.u32 %v2725, 16
        %v2840 = vrot.slane %v2838, 5
        %v2841 = vshll.u32 %v2725, 16
        %v2843 = vrot.slane %v2841, 6
        %v2844 = vor.u32 %v2840, %v2843
        %v2845 = vrot.slane %v2844, 4
        %v2847 = vshrl.u32 %v2726, 16
        %v2849 = vrot.slane %v2847, 5
        %v2850 = vshll.u32 %v2726, 16
        %v2852 = vrot.slane %v2850, 6
        %v2853 = vor.u32 %v2849, %v2852
        %v2854 = vsel %vm477, %v2845, %v2853
        %v2856 = vshrl.u32 %v2727, 16
        %v2858 = vrot.slane %v2856, 5
        %v2859 = vshll.u32 %v2727, 16
        %v2861 = vrot.slane %v2859, 6
        %v2862 = vor.u32 %v2858, %v2861
        %v2863 = vrot.slane %v2862, 4
        %v2865 = vshrl.u32 %v2728, 16
        %v2867 = vrot.slane %v2865, 5
        %v2868 = vshll.u32 %v2728, 16
        %v2870 = vrot.slane %v2868, 6
        %v2871 = vor.u32 %v2867, %v2870
        %v2872 = vsel %vm477, %v2863, %v2871
        %v2873 = vld [vmem:[#allocation2] sm:$0xff]
        %v2874 = vld [vmem:[#allocation2 + $0x8] sm:$0xff]
        %v2875 = vld [vmem:[#allocation2 + $0x10] sm:$0xff]
        %v2876 = vld [vmem:[#allocation2 + $0x18] sm:$0xff]
        %v2877 = vld [vmem:[#allocation2 + $0x20] sm:$0xff]
        %v2878 = vld [vmem:[#allocation2 + $0x28] sm:$0xff]
        %v2879 = vld [vmem:[#allocation2 + $0x30] sm:$0xff]
        %v2880 = vld [vmem:[#allocation2 + $0x38] sm:$0xff]
        %s2881 = scalar_lea.vmem [#allocation6], 280
        %v2882 = vld [vmem:[%s2881] sm:$0xf]
        %v2883 = vld [vmem:[%s2881 + $0x4] sm:$0xf]
        %v2884 = vld [vmem:[%s2881 + $0x8] sm:$0xf]
        %v2885 = vld [vmem:[%s2881 + $0xc] sm:$0xf]
        %v2886 = vld [vmem:[%s2881 + $0x10] sm:$0xf]
        %v2887 = vld [vmem:[%s2881 + $0x14] sm:$0xf]
        %v2888 = vld [vmem:[%s2881 + $0x18] sm:$0xf]
        %v2889 = vunpack.c.l.b16 %v2746
        %v2890 = vunpack.c.l.b16 %v2764
        %v2891 = vunpack.c.l.b16 %v2782
        %v2892 = vunpack.c.l.b16 %v2800
        %v2893 = vunpack.c.l.b16 %v2818
        %v2894 = vunpack.c.l.b16 %v2836
        %v2895 = vunpack.c.l.b16 %v2854
        %v2896 = vunpack.c.l.b16 %v2872
        %v2897 = vpack.c.b16 %v2890, %v2889
        %v2898 = vpack.c.b16 %v2892, %v2891
        %v2899 = vpack.c.b16 %v2894, %v2893
        %v2900 = vpack.c.b16 %v2896, %v2895
        %v2908 = vunpack.c.l.b16 %v2882
        %v2909 = vunpack.c.l.b16 %v2883
        %v2910 = vunpack.c.l.b16 %v2884
        %v2911 = vunpack.c.l.b16 %v2885
        %v2912 = vunpack.c.l.b16 %v2886
        %v2913 = vunpack.c.l.b16 %v2887
        %v2914 = vunpack.c.l.b16 %v2888
        %v2915 = vpack.c.b16 %v2909, %v2908
        %v2916 = vpack.c.b16 %v2911, %v2910
        %v2917 = vpack.c.b16 %v2913, %v2912
        %v2918 = vpack.c.b16 %v2914, %v2914
        %v2923 = vsel %vm361, %v2897, 0
        %v2926 = vsel %vm361, %v2898, 0
        %v2929 = vsel %vm361, %v2899, 0
        %v2932 = vsel %vm361, %v2900, 0
        %v2935 = vsel %vm374, %v2918, 0
        %2937 = vmatprep.subr.bf16.mxu0 0
        %2938 = vmatpush1.bf16.msra.mxu0 %v2915
        %2939 = vmatprep.subr.bf16.mxu0 0
        %2940 = vmatpush1.bf16.msra.mxu0 %v2916
        %2941 = vmatprep.subr.bf16.mxu0 0
        %2942 = vmatpush1.bf16.msra.mxu0 %v2917
        %2943 = vmatprep.subr.bf16.mxu0 0
        %2944 = vmatpush1.bf16.msra.mxu0 %v2935
        %2945 = vmatprep.subr.bf16.mxu0 0
        %2946 = vmatpush1.bf16.msra.mxu0 0
        %2947 = vmatprep.subr.bf16.mxu0 0
        %2948 = vmatpush1.bf16.msra.mxu0 0
        %2949 = vmatprep.subr.bf16.mxu0 0
        %2950 = vmatpush1.bf16.msra.mxu0 0
        %2951 = vmatprep.subr.bf16.mxu0 0
        %2952 = vmatpush1.bf16.msra.mxu0 0
        %2953 = vmatprep.subr.bf16.mxu0 0
        %2954 = vmatpush1.bf16.msra.mxu0 0
        %2955 = vmatprep.subr.bf16.mxu0 0
        %2956 = vmatpush1.bf16.msra.mxu0 0
        %2957 = vmatprep.subr.bf16.mxu0 0
        %2958 = vmatpush1.bf16.msra.mxu0 0
        %2959 = vmatprep.subr.bf16.mxu0 0
        %2960 = vmatpush1.bf16.msra.mxu0 0
        %2961 = vmatprep.subr.bf16.mxu0 0
        %2962 = vmatpush1.bf16.msra.mxu0 0
        %2963 = vmatprep.subr.bf16.mxu0 0
        %2964 = vmatpush1.bf16.msra.mxu0 0
        %2965 = vmatprep.subr.bf16.mxu0 0
        %2966 = vmatpush1.bf16.msra.mxu0 0
        %2967 = vmatprep.subr.bf16.mxu0 0
        %2968 = vmatpush1.bf16.msra.mxu0 0
        %2969 = vmatprep.mubr.bf16.mxu0 0
        %2970 = vmatmul.mubr.bf16.gmra.mrb[0].mxu0 %v2923
        %v2971 = vpop.f32.mrb[0].mxu0
        %v2972 = vadd.f32 0.0, %v2971
        %v2973 = vpop.f32.mrb[0].mxu0
        %v2974 = vpop.f32.mrb[0].mxu0
        %v2975 = vadd.f32 0.0, %v2974
        %v2976 = vpop.f32.mrb[0].mxu0
        %2977 = vmatprep.mubr.bf16.mxu0 0
        %2978 = vmatmul.mubr.bf16.gmra.mrb[0].mxu0 %v2926
        %v2979 = vpop.f32.mrb[0].mxu0
        %v2980 = vadd.f32 0.0, %v2979
        %v2981 = vpop.f32.mrb[0].mxu0
        %v2982 = vpop.f32.mrb[0].mxu0
        %v2983 = vadd.f32 0.0, %v2982
        %v2984 = vpop.f32.mrb[0].mxu0
        %2985 = vmatprep.mubr.bf16.mxu0 0
        %2986 = vmatmul.mubr.bf16.gmra.mrb[0].mxu0 %v2929
        %v2987 = vpop.f32.mrb[0].mxu0
        %v2988 = vadd.f32 0.0, %v2987
        %v2989 = vpop.f32.mrb[0].mxu0
        %v2990 = vpop.f32.mrb[0].mxu0
        %v2991 = vadd.f32 0.0, %v2990
        %v2992 = vpop.f32.mrb[0].mxu0
        %2993 = vmatprep.mubr.bf16.mxu0 0
        %2994 = vmatmul.mubr.bf16.gmra.mrb[0].mxu0 %v2932
        %v2995 = vpop.f32.mrb[0].mxu0
        %v2996 = vadd.f32 0.0, %v2995
        %v2997 = vpop.f32.mrb[0].mxu0
        %v2998 = vpop.f32.mrb[0].mxu0
        %v2999 = vadd.f32 0.0, %v2998
        %v3000 = vpop.f32.mrb[0].mxu0
        %3001 = vdwg.mxu0
        %v3002 = vadd.f32 %v2873, %v2972
        %v3003 = vadd.f32 %v2874, %v2975
        %v3004 = vadd.f32 %v2875, %v2980
        %v3005 = vadd.f32 %v2876, %v2983
        %v3006 = vadd.f32 %v2877, %v2988
        %v3007 = vadd.f32 %v2878, %v2991
        %v3008 = vadd.f32 %v2879, %v2996
        %v3009 = vadd.f32 %v2880, %v2999
        %3010 = vst.msk [vmem:[#allocation2] sm:$0xff] %vm232, %v3002
        %3011 = vst.msk [vmem:[#allocation2 + $0x8] sm:$0xff] %vm232, %v3003
        %3012 = vst.msk [vmem:[#allocation2 + $0x10] sm:$0xff] %vm232, %v3004
        %3013 = vst.msk [vmem:[#allocation2 + $0x18] sm:$0xff] %vm232, %v3005
        %3014 = vst.msk [vmem:[#allocation2 + $0x20] sm:$0xff] %vm232, %v3006
        %3015 = vst.msk [vmem:[#allocation2 + $0x28] sm:$0xff] %vm232, %v3007
        %3016 = vst.msk [vmem:[#allocation2 + $0x30] sm:$0xff] %vm232, %v3008
        %3017 = vst.msk [vmem:[#allocation2 + $0x38] sm:$0xff] %vm232, %v3009
        %v3018 = vld [vmem:[%s2436] sm:$0xc]
        %v3019 = vld [vmem:[%s2436 + $0x4] sm:$0x7]
        %v3020 = vld [vmem:[%s2436 + $0x8] sm:$0xc]
        %v3021 = vld [vmem:[%s2436 + $0xc] sm:$0x7]
        %v3022 = vld [vmem:[%s2436 + $0x10] sm:$0xc]
        %v3023 = vld [vmem:[%s2436 + $0x14] sm:$0x7]
        %v3024 = vld [vmem:[%s2436 + $0x18] sm:$0xc]
        %v3025 = vld [vmem:[%s2436 + $0x1c] sm:$0x7]
        %v3026 = vld [vmem:[%s2436 + $0x20] sm:$0xc]
        %v3027 = vld [vmem:[%s2436 + $0x24] sm:$0x7]
        %v3028 = vld [vmem:[%s2436 + $0x28] sm:$0xc]
        %v3029 = vld [vmem:[%s2436 + $0x2c] sm:$0x7]
        %v3030 = vld [vmem:[%s2436 + $0x30] sm:$0xc]
        %v3031 = vld [vmem:[%s2436 + $0x34] sm:$0x7]
        %v3032 = vld [vmem:[%s2436 + $0x38] sm:$0xc]
        %v3033 = vld [vmem:[%s2436 + $0x3c] sm:$0x7]
        %vm3034 = vsmask.f32 1280
        %vm3035 = vsmask.f32 5392
        %vm3036 = vmor %vm3034, %vm3035
        %v3038 = vshrl.u32 %v3018, 16
        %v3040 = vrot.slane %v3038, 6
        %v3041 = vshll.u32 %v3018, 16
        %v3043 = vrot.slane %v3041, 7
        %v3044 = vor.u32 %v3040, %v3043
        %v3045 = vrot.slane %v3044, 4
        %v3047 = vshrl.u32 %v3019, 16
        %v3049 = vrot.slane %v3047, 6
        %v3050 = vshll.u32 %v3019, 16
        %v3052 = vrot.slane %v3050, 7
        %v3053 = vor.u32 %v3049, %v3052
        %v3054 = vsel %vm3036, %v3045, %v3053
        %v3056 = vshrl.u32 %v3020, 16
        %v3058 = vrot.slane %v3056, 6
        %v3059 = vshll.u32 %v3020, 16
        %v3061 = vrot.slane %v3059, 7
        %v3062 = vor.u32 %v3058, %v3061
        %v3063 = vrot.slane %v3062, 4
        %v3065 = vshrl.u32 %v3021, 16
        %v3067 = vrot.slane %v3065, 6
        %v3068 = vshll.u32 %v3021, 16
        %v3070 = vrot.slane %v3068, 7
        %v3071 = vor.u32 %v3067, %v3070
        %v3072 = vsel %vm3036, %v3063, %v3071
        %v3074 = vshrl.u32 %v3022, 16
        %v3076 = vrot.slane %v3074, 6
        %v3077 = vshll.u32 %v3022, 16
        %v3079 = vrot.slane %v3077, 7
        %v3080 = vor.u32 %v3076, %v3079
        %v3081 = vrot.slane %v3080, 4
        %v3083 = vshrl.u32 %v3023, 16
        %v3085 = vrot.slane %v3083, 6
        %v3086 = vshll.u32 %v3023, 16
        %v3088 = vrot.slane %v3086, 7
        %v3089 = vor.u32 %v3085, %v3088
        %v3090 = vsel %vm3036, %v3081, %v3089
        %v3092 = vshrl.u32 %v3024, 16
        %v3094 = vrot.slane %v3092, 6
        %v3095 = vshll.u32 %v3024, 16
        %v3097 = vrot.slane %v3095, 7
        %v3098 = vor.u32 %v3094, %v3097
        %v3099 = vrot.slane %v3098, 4
        %v3101 = vshrl.u32 %v3025, 16
        %v3103 = vrot.slane %v3101, 6
        %v3104 = vshll.u32 %v3025, 16
        %v3106 = vrot.slane %v3104, 7
        %v3107 = vor.u32 %v3103, %v3106
        %v3108 = vsel %vm3036, %v3099, %v3107
        %v3110 = vshrl.u32 %v3026, 16
        %v3112 = vrot.slane %v3110, 6
        %v3113 = vshll.u32 %v3026, 16
        %v3115 = vrot.slane %v3113, 7
        %v3116 = vor.u32 %v3112, %v3115
        %v3117 = vrot.slane %v3116, 4
        %v3119 = vshrl.u32 %v3027, 16
        %v3121 = vrot.slane %v3119, 6
        %v3122 = vshll.u32 %v3027, 16
        %v3124 = vrot.slane %v3122, 7
        %v3125 = vor.u32 %v3121, %v3124
        %v3126 = vsel %vm3036, %v3117, %v3125
        %v3128 = vshrl.u32 %v3028, 16
        %v3130 = vrot.slane %v3128, 6
        %v3131 = vshll.u32 %v3028, 16
        %v3133 = vrot.slane %v3131, 7
        %v3134 = vor.u32 %v3130, %v3133
        %v3135 = vrot.slane %v3134, 4
        %v3137 = vshrl.u32 %v3029, 16
        %v3139 = vrot.slane %v3137, 6
        %v3140 = vshll.u32 %v3029, 16
        %v3142 = vrot.slane %v3140, 7
        %v3143 = vor.u32 %v3139, %v3142
        %v3144 = vsel %vm3036, %v3135, %v3143
        %v3146 = vshrl.u32 %v3030, 16
        %v3148 = vrot.slane %v3146, 6
        %v3149 = vshll.u32 %v3030, 16
        %v3151 = vrot.slane %v3149, 7
        %v3152 = vor.u32 %v3148, %v3151
        %v3153 = vrot.slane %v3152, 4
        %v3155 = vshrl.u32 %v3031, 16
        %v3157 = vrot.slane %v3155, 6
        %v3158 = vshll.u32 %v3031, 16
        %v3160 = vrot.slane %v3158, 7
        %v3161 = vor.u32 %v3157, %v3160
        %v3162 = vsel %vm3036, %v3153, %v3161
        %v3164 = vshrl.u32 %v3032, 16
        %v3166 = vrot.slane %v3164, 6
        %v3167 = vshll.u32 %v3032, 16
        %v3169 = vrot.slane %v3167, 7
        %v3170 = vor.u32 %v3166, %v3169
        %v3171 = vrot.slane %v3170, 4
        %v3173 = vshrl.u32 %v3033, 16
        %v3175 = vrot.slane %v3173, 6
        %v3176 = vshll.u32 %v3033, 16
        %v3178 = vrot.slane %v3176, 7
        %v3179 = vor.u32 %v3175, %v3178
        %v3180 = vsel %vm3036, %v3171, %v3179
        %v3181 = vld [vmem:[#allocation2] sm:$0xff]
        %v3182 = vld [vmem:[#allocation2 + $0x8] sm:$0xff]
        %v3183 = vld [vmem:[#allocation2 + $0x10] sm:$0xff]
        %v3184 = vld [vmem:[#allocation2 + $0x18] sm:$0xff]
        %v3185 = vld [vmem:[#allocation2 + $0x20] sm:$0xff]
        %v3186 = vld [vmem:[#allocation2 + $0x28] sm:$0xff]
        %v3187 = vld [vmem:[#allocation2 + $0x30] sm:$0xff]
        %v3188 = vld [vmem:[#allocation2 + $0x38] sm:$0xff]
        %s3189 = scalar_lea.vmem [#allocation6], 308
        %v3190 = vld [vmem:[%s3189] sm:$0xf]
        %v3191 = vld [vmem:[%s3189 + $0x4] sm:$0xf]
        %v3192 = vld [vmem:[%s3189 + $0x8] sm:$0xf]
        %v3193 = vld [vmem:[%s3189 + $0xc] sm:$0xf]
        %v3194 = vld [vmem:[%s3189 + $0x10] sm:$0xf]
        %v3195 = vld [vmem:[%s3189 + $0x14] sm:$0xf]
        %v3196 = vld [vmem:[%s3189 + $0x18] sm:$0xf]
        %v3197 = vunpack.c.l.b16 %v3054
        %v3198 = vunpack.c.l.b16 %v3072
        %v3199 = vunpack.c.l.b16 %v3090
        %v3200 = vunpack.c.l.b16 %v3108
        %v3201 = vunpack.c.l.b16 %v3126
        %v3202 = vunpack.c.l.b16 %v3144
        %v3203 = vunpack.c.l.b16 %v3162
        %v3204 = vunpack.c.l.b16 %v3180
        %v3205 = vpack.c.b16 %v3198, %v3197
        %v3206 = vpack.c.b16 %v3200, %v3199
        %v3207 = vpack.c.b16 %v3202, %v3201
        %v3208 = vpack.c.b16 %v3204, %v3203
        %v3216 = vunpack.c.l.b16 %v3190
        %v3217 = vunpack.c.l.b16 %v3191
        %v3218 = vunpack.c.l.b16 %v3192
        %v3219 = vunpack.c.l.b16 %v3193
        %v3220 = vunpack.c.l.b16 %v3194
        %v3221 = vunpack.c.l.b16 %v3195
        %v3222 = vunpack.c.l.b16 %v3196
        %v3223 = vpack.c.b16 %v3217, %v3216
        %v3224 = vpack.c.b16 %v3219, %v3218
        %v3225 = vpack.c.b16 %v3221, %v3220
        %v3226 = vpack.c.b16 %v3222, %v3222
        %v3231 = vsel %vm361, %v3205, 0
        %v3234 = vsel %vm361, %v3206, 0
        %v3237 = vsel %vm361, %v3207, 0
        %v3240 = vsel %vm361, %v3208, 0
        %v3243 = vsel %vm374, %v3226, 0
        %3245 = vmatprep.subr.bf16.mxu0 0
        %3246 = vmatpush1.bf16.msra.mxu0 %v3223
        %3247 = vmatprep.subr.bf16.mxu0 0
        %3248 = vmatpush1.bf16.msra.mxu0 %v3224
        %3249 = vmatprep.subr.bf16.mxu0 0
        %3250 = vmatpush1.bf16.msra.mxu0 %v3225
        %3251 = vmatprep.subr.bf16.mxu0 0
        %3252 = vmatpush1.bf16.msra.mxu0 %v3243
        %3253 = vmatprep.subr.bf16.mxu0 0
        %3254 = vmatpush1.bf16.msra.mxu0 0
        %3255 = vmatprep.subr.bf16.mxu0 0
        %3256 = vmatpush1.bf16.msra.mxu0 0
        %3257 = vmatprep.subr.bf16.mxu0 0
        %3258 = vmatpush1.bf16.msra.mxu0 0
        %3259 = vmatprep.subr.bf16.mxu0 0
        %3260 = vmatpush1.bf16.msra.mxu0 0
        %3261 = vmatprep.subr.bf16.mxu0 0
        %3262 = vmatpush1.bf16.msra.mxu0 0
        %3263 = vmatprep.subr.bf16.mxu0 0
        %3264 = vmatpush1.bf16.msra.mxu0 0
        %3265 = vmatprep.subr.bf16.mxu0 0
        %3266 = vmatpush1.bf16.msra.mxu0 0
        %3267 = vmatprep.subr.bf16.mxu0 0
        %3268 = vmatpush1.bf16.msra.mxu0 0
        %3269 = vmatprep.subr.bf16.mxu0 0
        %3270 = vmatpush1.bf16.msra.mxu0 0
        %3271 = vmatprep.subr.bf16.mxu0 0
        %3272 = vmatpush1.bf16.msra.mxu0 0
        %3273 = vmatprep.subr.bf16.mxu0 0
        %3274 = vmatpush1.bf16.msra.mxu0 0
        %3275 = vmatprep.subr.bf16.mxu0 0
        %3276 = vmatpush1.bf16.msra.mxu0 0
        %3277 = vmatprep.mubr.bf16.mxu0 0
        %3278 = vmatmul.mubr.bf16.gmra.mrb[0].mxu0 %v3231
        %v3279 = vpop.f32.mrb[0].mxu0
        %v3280 = vadd.f32 0.0, %v3279
        %v3281 = vpop.f32.mrb[0].mxu0
        %v3282 = vpop.f32.mrb[0].mxu0
        %v3283 = vadd.f32 0.0, %v3282
        %v3284 = vpop.f32.mrb[0].mxu0
        %3285 = vmatprep.mubr.bf16.mxu0 0
        %3286 = vmatmul.mubr.bf16.gmra.mrb[0].mxu0 %v3234
        %v3287 = vpop.f32.mrb[0].mxu0
        %v3288 = vadd.f32 0.0, %v3287
        %v3289 = vpop.f32.mrb[0].mxu0
        %v3290 = vpop.f32.mrb[0].mxu0
        %v3291 = vadd.f32 0.0, %v3290
        %v3292 = vpop.f32.mrb[0].mxu0
        %3293 = vmatprep.mubr.bf16.mxu0 0
        %3294 = vmatmul.mubr.bf16.gmra.mrb[0].mxu0 %v3237
        %v3295 = vpop.f32.mrb[0].mxu0
        %v3296 = vadd.f32 0.0, %v3295
        %v3297 = vpop.f32.mrb[0].mxu0
        %v3298 = vpop.f32.mrb[0].mxu0
        %v3299 = vadd.f32 0.0, %v3298
        %v3300 = vpop.f32.mrb[0].mxu0
        %3301 = vmatprep.mubr.bf16.mxu0 0
        %3302 = vmatmul.mubr.bf16.gmra.mrb[0].mxu0 %v3240
        %v3303 = vpop.f32.mrb[0].mxu0
        %v3304 = vadd.f32 0.0, %v3303
        %v3305 = vpop.f32.mrb[0].mxu0
        %v3306 = vpop.f32.mrb[0].mxu0
        %v3307 = vadd.f32 0.0, %v3306
        %v3308 = vpop.f32.mrb[0].mxu0
        %3309 = vdwg.mxu0
        %v3310 = vadd.f32 %v3181, %v3280
        %v3311 = vadd.f32 %v3182, %v3283
        %v3312 = vadd.f32 %v3183, %v3288
        %v3313 = vadd.f32 %v3184, %v3291
        %v3314 = vadd.f32 %v3185, %v3296
        %v3315 = vadd.f32 %v3186, %v3299
        %v3316 = vadd.f32 %v3187, %v3304
        %v3317 = vadd.f32 %v3188, %v3307
        %3318 = vst.msk [vmem:[#allocation2] sm:$0xff] %vm232, %v3310
        %3319 = vst.msk [vmem:[#allocation2 + $0x8] sm:$0xff] %vm232, %v3311
        %3320 = vst.msk [vmem:[#allocation2 + $0x10] sm:$0xff] %vm232, %v3312
        %3321 = vst.msk [vmem:[#allocation2 + $0x18] sm:$0xff] %vm232, %v3313
        %3322 = vst.msk [vmem:[#allocation2 + $0x20] sm:$0xff] %vm232, %v3314
        %3323 = vst.msk [vmem:[#allocation2 + $0x28] sm:$0xff] %vm232, %v3315
        %3324 = vst.msk [vmem:[#allocation2 + $0x30] sm:$0xff] %vm232, %v3316
        %3325 = vst.msk [vmem:[#allocation2 + $0x38] sm:$0xff] %vm232, %v3317
        %v3326 = vld [vmem:[%s982] sm:$0xf]
        %v3327 = vld [vmem:[%s982 + $0x4] sm:$0x1]
        %v3328 = vld [vmem:[%s982 + $0x8] sm:$0xf]
        %v3329 = vld [vmem:[%s982 + $0xc] sm:$0x1]
        %v3330 = vld [vmem:[%s982 + $0x10] sm:$0xf]
        %v3331 = vld [vmem:[%s982 + $0x14] sm:$0x1]
        %v3332 = vld [vmem:[%s982 + $0x18] sm:$0xf]
        %v3333 = vld [vmem:[%s982 + $0x1c] sm:$0x1]
        %v3334 = vld [vmem:[%s982 + $0x20] sm:$0xf]
        %v3335 = vld [vmem:[%s982 + $0x24] sm:$0x1]
        %v3336 = vld [vmem:[%s982 + $0x28] sm:$0xf]
        %v3337 = vld [vmem:[%s982 + $0x2c] sm:$0x1]
        %v3338 = vld [vmem:[%s982 + $0x30] sm:$0xf]
        %v3339 = vld [vmem:[%s982 + $0x34] sm:$0x1]
        %v3340 = vld [vmem:[%s982 + $0x38] sm:$0xf]
        %v3341 = vld [vmem:[%s982 + $0x3c] sm:$0x1]
        %v3343 = vshrl.u32 %v3326, 16
        %v3345 = vrot.slane %v3343, 4
        %v3346 = vshll.u32 %v3326, 16
        %v3348 = vrot.slane %v3346, 5
        %v3349 = vor.u32 %v3345, %v3348
        %v3350 = vrot.slane %v3349, 4
        %v3352 = vshll.u32 %v3327, 16
        %v3354 = vrot.slane %v3352, 5
        %v3355 = vsel %vm2455, %v3350, %v3354
        %v3357 = vshrl.u32 %v3328, 16
        %v3359 = vrot.slane %v3357, 4
        %v3360 = vshll.u32 %v3328, 16
        %v3362 = vrot.slane %v3360, 5
        %v3363 = vor.u32 %v3359, %v3362
        %v3364 = vrot.slane %v3363, 4
        %v3366 = vshll.u32 %v3329, 16
        %v3368 = vrot.slane %v3366, 5
        %v3369 = vsel %vm2455, %v3364, %v3368
        %v3371 = vshrl.u32 %v3330, 16
        %v3373 = vrot.slane %v3371, 4
        %v3374 = vshll.u32 %v3330, 16
        %v3376 = vrot.slane %v3374, 5
        %v3377 = vor.u32 %v3373, %v3376
        %v3378 = vrot.slane %v3377, 4
        %v3380 = vshll.u32 %v3331, 16
        %v3382 = vrot.slane %v3380, 5
        %v3383 = vsel %vm2455, %v3378, %v3382
        %v3385 = vshrl.u32 %v3332, 16
        %v3387 = vrot.slane %v3385, 4
        %v3388 = vshll.u32 %v3332, 16
        %v3390 = vrot.slane %v3388, 5
        %v3391 = vor.u32 %v3387, %v3390
        %v3392 = vrot.slane %v3391, 4
        %v3394 = vshll.u32 %v3333, 16
        %v3396 = vrot.slane %v3394, 5
        %v3397 = vsel %vm2455, %v3392, %v3396
        %v3399 = vshrl.u32 %v3334, 16
        %v3401 = vrot.slane %v3399, 4
        %v3402 = vshll.u32 %v3334, 16
        %v3404 = vrot.slane %v3402, 5
        %v3405 = vor.u32 %v3401, %v3404
        %v3406 = vrot.slane %v3405, 4
        %v3408 = vshll.u32 %v3335, 16
        %v3410 = vrot.slane %v3408, 5
        %v3411 = vsel %vm2455, %v3406, %v3410
        %v3413 = vshrl.u32 %v3336, 16
        %v3415 = vrot.slane %v3413, 4
        %v3416 = vshll.u32 %v3336, 16
        %v3418 = vrot.slane %v3416, 5
        %v3419 = vor.u32 %v3415, %v3418
        %v3420 = vrot.slane %v3419, 4
        %v3422 = vshll.u32 %v3337, 16
        %v3424 = vrot.slane %v3422, 5
        %v3425 = vsel %vm2455, %v3420, %v3424
        %v3427 = vshrl.u32 %v3338, 16
        %v3429 = vrot.slane %v3427, 4
        %v3430 = vshll.u32 %v3338, 16
        %v3432 = vrot.slane %v3430, 5
        %v3433 = vor.u32 %v3429, %v3432
        %v3434 = vrot.slane %v3433, 4
        %v3436 = vshll.u32 %v3339, 16
        %v3438 = vrot.slane %v3436, 5
        %v3439 = vsel %vm2455, %v3434, %v3438
        %v3441 = vshrl.u32 %v3340, 16
        %v3443 = vrot.slane %v3441, 4
        %v3444 = vshll.u32 %v3340, 16
        %v3446 = vrot.slane %v3444, 5
        %v3447 = vor.u32 %v3443, %v3446
        %v3448 = vrot.slane %v3447, 4
        %v3450 = vshll.u32 %v3341, 16
        %v3452 = vrot.slane %v3450, 5
        %v3453 = vsel %vm2455, %v3448, %v3452
        %v3454 = vld [vmem:[#allocation2] sm:$0xff]
        %v3455 = vld [vmem:[#allocation2 + $0x8] sm:$0xff]
        %v3456 = vld [vmem:[#allocation2 + $0x10] sm:$0xff]
        %v3457 = vld [vmem:[#allocation2 + $0x18] sm:$0xff]
        %v3458 = vld [vmem:[#allocation2 + $0x20] sm:$0xff]
        %v3459 = vld [vmem:[#allocation2 + $0x28] sm:$0xff]
        %v3460 = vld [vmem:[#allocation2 + $0x30] sm:$0xff]
        %v3461 = vld [vmem:[#allocation2 + $0x38] sm:$0xff]
        %s3462 = scalar_lea.vmem [#allocation6], 336
        %v3463 = vld [vmem:[%s3462] sm:$0xf]
        %v3464 = vld [vmem:[%s3462 + $0x4] sm:$0xf]
        %v3465 = vld [vmem:[%s3462 + $0x8] sm:$0xf]
        %v3466 = vld [vmem:[%s3462 + $0xc] sm:$0xf]
        %v3467 = vld [vmem:[%s3462 + $0x10] sm:$0xf]
        %v3468 = vld [vmem:[%s3462 + $0x14] sm:$0xf]
        %v3469 = vld [vmem:[%s3462 + $0x18] sm:$0xf]
        %v3470 = vunpack.c.l.b16 %v3355
        %v3471 = vunpack.c.l.b16 %v3369
        %v3472 = vunpack.c.l.b16 %v3383
        %v3473 = vunpack.c.l.b16 %v3397
        %v3474 = vunpack.c.l.b16 %v3411
        %v3475 = vunpack.c.l.b16 %v3425
        %v3476 = vunpack.c.l.b16 %v3439
        %v3477 = vunpack.c.l.b16 %v3453
        %v3478 = vpack.c.b16 %v3471, %v3470
        %v3479 = vpack.c.b16 %v3473, %v3472
        %v3480 = vpack.c.b16 %v3475, %v3474
        %v3481 = vpack.c.b16 %v3477, %v3476
        %v3489 = vunpack.c.l.b16 %v3463
        %v3490 = vunpack.c.l.b16 %v3464
        %v3491 = vunpack.c.l.b16 %v3465
        %v3492 = vunpack.c.l.b16 %v3466
        %v3493 = vunpack.c.l.b16 %v3467
        %v3494 = vunpack.c.l.b16 %v3468
        %v3495 = vunpack.c.l.b16 %v3469
        %v3496 = vpack.c.b16 %v3490, %v3489
        %v3497 = vpack.c.b16 %v3492, %v3491
        %v3498 = vpack.c.b16 %v3494, %v3493
        %v3499 = vpack.c.b16 %v3495, %v3495
        %v3504 = vsel %vm361, %v3478, 0
        %v3507 = vsel %vm361, %v3479, 0
        %v3510 = vsel %vm361, %v3480, 0
        %v3513 = vsel %vm361, %v3481, 0
        %v3516 = vsel %vm374, %v3499, 0
        %3518 = vmatprep.subr.bf16.mxu0 0
        %3519 = vmatpush1.bf16.msra.mxu0 %v3496
        %3520 = vmatprep.subr.bf16.mxu0 0
        %3521 = vmatpush1.bf16.msra.mxu0 %v3497
        %3522 = vmatprep.subr.bf16.mxu0 0
        %3523 = vmatpush1.bf16.msra.mxu0 %v3498
        %3524 = vmatprep.subr.bf16.mxu0 0
        %3525 = vmatpush1.bf16.msra.mxu0 %v3516
        %3526 = vmatprep.subr.bf16.mxu0 0
        %3527 = vmatpush1.bf16.msra.mxu0 0
        %3528 = vmatprep.subr.bf16.mxu0 0
        %3529 = vmatpush1.bf16.msra.mxu0 0
        %3530 = vmatprep.subr.bf16.mxu0 0
        %3531 = vmatpush1.bf16.msra.mxu0 0
        %3532 = vmatprep.subr.bf16.mxu0 0
        %3533 = vmatpush1.bf16.msra.mxu0 0
        %3534 = vmatprep.subr.bf16.mxu0 0
        %3535 = vmatpush1.bf16.msra.mxu0 0
        %3536 = vmatprep.subr.bf16.mxu0 0
        %3537 = vmatpush1.bf16.msra.mxu0 0
        %3538 = vmatprep.subr.bf16.mxu0 0
        %3539 = vmatpush1.bf16.msra.mxu0 0
        %3540 = vmatprep.subr.bf16.mxu0 0
        %3541 = vmatpush1.bf16.msra.mxu0 0
        %3542 = vmatprep.subr.bf16.mxu0 0
        %3543 = vmatpush1.bf16.msra.mxu0 0
        %3544 = vmatprep.subr.bf16.mxu0 0
        %3545 = vmatpush1.bf16.msra.mxu0 0
        %3546 = vmatprep.subr.bf16.mxu0 0
        %3547 = vmatpush1.bf16.msra.mxu0 0
        %3548 = vmatprep.subr.bf16.mxu0 0
        %3549 = vmatpush1.bf16.msra.mxu0 0
        %3550 = vmatprep.mubr.bf16.mxu0 0
        %3551 = vmatmul.mubr.bf16.gmra.mrb[0].mxu0 %v3504
        %v3552 = vpop.f32.mrb[0].mxu0
        %v3553 = vadd.f32 0.0, %v3552
        %v3554 = vpop.f32.mrb[0].mxu0
        %v3555 = vpop.f32.mrb[0].mxu0
        %v3556 = vadd.f32 0.0, %v3555
        %v3557 = vpop.f32.mrb[0].mxu0
        %3558 = vmatprep.mubr.bf16.mxu0 0
        %3559 = vmatmul.mubr.bf16.gmra.mrb[0].mxu0 %v3507
        %v3560 = vpop.f32.mrb[0].mxu0
        %v3561 = vadd.f32 0.0, %v3560
        %v3562 = vpop.f32.mrb[0].mxu0
        %v3563 = vpop.f32.mrb[0].mxu0
        %v3564 = vadd.f32 0.0, %v3563
        %v3565 = vpop.f32.mrb[0].mxu0
        %3566 = vmatprep.mubr.bf16.mxu0 0
        %3567 = vmatmul.mubr.bf16.gmra.mrb[0].mxu0 %v3510
        %v3568 = vpop.f32.mrb[0].mxu0
        %v3569 = vadd.f32 0.0, %v3568
        %v3570 = vpop.f32.mrb[0].mxu0
        %v3571 = vpop.f32.mrb[0].mxu0
        %v3572 = vadd.f32 0.0, %v3571
        %v3573 = vpop.f32.mrb[0].mxu0
        %3574 = vmatprep.mubr.bf16.mxu0 0
        %3575 = vmatmul.mubr.bf16.gmra.mrb[0].mxu0 %v3513
        %v3576 = vpop.f32.mrb[0].mxu0
        %v3577 = vadd.f32 0.0, %v3576
        %v3578 = vpop.f32.mrb[0].mxu0
        %v3579 = vpop.f32.mrb[0].mxu0
        %v3580 = vadd.f32 0.0, %v3579
        %v3581 = vpop.f32.mrb[0].mxu0
        %3582 = vdwg.mxu0
        %v3583 = vadd.f32 %v3454, %v3553
        %v3584 = vadd.f32 %v3455, %v3556
        %v3585 = vadd.f32 %v3456, %v3561
        %v3586 = vadd.f32 %v3457, %v3564
        %v3587 = vadd.f32 %v3458, %v3569
        %v3588 = vadd.f32 %v3459, %v3572
        %v3589 = vadd.f32 %v3460, %v3577
        %v3590 = vadd.f32 %v3461, %v3580
        %3591 = vst.msk [vmem:[#allocation2] sm:$0xff] %vm232, %v3583
        %3592 = vst.msk [vmem:[#allocation2 + $0x8] sm:$0xff] %vm232, %v3584
        %3593 = vst.msk [vmem:[#allocation2 + $0x10] sm:$0xff] %vm232, %v3585
        %3594 = vst.msk [vmem:[#allocation2 + $0x18] sm:$0xff] %vm232, %v3586
        %3595 = vst.msk [vmem:[#allocation2 + $0x20] sm:$0xff] %vm232, %v3587
        %3596 = vst.msk [vmem:[#allocation2 + $0x28] sm:$0xff] %vm232, %v3588
        %3597 = vst.msk [vmem:[#allocation2 + $0x30] sm:$0xff] %vm232, %v3589
        %3598 = vst.msk [vmem:[#allocation2 + $0x38] sm:$0xff] %vm232, %v3590
        %v3599 = vld [vmem:[%s982] sm:$0xe]
        %v3600 = vld [vmem:[%s982 + $0x4] sm:$0x3]
        %v3601 = vld [vmem:[%s982 + $0x8] sm:$0xe]
        %v3602 = vld [vmem:[%s982 + $0xc] sm:$0x3]
        %v3603 = vld [vmem:[%s982 + $0x10] sm:$0xe]
        %v3604 = vld [vmem:[%s982 + $0x14] sm:$0x3]
        %v3605 = vld [vmem:[%s982 + $0x18] sm:$0xe]
        %v3606 = vld [vmem:[%s982 + $0x1c] sm:$0x3]
        %v3607 = vld [vmem:[%s982 + $0x20] sm:$0xe]
        %v3608 = vld [vmem:[%s982 + $0x24] sm:$0x3]
        %v3609 = vld [vmem:[%s982 + $0x28] sm:$0xe]
        %v3610 = vld [vmem:[%s982 + $0x2c] sm:$0x3]
        %v3611 = vld [vmem:[%s982 + $0x30] sm:$0xe]
        %v3612 = vld [vmem:[%s982 + $0x34] sm:$0x3]
        %v3613 = vld [vmem:[%s982 + $0x38] sm:$0xe]
        %v3614 = vld [vmem:[%s982 + $0x3c] sm:$0x3]
        %v3616 = vshrl.u32 %v3599, 16
        %v3618 = vrot.slane %v3616, 5
        %v3619 = vshll.u32 %v3599, 16
        %v3621 = vrot.slane %v3619, 6
        %v3622 = vor.u32 %v3618, %v3621
        %v3623 = vrot.slane %v3622, 4
        %v3625 = vshrl.u32 %v3600, 16
        %v3627 = vrot.slane %v3625, 5
        %v3628 = vshll.u32 %v3600, 16
        %v3630 = vrot.slane %v3628, 6
        %v3631 = vor.u32 %v3627, %v3630
        %v3632 = vsel %vm477, %v3623, %v3631
        %v3634 = vshrl.u32 %v3601, 16
        %v3636 = vrot.slane %v3634, 5
        %v3637 = vshll.u32 %v3601, 16
        %v3639 = vrot.slane %v3637, 6
        %v3640 = vor.u32 %v3636, %v3639
        %v3641 = vrot.slane %v3640, 4
        %v3643 = vshrl.u32 %v3602, 16
        %v3645 = vrot.slane %v3643, 5
        %v3646 = vshll.u32 %v3602, 16
        %v3648 = vrot.slane %v3646, 6
        %v3649 = vor.u32 %v3645, %v3648
        %v3650 = vsel %vm477, %v3641, %v3649
        %v3652 = vshrl.u32 %v3603, 16
        %v3654 = vrot.slane %v3652, 5
        %v3655 = vshll.u32 %v3603, 16
        %v3657 = vrot.slane %v3655, 6
        %v3658 = vor.u32 %v3654, %v3657
        %v3659 = vrot.slane %v3658, 4
        %v3661 = vshrl.u32 %v3604, 16
        %v3663 = vrot.slane %v3661, 5
        %v3664 = vshll.u32 %v3604, 16
        %v3666 = vrot.slane %v3664, 6
        %v3667 = vor.u32 %v3663, %v3666
        %v3668 = vsel %vm477, %v3659, %v3667
        %v3670 = vshrl.u32 %v3605, 16
        %v3672 = vrot.slane %v3670, 5
        %v3673 = vshll.u32 %v3605, 16
        %v3675 = vrot.slane %v3673, 6
        %v3676 = vor.u32 %v3672, %v3675
        %v3677 = vrot.slane %v3676, 4
        %v3679 = vshrl.u32 %v3606, 16
        %v3681 = vrot.slane %v3679, 5
        %v3682 = vshll.u32 %v3606, 16
        %v3684 = vrot.slane %v3682, 6
        %v3685 = vor.u32 %v3681, %v3684
        %v3686 = vsel %vm477, %v3677, %v3685
        %v3688 = vshrl.u32 %v3607, 16
        %v3690 = vrot.slane %v3688, 5
        %v3691 = vshll.u32 %v3607, 16
        %v3693 = vrot.slane %v3691, 6
        %v3694 = vor.u32 %v3690, %v3693
        %v3695 = vrot.slane %v3694, 4
        %v3697 = vshrl.u32 %v3608, 16
        %v3699 = vrot.slane %v3697, 5
        %v3700 = vshll.u32 %v3608, 16
        %v3702 = vrot.slane %v3700, 6
        %v3703 = vor.u32 %v3699, %v3702
        %v3704 = vsel %vm477, %v3695, %v3703
        %v3706 = vshrl.u32 %v3609, 16
        %v3708 = vrot.slane %v3706, 5
        %v3709 = vshll.u32 %v3609, 16
        %v3711 = vrot.slane %v3709, 6
        %v3712 = vor.u32 %v3708, %v3711
        %v3713 = vrot.slane %v3712, 4
        %v3715 = vshrl.u32 %v3610, 16
        %v3717 = vrot.slane %v3715, 5
        %v3718 = vshll.u32 %v3610, 16
        %v3720 = vrot.slane %v3718, 6
        %v3721 = vor.u32 %v3717, %v3720
        %v3722 = vsel %vm477, %v3713, %v3721
        %v3724 = vshrl.u32 %v3611, 16
        %v3726 = vrot.slane %v3724, 5
        %v3727 = vshll.u32 %v3611, 16
        %v3729 = vrot.slane %v3727, 6
        %v3730 = vor.u32 %v3726, %v3729
        %v3731 = vrot.slane %v3730, 4
        %v3733 = vshrl.u32 %v3612, 16
        %v3735 = vrot.slane %v3733, 5
        %v3736 = vshll.u32 %v3612, 16
        %v3738 = vrot.slane %v3736, 6
        %v3739 = vor.u32 %v3735, %v3738
        %v3740 = vsel %vm477, %v3731, %v3739
        %v3742 = vshrl.u32 %v3613, 16
        %v3744 = vrot.slane %v3742, 5
        %v3745 = vshll.u32 %v3613, 16
        %v3747 = vrot.slane %v3745, 6
        %v3748 = vor.u32 %v3744, %v3747
        %v3749 = vrot.slane %v3748, 4
        %v3751 = vshrl.u32 %v3614, 16
        %v3753 = vrot.slane %v3751, 5
        %v3754 = vshll.u32 %v3614, 16
        %v3756 = vrot.slane %v3754, 6
        %v3757 = vor.u32 %v3753, %v3756
        %v3758 = vsel %vm477, %v3749, %v3757
        %v3759 = vld [vmem:[#allocation2] sm:$0xff]
        %v3760 = vld [vmem:[#allocation2 + $0x8] sm:$0xff]
        %v3761 = vld [vmem:[#allocation2 + $0x10] sm:$0xff]
        %v3762 = vld [vmem:[#allocation2 + $0x18] sm:$0xff]
        %v3763 = vld [vmem:[#allocation2 + $0x20] sm:$0xff]
        %v3764 = vld [vmem:[#allocation2 + $0x28] sm:$0xff]
        %v3765 = vld [vmem:[#allocation2 + $0x30] sm:$0xff]
        %v3766 = vld [vmem:[#allocation2 + $0x38] sm:$0xff]
        %s3767 = scalar_lea.vmem [#allocation6], 364
        %v3768 = vld [vmem:[%s3767] sm:$0xf]
        %v3769 = vld [vmem:[%s3767 + $0x4] sm:$0xf]
        %v3770 = vld [vmem:[%s3767 + $0x8] sm:$0xf]
        %v3771 = vld [vmem:[%s3767 + $0xc] sm:$0xf]
        %v3772 = vld [vmem:[%s3767 + $0x10] sm:$0xf]
        %v3773 = vld [vmem:[%s3767 + $0x14] sm:$0xf]
        %v3774 = vld [vmem:[%s3767 + $0x18] sm:$0xf]
        %v3775 = vunpack.c.l.b16 %v3632
        %v3776 = vunpack.c.l.b16 %v3650
        %v3777 = vunpack.c.l.b16 %v3668
        %v3778 = vunpack.c.l.b16 %v3686
        %v3779 = vunpack.c.l.b16 %v3704
        %v3780 = vunpack.c.l.b16 %v3722
        %v3781 = vunpack.c.l.b16 %v3740
        %v3782 = vunpack.c.l.b16 %v3758
        %v3783 = vpack.c.b16 %v3776, %v3775
        %v3784 = vpack.c.b16 %v3778, %v3777
        %v3785 = vpack.c.b16 %v3780, %v3779
        %v3786 = vpack.c.b16 %v3782, %v3781
        %v3794 = vunpack.c.l.b16 %v3768
        %v3795 = vunpack.c.l.b16 %v3769
        %v3796 = vunpack.c.l.b16 %v3770
        %v3797 = vunpack.c.l.b16 %v3771
        %v3798 = vunpack.c.l.b16 %v3772
        %v3799 = vunpack.c.l.b16 %v3773
        %v3800 = vunpack.c.l.b16 %v3774
        %v3801 = vpack.c.b16 %v3795, %v3794
        %v3802 = vpack.c.b16 %v3797, %v3796
        %v3803 = vpack.c.b16 %v3799, %v3798
        %v3804 = vpack.c.b16 %v3800, %v3800
        %v3809 = vsel %vm361, %v3783, 0
        %v3812 = vsel %vm361, %v3784, 0
        %v3815 = vsel %vm361, %v3785, 0
        %v3818 = vsel %vm361, %v3786, 0
        %v3821 = vsel %vm374, %v3804, 0
        %3823 = vmatprep.subr.bf16.mxu0 0
        %3824 = vmatpush1.bf16.msra.mxu0 %v3801
        %3825 = vmatprep.subr.bf16.mxu0 0
        %3826 = vmatpush1.bf16.msra.mxu0 %v3802
        %3827 = vmatprep.subr.bf16.mxu0 0
        %3828 = vmatpush1.bf16.msra.mxu0 %v3803
        %3829 = vmatprep.subr.bf16.mxu0 0
        %3830 = vmatpush1.bf16.msra.mxu0 %v3821
        %3831 = vmatprep.subr.bf16.mxu0 0
        %3832 = vmatpush1.bf16.msra.mxu0 0
        %3833 = vmatprep.subr.bf16.mxu0 0
        %3834 = vmatpush1.bf16.msra.mxu0 0
        %3835 = vmatprep.subr.bf16.mxu0 0
        %3836 = vmatpush1.bf16.msra.mxu0 0
        %3837 = vmatprep.subr.bf16.mxu0 0
        %3838 = vmatpush1.bf16.msra.mxu0 0
        %3839 = vmatprep.subr.bf16.mxu0 0
        %3840 = vmatpush1.bf16.msra.mxu0 0
        %3841 = vmatprep.subr.bf16.mxu0 0
        %3842 = vmatpush1.bf16.msra.mxu0 0
        %3843 = vmatprep.subr.bf16.mxu0 0
        %3844 = vmatpush1.bf16.msra.mxu0 0
        %3845 = vmatprep.subr.bf16.mxu0 0
        %3846 = vmatpush1.bf16.msra.mxu0 0
        %3847 = vmatprep.subr.bf16.mxu0 0
        %3848 = vmatpush1.bf16.msra.mxu0 0
        %3849 = vmatprep.subr.bf16.mxu0 0
        %3850 = vmatpush1.bf16.msra.mxu0 0
        %3851 = vmatprep.subr.bf16.mxu0 0
        %3852 = vmatpush1.bf16.msra.mxu0 0
        %3853 = vmatprep.subr.bf16.mxu0 0
        %3854 = vmatpush1.bf16.msra.mxu0 0
        %3855 = vmatprep.mubr.bf16.mxu0 0
        %3856 = vmatmul.mubr.bf16.gmra.mrb[0].mxu0 %v3809
        %v3857 = vpop.f32.mrb[0].mxu0
        %v3858 = vadd.f32 0.0, %v3857
        %v3859 = vpop.f32.mrb[0].mxu0
        %v3860 = vpop.f32.mrb[0].mxu0
        %v3861 = vadd.f32 0.0, %v3860
        %v3862 = vpop.f32.mrb[0].mxu0
        %3863 = vmatprep.mubr.bf16.mxu0 0
        %3864 = vmatmul.mubr.bf16.gmra.mrb[0].mxu0 %v3812
        %v3865 = vpop.f32.mrb[0].mxu0
        %v3866 = vadd.f32 0.0, %v3865
        %v3867 = vpop.f32.mrb[0].mxu0
        %v3868 = vpop.f32.mrb[0].mxu0
        %v3869 = vadd.f32 0.0, %v3868
        %v3870 = vpop.f32.mrb[0].mxu0
        %3871 = vmatprep.mubr.bf16.mxu0 0
        %3872 = vmatmul.mubr.bf16.gmra.mrb[0].mxu0 %v3815
        %v3873 = vpop.f32.mrb[0].mxu0
        %v3874 = vadd.f32 0.0, %v3873
        %v3875 = vpop.f32.mrb[0].mxu0
        %v3876 = vpop.f32.mrb[0].mxu0
        %v3877 = vadd.f32 0.0, %v3876
        %v3878 = vpop.f32.mrb[0].mxu0
        %3879 = vmatprep.mubr.bf16.mxu0 0
        %3880 = vmatmul.mubr.bf16.gmra.mrb[0].mxu0 %v3818
        %v3881 = vpop.f32.mrb[0].mxu0
        %v3882 = vadd.f32 0.0, %v3881
        %v3883 = vpop.f32.mrb[0].mxu0
        %v3884 = vpop.f32.mrb[0].mxu0
        %v3885 = vadd.f32 0.0, %v3884
        %v3886 = vpop.f32.mrb[0].mxu0
        %3887 = vdwg.mxu0
        %v3888 = vadd.f32 %v3759, %v3858
        %v3889 = vadd.f32 %v3760, %v3861
        %v3890 = vadd.f32 %v3761, %v3866
        %v3891 = vadd.f32 %v3762, %v3869
        %v3892 = vadd.f32 %v3763, %v3874
        %v3893 = vadd.f32 %v3764, %v3877
        %v3894 = vadd.f32 %v3765, %v3882
        %v3895 = vadd.f32 %v3766, %v3885
        %3896 = vst.msk [vmem:[#allocation2] sm:$0xff] %vm232, %v3888
        %3897 = vst.msk [vmem:[#allocation2 + $0x8] sm:$0xff] %vm232, %v3889
        %3898 = vst.msk [vmem:[#allocation2 + $0x10] sm:$0xff] %vm232, %v3890
        %3899 = vst.msk [vmem:[#allocation2 + $0x18] sm:$0xff] %vm232, %v3891
        %3900 = vst.msk [vmem:[#allocation2 + $0x20] sm:$0xff] %vm232, %v3892
        %3901 = vst.msk [vmem:[#allocation2 + $0x28] sm:$0xff] %vm232, %v3893
        %3902 = vst.msk [vmem:[#allocation2 + $0x30] sm:$0xff] %vm232, %v3894
        %3903 = vst.msk [vmem:[#allocation2 + $0x38] sm:$0xff] %vm232, %v3895
        %v3904 = vld [vmem:[%s982] sm:$0xc]
        %v3905 = vld [vmem:[%s982 + $0x4] sm:$0x7]
        %v3906 = vld [vmem:[%s982 + $0x8] sm:$0xc]
        %v3907 = vld [vmem:[%s982 + $0xc] sm:$0x7]
        %v3908 = vld [vmem:[%s982 + $0x10] sm:$0xc]
        %v3909 = vld [vmem:[%s982 + $0x14] sm:$0x7]
        %v3910 = vld [vmem:[%s982 + $0x18] sm:$0xc]
        %v3911 = vld [vmem:[%s982 + $0x1c] sm:$0x7]
        %v3912 = vld [vmem:[%s982 + $0x20] sm:$0xc]
        %v3913 = vld [vmem:[%s982 + $0x24] sm:$0x7]
        %v3914 = vld [vmem:[%s982 + $0x28] sm:$0xc]
        %v3915 = vld [vmem:[%s982 + $0x2c] sm:$0x7]
        %v3916 = vld [vmem:[%s982 + $0x30] sm:$0xc]
        %v3917 = vld [vmem:[%s982 + $0x34] sm:$0x7]
        %v3918 = vld [vmem:[%s982 + $0x38] sm:$0xc]
        %v3919 = vld [vmem:[%s982 + $0x3c] sm:$0x7]
        %v3921 = vshrl.u32 %v3904, 16
        %v3923 = vrot.slane %v3921, 6
        %v3924 = vshll.u32 %v3904, 16
        %v3926 = vrot.slane %v3924, 7
        %v3927 = vor.u32 %v3923, %v3926
        %v3928 = vrot.slane %v3927, 4
        %v3930 = vshrl.u32 %v3905, 16
        %v3932 = vrot.slane %v3930, 6
        %v3933 = vshll.u32 %v3905, 16
        %v3935 = vrot.slane %v3933, 7
        %v3936 = vor.u32 %v3932, %v3935
        %v3937 = vsel %vm3036, %v3928, %v3936
        %v3939 = vshrl.u32 %v3906, 16
        %v3941 = vrot.slane %v3939, 6
        %v3942 = vshll.u32 %v3906, 16
        %v3944 = vrot.slane %v3942, 7
        %v3945 = vor.u32 %v3941, %v3944
        %v3946 = vrot.slane %v3945, 4
        %v3948 = vshrl.u32 %v3907, 16
        %v3950 = vrot.slane %v3948, 6
        %v3951 = vshll.u32 %v3907, 16
        %v3953 = vrot.slane %v3951, 7
        %v3954 = vor.u32 %v3950, %v3953
        %v3955 = vsel %vm3036, %v3946, %v3954
        %v3957 = vshrl.u32 %v3908, 16
        %v3959 = vrot.slane %v3957, 6
        %v3960 = vshll.u32 %v3908, 16
        %v3962 = vrot.slane %v3960, 7
        %v3963 = vor.u32 %v3959, %v3962
        %v3964 = vrot.slane %v3963, 4
        %v3966 = vshrl.u32 %v3909, 16
        %v3968 = vrot.slane %v3966, 6
        %v3969 = vshll.u32 %v3909, 16
        %v3971 = vrot.slane %v3969, 7
        %v3972 = vor.u32 %v3968, %v3971
        %v3973 = vsel %vm3036, %v3964, %v3972
        %v3975 = vshrl.u32 %v3910, 16
        %v3977 = vrot.slane %v3975, 6
        %v3978 = vshll.u32 %v3910, 16
        %v3980 = vrot.slane %v3978, 7
        %v3981 = vor.u32 %v3977, %v3980
        %v3982 = vrot.slane %v3981, 4
        %v3984 = vshrl.u32 %v3911, 16
        %v3986 = vrot.slane %v3984, 6
        %v3987 = vshll.u32 %v3911, 16
        %v3989 = vrot.slane %v3987, 7
        %v3990 = vor.u32 %v3986, %v3989
        %v3991 = vsel %vm3036, %v3982, %v3990
        %v3993 = vshrl.u32 %v3912, 16
        %v3995 = vrot.slane %v3993, 6
        %v3996 = vshll.u32 %v3912, 16
        %v3998 = vrot.slane %v3996, 7
        %v3999 = vor.u32 %v3995, %v3998
        %v4000 = vrot.slane %v3999, 4
        %v4002 = vshrl.u32 %v3913, 16
        %v4004 = vrot.slane %v4002, 6
        %v4005 = vshll.u32 %v3913, 16
        %v4007 = vrot.slane %v4005, 7
        %v4008 = vor.u32 %v4004, %v4007
        %v4009 = vsel %vm3036, %v4000, %v4008
        %v4011 = vshrl.u32 %v3914, 16
        %v4013 = vrot.slane %v4011, 6
        %v4014 = vshll.u32 %v3914, 16
        %v4016 = vrot.slane %v4014, 7
        %v4017 = vor.u32 %v4013, %v4016
        %v4018 = vrot.slane %v4017, 4
        %v4020 = vshrl.u32 %v3915, 16
        %v4022 = vrot.slane %v4020, 6
        %v4023 = vshll.u32 %v3915, 16
        %v4025 = vrot.slane %v4023, 7
        %v4026 = vor.u32 %v4022, %v4025
        %v4027 = vsel %vm3036, %v4018, %v4026
        %v4029 = vshrl.u32 %v3916, 16
        %v4031 = vrot.slane %v4029, 6
        %v4032 = vshll.u32 %v3916, 16
        %v4034 = vrot.slane %v4032, 7
        %v4035 = vor.u32 %v4031, %v4034
        %v4036 = vrot.slane %v4035, 4
        %v4038 = vshrl.u32 %v3917, 16
        %v4040 = vrot.slane %v4038, 6
        %v4041 = vshll.u32 %v3917, 16
        %v4043 = vrot.slane %v4041, 7
        %v4044 = vor.u32 %v4040, %v4043
        %v4045 = vsel %vm3036, %v4036, %v4044
        %v4047 = vshrl.u32 %v3918, 16
        %v4049 = vrot.slane %v4047, 6
        %v4050 = vshll.u32 %v3918, 16
        %v4052 = vrot.slane %v4050, 7
        %v4053 = vor.u32 %v4049, %v4052
        %v4054 = vrot.slane %v4053, 4
        %v4056 = vshrl.u32 %v3919, 16
        %v4058 = vrot.slane %v4056, 6
        %v4059 = vshll.u32 %v3919, 16
        %v4061 = vrot.slane %v4059, 7
        %v4062 = vor.u32 %v4058, %v4061
        %v4063 = vsel %vm3036, %v4054, %v4062
        %v4064 = vld [vmem:[#allocation2] sm:$0xff]
        %v4065 = vld [vmem:[#allocation2 + $0x8] sm:$0xff]
        %v4066 = vld [vmem:[#allocation2 + $0x10] sm:$0xff]
        %v4067 = vld [vmem:[#allocation2 + $0x18] sm:$0xff]
        %v4068 = vld [vmem:[#allocation2 + $0x20] sm:$0xff]
        %v4069 = vld [vmem:[#allocation2 + $0x28] sm:$0xff]
        %v4070 = vld [vmem:[#allocation2 + $0x30] sm:$0xff]
        %v4071 = vld [vmem:[#allocation2 + $0x38] sm:$0xff]
        %s4072 = scalar_lea.vmem [#allocation6], 392
        %v4073 = vld [vmem:[%s4072] sm:$0xf]
        %v4074 = vld [vmem:[%s4072 + $0x4] sm:$0xf]
        %v4075 = vld [vmem:[%s4072 + $0x8] sm:$0xf]
        %v4076 = vld [vmem:[%s4072 + $0xc] sm:$0xf]
        %v4077 = vld [vmem:[%s4072 + $0x10] sm:$0xf]
        %v4078 = vld [vmem:[%s4072 + $0x14] sm:$0xf]
        %v4079 = vld [vmem:[%s4072 + $0x18] sm:$0xf]
        %v4080 = vunpack.c.l.b16 %v3937
        %v4081 = vunpack.c.l.b16 %v3955
        %v4082 = vunpack.c.l.b16 %v3973
        %v4083 = vunpack.c.l.b16 %v3991
        %v4084 = vunpack.c.l.b16 %v4009
        %v4085 = vunpack.c.l.b16 %v4027
        %v4086 = vunpack.c.l.b16 %v4045
        %v4087 = vunpack.c.l.b16 %v4063
        %v4088 = vpack.c.b16 %v4081, %v4080
        %v4089 = vpack.c.b16 %v4083, %v4082
        %v4090 = vpack.c.b16 %v4085, %v4084
        %v4091 = vpack.c.b16 %v4087, %v4086
        %v4099 = vunpack.c.l.b16 %v4073
        %v4100 = vunpack.c.l.b16 %v4074
        %v4101 = vunpack.c.l.b16 %v4075
        %v4102 = vunpack.c.l.b16 %v4076
        %v4103 = vunpack.c.l.b16 %v4077
        %v4104 = vunpack.c.l.b16 %v4078
        %v4105 = vunpack.c.l.b16 %v4079
        %v4106 = vpack.c.b16 %v4100, %v4099
        %v4107 = vpack.c.b16 %v4102, %v4101
        %v4108 = vpack.c.b16 %v4104, %v4103
        %v4109 = vpack.c.b16 %v4105, %v4105
        %v4114 = vsel %vm361, %v4088, 0
        %v4117 = vsel %vm361, %v4089, 0
        %v4120 = vsel %vm361, %v4090, 0
        %v4123 = vsel %vm361, %v4091, 0
        %v4126 = vsel %vm374, %v4109, 0
        %4128 = vmatprep.subr.bf16.mxu0 0
        %4129 = vmatpush1.bf16.msra.mxu0 %v4106
        %4130 = vmatprep.subr.bf16.mxu0 0
        %4131 = vmatpush1.bf16.msra.mxu0 %v4107
        %4132 = vmatprep.subr.bf16.mxu0 0
        %4133 = vmatpush1.bf16.msra.mxu0 %v4108
        %4134 = vmatprep.subr.bf16.mxu0 0
        %4135 = vmatpush1.bf16.msra.mxu0 %v4126
        %4136 = vmatprep.subr.bf16.mxu0 0
        %4137 = vmatpush1.bf16.msra.mxu0 0
        %4138 = vmatprep.subr.bf16.mxu0 0
        %4139 = vmatpush1.bf16.msra.mxu0 0
        %4140 = vmatprep.subr.bf16.mxu0 0
        %4141 = vmatpush1.bf16.msra.mxu0 0
        %4142 = vmatprep.subr.bf16.mxu0 0
        %4143 = vmatpush1.bf16.msra.mxu0 0
        %4144 = vmatprep.subr.bf16.mxu0 0
        %4145 = vmatpush1.bf16.msra.mxu0 0
        %4146 = vmatprep.subr.bf16.mxu0 0
        %4147 = vmatpush1.bf16.msra.mxu0 0
        %4148 = vmatprep.subr.bf16.mxu0 0
        %4149 = vmatpush1.bf16.msra.mxu0 0
        %4150 = vmatprep.subr.bf16.mxu0 0
        %4151 = vmatpush1.bf16.msra.mxu0 0
        %4152 = vmatprep.subr.bf16.mxu0 0
        %4153 = vmatpush1.bf16.msra.mxu0 0
        %4154 = vmatprep.subr.bf16.mxu0 0
        %4155 = vmatpush1.bf16.msra.mxu0 0
        %4156 = vmatprep.subr.bf16.mxu0 0
        %4157 = vmatpush1.bf16.msra.mxu0 0
        %4158 = vmatprep.subr.bf16.mxu0 0
        %4159 = vmatpush1.bf16.msra.mxu0 0
        %4160 = vmatprep.mubr.bf16.mxu0 0
        %4161 = vmatmul.mubr.bf16.gmra.mrb[0].mxu0 %v4114
        %v4162 = vpop.f32.mrb[0].mxu0
        %v4163 = vadd.f32 0.0, %v4162
        %v4164 = vpop.f32.mrb[0].mxu0
        %v4165 = vpop.f32.mrb[0].mxu0
        %v4166 = vadd.f32 0.0, %v4165
        %v4167 = vpop.f32.mrb[0].mxu0
        %4168 = vmatprep.mubr.bf16.mxu0 0
        %4169 = vmatmul.mubr.bf16.gmra.mrb[0].mxu0 %v4117
        %v4170 = vpop.f32.mrb[0].mxu0
        %v4171 = vadd.f32 0.0, %v4170
        %v4172 = vpop.f32.mrb[0].mxu0
        %v4173 = vpop.f32.mrb[0].mxu0
        %v4174 = vadd.f32 0.0, %v4173
        %v4175 = vpop.f32.mrb[0].mxu0
        %4176 = vmatprep.mubr.bf16.mxu0 0
        %4177 = vmatmul.mubr.bf16.gmra.mrb[0].mxu0 %v4120
        %v4178 = vpop.f32.mrb[0].mxu0
        %v4179 = vadd.f32 0.0, %v4178
        %v4180 = vpop.f32.mrb[0].mxu0
        %v4181 = vpop.f32.mrb[0].mxu0
        %v4182 = vadd.f32 0.0, %v4181
        %v4183 = vpop.f32.mrb[0].mxu0
        %4184 = vmatprep.mubr.bf16.mxu0 0
        %4185 = vmatmul.mubr.bf16.gmra.mrb[0].mxu0 %v4123
        %v4186 = vpop.f32.mrb[0].mxu0
        %v4187 = vadd.f32 0.0, %v4186
        %v4188 = vpop.f32.mrb[0].mxu0
        %v4189 = vpop.f32.mrb[0].mxu0
        %v4190 = vadd.f32 0.0, %v4189
        %v4191 = vpop.f32.mrb[0].mxu0
        %4192 = vdwg.mxu0
        %v4193 = vadd.f32 %v4064, %v4163
        %v4194 = vadd.f32 %v4065, %v4166
        %v4195 = vadd.f32 %v4066, %v4171
        %v4196 = vadd.f32 %v4067, %v4174
        %v4197 = vadd.f32 %v4068, %v4179
        %v4198 = vadd.f32 %v4069, %v4182
        %v4199 = vadd.f32 %v4070, %v4187
        %v4200 = vadd.f32 %v4071, %v4190
        %4201 = vst.msk [vmem:[#allocation2] sm:$0xff] %vm232, %v4193
        %4202 = vst.msk [vmem:[#allocation2 + $0x8] sm:$0xff] %vm232, %v4194
        %4203 = vst.msk [vmem:[#allocation2 + $0x10] sm:$0xff] %vm232, %v4195
        %4204 = vst.msk [vmem:[#allocation2 + $0x18] sm:$0xff] %vm232, %v4196
        %4205 = vst.msk [vmem:[#allocation2 + $0x20] sm:$0xff] %vm232, %v4197
        %4206 = vst.msk [vmem:[#allocation2 + $0x28] sm:$0xff] %vm232, %v4198
        %4207 = vst.msk [vmem:[#allocation2 + $0x30] sm:$0xff] %vm232, %v4199
        %4208 = vst.msk [vmem:[#allocation2 + $0x38] sm:$0xff] %vm232, %v4200
        %s4209 = sadd.s32 %s241, 5
        %s4210 = smul.u32 %s4209, 2
        %s4211 = smul.addr %s4210, 4
        %s4212 = scalar_lea.vmem %s199, %s4211 [#allocation3]
        %v4213 = vld [vmem:[%s4212] sm:$0xf]
        %v4214 = vld [vmem:[%s4212 + $0x4] sm:$0x1]
        %v4215 = vld [vmem:[%s4212 + $0x8] sm:$0xf]
        %v4216 = vld [vmem:[%s4212 + $0xc] sm:$0x1]
        %v4217 = vld [vmem:[%s4212 + $0x10] sm:$0xf]
        %v4218 = vld [vmem:[%s4212 + $0x14] sm:$0x1]
        %v4219 = vld [vmem:[%s4212 + $0x18] sm:$0xf]
        %v4220 = vld [vmem:[%s4212 + $0x1c] sm:$0x1]
        %v4221 = vld [vmem:[%s4212 + $0x20] sm:$0xf]
        %v4222 = vld [vmem:[%s4212 + $0x24] sm:$0x1]
        %v4223 = vld [vmem:[%s4212 + $0x28] sm:$0xf]
        %v4224 = vld [vmem:[%s4212 + $0x2c] sm:$0x1]
        %v4225 = vld [vmem:[%s4212 + $0x30] sm:$0xf]
        %v4226 = vld [vmem:[%s4212 + $0x34] sm:$0x1]
        %v4227 = vld [vmem:[%s4212 + $0x38] sm:$0xf]
        %v4228 = vld [vmem:[%s4212 + $0x3c] sm:$0x1]
        %v4230 = vshrl.u32 %v4213, 16
        %v4232 = vrot.slane %v4230, 4
        %v4233 = vshll.u32 %v4213, 16
        %v4235 = vrot.slane %v4233, 5
        %v4236 = vor.u32 %v4232, %v4235
        %v4237 = vrot.slane %v4236, 4
        %v4239 = vshll.u32 %v4214, 16
        %v4241 = vrot.slane %v4239, 5
        %v4242 = vsel %vm2455, %v4237, %v4241
        %v4244 = vshrl.u32 %v4215, 16
        %v4246 = vrot.slane %v4244, 4
        %v4247 = vshll.u32 %v4215, 16
        %v4249 = vrot.slane %v4247, 5
        %v4250 = vor.u32 %v4246, %v4249
        %v4251 = vrot.slane %v4250, 4
        %v4253 = vshll.u32 %v4216, 16
        %v4255 = vrot.slane %v4253, 5
        %v4256 = vsel %vm2455, %v4251, %v4255
        %v4258 = vshrl.u32 %v4217, 16
        %v4260 = vrot.slane %v4258, 4
        %v4261 = vshll.u32 %v4217, 16
        %v4263 = vrot.slane %v4261, 5
        %v4264 = vor.u32 %v4260, %v4263
        %v4265 = vrot.slane %v4264, 4
        %v4267 = vshll.u32 %v4218, 16
        %v4269 = vrot.slane %v4267, 5
        %v4270 = vsel %vm2455, %v4265, %v4269
        %v4272 = vshrl.u32 %v4219, 16
        %v4274 = vrot.slane %v4272, 4
        %v4275 = vshll.u32 %v4219, 16
        %v4277 = vrot.slane %v4275, 5
        %v4278 = vor.u32 %v4274, %v4277
        %v4279 = vrot.slane %v4278, 4
        %v4281 = vshll.u32 %v4220, 16
        %v4283 = vrot.slane %v4281, 5
        %v4284 = vsel %vm2455, %v4279, %v4283
        %v4286 = vshrl.u32 %v4221, 16
        %v4288 = vrot.slane %v4286, 4
        %v4289 = vshll.u32 %v4221, 16
        %v4291 = vrot.slane %v4289, 5
        %v4292 = vor.u32 %v4288, %v4291
        %v4293 = vrot.slane %v4292, 4
        %v4295 = vshll.u32 %v4222, 16
        %v4297 = vrot.slane %v4295, 5
        %v4298 = vsel %vm2455, %v4293, %v4297
        %v4300 = vshrl.u32 %v4223, 16
        %v4302 = vrot.slane %v4300, 4
        %v4303 = vshll.u32 %v4223, 16
        %v4305 = vrot.slane %v4303, 5
        %v4306 = vor.u32 %v4302, %v4305
        %v4307 = vrot.slane %v4306, 4
        %v4309 = vshll.u32 %v4224, 16
        %v4311 = vrot.slane %v4309, 5
        %v4312 = vsel %vm2455, %v4307, %v4311
        %v4314 = vshrl.u32 %v4225, 16
        %v4316 = vrot.slane %v4314, 4
        %v4317 = vshll.u32 %v4225, 16
        %v4319 = vrot.slane %v4317, 5
        %v4320 = vor.u32 %v4316, %v4319
        %v4321 = vrot.slane %v4320, 4
        %v4323 = vshll.u32 %v4226, 16
        %v4325 = vrot.slane %v4323, 5
        %v4326 = vsel %vm2455, %v4321, %v4325
        %v4328 = vshrl.u32 %v4227, 16
        %v4330 = vrot.slane %v4328, 4
        %v4331 = vshll.u32 %v4227, 16
        %v4333 = vrot.slane %v4331, 5
        %v4334 = vor.u32 %v4330, %v4333
        %v4335 = vrot.slane %v4334, 4
        %v4337 = vshll.u32 %v4228, 16
        %v4339 = vrot.slane %v4337, 5
        %v4340 = vsel %vm2455, %v4335, %v4339
        %v4341 = vld [vmem:[#allocation2] sm:$0xff]
        %v4342 = vld [vmem:[#allocation2 + $0x8] sm:$0xff]
        %v4343 = vld [vmem:[#allocation2 + $0x10] sm:$0xff]
        %v4344 = vld [vmem:[#allocation2 + $0x18] sm:$0xff]
        %v4345 = vld [vmem:[#allocation2 + $0x20] sm:$0xff]
        %v4346 = vld [vmem:[#allocation2 + $0x28] sm:$0xff]
        %v4347 = vld [vmem:[#allocation2 + $0x30] sm:$0xff]
        %v4348 = vld [vmem:[#allocation2 + $0x38] sm:$0xff]
        %s4349 = scalar_lea.vmem [#allocation6], 420
        %v4350 = vld [vmem:[%s4349] sm:$0xf]
        %v4351 = vld [vmem:[%s4349 + $0x4] sm:$0xf]
        %v4352 = vld [vmem:[%s4349 + $0x8] sm:$0xf]
        %v4353 = vld [vmem:[%s4349 + $0xc] sm:$0xf]
        %v4354 = vld [vmem:[%s4349 + $0x10] sm:$0xf]
        %v4355 = vld [vmem:[%s4349 + $0x14] sm:$0xf]
        %v4356 = vld [vmem:[%s4349 + $0x18] sm:$0xf]
        %v4357 = vunpack.c.l.b16 %v4242
        %v4358 = vunpack.c.l.b16 %v4256
        %v4359 = vunpack.c.l.b16 %v4270
        %v4360 = vunpack.c.l.b16 %v4284
        %v4361 = vunpack.c.l.b16 %v4298
        %v4362 = vunpack.c.l.b16 %v4312
        %v4363 = vunpack.c.l.b16 %v4326
        %v4364 = vunpack.c.l.b16 %v4340
        %v4365 = vpack.c.b16 %v4358, %v4357
        %v4366 = vpack.c.b16 %v4360, %v4359
        %v4367 = vpack.c.b16 %v4362, %v4361
        %v4368 = vpack.c.b16 %v4364, %v4363
        %v4376 = vunpack.c.l.b16 %v4350
        %v4377 = vunpack.c.l.b16 %v4351
        %v4378 = vunpack.c.l.b16 %v4352
        %v4379 = vunpack.c.l.b16 %v4353
        %v4380 = vunpack.c.l.b16 %v4354
        %v4381 = vunpack.c.l.b16 %v4355
        %v4382 = vunpack.c.l.b16 %v4356
        %v4383 = vpack.c.b16 %v4377, %v4376
        %v4384 = vpack.c.b16 %v4379, %v4378
        %v4385 = vpack.c.b16 %v4381, %v4380
        %v4386 = vpack.c.b16 %v4382, %v4382
        %v4391 = vsel %vm361, %v4365, 0
        %v4394 = vsel %vm361, %v4366, 0
        %v4397 = vsel %vm361, %v4367, 0
        %v4400 = vsel %vm361, %v4368, 0
        %v4403 = vsel %vm374, %v4386, 0
        %4405 = vmatprep.subr.bf16.mxu0 0
        %4406 = vmatpush1.bf16.msra.mxu0 %v4383
        %4407 = vmatprep.subr.bf16.mxu0 0
        %4408 = vmatpush1.bf16.msra.mxu0 %v4384
        %4409 = vmatprep.subr.bf16.mxu0 0
        %4410 = vmatpush1.bf16.msra.mxu0 %v4385
        %4411 = vmatprep.subr.bf16.mxu0 0
        %4412 = vmatpush1.bf16.msra.mxu0 %v4403
        %4413 = vmatprep.subr.bf16.mxu0 0
        %4414 = vmatpush1.bf16.msra.mxu0 0
        %4415 = vmatprep.subr.bf16.mxu0 0
        %4416 = vmatpush1.bf16.msra.mxu0 0
        %4417 = vmatprep.subr.bf16.mxu0 0
        %4418 = vmatpush1.bf16.msra.mxu0 0
        %4419 = vmatprep.subr.bf16.mxu0 0
        %4420 = vmatpush1.bf16.msra.mxu0 0
        %4421 = vmatprep.subr.bf16.mxu0 0
        %4422 = vmatpush1.bf16.msra.mxu0 0
        %4423 = vmatprep.subr.bf16.mxu0 0
        %4424 = vmatpush1.bf16.msra.mxu0 0
        %4425 = vmatprep.subr.bf16.mxu0 0
        %4426 = vmatpush1.bf16.msra.mxu0 0
        %4427 = vmatprep.subr.bf16.mxu0 0
        %4428 = vmatpush1.bf16.msra.mxu0 0
        %4429 = vmatprep.subr.bf16.mxu0 0
        %4430 = vmatpush1.bf16.msra.mxu0 0
        %4431 = vmatprep.subr.bf16.mxu0 0
        %4432 = vmatpush1.bf16.msra.mxu0 0
        %4433 = vmatprep.subr.bf16.mxu0 0
        %4434 = vmatpush1.bf16.msra.mxu0 0
        %4435 = vmatprep.subr.bf16.mxu0 0
        %4436 = vmatpush1.bf16.msra.mxu0 0
        %4437 = vmatprep.mubr.bf16.mxu0 0
        %4438 = vmatmul.mubr.bf16.gmra.mrb[0].mxu0 %v4391
        %v4439 = vpop.f32.mrb[0].mxu0
        %v4440 = vadd.f32 0.0, %v4439
        %v4441 = vpop.f32.mrb[0].mxu0
        %v4442 = vpop.f32.mrb[0].mxu0
        %v4443 = vadd.f32 0.0, %v4442
        %v4444 = vpop.f32.mrb[0].mxu0
        %4445 = vmatprep.mubr.bf16.mxu0 0
        %4446 = vmatmul.mubr.bf16.gmra.mrb[0].mxu0 %v4394
        %v4447 = vpop.f32.mrb[0].mxu0
        %v4448 = vadd.f32 0.0, %v4447
        %v4449 = vpop.f32.mrb[0].mxu0
        %v4450 = vpop.f32.mrb[0].mxu0
        %v4451 = vadd.f32 0.0, %v4450
        %v4452 = vpop.f32.mrb[0].mxu0
        %4453 = vmatprep.mubr.bf16.mxu0 0
        %4454 = vmatmul.mubr.bf16.gmra.mrb[0].mxu0 %v4397
        %v4455 = vpop.f32.mrb[0].mxu0
        %v4456 = vadd.f32 0.0, %v4455
        %v4457 = vpop.f32.mrb[0].mxu0
        %v4458 = vpop.f32.mrb[0].mxu0
        %v4459 = vadd.f32 0.0, %v4458
        %v4460 = vpop.f32.mrb[0].mxu0
        %4461 = vmatprep.mubr.bf16.mxu0 0
        %4462 = vmatmul.mubr.bf16.gmra.mrb[0].mxu0 %v4400
        %v4463 = vpop.f32.mrb[0].mxu0
        %v4464 = vadd.f32 0.0, %v4463
        %v4465 = vpop.f32.mrb[0].mxu0
        %v4466 = vpop.f32.mrb[0].mxu0
        %v4467 = vadd.f32 0.0, %v4466
        %v4468 = vpop.f32.mrb[0].mxu0
        %4469 = vdwg.mxu0
        %v4470 = vadd.f32 %v4341, %v4440
        %v4471 = vadd.f32 %v4342, %v4443
        %v4472 = vadd.f32 %v4343, %v4448
        %v4473 = vadd.f32 %v4344, %v4451
        %v4474 = vadd.f32 %v4345, %v4456
        %v4475 = vadd.f32 %v4346, %v4459
        %v4476 = vadd.f32 %v4347, %v4464
        %v4477 = vadd.f32 %v4348, %v4467
        %4478 = vst.msk [vmem:[#allocation2] sm:$0xff] %vm232, %v4470
        %4479 = vst.msk [vmem:[#allocation2 + $0x8] sm:$0xff] %vm232, %v4471
        %4480 = vst.msk [vmem:[#allocation2 + $0x10] sm:$0xff] %vm232, %v4472
        %4481 = vst.msk [vmem:[#allocation2 + $0x18] sm:$0xff] %vm232, %v4473
        %4482 = vst.msk [vmem:[#allocation2 + $0x20] sm:$0xff] %vm232, %v4474
        %4483 = vst.msk [vmem:[#allocation2 + $0x28] sm:$0xff] %vm232, %v4475
        %4484 = vst.msk [vmem:[#allocation2 + $0x30] sm:$0xff] %vm232, %v4476
        %4485 = vst.msk [vmem:[#allocation2 + $0x38] sm:$0xff] %vm232, %v4477
        %v4486 = vld [vmem:[%s4212] sm:$0xe]
        %v4487 = vld [vmem:[%s4212 + $0x4] sm:$0x3]
        %v4488 = vld [vmem:[%s4212 + $0x8] sm:$0xe]
        %v4489 = vld [vmem:[%s4212 + $0xc] sm:$0x3]
        %v4490 = vld [vmem:[%s4212 + $0x10] sm:$0xe]
        %v4491 = vld [vmem:[%s4212 + $0x14] sm:$0x3]
        %v4492 = vld [vmem:[%s4212 + $0x18] sm:$0xe]
        %v4493 = vld [vmem:[%s4212 + $0x1c] sm:$0x3]
        %v4494 = vld [vmem:[%s4212 + $0x20] sm:$0xe]
        %v4495 = vld [vmem:[%s4212 + $0x24] sm:$0x3]
        %v4496 = vld [vmem:[%s4212 + $0x28] sm:$0xe]
        %v4497 = vld [vmem:[%s4212 + $0x2c] sm:$0x3]
        %v4498 = vld [vmem:[%s4212 + $0x30] sm:$0xe]
        %v4499 = vld [vmem:[%s4212 + $0x34] sm:$0x3]
        %v4500 = vld [vmem:[%s4212 + $0x38] sm:$0xe]
        %v4501 = vld [vmem:[%s4212 + $0x3c] sm:$0x3]
        %v4503 = vshrl.u32 %v4486, 16
        %v4505 = vrot.slane %v4503, 5
        %v4506 = vshll.u32 %v4486, 16
        %v4508 = vrot.slane %v4506, 6
        %v4509 = vor.u32 %v4505, %v4508
        %v4510 = vrot.slane %v4509, 4
        %v4512 = vshrl.u32 %v4487, 16
        %v4514 = vrot.slane %v4512, 5
        %v4515 = vshll.u32 %v4487, 16
        %v4517 = vrot.slane %v4515, 6
        %v4518 = vor.u32 %v4514, %v4517
        %v4519 = vsel %vm477, %v4510, %v4518
        %v4521 = vshrl.u32 %v4488, 16
        %v4523 = vrot.slane %v4521, 5
        %v4524 = vshll.u32 %v4488, 16
        %v4526 = vrot.slane %v4524, 6
        %v4527 = vor.u32 %v4523, %v4526
        %v4528 = vrot.slane %v4527, 4
        %v4530 = vshrl.u32 %v4489, 16
        %v4532 = vrot.slane %v4530, 5
        %v4533 = vshll.u32 %v4489, 16
        %v4535 = vrot.slane %v4533, 6
        %v4536 = vor.u32 %v4532, %v4535
        %v4537 = vsel %vm477, %v4528, %v4536
        %v4539 = vshrl.u32 %v4490, 16
        %v4541 = vrot.slane %v4539, 5
        %v4542 = vshll.u32 %v4490, 16
        %v4544 = vrot.slane %v4542, 6
        %v4545 = vor.u32 %v4541, %v4544
        %v4546 = vrot.slane %v4545, 4
        %v4548 = vshrl.u32 %v4491, 16
        %v4550 = vrot.slane %v4548, 5
        %v4551 = vshll.u32 %v4491, 16
        %v4553 = vrot.slane %v4551, 6
        %v4554 = vor.u32 %v4550, %v4553
        %v4555 = vsel %vm477, %v4546, %v4554
        %v4557 = vshrl.u32 %v4492, 16
        %v4559 = vrot.slane %v4557, 5
        %v4560 = vshll.u32 %v4492, 16
        %v4562 = vrot.slane %v4560, 6
        %v4563 = vor.u32 %v4559, %v4562
        %v4564 = vrot.slane %v4563, 4
        %v4566 = vshrl.u32 %v4493, 16
        %v4568 = vrot.slane %v4566, 5
        %v4569 = vshll.u32 %v4493, 16
        %v4571 = vrot.slane %v4569, 6
        %v4572 = vor.u32 %v4568, %v4571
        %v4573 = vsel %vm477, %v4564, %v4572
        %v4575 = vshrl.u32 %v4494, 16
        %v4577 = vrot.slane %v4575, 5
        %v4578 = vshll.u32 %v4494, 16
        %v4580 = vrot.slane %v4578, 6
        %v4581 = vor.u32 %v4577, %v4580
        %v4582 = vrot.slane %v4581, 4
        %v4584 = vshrl.u32 %v4495, 16
        %v4586 = vrot.slane %v4584, 5
        %v4587 = vshll.u32 %v4495, 16
        %v4589 = vrot.slane %v4587, 6
        %v4590 = vor.u32 %v4586, %v4589
        %v4591 = vsel %vm477, %v4582, %v4590
        %v4593 = vshrl.u32 %v4496, 16
        %v4595 = vrot.slane %v4593, 5
        %v4596 = vshll.u32 %v4496, 16
        %v4598 = vrot.slane %v4596, 6
        %v4599 = vor.u32 %v4595, %v4598
        %v4600 = vrot.slane %v4599, 4
        %v4602 = vshrl.u32 %v4497, 16
        %v4604 = vrot.slane %v4602, 5
        %v4605 = vshll.u32 %v4497, 16
        %v4607 = vrot.slane %v4605, 6
        %v4608 = vor.u32 %v4604, %v4607
        %v4609 = vsel %vm477, %v4600, %v4608
        %v4611 = vshrl.u32 %v4498, 16
        %v4613 = vrot.slane %v4611, 5
        %v4614 = vshll.u32 %v4498, 16
        %v4616 = vrot.slane %v4614, 6
        %v4617 = vor.u32 %v4613, %v4616
        %v4618 = vrot.slane %v4617, 4
        %v4620 = vshrl.u32 %v4499, 16
        %v4622 = vrot.slane %v4620, 5
        %v4623 = vshll.u32 %v4499, 16
        %v4625 = vrot.slane %v4623, 6
        %v4626 = vor.u32 %v4622, %v4625
        %v4627 = vsel %vm477, %v4618, %v4626
        %v4629 = vshrl.u32 %v4500, 16
        %v4631 = vrot.slane %v4629, 5
        %v4632 = vshll.u32 %v4500, 16
        %v4634 = vrot.slane %v4632, 6
        %v4635 = vor.u32 %v4631, %v4634
        %v4636 = vrot.slane %v4635, 4
        %v4638 = vshrl.u32 %v4501, 16
        %v4640 = vrot.slane %v4638, 5
        %v4641 = vshll.u32 %v4501, 16
        %v4643 = vrot.slane %v4641, 6
        %v4644 = vor.u32 %v4640, %v4643
        %v4645 = vsel %vm477, %v4636, %v4644
        %v4646 = vld [vmem:[#allocation2] sm:$0xff]
        %v4647 = vld [vmem:[#allocation2 + $0x8] sm:$0xff]
        %v4648 = vld [vmem:[#allocation2 + $0x10] sm:$0xff]
        %v4649 = vld [vmem:[#allocation2 + $0x18] sm:$0xff]
        %v4650 = vld [vmem:[#allocation2 + $0x20] sm:$0xff]
        %v4651 = vld [vmem:[#allocation2 + $0x28] sm:$0xff]
        %v4652 = vld [vmem:[#allocation2 + $0x30] sm:$0xff]
        %v4653 = vld [vmem:[#allocation2 + $0x38] sm:$0xff]
        %s4654 = scalar_lea.vmem [#allocation6], 448
        %v4655 = vld [vmem:[%s4654] sm:$0xf]
        %v4656 = vld [vmem:[%s4654 + $0x4] sm:$0xf]
        %v4657 = vld [vmem:[%s4654 + $0x8] sm:$0xf]
        %v4658 = vld [vmem:[%s4654 + $0xc] sm:$0xf]
        %v4659 = vld [vmem:[%s4654 + $0x10] sm:$0xf]
        %v4660 = vld [vmem:[%s4654 + $0x14] sm:$0xf]
        %v4661 = vld [vmem:[%s4654 + $0x18] sm:$0xf]
        %v4662 = vunpack.c.l.b16 %v4519
        %v4663 = vunpack.c.l.b16 %v4537
        %v4664 = vunpack.c.l.b16 %v4555
        %v4665 = vunpack.c.l.b16 %v4573
        %v4666 = vunpack.c.l.b16 %v4591
        %v4667 = vunpack.c.l.b16 %v4609
        %v4668 = vunpack.c.l.b16 %v4627
        %v4669 = vunpack.c.l.b16 %v4645
        %v4670 = vpack.c.b16 %v4663, %v4662
        %v4671 = vpack.c.b16 %v4665, %v4664
        %v4672 = vpack.c.b16 %v4667, %v4666
        %v4673 = vpack.c.b16 %v4669, %v4668
        %v4681 = vunpack.c.l.b16 %v4655
        %v4682 = vunpack.c.l.b16 %v4656
        %v4683 = vunpack.c.l.b16 %v4657
        %v4684 = vunpack.c.l.b16 %v4658
        %v4685 = vunpack.c.l.b16 %v4659
        %v4686 = vunpack.c.l.b16 %v4660
        %v4687 = vunpack.c.l.b16 %v4661
        %v4688 = vpack.c.b16 %v4682, %v4681
        %v4689 = vpack.c.b16 %v4684, %v4683
        %v4690 = vpack.c.b16 %v4686, %v4685
        %v4691 = vpack.c.b16 %v4687, %v4687
        %v4696 = vsel %vm361, %v4670, 0
        %v4699 = vsel %vm361, %v4671, 0
        %v4702 = vsel %vm361, %v4672, 0
        %v4705 = vsel %vm361, %v4673, 0
        %v4708 = vsel %vm374, %v4691, 0
        %4710 = vmatprep.subr.bf16.mxu0 0
        %4711 = vmatpush1.bf16.msra.mxu0 %v4688
        %4712 = vmatprep.subr.bf16.mxu0 0
        %4713 = vmatpush1.bf16.msra.mxu0 %v4689
        %4714 = vmatprep.subr.bf16.mxu0 0
        %4715 = vmatpush1.bf16.msra.mxu0 %v4690
        %4716 = vmatprep.subr.bf16.mxu0 0
        %4717 = vmatpush1.bf16.msra.mxu0 %v4708
        %4718 = vmatprep.subr.bf16.mxu0 0
        %4719 = vmatpush1.bf16.msra.mxu0 0
        %4720 = vmatprep.subr.bf16.mxu0 0
        %4721 = vmatpush1.bf16.msra.mxu0 0
        %4722 = vmatprep.subr.bf16.mxu0 0
        %4723 = vmatpush1.bf16.msra.mxu0 0
        %4724 = vmatprep.subr.bf16.mxu0 0
        %4725 = vmatpush1.bf16.msra.mxu0 0
        %4726 = vmatprep.subr.bf16.mxu0 0
        %4727 = vmatpush1.bf16.msra.mxu0 0
        %4728 = vmatprep.subr.bf16.mxu0 0
        %4729 = vmatpush1.bf16.msra.mxu0 0
        %4730 = vmatprep.subr.bf16.mxu0 0
        %4731 = vmatpush1.bf16.msra.mxu0 0
        %4732 = vmatprep.subr.bf16.mxu0 0
        %4733 = vmatpush1.bf16.msra.mxu0 0
        %4734 = vmatprep.subr.bf16.mxu0 0
        %4735 = vmatpush1.bf16.msra.mxu0 0
        %4736 = vmatprep.subr.bf16.mxu0 0
        %4737 = vmatpush1.bf16.msra.mxu0 0
        %4738 = vmatprep.subr.bf16.mxu0 0
        %4739 = vmatpush1.bf16.msra.mxu0 0
        %4740 = vmatprep.subr.bf16.mxu0 0
        %4741 = vmatpush1.bf16.msra.mxu0 0
        %4742 = vmatprep.mubr.bf16.mxu0 0
        %4743 = vmatmul.mubr.bf16.gmra.mrb[0].mxu0 %v4696
        %v4744 = vpop.f32.mrb[0].mxu0
        %v4745 = vadd.f32 0.0, %v4744
        %v4746 = vpop.f32.mrb[0].mxu0
        %v4747 = vpop.f32.mrb[0].mxu0
        %v4748 = vadd.f32 0.0, %v4747
        %v4749 = vpop.f32.mrb[0].mxu0
        %4750 = vmatprep.mubr.bf16.mxu0 0
        %4751 = vmatmul.mubr.bf16.gmra.mrb[0].mxu0 %v4699
        %v4752 = vpop.f32.mrb[0].mxu0
        %v4753 = vadd.f32 0.0, %v4752
        %v4754 = vpop.f32.mrb[0].mxu0
        %v4755 = vpop.f32.mrb[0].mxu0
        %v4756 = vadd.f32 0.0, %v4755
        %v4757 = vpop.f32.mrb[0].mxu0
        %4758 = vmatprep.mubr.bf16.mxu0 0
        %4759 = vmatmul.mubr.bf16.gmra.mrb[0].mxu0 %v4702
        %v4760 = vpop.f32.mrb[0].mxu0
        %v4761 = vadd.f32 0.0, %v4760
        %v4762 = vpop.f32.mrb[0].mxu0
        %v4763 = vpop.f32.mrb[0].mxu0
        %v4764 = vadd.f32 0.0, %v4763
        %v4765 = vpop.f32.mrb[0].mxu0
        %4766 = vmatprep.mubr.bf16.mxu0 0
        %4767 = vmatmul.mubr.bf16.gmra.mrb[0].mxu0 %v4705
        %v4768 = vpop.f32.mrb[0].mxu0
        %v4769 = vadd.f32 0.0, %v4768
        %v4770 = vpop.f32.mrb[0].mxu0
        %v4771 = vpop.f32.mrb[0].mxu0
        %v4772 = vadd.f32 0.0, %v4771
        %v4773 = vpop.f32.mrb[0].mxu0
        %4774 = vdwg.mxu0
        %v4775 = vadd.f32 %v4646, %v4745
        %v4776 = vadd.f32 %v4647, %v4748
        %v4777 = vadd.f32 %v4648, %v4753
        %v4778 = vadd.f32 %v4649, %v4756
        %v4779 = vadd.f32 %v4650, %v4761
        %v4780 = vadd.f32 %v4651, %v4764
        %v4781 = vadd.f32 %v4652, %v4769
        %v4782 = vadd.f32 %v4653, %v4772
        %4783 = vst.msk [vmem:[#allocation2] sm:$0xff] %vm232, %v4775
        %4784 = vst.msk [vmem:[#allocation2 + $0x8] sm:$0xff] %vm232, %v4776
        %4785 = vst.msk [vmem:[#allocation2 + $0x10] sm:$0xff] %vm232, %v4777
        %4786 = vst.msk [vmem:[#allocation2 + $0x18] sm:$0xff] %vm232, %v4778
        %4787 = vst.msk [vmem:[#allocation2 + $0x20] sm:$0xff] %vm232, %v4779
        %4788 = vst.msk [vmem:[#allocation2 + $0x28] sm:$0xff] %vm232, %v4780
        %4789 = vst.msk [vmem:[#allocation2 + $0x30] sm:$0xff] %vm232, %v4781
        %4790 = vst.msk [vmem:[#allocation2 + $0x38] sm:$0xff] %vm232, %v4782
        %v4791 = vld [vmem:[%s4212] sm:$0xc]
        %v4792 = vld [vmem:[%s4212 + $0x4] sm:$0x7]
        %v4793 = vld [vmem:[%s4212 + $0x8] sm:$0xc]
        %v4794 = vld [vmem:[%s4212 + $0xc] sm:$0x7]
        %v4795 = vld [vmem:[%s4212 + $0x10] sm:$0xc]
        %v4796 = vld [vmem:[%s4212 + $0x14] sm:$0x7]
        %v4797 = vld [vmem:[%s4212 + $0x18] sm:$0xc]
        %v4798 = vld [vmem:[%s4212 + $0x1c] sm:$0x7]
        %v4799 = vld [vmem:[%s4212 + $0x20] sm:$0xc]
        %v4800 = vld [vmem:[%s4212 + $0x24] sm:$0x7]
        %v4801 = vld [vmem:[%s4212 + $0x28] sm:$0xc]
        %v4802 = vld [vmem:[%s4212 + $0x2c] sm:$0x7]
        %v4803 = vld [vmem:[%s4212 + $0x30] sm:$0xc]
        %v4804 = vld [vmem:[%s4212 + $0x34] sm:$0x7]
        %v4805 = vld [vmem:[%s4212 + $0x38] sm:$0xc]
        %v4806 = vld [vmem:[%s4212 + $0x3c] sm:$0x7]
        %v4808 = vshrl.u32 %v4791, 16
        %v4810 = vrot.slane %v4808, 6
        %v4811 = vshll.u32 %v4791, 16
        %v4813 = vrot.slane %v4811, 7
        %v4814 = vor.u32 %v4810, %v4813
        %v4815 = vrot.slane %v4814, 4
        %v4817 = vshrl.u32 %v4792, 16
        %v4819 = vrot.slane %v4817, 6
        %v4820 = vshll.u32 %v4792, 16
        %v4822 = vrot.slane %v4820, 7
        %v4823 = vor.u32 %v4819, %v4822
        %v4824 = vsel %vm3036, %v4815, %v4823
        %v4826 = vshrl.u32 %v4793, 16
        %v4828 = vrot.slane %v4826, 6
        %v4829 = vshll.u32 %v4793, 16
        %v4831 = vrot.slane %v4829, 7
        %v4832 = vor.u32 %v4828, %v4831
        %v4833 = vrot.slane %v4832, 4
        %v4835 = vshrl.u32 %v4794, 16
        %v4837 = vrot.slane %v4835, 6
        %v4838 = vshll.u32 %v4794, 16
        %v4840 = vrot.slane %v4838, 7
        %v4841 = vor.u32 %v4837, %v4840
        %v4842 = vsel %vm3036, %v4833, %v4841
        %v4844 = vshrl.u32 %v4795, 16
        %v4846 = vrot.slane %v4844, 6
        %v4847 = vshll.u32 %v4795, 16
        %v4849 = vrot.slane %v4847, 7
        %v4850 = vor.u32 %v4846, %v4849
        %v4851 = vrot.slane %v4850, 4
        %v4853 = vshrl.u32 %v4796, 16
        %v4855 = vrot.slane %v4853, 6
        %v4856 = vshll.u32 %v4796, 16
        %v4858 = vrot.slane %v4856, 7
        %v4859 = vor.u32 %v4855, %v4858
        %v4860 = vsel %vm3036, %v4851, %v4859
        %v4862 = vshrl.u32 %v4797, 16
        %v4864 = vrot.slane %v4862, 6
        %v4865 = vshll.u32 %v4797, 16
        %v4867 = vrot.slane %v4865, 7
        %v4868 = vor.u32 %v4864, %v4867
        %v4869 = vrot.slane %v4868, 4
        %v4871 = vshrl.u32 %v4798, 16
        %v4873 = vrot.slane %v4871, 6
        %v4874 = vshll.u32 %v4798, 16
        %v4876 = vrot.slane %v4874, 7
        %v4877 = vor.u32 %v4873, %v4876
        %v4878 = vsel %vm3036, %v4869, %v4877
        %v4880 = vshrl.u32 %v4799, 16
        %v4882 = vrot.slane %v4880, 6
        %v4883 = vshll.u32 %v4799, 16
        %v4885 = vrot.slane %v4883, 7
        %v4886 = vor.u32 %v4882, %v4885
        %v4887 = vrot.slane %v4886, 4
        %v4889 = vshrl.u32 %v4800, 16
        %v4891 = vrot.slane %v4889, 6
        %v4892 = vshll.u32 %v4800, 16
        %v4894 = vrot.slane %v4892, 7
        %v4895 = vor.u32 %v4891, %v4894
        %v4896 = vsel %vm3036, %v4887, %v4895
        %v4898 = vshrl.u32 %v4801, 16
        %v4900 = vrot.slane %v4898, 6
        %v4901 = vshll.u32 %v4801, 16
        %v4903 = vrot.slane %v4901, 7
        %v4904 = vor.u32 %v4900, %v4903
        %v4905 = vrot.slane %v4904, 4
        %v4907 = vshrl.u32 %v4802, 16
        %v4909 = vrot.slane %v4907, 6
        %v4910 = vshll.u32 %v4802, 16
        %v4912 = vrot.slane %v4910, 7
        %v4913 = vor.u32 %v4909, %v4912
        %v4914 = vsel %vm3036, %v4905, %v4913
        %v4916 = vshrl.u32 %v4803, 16
        %v4918 = vrot.slane %v4916, 6
        %v4919 = vshll.u32 %v4803, 16
        %v4921 = vrot.slane %v4919, 7
        %v4922 = vor.u32 %v4918, %v4921
        %v4923 = vrot.slane %v4922, 4
        %v4925 = vshrl.u32 %v4804, 16
        %v4927 = vrot.slane %v4925, 6
        %v4928 = vshll.u32 %v4804, 16
        %v4930 = vrot.slane %v4928, 7
        %v4931 = vor.u32 %v4927, %v4930
        %v4932 = vsel %vm3036, %v4923, %v4931
        %v4934 = vshrl.u32 %v4805, 16
        %v4936 = vrot.slane %v4934, 6
        %v4937 = vshll.u32 %v4805, 16
        %v4939 = vrot.slane %v4937, 7
        %v4940 = vor.u32 %v4936, %v4939
        %v4941 = vrot.slane %v4940, 4
        %v4943 = vshrl.u32 %v4806, 16
        %v4945 = vrot.slane %v4943, 6
        %v4946 = vshll.u32 %v4806, 16
        %v4948 = vrot.slane %v4946, 7
        %v4949 = vor.u32 %v4945, %v4948
        %v4950 = vsel %vm3036, %v4941, %v4949
        %v4951 = vld [vmem:[#allocation2] sm:$0xff]
        %v4952 = vld [vmem:[#allocation2 + $0x8] sm:$0xff]
        %v4953 = vld [vmem:[#allocation2 + $0x10] sm:$0xff]
        %v4954 = vld [vmem:[#allocation2 + $0x18] sm:$0xff]
        %v4955 = vld [vmem:[#allocation2 + $0x20] sm:$0xff]
        %v4956 = vld [vmem:[#allocation2 + $0x28] sm:$0xff]
        %v4957 = vld [vmem:[#allocation2 + $0x30] sm:$0xff]
        %v4958 = vld [vmem:[#allocation2 + $0x38] sm:$0xff]
        %s4959 = scalar_lea.vmem [#allocation6], 476
        %v4960 = vld [vmem:[%s4959] sm:$0xf]
        %v4961 = vld [vmem:[%s4959 + $0x4] sm:$0xf]
        %v4962 = vld [vmem:[%s4959 + $0x8] sm:$0xf]
        %v4963 = vld [vmem:[%s4959 + $0xc] sm:$0xf]
        %v4964 = vld [vmem:[%s4959 + $0x10] sm:$0xf]
        %v4965 = vld [vmem:[%s4959 + $0x14] sm:$0xf]
        %v4966 = vld [vmem:[%s4959 + $0x18] sm:$0xf]
        %v4967 = vunpack.c.l.b16 %v4824
        %v4968 = vunpack.c.l.b16 %v4842
        %v4969 = vunpack.c.l.b16 %v4860
        %v4970 = vunpack.c.l.b16 %v4878
        %v4971 = vunpack.c.l.b16 %v4896
        %v4972 = vunpack.c.l.b16 %v4914
        %v4973 = vunpack.c.l.b16 %v4932
        %v4974 = vunpack.c.l.b16 %v4950
        %v4975 = vpack.c.b16 %v4968, %v4967
        %v4976 = vpack.c.b16 %v4970, %v4969
        %v4977 = vpack.c.b16 %v4972, %v4971
        %v4978 = vpack.c.b16 %v4974, %v4973
        %v4986 = vunpack.c.l.b16 %v4960
        %v4987 = vunpack.c.l.b16 %v4961
        %v4988 = vunpack.c.l.b16 %v4962
        %v4989 = vunpack.c.l.b16 %v4963
        %v4990 = vunpack.c.l.b16 %v4964
        %v4991 = vunpack.c.l.b16 %v4965
        %v4992 = vunpack.c.l.b16 %v4966
        %v4993 = vpack.c.b16 %v4987, %v4986
        %v4994 = vpack.c.b16 %v4989, %v4988
        %v4995 = vpack.c.b16 %v4991, %v4990
        %v4996 = vpack.c.b16 %v4992, %v4992
        %v5001 = vsel %vm361, %v4975, 0
        %v5004 = vsel %vm361, %v4976, 0
        %v5007 = vsel %vm361, %v4977, 0
        %v5010 = vsel %vm361, %v4978, 0
        %v5013 = vsel %vm374, %v4996, 0
        %5015 = vmatprep.subr.bf16.mxu0 0
        %5016 = vmatpush1.bf16.msra.mxu0 %v4993
        %5017 = vmatprep.subr.bf16.mxu0 0
        %5018 = vmatpush1.bf16.msra.mxu0 %v4994
        %5019 = vmatprep.subr.bf16.mxu0 0
        %5020 = vmatpush1.bf16.msra.mxu0 %v4995
        %5021 = vmatprep.subr.bf16.mxu0 0
        %5022 = vmatpush1.bf16.msra.mxu0 %v5013
        %5023 = vmatprep.subr.bf16.mxu0 0
        %5024 = vmatpush1.bf16.msra.mxu0 0
        %5025 = vmatprep.subr.bf16.mxu0 0
        %5026 = vmatpush1.bf16.msra.mxu0 0
        %5027 = vmatprep.subr.bf16.mxu0 0
        %5028 = vmatpush1.bf16.msra.mxu0 0
        %5029 = vmatprep.subr.bf16.mxu0 0
        %5030 = vmatpush1.bf16.msra.mxu0 0
        %5031 = vmatprep.subr.bf16.mxu0 0
        %5032 = vmatpush1.bf16.msra.mxu0 0
        %5033 = vmatprep.subr.bf16.mxu0 0
        %5034 = vmatpush1.bf16.msra.mxu0 0
        %5035 = vmatprep.subr.bf16.mxu0 0
        %5036 = vmatpush1.bf16.msra.mxu0 0
        %5037 = vmatprep.subr.bf16.mxu0 0
        %5038 = vmatpush1.bf16.msra.mxu0 0
        %5039 = vmatprep.subr.bf16.mxu0 0
        %5040 = vmatpush1.bf16.msra.mxu0 0
        %5041 = vmatprep.subr.bf16.mxu0 0
        %5042 = vmatpush1.bf16.msra.mxu0 0
        %5043 = vmatprep.subr.bf16.mxu0 0
        %5044 = vmatpush1.bf16.msra.mxu0 0
        %5045 = vmatprep.subr.bf16.mxu0 0
        %5046 = vmatpush1.bf16.msra.mxu0 0
        %5047 = vmatprep.mubr.bf16.mxu0 0
        %5048 = vmatmul.mubr.bf16.gmra.mrb[0].mxu0 %v5001
        %v5049 = vpop.f32.mrb[0].mxu0
        %v5050 = vadd.f32 0.0, %v5049
        %v5051 = vpop.f32.mrb[0].mxu0
        %v5052 = vpop.f32.mrb[0].mxu0
        %v5053 = vadd.f32 0.0, %v5052
        %v5054 = vpop.f32.mrb[0].mxu0
        %5055 = vmatprep.mubr.bf16.mxu0 0
        %5056 = vmatmul.mubr.bf16.gmra.mrb[0].mxu0 %v5004
        %v5057 = vpop.f32.mrb[0].mxu0
        %v5058 = vadd.f32 0.0, %v5057
        %v5059 = vpop.f32.mrb[0].mxu0
        %v5060 = vpop.f32.mrb[0].mxu0
        %v5061 = vadd.f32 0.0, %v5060
        %v5062 = vpop.f32.mrb[0].mxu0
        %5063 = vmatprep.mubr.bf16.mxu0 0
        %5064 = vmatmul.mubr.bf16.gmra.mrb[0].mxu0 %v5007
        %v5065 = vpop.f32.mrb[0].mxu0
        %v5066 = vadd.f32 0.0, %v5065
        %v5067 = vpop.f32.mrb[0].mxu0
        %v5068 = vpop.f32.mrb[0].mxu0
        %v5069 = vadd.f32 0.0, %v5068
        %v5070 = vpop.f32.mrb[0].mxu0
        %5071 = vmatprep.mubr.bf16.mxu0 0
        %5072 = vmatmul.mubr.bf16.gmra.mrb[0].mxu0 %v5010
        %v5073 = vpop.f32.mrb[0].mxu0
        %v5074 = vadd.f32 0.0, %v5073
        %v5075 = vpop.f32.mrb[0].mxu0
        %v5076 = vpop.f32.mrb[0].mxu0
        %v5077 = vadd.f32 0.0, %v5076
        %v5078 = vpop.f32.mrb[0].mxu0
        %5079 = vdwg.mxu0
        %v5080 = vadd.f32 %v4951, %v5050
        %v5081 = vadd.f32 %v4952, %v5053
        %v5082 = vadd.f32 %v4953, %v5058
        %v5083 = vadd.f32 %v4954, %v5061
        %v5084 = vadd.f32 %v4955, %v5066
        %v5085 = vadd.f32 %v4956, %v5069
        %v5086 = vadd.f32 %v4957, %v5074
        %v5087 = vadd.f32 %v4958, %v5077
        %5088 = vst.msk [vmem:[#allocation2] sm:$0xff] %vm232, %v5080
        %5089 = vst.msk [vmem:[#allocation2 + $0x8] sm:$0xff] %vm232, %v5081
        %5090 = vst.msk [vmem:[#allocation2 + $0x10] sm:$0xff] %vm232, %v5082
        %5091 = vst.msk [vmem:[#allocation2 + $0x18] sm:$0xff] %vm232, %v5083
        %5092 = vst.msk [vmem:[#allocation2 + $0x20] sm:$0xff] %vm232, %v5084
        %5093 = vst.msk [vmem:[#allocation2 + $0x28] sm:$0xff] %vm232, %v5085
        %5094 = vst.msk [vmem:[#allocation2 + $0x30] sm:$0xff] %vm232, %v5086
        %5095 = vst.msk [vmem:[#allocation2 + $0x38] sm:$0xff] %vm232, %v5087
        %s5096 = smul.u32 %s241, 2
        %s5097 = smul.addr %s5096, 4
        %s5098 = scalar_lea.vmem %s199, %s5097 [#allocation3]
        %v5099 = vld [vmem:[%s5098] sm:$0xf]
        %v5100 = vld [vmem:[%s5098 + $0x8] sm:$0xf]
        %v5101 = vld [vmem:[%s5098 + $0x10] sm:$0xf]
        %v5102 = vld [vmem:[%s5098 + $0x18] sm:$0xf]
        %v5103 = vld [vmem:[%s5098 + $0x20] sm:$0xf]
        %v5104 = vld [vmem:[%s5098 + $0x28] sm:$0xf]
        %v5105 = vld [vmem:[%s5098 + $0x30] sm:$0xf]
        %v5106 = vld [vmem:[%s5098 + $0x38] sm:$0xf]
        %v5107 = vld [vmem:[#allocation2] sm:$0xff]
        %v5108 = vld [vmem:[#allocation2 + $0x8] sm:$0xff]
        %v5109 = vld [vmem:[#allocation2 + $0x10] sm:$0xff]
        %v5110 = vld [vmem:[#allocation2 + $0x18] sm:$0xff]
        %v5111 = vld [vmem:[#allocation2 + $0x20] sm:$0xff]
        %v5112 = vld [vmem:[#allocation2 + $0x28] sm:$0xff]
        %v5113 = vld [vmem:[#allocation2 + $0x30] sm:$0xff]
        %v5114 = vld [vmem:[#allocation2 + $0x38] sm:$0xff]
        %s5115 = scalar_lea.vmem [#allocation6], 504
        %v5116 = vld [vmem:[%s5115] sm:$0xf]
        %v5117 = vld [vmem:[%s5115 + $0x4] sm:$0xf]
        %v5118 = vld [vmem:[%s5115 + $0x8] sm:$0xf]
        %v5119 = vld [vmem:[%s5115 + $0xc] sm:$0xf]
        %v5120 = vld [vmem:[%s5115 + $0x10] sm:$0xf]
        %v5121 = vld [vmem:[%s5115 + $0x14] sm:$0xf]
        %v5122 = vld [vmem:[%s5115 + $0x18] sm:$0xf]
        %v5131 = vunpack.c.l.b16 %v5099
        %v5132 = vunpack.c.l.b16 %v5100
        %v5133 = vunpack.c.l.b16 %v5101
        %v5134 = vunpack.c.l.b16 %v5102
        %v5135 = vunpack.c.l.b16 %v5103
        %v5136 = vunpack.c.l.b16 %v5104
        %v5137 = vunpack.c.l.b16 %v5105
        %v5138 = vunpack.c.l.b16 %v5106
        %v5139 = vpack.c.b16 %v5132, %v5131
        %v5140 = vpack.c.b16 %v5134, %v5133
        %v5141 = vpack.c.b16 %v5136, %v5135
        %v5142 = vpack.c.b16 %v5138, %v5137
        %v5150 = vunpack.c.l.b16 %v5116
        %v5151 = vunpack.c.l.b16 %v5117
        %v5152 = vunpack.c.l.b16 %v5118
        %v5153 = vunpack.c.l.b16 %v5119
        %v5154 = vunpack.c.l.b16 %v5120
        %v5155 = vunpack.c.l.b16 %v5121
        %v5156 = vunpack.c.l.b16 %v5122
        %v5157 = vpack.c.b16 %v5151, %v5150
        %v5158 = vpack.c.b16 %v5153, %v5152
        %v5159 = vpack.c.b16 %v5155, %v5154
        %v5160 = vpack.c.b16 %v5156, %v5156
        %v5165 = vsel %vm361, %v5139, 0
        %v5168 = vsel %vm361, %v5140, 0
        %v5171 = vsel %vm361, %v5141, 0
        %v5174 = vsel %vm361, %v5142, 0
        %v5177 = vsel %vm374, %v5160, 0
        %5179 = vmatprep.subr.bf16.mxu0 0
        %5180 = vmatpush1.bf16.msra.mxu0 %v5157
        %5181 = vmatprep.subr.bf16.mxu0 0
        %5182 = vmatpush1.bf16.msra.mxu0 %v5158
        %5183 = vmatprep.subr.bf16.mxu0 0
        %5184 = vmatpush1.bf16.msra.mxu0 %v5159
        %5185 = vmatprep.subr.bf16.mxu0 0
        %5186 = vmatpush1.bf16.msra.mxu0 %v5177
        %5187 = vmatprep.subr.bf16.mxu0 0
        %5188 = vmatpush1.bf16.msra.mxu0 0
        %5189 = vmatprep.subr.bf16.mxu0 0
        %5190 = vmatpush1.bf16.msra.mxu0 0
        %5191 = vmatprep.subr.bf16.mxu0 0
        %5192 = vmatpush1.bf16.msra.mxu0 0
        %5193 = vmatprep.subr.bf16.mxu0 0
        %5194 = vmatpush1.bf16.msra.mxu0 0
        %5195 = vmatprep.subr.bf16.mxu0 0
        %5196 = vmatpush1.bf16.msra.mxu0 0
        %5197 = vmatprep.subr.bf16.mxu0 0
        %5198 = vmatpush1.bf16.msra.mxu0 0
        %5199 = vmatprep.subr.bf16.mxu0 0
        %5200 = vmatpush1.bf16.msra.mxu0 0
        %5201 = vmatprep.subr.bf16.mxu0 0
        %5202 = vmatpush1.bf16.msra.mxu0 0
        %5203 = vmatprep.subr.bf16.mxu0 0
        %5204 = vmatpush1.bf16.msra.mxu0 0
        %5205 = vmatprep.subr.bf16.mxu0 0
        %5206 = vmatpush1.bf16.msra.mxu0 0
        %5207 = vmatprep.subr.bf16.mxu0 0
        %5208 = vmatpush1.bf16.msra.mxu0 0
        %5209 = vmatprep.subr.bf16.mxu0 0
        %5210 = vmatpush1.bf16.msra.mxu0 0
        %5211 = vmatprep.mubr.bf16.mxu0 0
        %5212 = vmatmul.mubr.bf16.gmra.mrb[0].mxu0 %v5165
        %v5213 = vpop.f32.mrb[0].mxu0
        %v5214 = vadd.f32 0.0, %v5213
        %v5215 = vpop.f32.mrb[0].mxu0
        %v5216 = vpop.f32.mrb[0].mxu0
        %v5217 = vadd.f32 0.0, %v5216
        %v5218 = vpop.f32.mrb[0].mxu0
        %5219 = vmatprep.mubr.bf16.mxu0 0
        %5220 = vmatmul.mubr.bf16.gmra.mrb[0].mxu0 %v5168
        %v5221 = vpop.f32.mrb[0].mxu0
        %v5222 = vadd.f32 0.0, %v5221
        %v5223 = vpop.f32.mrb[0].mxu0
        %v5224 = vpop.f32.mrb[0].mxu0
        %v5225 = vadd.f32 0.0, %v5224
        %v5226 = vpop.f32.mrb[0].mxu0
        %5227 = vmatprep.mubr.bf16.mxu0 0
        %5228 = vmatmul.mubr.bf16.gmra.mrb[0].mxu0 %v5171
        %v5229 = vpop.f32.mrb[0].mxu0
        %v5230 = vadd.f32 0.0, %v5229
        %v5231 = vpop.f32.mrb[0].mxu0
        %v5232 = vpop.f32.mrb[0].mxu0
        %v5233 = vadd.f32 0.0, %v5232
        %v5234 = vpop.f32.mrb[0].mxu0
        %5235 = vmatprep.mubr.bf16.mxu0 0
        %5236 = vmatmul.mubr.bf16.gmra.mrb[0].mxu0 %v5174
        %v5237 = vpop.f32.mrb[0].mxu0
        %v5238 = vadd.f32 0.0, %v5237
        %v5239 = vpop.f32.mrb[0].mxu0
        %v5240 = vpop.f32.mrb[0].mxu0
        %v5241 = vadd.f32 0.0, %v5240
        %v5242 = vpop.f32.mrb[0].mxu0
        %5243 = vdwg.mxu0
        %v5244 = vadd.f32 %v5107, %v5214
        %v5245 = vadd.f32 %v5108, %v5217
        %v5246 = vadd.f32 %v5109, %v5222
        %v5247 = vadd.f32 %v5110, %v5225
        %v5248 = vadd.f32 %v5111, %v5230
        %v5249 = vadd.f32 %v5112, %v5233
        %v5250 = vadd.f32 %v5113, %v5238
        %v5251 = vadd.f32 %v5114, %v5241
        %5252 = vst.msk [vmem:[#allocation2] sm:$0xff] %vm232, %v5244
        %5253 = vst.msk [vmem:[#allocation2 + $0x8] sm:$0xff] %vm232, %v5245
        %5254 = vst.msk [vmem:[#allocation2 + $0x10] sm:$0xff] %vm232, %v5246
        %5255 = vst.msk [vmem:[#allocation2 + $0x18] sm:$0xff] %vm232, %v5247
        %5256 = vst.msk [vmem:[#allocation2 + $0x20] sm:$0xff] %vm232, %v5248
        %5257 = vst.msk [vmem:[#allocation2 + $0x28] sm:$0xff] %vm232, %v5249
        %5258 = vst.msk [vmem:[#allocation2 + $0x30] sm:$0xff] %vm232, %v5250
        %5259 = vst.msk [vmem:[#allocation2 + $0x38] sm:$0xff] %vm232, %v5251
        %v5260 = vld [vmem:[%s5098] sm:$0xe]
        %v5261 = vld [vmem:[%s5098 + $0x4] sm:$0x3]
        %v5262 = vld [vmem:[%s5098 + $0x8] sm:$0xe]
        %v5263 = vld [vmem:[%s5098 + $0xc] sm:$0x3]
        %v5264 = vld [vmem:[%s5098 + $0x10] sm:$0xe]
        %v5265 = vld [vmem:[%s5098 + $0x14] sm:$0x3]
        %v5266 = vld [vmem:[%s5098 + $0x18] sm:$0xe]
        %v5267 = vld [vmem:[%s5098 + $0x1c] sm:$0x3]
        %v5268 = vld [vmem:[%s5098 + $0x20] sm:$0xe]
        %v5269 = vld [vmem:[%s5098 + $0x24] sm:$0x3]
        %v5270 = vld [vmem:[%s5098 + $0x28] sm:$0xe]
        %v5271 = vld [vmem:[%s5098 + $0x2c] sm:$0x3]
        %v5272 = vld [vmem:[%s5098 + $0x30] sm:$0xe]
        %v5273 = vld [vmem:[%s5098 + $0x34] sm:$0x3]
        %v5274 = vld [vmem:[%s5098 + $0x38] sm:$0xe]
        %v5275 = vld [vmem:[%s5098 + $0x3c] sm:$0x3]
        %v5277 = vshrl.u32 %v5260, 16
        %v5279 = vrot.slane %v5277, 5
        %v5280 = vshll.u32 %v5260, 16
        %v5282 = vrot.slane %v5280, 6
        %v5283 = vor.u32 %v5279, %v5282
        %v5284 = vrot.slane %v5283, 4
        %v5286 = vshrl.u32 %v5261, 16
        %v5288 = vrot.slane %v5286, 5
        %v5289 = vshll.u32 %v5261, 16
        %v5291 = vrot.slane %v5289, 6
        %v5292 = vor.u32 %v5288, %v5291
        %v5293 = vsel %vm477, %v5284, %v5292
        %v5295 = vshrl.u32 %v5262, 16
        %v5297 = vrot.slane %v5295, 5
        %v5298 = vshll.u32 %v5262, 16
        %v5300 = vrot.slane %v5298, 6
        %v5301 = vor.u32 %v5297, %v5300
        %v5302 = vrot.slane %v5301, 4
        %v5304 = vshrl.u32 %v5263, 16
        %v5306 = vrot.slane %v5304, 5
        %v5307 = vshll.u32 %v5263, 16
        %v5309 = vrot.slane %v5307, 6
        %v5310 = vor.u32 %v5306, %v5309
        %v5311 = vsel %vm477, %v5302, %v5310
        %v5313 = vshrl.u32 %v5264, 16
        %v5315 = vrot.slane %v5313, 5
        %v5316 = vshll.u32 %v5264, 16
        %v5318 = vrot.slane %v5316, 6
        %v5319 = vor.u32 %v5315, %v5318
        %v5320 = vrot.slane %v5319, 4
        %v5322 = vshrl.u32 %v5265, 16
        %v5324 = vrot.slane %v5322, 5
        %v5325 = vshll.u32 %v5265, 16
        %v5327 = vrot.slane %v5325, 6
        %v5328 = vor.u32 %v5324, %v5327
        %v5329 = vsel %vm477, %v5320, %v5328
        %v5331 = vshrl.u32 %v5266, 16
        %v5333 = vrot.slane %v5331, 5
        %v5334 = vshll.u32 %v5266, 16
        %v5336 = vrot.slane %v5334, 6
        %v5337 = vor.u32 %v5333, %v5336
        %v5338 = vrot.slane %v5337, 4
        %v5340 = vshrl.u32 %v5267, 16
        %v5342 = vrot.slane %v5340, 5
        %v5343 = vshll.u32 %v5267, 16
        %v5345 = vrot.slane %v5343, 6
        %v5346 = vor.u32 %v5342, %v5345
        %v5347 = vsel %vm477, %v5338, %v5346
        %v5349 = vshrl.u32 %v5268, 16
        %v5351 = vrot.slane %v5349, 5
        %v5352 = vshll.u32 %v5268, 16
        %v5354 = vrot.slane %v5352, 6
        %v5355 = vor.u32 %v5351, %v5354
        %v5356 = vrot.slane %v5355, 4
        %v5358 = vshrl.u32 %v5269, 16
        %v5360 = vrot.slane %v5358, 5
        %v5361 = vshll.u32 %v5269, 16
        %v5363 = vrot.slane %v5361, 6
        %v5364 = vor.u32 %v5360, %v5363
        %v5365 = vsel %vm477, %v5356, %v5364
        %v5367 = vshrl.u32 %v5270, 16
        %v5369 = vrot.slane %v5367, 5
        %v5370 = vshll.u32 %v5270, 16
        %v5372 = vrot.slane %v5370, 6
        %v5373 = vor.u32 %v5369, %v5372
        %v5374 = vrot.slane %v5373, 4
        %v5376 = vshrl.u32 %v5271, 16
        %v5378 = vrot.slane %v5376, 5
        %v5379 = vshll.u32 %v5271, 16
        %v5381 = vrot.slane %v5379, 6
        %v5382 = vor.u32 %v5378, %v5381
        %v5383 = vsel %vm477, %v5374, %v5382
        %v5385 = vshrl.u32 %v5272, 16
        %v5387 = vrot.slane %v5385, 5
        %v5388 = vshll.u32 %v5272, 16
        %v5390 = vrot.slane %v5388, 6
        %v5391 = vor.u32 %v5387, %v5390
        %v5392 = vrot.slane %v5391, 4
        %v5394 = vshrl.u32 %v5273, 16
        %v5396 = vrot.slane %v5394, 5
        %v5397 = vshll.u32 %v5273, 16
        %v5399 = vrot.slane %v5397, 6
        %v5400 = vor.u32 %v5396, %v5399
        %v5401 = vsel %vm477, %v5392, %v5400
        %v5403 = vshrl.u32 %v5274, 16
        %v5405 = vrot.slane %v5403, 5
        %v5406 = vshll.u32 %v5274, 16
        %v5408 = vrot.slane %v5406, 6
        %v5409 = vor.u32 %v5405, %v5408
        %v5410 = vrot.slane %v5409, 4
        %v5412 = vshrl.u32 %v5275, 16
        %v5414 = vrot.slane %v5412, 5
        %v5415 = vshll.u32 %v5275, 16
        %v5417 = vrot.slane %v5415, 6
        %v5418 = vor.u32 %v5414, %v5417
        %v5419 = vsel %vm477, %v5410, %v5418
        %v5420 = vld [vmem:[#allocation2] sm:$0xff]
        %v5421 = vld [vmem:[#allocation2 + $0x8] sm:$0xff]
        %v5422 = vld [vmem:[#allocation2 + $0x10] sm:$0xff]
        %v5423 = vld [vmem:[#allocation2 + $0x18] sm:$0xff]
        %v5424 = vld [vmem:[#allocation2 + $0x20] sm:$0xff]
        %v5425 = vld [vmem:[#allocation2 + $0x28] sm:$0xff]
        %v5426 = vld [vmem:[#allocation2 + $0x30] sm:$0xff]
        %v5427 = vld [vmem:[#allocation2 + $0x38] sm:$0xff]
        %s5428 = scalar_lea.vmem [#allocation6], 532
        %v5429 = vld [vmem:[%s5428] sm:$0xf]
        %v5430 = vld [vmem:[%s5428 + $0x4] sm:$0xf]
        %v5431 = vld [vmem:[%s5428 + $0x8] sm:$0xf]
        %v5432 = vld [vmem:[%s5428 + $0xc] sm:$0xf]
        %v5433 = vld [vmem:[%s5428 + $0x10] sm:$0xf]
        %v5434 = vld [vmem:[%s5428 + $0x14] sm:$0xf]
        %v5435 = vld [vmem:[%s5428 + $0x18] sm:$0xf]
        %v5436 = vunpack.c.l.b16 %v5293
        %v5437 = vunpack.c.l.b16 %v5311
        %v5438 = vunpack.c.l.b16 %v5329
        %v5439 = vunpack.c.l.b16 %v5347
        %v5440 = vunpack.c.l.b16 %v5365
        %v5441 = vunpack.c.l.b16 %v5383
        %v5442 = vunpack.c.l.b16 %v5401
        %v5443 = vunpack.c.l.b16 %v5419
        %v5444 = vpack.c.b16 %v5437, %v5436
        %v5445 = vpack.c.b16 %v5439, %v5438
        %v5446 = vpack.c.b16 %v5441, %v5440
        %v5447 = vpack.c.b16 %v5443, %v5442
        %v5455 = vunpack.c.l.b16 %v5429
        %v5456 = vunpack.c.l.b16 %v5430
        %v5457 = vunpack.c.l.b16 %v5431
        %v5458 = vunpack.c.l.b16 %v5432
        %v5459 = vunpack.c.l.b16 %v5433
        %v5460 = vunpack.c.l.b16 %v5434
        %v5461 = vunpack.c.l.b16 %v5435
        %v5462 = vpack.c.b16 %v5456, %v5455
        %v5463 = vpack.c.b16 %v5458, %v5457
        %v5464 = vpack.c.b16 %v5460, %v5459
        %v5465 = vpack.c.b16 %v5461, %v5461
        %v5470 = vsel %vm361, %v5444, 0
        %v5473 = vsel %vm361, %v5445, 0
        %v5476 = vsel %vm361, %v5446, 0
        %v5479 = vsel %vm361, %v5447, 0
        %v5482 = vsel %vm374, %v5465, 0
        %5484 = vmatprep.subr.bf16.mxu0 0
        %5485 = vmatpush1.bf16.msra.mxu0 %v5462
        %5486 = vmatprep.subr.bf16.mxu0 0
        %5487 = vmatpush1.bf16.msra.mxu0 %v5463
        %5488 = vmatprep.subr.bf16.mxu0 0
        %5489 = vmatpush1.bf16.msra.mxu0 %v5464
        %5490 = vmatprep.subr.bf16.mxu0 0
        %5491 = vmatpush1.bf16.msra.mxu0 %v5482
        %5492 = vmatprep.subr.bf16.mxu0 0
        %5493 = vmatpush1.bf16.msra.mxu0 0
        %5494 = vmatprep.subr.bf16.mxu0 0
        %5495 = vmatpush1.bf16.msra.mxu0 0
        %5496 = vmatprep.subr.bf16.mxu0 0
        %5497 = vmatpush1.bf16.msra.mxu0 0
        %5498 = vmatprep.subr.bf16.mxu0 0
        %5499 = vmatpush1.bf16.msra.mxu0 0
        %5500 = vmatprep.subr.bf16.mxu0 0
        %5501 = vmatpush1.bf16.msra.mxu0 0
        %5502 = vmatprep.subr.bf16.mxu0 0
        %5503 = vmatpush1.bf16.msra.mxu0 0
        %5504 = vmatprep.subr.bf16.mxu0 0
        %5505 = vmatpush1.bf16.msra.mxu0 0
        %5506 = vmatprep.subr.bf16.mxu0 0
        %5507 = vmatpush1.bf16.msra.mxu0 0
        %5508 = vmatprep.subr.bf16.mxu0 0
        %5509 = vmatpush1.bf16.msra.mxu0 0
        %5510 = vmatprep.subr.bf16.mxu0 0
        %5511 = vmatpush1.bf16.msra.mxu0 0
        %5512 = vmatprep.subr.bf16.mxu0 0
        %5513 = vmatpush1.bf16.msra.mxu0 0
        %5514 = vmatprep.subr.bf16.mxu0 0
        %5515 = vmatpush1.bf16.msra.mxu0 0
        %5516 = vmatprep.mubr.bf16.mxu0 0
        %5517 = vmatmul.mubr.bf16.gmra.mrb[0].mxu0 %v5470
        %v5518 = vpop.f32.mrb[0].mxu0
        %v5519 = vadd.f32 0.0, %v5518
        %v5520 = vpop.f32.mrb[0].mxu0
        %v5521 = vpop.f32.mrb[0].mxu0
        %v5522 = vadd.f32 0.0, %v5521
        %v5523 = vpop.f32.mrb[0].mxu0
        %5524 = vmatprep.mubr.bf16.mxu0 0
        %5525 = vmatmul.mubr.bf16.gmra.mrb[0].mxu0 %v5473
        %v5526 = vpop.f32.mrb[0].mxu0
        %v5527 = vadd.f32 0.0, %v5526
        %v5528 = vpop.f32.mrb[0].mxu0
        %v5529 = vpop.f32.mrb[0].mxu0
        %v5530 = vadd.f32 0.0, %v5529
        %v5531 = vpop.f32.mrb[0].mxu0
        %5532 = vmatprep.mubr.bf16.mxu0 0
        %5533 = vmatmul.mubr.bf16.gmra.mrb[0].mxu0 %v5476
        %v5534 = vpop.f32.mrb[0].mxu0
        %v5535 = vadd.f32 0.0, %v5534
        %v5536 = vpop.f32.mrb[0].mxu0
        %v5537 = vpop.f32.mrb[0].mxu0
        %v5538 = vadd.f32 0.0, %v5537
        %v5539 = vpop.f32.mrb[0].mxu0
        %5540 = vmatprep.mubr.bf16.mxu0 0
        %5541 = vmatmul.mubr.bf16.gmra.mrb[0].mxu0 %v5479
        %v5542 = vpop.f32.mrb[0].mxu0
        %v5543 = vadd.f32 0.0, %v5542
        %v5544 = vpop.f32.mrb[0].mxu0
        %v5545 = vpop.f32.mrb[0].mxu0
        %v5546 = vadd.f32 0.0, %v5545
        %v5547 = vpop.f32.mrb[0].mxu0
        %5548 = vdwg.mxu0
        %v5549 = vadd.f32 %v5420, %v5519
        %v5550 = vadd.f32 %v5421, %v5522
        %v5551 = vadd.f32 %v5422, %v5527
        %v5552 = vadd.f32 %v5423, %v5530
        %v5553 = vadd.f32 %v5424, %v5535
        %v5554 = vadd.f32 %v5425, %v5538
        %v5555 = vadd.f32 %v5426, %v5543
        %v5556 = vadd.f32 %v5427, %v5546
        %5557 = vst.msk [vmem:[#allocation2] sm:$0xff] %vm232, %v5549
        %5558 = vst.msk [vmem:[#allocation2 + $0x8] sm:$0xff] %vm232, %v5550
        %5559 = vst.msk [vmem:[#allocation2 + $0x10] sm:$0xff] %vm232, %v5551
        %5560 = vst.msk [vmem:[#allocation2 + $0x18] sm:$0xff] %vm232, %v5552
        %5561 = vst.msk [vmem:[#allocation2 + $0x20] sm:$0xff] %vm232, %v5553
        %5562 = vst.msk [vmem:[#allocation2 + $0x28] sm:$0xff] %vm232, %v5554
        %5563 = vst.msk [vmem:[#allocation2 + $0x30] sm:$0xff] %vm232, %v5555
        %5564 = vst.msk [vmem:[#allocation2 + $0x38] sm:$0xff] %vm232, %v5556
        %v5565 = vld [vmem:[%s5098] sm:$0x8]
        %v5566 = vld [vmem:[%s5098 + $0x4] sm:$0x7]
        %v5567 = vld [vmem:[%s5098 + $0x8] sm:$0x8]
        %v5568 = vld [vmem:[%s5098 + $0xc] sm:$0x7]
        %v5569 = vld [vmem:[%s5098 + $0x10] sm:$0x8]
        %v5570 = vld [vmem:[%s5098 + $0x14] sm:$0x7]
        %v5571 = vld [vmem:[%s5098 + $0x18] sm:$0x8]
        %v5572 = vld [vmem:[%s5098 + $0x1c] sm:$0x7]
        %v5573 = vld [vmem:[%s5098 + $0x20] sm:$0x8]
        %v5574 = vld [vmem:[%s5098 + $0x24] sm:$0x7]
        %v5575 = vld [vmem:[%s5098 + $0x28] sm:$0x8]
        %v5576 = vld [vmem:[%s5098 + $0x2c] sm:$0x7]
        %v5577 = vld [vmem:[%s5098 + $0x30] sm:$0x8]
        %v5578 = vld [vmem:[%s5098 + $0x34] sm:$0x7]
        %v5579 = vld [vmem:[%s5098 + $0x38] sm:$0x8]
        %v5580 = vld [vmem:[%s5098 + $0x3c] sm:$0x7]
        %vm5597 = vcmask 1040384
        %vm5598 = vcmask 1044484
        %vm5599 = vmor %vm5597, %vm5598
        %v5600 = vrot.slane %v5565, 7
        %v5601 = vrot.slane %v5600, 4
        %v5602 = vrot.slane %v5566, 7
        %v5603 = vsel %vm5599, %v5601, %v5602
        %v5604 = vrot.slane %v5567, 7
        %v5605 = vrot.slane %v5604, 4
        %v5606 = vrot.slane %v5568, 7
        %v5607 = vsel %vm5599, %v5605, %v5606
        %v5608 = vrot.slane %v5569, 7
        %v5609 = vrot.slane %v5608, 4
        %v5610 = vrot.slane %v5570, 7
        %v5611 = vsel %vm5599, %v5609, %v5610
        %v5612 = vrot.slane %v5571, 7
        %v5613 = vrot.slane %v5612, 4
        %v5614 = vrot.slane %v5572, 7
        %v5615 = vsel %vm5599, %v5613, %v5614
        %v5616 = vrot.slane %v5573, 7
        %v5617 = vrot.slane %v5616, 4
        %v5618 = vrot.slane %v5574, 7
        %v5619 = vsel %vm5599, %v5617, %v5618
        %v5620 = vrot.slane %v5575, 7
        %v5621 = vrot.slane %v5620, 4
        %v5622 = vrot.slane %v5576, 7
        %v5623 = vsel %vm5599, %v5621, %v5622
        %v5624 = vrot.slane %v5577, 7
        %v5625 = vrot.slane %v5624, 4
        %v5626 = vrot.slane %v5578, 7
        %v5627 = vsel %vm5599, %v5625, %v5626
        %v5628 = vrot.slane %v5579, 7
        %v5629 = vrot.slane %v5628, 4
        %v5630 = vrot.slane %v5580, 7
        %v5631 = vsel %vm5599, %v5629, %v5630
        %v5632 = vld [vmem:[#allocation2] sm:$0xff]
        %v5633 = vld [vmem:[#allocation2 + $0x8] sm:$0xff]
        %v5634 = vld [vmem:[#allocation2 + $0x10] sm:$0xff]
        %v5635 = vld [vmem:[#allocation2 + $0x18] sm:$0xff]
        %v5636 = vld [vmem:[#allocation2 + $0x20] sm:$0xff]
        %v5637 = vld [vmem:[#allocation2 + $0x28] sm:$0xff]
        %v5638 = vld [vmem:[#allocation2 + $0x30] sm:$0xff]
        %v5639 = vld [vmem:[#allocation2 + $0x38] sm:$0xff]
        %s5640 = scalar_lea.vmem [#allocation6], 560
        %v5641 = vld [vmem:[%s5640] sm:$0xf]
        %v5642 = vld [vmem:[%s5640 + $0x4] sm:$0xf]
        %v5643 = vld [vmem:[%s5640 + $0x8] sm:$0xf]
        %v5644 = vld [vmem:[%s5640 + $0xc] sm:$0xf]
        %v5645 = vld [vmem:[%s5640 + $0x10] sm:$0xf]
        %v5646 = vld [vmem:[%s5640 + $0x14] sm:$0xf]
        %v5647 = vld [vmem:[%s5640 + $0x18] sm:$0xf]
        %v5648 = vunpack.c.l.b16 %v5603
        %v5649 = vunpack.c.l.b16 %v5607
        %v5650 = vunpack.c.l.b16 %v5611
        %v5651 = vunpack.c.l.b16 %v5615
        %v5652 = vunpack.c.l.b16 %v5619
        %v5653 = vunpack.c.l.b16 %v5623
        %v5654 = vunpack.c.l.b16 %v5627
        %v5655 = vunpack.c.l.b16 %v5631
        %v5656 = vpack.c.b16 %v5649, %v5648
        %v5657 = vpack.c.b16 %v5651, %v5650
        %v5658 = vpack.c.b16 %v5653, %v5652
        %v5659 = vpack.c.b16 %v5655, %v5654
        %v5667 = vunpack.c.l.b16 %v5641
        %v5668 = vunpack.c.l.b16 %v5642
        %v5669 = vunpack.c.l.b16 %v5643
        %v5670 = vunpack.c.l.b16 %v5644
        %v5671 = vunpack.c.l.b16 %v5645
        %v5672 = vunpack.c.l.b16 %v5646
        %v5673 = vunpack.c.l.b16 %v5647
        %v5674 = vpack.c.b16 %v5668, %v5667
        %v5675 = vpack.c.b16 %v5670, %v5669
        %v5676 = vpack.c.b16 %v5672, %v5671
        %v5677 = vpack.c.b16 %v5673, %v5673
        %v5682 = vsel %vm361, %v5656, 0
        %v5685 = vsel %vm361, %v5657, 0
        %v5688 = vsel %vm361, %v5658, 0
        %v5691 = vsel %vm361, %v5659, 0
        %v5694 = vsel %vm374, %v5677, 0
        %5696 = vmatprep.subr.bf16.mxu0 0
        %5697 = vmatpush1.bf16.msra.mxu0 %v5674
        %5698 = vmatprep.subr.bf16.mxu0 0
        %5699 = vmatpush1.bf16.msra.mxu0 %v5675
        %5700 = vmatprep.subr.bf16.mxu0 0
        %5701 = vmatpush1.bf16.msra.mxu0 %v5676
        %5702 = vmatprep.subr.bf16.mxu0 0
        %5703 = vmatpush1.bf16.msra.mxu0 %v5694
        %5704 = vmatprep.subr.bf16.mxu0 0
        %5705 = vmatpush1.bf16.msra.mxu0 0
        %5706 = vmatprep.subr.bf16.mxu0 0
        %5707 = vmatpush1.bf16.msra.mxu0 0
        %5708 = vmatprep.subr.bf16.mxu0 0
        %5709 = vmatpush1.bf16.msra.mxu0 0
        %5710 = vmatprep.subr.bf16.mxu0 0
        %5711 = vmatpush1.bf16.msra.mxu0 0
        %5712 = vmatprep.subr.bf16.mxu0 0
        %5713 = vmatpush1.bf16.msra.mxu0 0
        %5714 = vmatprep.subr.bf16.mxu0 0
        %5715 = vmatpush1.bf16.msra.mxu0 0
        %5716 = vmatprep.subr.bf16.mxu0 0
        %5717 = vmatpush1.bf16.msra.mxu0 0
        %5718 = vmatprep.subr.bf16.mxu0 0
        %5719 = vmatpush1.bf16.msra.mxu0 0
        %5720 = vmatprep.subr.bf16.mxu0 0
        %5721 = vmatpush1.bf16.msra.mxu0 0
        %5722 = vmatprep.subr.bf16.mxu0 0
        %5723 = vmatpush1.bf16.msra.mxu0 0
        %5724 = vmatprep.subr.bf16.mxu0 0
        %5725 = vmatpush1.bf16.msra.mxu0 0
        %5726 = vmatprep.subr.bf16.mxu0 0
        %5727 = vmatpush1.bf16.msra.mxu0 0
        %5728 = vmatprep.mubr.bf16.mxu0 0
        %5729 = vmatmul.mubr.bf16.gmra.mrb[0].mxu0 %v5682
        %v5730 = vpop.f32.mrb[0].mxu0
        %v5731 = vadd.f32 0.0, %v5730
        %v5732 = vpop.f32.mrb[0].mxu0
        %v5733 = vpop.f32.mrb[0].mxu0
        %v5734 = vadd.f32 0.0, %v5733
        %v5735 = vpop.f32.mrb[0].mxu0
        %5736 = vmatprep.mubr.bf16.mxu0 0
        %5737 = vmatmul.mubr.bf16.gmra.mrb[0].mxu0 %v5685
        %v5738 = vpop.f32.mrb[0].mxu0
        %v5739 = vadd.f32 0.0, %v5738
        %v5740 = vpop.f32.mrb[0].mxu0
        %v5741 = vpop.f32.mrb[0].mxu0
        %v5742 = vadd.f32 0.0, %v5741
        %v5743 = vpop.f32.mrb[0].mxu0
        %5744 = vmatprep.mubr.bf16.mxu0 0
        %5745 = vmatmul.mubr.bf16.gmra.mrb[0].mxu0 %v5688
        %v5746 = vpop.f32.mrb[0].mxu0
        %v5747 = vadd.f32 0.0, %v5746
        %v5748 = vpop.f32.mrb[0].mxu0
        %v5749 = vpop.f32.mrb[0].mxu0
        %v5750 = vadd.f32 0.0, %v5749
        %v5751 = vpop.f32.mrb[0].mxu0
        %5752 = vmatprep.mubr.bf16.mxu0 0
        %5753 = vmatmul.mubr.bf16.gmra.mrb[0].mxu0 %v5691
        %v5754 = vpop.f32.mrb[0].mxu0
        %v5755 = vadd.f32 0.0, %v5754
        %v5756 = vpop.f32.mrb[0].mxu0
        %v5757 = vpop.f32.mrb[0].mxu0
        %v5758 = vadd.f32 0.0, %v5757
        %v5759 = vpop.f32.mrb[0].mxu0
        %5760 = vdwg.mxu0
        %v5761 = vadd.f32 %v5632, %v5731
        %v5762 = vadd.f32 %v5633, %v5734
        %v5763 = vadd.f32 %v5634, %v5739
        %v5764 = vadd.f32 %v5635, %v5742
        %v5765 = vadd.f32 %v5636, %v5747
        %v5766 = vadd.f32 %v5637, %v5750
        %v5767 = vadd.f32 %v5638, %v5755
        %v5768 = vadd.f32 %v5639, %v5758
        %5769 = vst.msk [vmem:[#allocation2] sm:$0xff] %vm232, %v5761
        %5770 = vst.msk [vmem:[#allocation2 + $0x8] sm:$0xff] %vm232, %v5762
        %5771 = vst.msk [vmem:[#allocation2 + $0x10] sm:$0xff] %vm232, %v5763
        %5772 = vst.msk [vmem:[#allocation2 + $0x18] sm:$0xff] %vm232, %v5764
        %5773 = vst.msk [vmem:[#allocation2 + $0x20] sm:$0xff] %vm232, %v5765
        %5774 = vst.msk [vmem:[#allocation2 + $0x28] sm:$0xff] %vm232, %v5766
        %5775 = vst.msk [vmem:[#allocation2 + $0x30] sm:$0xff] %vm232, %v5767
        %5776 = vst.msk [vmem:[#allocation2 + $0x38] sm:$0xff] %vm232, %v5768
        %v5777 = vld [vmem:[%s982] sm:$0xf]
        %v5778 = vld [vmem:[%s982 + $0x8] sm:$0xf]
        %v5779 = vld [vmem:[%s982 + $0x10] sm:$0xf]
        %v5780 = vld [vmem:[%s982 + $0x18] sm:$0xf]
        %v5781 = vld [vmem:[%s982 + $0x20] sm:$0xf]
        %v5782 = vld [vmem:[%s982 + $0x28] sm:$0xf]
        %v5783 = vld [vmem:[%s982 + $0x30] sm:$0xf]
        %v5784 = vld [vmem:[%s982 + $0x38] sm:$0xf]
        %v5785 = vld [vmem:[#allocation2] sm:$0xff]
        %v5786 = vld [vmem:[#allocation2 + $0x8] sm:$0xff]
        %v5787 = vld [vmem:[#allocation2 + $0x10] sm:$0xff]
        %v5788 = vld [vmem:[#allocation2 + $0x18] sm:$0xff]
        %v5789 = vld [vmem:[#allocation2 + $0x20] sm:$0xff]
        %v5790 = vld [vmem:[#allocation2 + $0x28] sm:$0xff]
        %v5791 = vld [vmem:[#allocation2 + $0x30] sm:$0xff]
        %v5792 = vld [vmem:[#allocation2 + $0x38] sm:$0xff]
        %s5793 = scalar_lea.vmem [#allocation6], 588
        %v5794 = vld [vmem:[%s5793] sm:$0xf]
        %v5795 = vld [vmem:[%s5793 + $0x4] sm:$0xf]
        %v5796 = vld [vmem:[%s5793 + $0x8] sm:$0xf]
        %v5797 = vld [vmem:[%s5793 + $0xc] sm:$0xf]
        %v5798 = vld [vmem:[%s5793 + $0x10] sm:$0xf]
        %v5799 = vld [vmem:[%s5793 + $0x14] sm:$0xf]
        %v5800 = vld [vmem:[%s5793 + $0x18] sm:$0xf]
        %v5809 = vunpack.c.l.b16 %v5777
        %v5810 = vunpack.c.l.b16 %v5778
        %v5811 = vunpack.c.l.b16 %v5779
        %v5812 = vunpack.c.l.b16 %v5780
        %v5813 = vunpack.c.l.b16 %v5781
        %v5814 = vunpack.c.l.b16 %v5782
        %v5815 = vunpack.c.l.b16 %v5783
        %v5816 = vunpack.c.l.b16 %v5784
        %v5817 = vpack.c.b16 %v5810, %v5809
        %v5818 = vpack.c.b16 %v5812, %v5811
        %v5819 = vpack.c.b16 %v5814, %v5813
        %v5820 = vpack.c.b16 %v5816, %v5815
        %v5828 = vunpack.c.l.b16 %v5794
        %v5829 = vunpack.c.l.b16 %v5795
        %v5830 = vunpack.c.l.b16 %v5796
        %v5831 = vunpack.c.l.b16 %v5797
        %v5832 = vunpack.c.l.b16 %v5798
        %v5833 = vunpack.c.l.b16 %v5799
        %v5834 = vunpack.c.l.b16 %v5800
        %v5835 = vpack.c.b16 %v5829, %v5828
        %v5836 = vpack.c.b16 %v5831, %v5830
        %v5837 = vpack.c.b16 %v5833, %v5832
        %v5838 = vpack.c.b16 %v5834, %v5834
        %v5843 = vsel %vm361, %v5817, 0
        %v5846 = vsel %vm361, %v5818, 0
        %v5849 = vsel %vm361, %v5819, 0
        %v5852 = vsel %vm361, %v5820, 0
        %v5855 = vsel %vm374, %v5838, 0
        %5857 = vmatprep.subr.bf16.mxu0 0
        %5858 = vmatpush1.bf16.msra.mxu0 %v5835
        %5859 = vmatprep.subr.bf16.mxu0 0
        %5860 = vmatpush1.bf16.msra.mxu0 %v5836
        %5861 = vmatprep.subr.bf16.mxu0 0
        %5862 = vmatpush1.bf16.msra.mxu0 %v5837
        %5863 = vmatprep.subr.bf16.mxu0 0
        %5864 = vmatpush1.bf16.msra.mxu0 %v5855
        %5865 = vmatprep.subr.bf16.mxu0 0
        %5866 = vmatpush1.bf16.msra.mxu0 0
        %5867 = vmatprep.subr.bf16.mxu0 0
        %5868 = vmatpush1.bf16.msra.mxu0 0
        %5869 = vmatprep.subr.bf16.mxu0 0
        %5870 = vmatpush1.bf16.msra.mxu0 0
        %5871 = vmatprep.subr.bf16.mxu0 0
        %5872 = vmatpush1.bf16.msra.mxu0 0
        %5873 = vmatprep.subr.bf16.mxu0 0
        %5874 = vmatpush1.bf16.msra.mxu0 0
        %5875 = vmatprep.subr.bf16.mxu0 0
        %5876 = vmatpush1.bf16.msra.mxu0 0
        %5877 = vmatprep.subr.bf16.mxu0 0
        %5878 = vmatpush1.bf16.msra.mxu0 0
        %5879 = vmatprep.subr.bf16.mxu0 0
        %5880 = vmatpush1.bf16.msra.mxu0 0
        %5881 = vmatprep.subr.bf16.mxu0 0
        %5882 = vmatpush1.bf16.msra.mxu0 0
        %5883 = vmatprep.subr.bf16.mxu0 0
        %5884 = vmatpush1.bf16.msra.mxu0 0
        %5885 = vmatprep.subr.bf16.mxu0 0
        %5886 = vmatpush1.bf16.msra.mxu0 0
        %5887 = vmatprep.subr.bf16.mxu0 0
        %5888 = vmatpush1.bf16.msra.mxu0 0
        %5889 = vmatprep.mubr.bf16.mxu0 0
        %5890 = vmatmul.mubr.bf16.gmra.mrb[0].mxu0 %v5843
        %v5891 = vpop.f32.mrb[0].mxu0
        %v5892 = vadd.f32 0.0, %v5891
        %v5893 = vpop.f32.mrb[0].mxu0
        %v5894 = vpop.f32.mrb[0].mxu0
        %v5895 = vadd.f32 0.0, %v5894
        %v5896 = vpop.f32.mrb[0].mxu0
        %5897 = vmatprep.mubr.bf16.mxu0 0
        %5898 = vmatmul.mubr.bf16.gmra.mrb[0].mxu0 %v5846
        %v5899 = vpop.f32.mrb[0].mxu0
        %v5900 = vadd.f32 0.0, %v5899
        %v5901 = vpop.f32.mrb[0].mxu0
        %v5902 = vpop.f32.mrb[0].mxu0
        %v5903 = vadd.f32 0.0, %v5902
        %v5904 = vpop.f32.mrb[0].mxu0
        %5905 = vmatprep.mubr.bf16.mxu0 0
        %5906 = vmatmul.mubr.bf16.gmra.mrb[0].mxu0 %v5849
        %v5907 = vpop.f32.mrb[0].mxu0
        %v5908 = vadd.f32 0.0, %v5907
        %v5909 = vpop.f32.mrb[0].mxu0
        %v5910 = vpop.f32.mrb[0].mxu0
        %v5911 = vadd.f32 0.0, %v5910
        %v5912 = vpop.f32.mrb[0].mxu0
        %5913 = vmatprep.mubr.bf16.mxu0 0
        %5914 = vmatmul.mubr.bf16.gmra.mrb[0].mxu0 %v5852
        %v5915 = vpop.f32.mrb[0].mxu0
        %v5916 = vadd.f32 0.0, %v5915
        %v5917 = vpop.f32.mrb[0].mxu0
        %v5918 = vpop.f32.mrb[0].mxu0
        %v5919 = vadd.f32 0.0, %v5918
        %v5920 = vpop.f32.mrb[0].mxu0
        %5921 = vdwg.mxu0
        %v5922 = vadd.f32 %v5785, %v5892
        %v5923 = vadd.f32 %v5786, %v5895
        %v5924 = vadd.f32 %v5787, %v5900
        %v5925 = vadd.f32 %v5788, %v5903
        %v5926 = vadd.f32 %v5789, %v5908
        %v5927 = vadd.f32 %v5790, %v5911
        %v5928 = vadd.f32 %v5791, %v5916
        %v5929 = vadd.f32 %v5792, %v5919
        %5930 = vst.msk [vmem:[#allocation2] sm:$0xff] %vm232, %v5922
        %5931 = vst.msk [vmem:[#allocation2 + $0x8] sm:$0xff] %vm232, %v5923
        %5932 = vst.msk [vmem:[#allocation2 + $0x10] sm:$0xff] %vm232, %v5924
        %5933 = vst.msk [vmem:[#allocation2 + $0x18] sm:$0xff] %vm232, %v5925
        %5934 = vst.msk [vmem:[#allocation2 + $0x20] sm:$0xff] %vm232, %v5926
        %5935 = vst.msk [vmem:[#allocation2 + $0x28] sm:$0xff] %vm232, %v5927
        %5936 = vst.msk [vmem:[#allocation2 + $0x30] sm:$0xff] %vm232, %v5928
        %5937 = vst.msk [vmem:[#allocation2 + $0x38] sm:$0xff] %vm232, %v5929
        %v5938 = vld [vmem:[%s982] sm:$0xe]
        %v5939 = vld [vmem:[%s982 + $0x4] sm:$0x3]
        %v5940 = vld [vmem:[%s982 + $0x8] sm:$0xe]
        %v5941 = vld [vmem:[%s982 + $0xc] sm:$0x3]
        %v5942 = vld [vmem:[%s982 + $0x10] sm:$0xe]
        %v5943 = vld [vmem:[%s982 + $0x14] sm:$0x3]
        %v5944 = vld [vmem:[%s982 + $0x18] sm:$0xe]
        %v5945 = vld [vmem:[%s982 + $0x1c] sm:$0x3]
        %v5946 = vld [vmem:[%s982 + $0x20] sm:$0xe]
        %v5947 = vld [vmem:[%s982 + $0x24] sm:$0x3]
        %v5948 = vld [vmem:[%s982 + $0x28] sm:$0xe]
        %v5949 = vld [vmem:[%s982 + $0x2c] sm:$0x3]
        %v5950 = vld [vmem:[%s982 + $0x30] sm:$0xe]
        %v5951 = vld [vmem:[%s982 + $0x34] sm:$0x3]
        %v5952 = vld [vmem:[%s982 + $0x38] sm:$0xe]
        %v5953 = vld [vmem:[%s982 + $0x3c] sm:$0x3]
        %v5955 = vshrl.u32 %v5938, 16
        %v5957 = vrot.slane %v5955, 5
        %v5958 = vshll.u32 %v5938, 16
        %v5960 = vrot.slane %v5958, 6
        %v5961 = vor.u32 %v5957, %v5960
        %v5962 = vrot.slane %v5961, 4
        %v5964 = vshrl.u32 %v5939, 16
        %v5966 = vrot.slane %v5964, 5
        %v5967 = vshll.u32 %v5939, 16
        %v5969 = vrot.slane %v5967, 6
        %v5970 = vor.u32 %v5966, %v5969
        %v5971 = vsel %vm477, %v5962, %v5970
        %v5973 = vshrl.u32 %v5940, 16
        %v5975 = vrot.slane %v5973, 5
        %v5976 = vshll.u32 %v5940, 16
        %v5978 = vrot.slane %v5976, 6
        %v5979 = vor.u32 %v5975, %v5978
        %v5980 = vrot.slane %v5979, 4
        %v5982 = vshrl.u32 %v5941, 16
        %v5984 = vrot.slane %v5982, 5
        %v5985 = vshll.u32 %v5941, 16
        %v5987 = vrot.slane %v5985, 6
        %v5988 = vor.u32 %v5984, %v5987
        %v5989 = vsel %vm477, %v5980, %v5988
        %v5991 = vshrl.u32 %v5942, 16
        %v5993 = vrot.slane %v5991, 5
        %v5994 = vshll.u32 %v5942, 16
        %v5996 = vrot.slane %v5994, 6
        %v5997 = vor.u32 %v5993, %v5996
        %v5998 = vrot.slane %v5997, 4
        %v6000 = vshrl.u32 %v5943, 16
        %v6002 = vrot.slane %v6000, 5
        %v6003 = vshll.u32 %v5943, 16
        %v6005 = vrot.slane %v6003, 6
        %v6006 = vor.u32 %v6002, %v6005
        %v6007 = vsel %vm477, %v5998, %v6006
        %v6009 = vshrl.u32 %v5944, 16
        %v6011 = vrot.slane %v6009, 5
        %v6012 = vshll.u32 %v5944, 16
        %v6014 = vrot.slane %v6012, 6
        %v6015 = vor.u32 %v6011, %v6014
        %v6016 = vrot.slane %v6015, 4
        %v6018 = vshrl.u32 %v5945, 16
        %v6020 = vrot.slane %v6018, 5
        %v6021 = vshll.u32 %v5945, 16
        %v6023 = vrot.slane %v6021, 6
        %v6024 = vor.u32 %v6020, %v6023
        %v6025 = vsel %vm477, %v6016, %v6024
        %v6027 = vshrl.u32 %v5946, 16
        %v6029 = vrot.slane %v6027, 5
        %v6030 = vshll.u32 %v5946, 16
        %v6032 = vrot.slane %v6030, 6
        %v6033 = vor.u32 %v6029, %v6032
        %v6034 = vrot.slane %v6033, 4
        %v6036 = vshrl.u32 %v5947, 16
        %v6038 = vrot.slane %v6036, 5
        %v6039 = vshll.u32 %v5947, 16
        %v6041 = vrot.slane %v6039, 6
        %v6042 = vor.u32 %v6038, %v6041
        %v6043 = vsel %vm477, %v6034, %v6042
        %v6045 = vshrl.u32 %v5948, 16
        %v6047 = vrot.slane %v6045, 5
        %v6048 = vshll.u32 %v5948, 16
        %v6050 = vrot.slane %v6048, 6
        %v6051 = vor.u32 %v6047, %v6050
        %v6052 = vrot.slane %v6051, 4
        %v6054 = vshrl.u32 %v5949, 16
        %v6056 = vrot.slane %v6054, 5
        %v6057 = vshll.u32 %v5949, 16
        %v6059 = vrot.slane %v6057, 6
        %v6060 = vor.u32 %v6056, %v6059
        %v6061 = vsel %vm477, %v6052, %v6060
        %v6063 = vshrl.u32 %v5950, 16
        %v6065 = vrot.slane %v6063, 5
        %v6066 = vshll.u32 %v5950, 16
        %v6068 = vrot.slane %v6066, 6
        %v6069 = vor.u32 %v6065, %v6068
        %v6070 = vrot.slane %v6069, 4
        %v6072 = vshrl.u32 %v5951, 16
        %v6074 = vrot.slane %v6072, 5
        %v6075 = vshll.u32 %v5951, 16
        %v6077 = vrot.slane %v6075, 6
        %v6078 = vor.u32 %v6074, %v6077
        %v6079 = vsel %vm477, %v6070, %v6078
        %v6081 = vshrl.u32 %v5952, 16
        %v6083 = vrot.slane %v6081, 5
        %v6084 = vshll.u32 %v5952, 16
        %v6086 = vrot.slane %v6084, 6
        %v6087 = vor.u32 %v6083, %v6086
        %v6088 = vrot.slane %v6087, 4
        %v6090 = vshrl.u32 %v5953, 16
        %v6092 = vrot.slane %v6090, 5
        %v6093 = vshll.u32 %v5953, 16
        %v6095 = vrot.slane %v6093, 6
        %v6096 = vor.u32 %v6092, %v6095
        %v6097 = vsel %vm477, %v6088, %v6096
        %v6098 = vld [vmem:[#allocation2] sm:$0xff]
        %v6099 = vld [vmem:[#allocation2 + $0x8] sm:$0xff]
        %v6100 = vld [vmem:[#allocation2 + $0x10] sm:$0xff]
        %v6101 = vld [vmem:[#allocation2 + $0x18] sm:$0xff]
        %v6102 = vld [vmem:[#allocation2 + $0x20] sm:$0xff]
        %v6103 = vld [vmem:[#allocation2 + $0x28] sm:$0xff]
        %v6104 = vld [vmem:[#allocation2 + $0x30] sm:$0xff]
        %v6105 = vld [vmem:[#allocation2 + $0x38] sm:$0xff]
        %s6106 = scalar_lea.vmem [#allocation6], 616
        %v6107 = vld [vmem:[%s6106] sm:$0xf]
        %v6108 = vld [vmem:[%s6106 + $0x4] sm:$0xf]
        %v6109 = vld [vmem:[%s6106 + $0x8] sm:$0xf]
        %v6110 = vld [vmem:[%s6106 + $0xc] sm:$0xf]
        %v6111 = vld [vmem:[%s6106 + $0x10] sm:$0xf]
        %v6112 = vld [vmem:[%s6106 + $0x14] sm:$0xf]
        %v6113 = vld [vmem:[%s6106 + $0x18] sm:$0xf]
        %v6114 = vunpack.c.l.b16 %v5971
        %v6115 = vunpack.c.l.b16 %v5989
        %v6116 = vunpack.c.l.b16 %v6007
        %v6117 = vunpack.c.l.b16 %v6025
        %v6118 = vunpack.c.l.b16 %v6043
        %v6119 = vunpack.c.l.b16 %v6061
        %v6120 = vunpack.c.l.b16 %v6079
        %v6121 = vunpack.c.l.b16 %v6097
        %v6122 = vpack.c.b16 %v6115, %v6114
        %v6123 = vpack.c.b16 %v6117, %v6116
        %v6124 = vpack.c.b16 %v6119, %v6118
        %v6125 = vpack.c.b16 %v6121, %v6120
        %v6133 = vunpack.c.l.b16 %v6107
        %v6134 = vunpack.c.l.b16 %v6108
        %v6135 = vunpack.c.l.b16 %v6109
        %v6136 = vunpack.c.l.b16 %v6110
        %v6137 = vunpack.c.l.b16 %v6111
        %v6138 = vunpack.c.l.b16 %v6112
        %v6139 = vunpack.c.l.b16 %v6113
        %v6140 = vpack.c.b16 %v6134, %v6133
        %v6141 = vpack.c.b16 %v6136, %v6135
        %v6142 = vpack.c.b16 %v6138, %v6137
        %v6143 = vpack.c.b16 %v6139, %v6139
        %v6148 = vsel %vm361, %v6122, 0
        %v6151 = vsel %vm361, %v6123, 0
        %v6154 = vsel %vm361, %v6124, 0
        %v6157 = vsel %vm361, %v6125, 0
        %v6160 = vsel %vm374, %v6143, 0
        %6162 = vmatprep.subr.bf16.mxu0 0
        %6163 = vmatpush1.bf16.msra.mxu0 %v6140
        %6164 = vmatprep.subr.bf16.mxu0 0
        %6165 = vmatpush1.bf16.msra.mxu0 %v6141
        %6166 = vmatprep.subr.bf16.mxu0 0
        %6167 = vmatpush1.bf16.msra.mxu0 %v6142
        %6168 = vmatprep.subr.bf16.mxu0 0
        %6169 = vmatpush1.bf16.msra.mxu0 %v6160
        %6170 = vmatprep.subr.bf16.mxu0 0
        %6171 = vmatpush1.bf16.msra.mxu0 0
        %6172 = vmatprep.subr.bf16.mxu0 0
        %6173 = vmatpush1.bf16.msra.mxu0 0
        %6174 = vmatprep.subr.bf16.mxu0 0
        %6175 = vmatpush1.bf16.msra.mxu0 0
        %6176 = vmatprep.subr.bf16.mxu0 0
        %6177 = vmatpush1.bf16.msra.mxu0 0
        %6178 = vmatprep.subr.bf16.mxu0 0
        %6179 = vmatpush1.bf16.msra.mxu0 0
        %6180 = vmatprep.subr.bf16.mxu0 0
        %6181 = vmatpush1.bf16.msra.mxu0 0
        %6182 = vmatprep.subr.bf16.mxu0 0
        %6183 = vmatpush1.bf16.msra.mxu0 0
        %6184 = vmatprep.subr.bf16.mxu0 0
        %6185 = vmatpush1.bf16.msra.mxu0 0
        %6186 = vmatprep.subr.bf16.mxu0 0
        %6187 = vmatpush1.bf16.msra.mxu0 0
        %6188 = vmatprep.subr.bf16.mxu0 0
        %6189 = vmatpush1.bf16.msra.mxu0 0
        %6190 = vmatprep.subr.bf16.mxu0 0
        %6191 = vmatpush1.bf16.msra.mxu0 0
        %6192 = vmatprep.subr.bf16.mxu0 0
        %6193 = vmatpush1.bf16.msra.mxu0 0
        %6194 = vmatprep.mubr.bf16.mxu0 0
        %6195 = vmatmul.mubr.bf16.gmra.mrb[0].mxu0 %v6148
        %v6196 = vpop.f32.mrb[0].mxu0
        %v6197 = vadd.f32 0.0, %v6196
        %v6198 = vpop.f32.mrb[0].mxu0
        %v6199 = vpop.f32.mrb[0].mxu0
        %v6200 = vadd.f32 0.0, %v6199
        %v6201 = vpop.f32.mrb[0].mxu0
        %6202 = vmatprep.mubr.bf16.mxu0 0
        %6203 = vmatmul.mubr.bf16.gmra.mrb[0].mxu0 %v6151
        %v6204 = vpop.f32.mrb[0].mxu0
        %v6205 = vadd.f32 0.0, %v6204
        %v6206 = vpop.f32.mrb[0].mxu0
        %v6207 = vpop.f32.mrb[0].mxu0
        %v6208 = vadd.f32 0.0, %v6207
        %v6209 = vpop.f32.mrb[0].mxu0
        %6210 = vmatprep.mubr.bf16.mxu0 0
        %6211 = vmatmul.mubr.bf16.gmra.mrb[0].mxu0 %v6154
        %v6212 = vpop.f32.mrb[0].mxu0
        %v6213 = vadd.f32 0.0, %v6212
        %v6214 = vpop.f32.mrb[0].mxu0
        %v6215 = vpop.f32.mrb[0].mxu0
        %v6216 = vadd.f32 0.0, %v6215
        %v6217 = vpop.f32.mrb[0].mxu0
        %6218 = vmatprep.mubr.bf16.mxu0 0
        %6219 = vmatmul.mubr.bf16.gmra.mrb[0].mxu0 %v6157
        %v6220 = vpop.f32.mrb[0].mxu0
        %v6221 = vadd.f32 0.0, %v6220
        %v6222 = vpop.f32.mrb[0].mxu0
        %v6223 = vpop.f32.mrb[0].mxu0
        %v6224 = vadd.f32 0.0, %v6223
        %v6225 = vpop.f32.mrb[0].mxu0
        %6226 = vdwg.mxu0
        %v6227 = vadd.f32 %v6098, %v6197
        %v6228 = vadd.f32 %v6099, %v6200
        %v6229 = vadd.f32 %v6100, %v6205
        %v6230 = vadd.f32 %v6101, %v6208
        %v6231 = vadd.f32 %v6102, %v6213
        %v6232 = vadd.f32 %v6103, %v6216
        %v6233 = vadd.f32 %v6104, %v6221
        %v6234 = vadd.f32 %v6105, %v6224
        %6235 = vst.msk [vmem:[#allocation2] sm:$0xff] %vm232, %v6227
        %6236 = vst.msk [vmem:[#allocation2 + $0x8] sm:$0xff] %vm232, %v6228
        %6237 = vst.msk [vmem:[#allocation2 + $0x10] sm:$0xff] %vm232, %v6229
        %6238 = vst.msk [vmem:[#allocation2 + $0x18] sm:$0xff] %vm232, %v6230
        %6239 = vst.msk [vmem:[#allocation2 + $0x20] sm:$0xff] %vm232, %v6231
        %6240 = vst.msk [vmem:[#allocation2 + $0x28] sm:$0xff] %vm232, %v6232
        %6241 = vst.msk [vmem:[#allocation2 + $0x30] sm:$0xff] %vm232, %v6233
        %6242 = vst.msk [vmem:[#allocation2 + $0x38] sm:$0xff] %vm232, %v6234
        %v6243 = vld [vmem:[%s982] sm:$0x8]
        %v6244 = vld [vmem:[%s982 + $0x4] sm:$0x7]
        %v6245 = vld [vmem:[%s982 + $0x8] sm:$0x8]
        %v6246 = vld [vmem:[%s982 + $0xc] sm:$0x7]
        %v6247 = vld [vmem:[%s982 + $0x10] sm:$0x8]
        %v6248 = vld [vmem:[%s982 + $0x14] sm:$0x7]
        %v6249 = vld [vmem:[%s982 + $0x18] sm:$0x8]
        %v6250 = vld [vmem:[%s982 + $0x1c] sm:$0x7]
        %v6251 = vld [vmem:[%s982 + $0x20] sm:$0x8]
        %v6252 = vld [vmem:[%s982 + $0x24] sm:$0x7]
        %v6253 = vld [vmem:[%s982 + $0x28] sm:$0x8]
        %v6254 = vld [vmem:[%s982 + $0x2c] sm:$0x7]
        %v6255 = vld [vmem:[%s982 + $0x30] sm:$0x8]
        %v6256 = vld [vmem:[%s982 + $0x34] sm:$0x7]
        %v6257 = vld [vmem:[%s982 + $0x38] sm:$0x8]
        %v6258 = vld [vmem:[%s982 + $0x3c] sm:$0x7]
        %v6275 = vrot.slane %v6243, 7
        %v6276 = vrot.slane %v6275, 4
        %v6277 = vrot.slane %v6244, 7
        %v6278 = vsel %vm5599, %v6276, %v6277
        %v6279 = vrot.slane %v6245, 7
        %v6280 = vrot.slane %v6279, 4
        %v6281 = vrot.slane %v6246, 7
        %v6282 = vsel %vm5599, %v6280, %v6281
        %v6283 = vrot.slane %v6247, 7
        %v6284 = vrot.slane %v6283, 4
        %v6285 = vrot.slane %v6248, 7
        %v6286 = vsel %vm5599, %v6284, %v6285
        %v6287 = vrot.slane %v6249, 7
        %v6288 = vrot.slane %v6287, 4
        %v6289 = vrot.slane %v6250, 7
        %v6290 = vsel %vm5599, %v6288, %v6289
        %v6291 = vrot.slane %v6251, 7
        %v6292 = vrot.slane %v6291, 4
        %v6293 = vrot.slane %v6252, 7
        %v6294 = vsel %vm5599, %v6292, %v6293
        %v6295 = vrot.slane %v6253, 7
        %v6296 = vrot.slane %v6295, 4
        %v6297 = vrot.slane %v6254, 7
        %v6298 = vsel %vm5599, %v6296, %v6297
        %v6299 = vrot.slane %v6255, 7
        %v6300 = vrot.slane %v6299, 4
        %v6301 = vrot.slane %v6256, 7
        %v6302 = vsel %vm5599, %v6300, %v6301
        %v6303 = vrot.slane %v6257, 7
        %v6304 = vrot.slane %v6303, 4
        %v6305 = vrot.slane %v6258, 7
        %v6306 = vsel %vm5599, %v6304, %v6305
        %v6307 = vld [vmem:[#allocation2] sm:$0xff]
        %v6308 = vld [vmem:[#allocation2 + $0x8] sm:$0xff]
        %v6309 = vld [vmem:[#allocation2 + $0x10] sm:$0xff]
        %v6310 = vld [vmem:[#allocation2 + $0x18] sm:$0xff]
        %v6311 = vld [vmem:[#allocation2 + $0x20] sm:$0xff]
        %v6312 = vld [vmem:[#allocation2 + $0x28] sm:$0xff]
        %v6313 = vld [vmem:[#allocation2 + $0x30] sm:$0xff]
        %v6314 = vld [vmem:[#allocation2 + $0x38] sm:$0xff]
        %s6315 = scalar_lea.vmem [#allocation6], 644
        %v6316 = vld [vmem:[%s6315] sm:$0xf]
        %v6317 = vld [vmem:[%s6315 + $0x4] sm:$0xf]
        %v6318 = vld [vmem:[%s6315 + $0x8] sm:$0xf]
        %v6319 = vld [vmem:[%s6315 + $0xc] sm:$0xf]
        %v6320 = vld [vmem:[%s6315 + $0x10] sm:$0xf]
        %v6321 = vld [vmem:[%s6315 + $0x14] sm:$0xf]
        %v6322 = vld [vmem:[%s6315 + $0x18] sm:$0xf]
        %v6323 = vunpack.c.l.b16 %v6278
        %v6324 = vunpack.c.l.b16 %v6282
        %v6325 = vunpack.c.l.b16 %v6286
        %v6326 = vunpack.c.l.b16 %v6290
        %v6327 = vunpack.c.l.b16 %v6294
        %v6328 = vunpack.c.l.b16 %v6298
        %v6329 = vunpack.c.l.b16 %v6302
        %v6330 = vunpack.c.l.b16 %v6306
        %v6331 = vpack.c.b16 %v6324, %v6323
        %v6332 = vpack.c.b16 %v6326, %v6325
        %v6333 = vpack.c.b16 %v6328, %v6327
        %v6334 = vpack.c.b16 %v6330, %v6329
        %v6342 = vunpack.c.l.b16 %v6316
        %v6343 = vunpack.c.l.b16 %v6317
        %v6344 = vunpack.c.l.b16 %v6318
        %v6345 = vunpack.c.l.b16 %v6319
        %v6346 = vunpack.c.l.b16 %v6320
        %v6347 = vunpack.c.l.b16 %v6321
        %v6348 = vunpack.c.l.b16 %v6322
        %v6349 = vpack.c.b16 %v6343, %v6342
        %v6350 = vpack.c.b16 %v6345, %v6344
        %v6351 = vpack.c.b16 %v6347, %v6346
        %v6352 = vpack.c.b16 %v6348, %v6348
        %v6357 = vsel %vm361, %v6331, 0
        %v6360 = vsel %vm361, %v6332, 0
        %v6363 = vsel %vm361, %v6333, 0
        %v6366 = vsel %vm361, %v6334, 0
        %v6369 = vsel %vm374, %v6352, 0
        %6371 = vmatprep.subr.bf16.mxu0 0
        %6372 = vmatpush1.bf16.msra.mxu0 %v6349
        %6373 = vmatprep.subr.bf16.mxu0 0
        %6374 = vmatpush1.bf16.msra.mxu0 %v6350
        %6375 = vmatprep.subr.bf16.mxu0 0
        %6376 = vmatpush1.bf16.msra.mxu0 %v6351
        %6377 = vmatprep.subr.bf16.mxu0 0
        %6378 = vmatpush1.bf16.msra.mxu0 %v6369
        %6379 = vmatprep.subr.bf16.mxu0 0
        %6380 = vmatpush1.bf16.msra.mxu0 0
        %6381 = vmatprep.subr.bf16.mxu0 0
        %6382 = vmatpush1.bf16.msra.mxu0 0
        %6383 = vmatprep.subr.bf16.mxu0 0
        %6384 = vmatpush1.bf16.msra.mxu0 0
        %6385 = vmatprep.subr.bf16.mxu0 0
        %6386 = vmatpush1.bf16.msra.mxu0 0
        %6387 = vmatprep.subr.bf16.mxu0 0
        %6388 = vmatpush1.bf16.msra.mxu0 0
        %6389 = vmatprep.subr.bf16.mxu0 0
        %6390 = vmatpush1.bf16.msra.mxu0 0
        %6391 = vmatprep.subr.bf16.mxu0 0
        %6392 = vmatpush1.bf16.msra.mxu0 0
        %6393 = vmatprep.subr.bf16.mxu0 0
        %6394 = vmatpush1.bf16.msra.mxu0 0
        %6395 = vmatprep.subr.bf16.mxu0 0
        %6396 = vmatpush1.bf16.msra.mxu0 0
        %6397 = vmatprep.subr.bf16.mxu0 0
        %6398 = vmatpush1.bf16.msra.mxu0 0
        %6399 = vmatprep.subr.bf16.mxu0 0
        %6400 = vmatpush1.bf16.msra.mxu0 0
        %6401 = vmatprep.subr.bf16.mxu0 0
        %6402 = vmatpush1.bf16.msra.mxu0 0
        %6403 = vmatprep.mubr.bf16.mxu0 0
        %6404 = vmatmul.mubr.bf16.gmra.mrb[0].mxu0 %v6357
        %v6405 = vpop.f32.mrb[0].mxu0
        %v6406 = vadd.f32 0.0, %v6405
        %v6407 = vpop.f32.mrb[0].mxu0
        %v6408 = vpop.f32.mrb[0].mxu0
        %v6409 = vadd.f32 0.0, %v6408
        %v6410 = vpop.f32.mrb[0].mxu0
        %6411 = vmatprep.mubr.bf16.mxu0 0
        %6412 = vmatmul.mubr.bf16.gmra.mrb[0].mxu0 %v6360
        %v6413 = vpop.f32.mrb[0].mxu0
        %v6414 = vadd.f32 0.0, %v6413
        %v6415 = vpop.f32.mrb[0].mxu0
        %v6416 = vpop.f32.mrb[0].mxu0
        %v6417 = vadd.f32 0.0, %v6416
        %v6418 = vpop.f32.mrb[0].mxu0
        %6419 = vmatprep.mubr.bf16.mxu0 0
        %6420 = vmatmul.mubr.bf16.gmra.mrb[0].mxu0 %v6363
        %v6421 = vpop.f32.mrb[0].mxu0
        %v6422 = vadd.f32 0.0, %v6421
        %v6423 = vpop.f32.mrb[0].mxu0
        %v6424 = vpop.f32.mrb[0].mxu0
        %v6425 = vadd.f32 0.0, %v6424
        %v6426 = vpop.f32.mrb[0].mxu0
        %6427 = vmatprep.mubr.bf16.mxu0 0
        %6428 = vmatmul.mubr.bf16.gmra.mrb[0].mxu0 %v6366
        %v6429 = vpop.f32.mrb[0].mxu0
        %v6430 = vadd.f32 0.0, %v6429
        %v6431 = vpop.f32.mrb[0].mxu0
        %v6432 = vpop.f32.mrb[0].mxu0
        %v6433 = vadd.f32 0.0, %v6432
        %v6434 = vpop.f32.mrb[0].mxu0
        %6435 = vdwg.mxu0
        %v6436 = vadd.f32 %v6307, %v6406
        %v6437 = vadd.f32 %v6308, %v6409
        %v6438 = vadd.f32 %v6309, %v6414
        %v6439 = vadd.f32 %v6310, %v6417
        %v6440 = vadd.f32 %v6311, %v6422
        %v6441 = vadd.f32 %v6312, %v6425
        %v6442 = vadd.f32 %v6313, %v6430
        %v6443 = vadd.f32 %v6314, %v6433
        %6444 = vst.msk [vmem:[#allocation2] sm:$0xff] %vm232, %v6436
        %6445 = vst.msk [vmem:[#allocation2 + $0x8] sm:$0xff] %vm232, %v6437
        %6446 = vst.msk [vmem:[#allocation2 + $0x10] sm:$0xff] %vm232, %v6438
        %6447 = vst.msk [vmem:[#allocation2 + $0x18] sm:$0xff] %vm232, %v6439
        %6448 = vst.msk [vmem:[#allocation2 + $0x20] sm:$0xff] %vm232, %v6440
        %6449 = vst.msk [vmem:[#allocation2 + $0x28] sm:$0xff] %vm232, %v6441
        %6450 = vst.msk [vmem:[#allocation2 + $0x30] sm:$0xff] %vm232, %v6442
        %6451 = vst.msk [vmem:[#allocation2 + $0x38] sm:$0xff] %vm232, %v6443
        %s6452 = sadd.s32 %s241, 6
        %s6453 = smul.u32 %s6452, 2
        %s6454 = smul.addr %s6453, 4
        %s6455 = scalar_lea.vmem %s199, %s6454 [#allocation3]
        %v6456 = vld [vmem:[%s6455] sm:$0xf]
        %v6457 = vld [vmem:[%s6455 + $0x8] sm:$0xf]
        %v6458 = vld [vmem:[%s6455 + $0x10] sm:$0xf]
        %v6459 = vld [vmem:[%s6455 + $0x18] sm:$0xf]
        %v6460 = vld [vmem:[%s6455 + $0x20] sm:$0xf]
        %v6461 = vld [vmem:[%s6455 + $0x28] sm:$0xf]
        %v6462 = vld [vmem:[%s6455 + $0x30] sm:$0xf]
        %v6463 = vld [vmem:[%s6455 + $0x38] sm:$0xf]
        %v6464 = vld [vmem:[#allocation2] sm:$0xff]
        %v6465 = vld [vmem:[#allocation2 + $0x8] sm:$0xff]
        %v6466 = vld [vmem:[#allocation2 + $0x10] sm:$0xff]
        %v6467 = vld [vmem:[#allocation2 + $0x18] sm:$0xff]
        %v6468 = vld [vmem:[#allocation2 + $0x20] sm:$0xff]
        %v6469 = vld [vmem:[#allocation2 + $0x28] sm:$0xff]
        %v6470 = vld [vmem:[#allocation2 + $0x30] sm:$0xff]
        %v6471 = vld [vmem:[#allocation2 + $0x38] sm:$0xff]
        %s6472 = scalar_lea.vmem [#allocation6], 672
        %v6473 = vld [vmem:[%s6472] sm:$0xf]
        %v6474 = vld [vmem:[%s6472 + $0x4] sm:$0xf]
        %v6475 = vld [vmem:[%s6472 + $0x8] sm:$0xf]
        %v6476 = vld [vmem:[%s6472 + $0xc] sm:$0xf]
        %v6477 = vld [vmem:[%s6472 + $0x10] sm:$0xf]
        %v6478 = vld [vmem:[%s6472 + $0x14] sm:$0xf]
        %v6479 = vld [vmem:[%s6472 + $0x18] sm:$0xf]
        %v6488 = vunpack.c.l.b16 %v6456
        %v6489 = vunpack.c.l.b16 %v6457
        %v6490 = vunpack.c.l.b16 %v6458
        %v6491 = vunpack.c.l.b16 %v6459
        %v6492 = vunpack.c.l.b16 %v6460
        %v6493 = vunpack.c.l.b16 %v6461
        %v6494 = vunpack.c.l.b16 %v6462
        %v6495 = vunpack.c.l.b16 %v6463
        %v6496 = vpack.c.b16 %v6489, %v6488
        %v6497 = vpack.c.b16 %v6491, %v6490
        %v6498 = vpack.c.b16 %v6493, %v6492
        %v6499 = vpack.c.b16 %v6495, %v6494
        %v6507 = vunpack.c.l.b16 %v6473
        %v6508 = vunpack.c.l.b16 %v6474
        %v6509 = vunpack.c.l.b16 %v6475
        %v6510 = vunpack.c.l.b16 %v6476
        %v6511 = vunpack.c.l.b16 %v6477
        %v6512 = vunpack.c.l.b16 %v6478
        %v6513 = vunpack.c.l.b16 %v6479
        %v6514 = vpack.c.b16 %v6508, %v6507
        %v6515 = vpack.c.b16 %v6510, %v6509
        %v6516 = vpack.c.b16 %v6512, %v6511
        %v6517 = vpack.c.b16 %v6513, %v6513
        %v6522 = vsel %vm361, %v6496, 0
        %v6525 = vsel %vm361, %v6497, 0
        %v6528 = vsel %vm361, %v6498, 0
        %v6531 = vsel %vm361, %v6499, 0
        %v6534 = vsel %vm374, %v6517, 0
        %6536 = vmatprep.subr.bf16.mxu0 0
        %6537 = vmatpush1.bf16.msra.mxu0 %v6514
        %6538 = vmatprep.subr.bf16.mxu0 0
        %6539 = vmatpush1.bf16.msra.mxu0 %v6515
        %6540 = vmatprep.subr.bf16.mxu0 0
        %6541 = vmatpush1.bf16.msra.mxu0 %v6516
        %6542 = vmatprep.subr.bf16.mxu0 0
        %6543 = vmatpush1.bf16.msra.mxu0 %v6534
        %6544 = vmatprep.subr.bf16.mxu0 0
        %6545 = vmatpush1.bf16.msra.mxu0 0
        %6546 = vmatprep.subr.bf16.mxu0 0
        %6547 = vmatpush1.bf16.msra.mxu0 0
        %6548 = vmatprep.subr.bf16.mxu0 0
        %6549 = vmatpush1.bf16.msra.mxu0 0
        %6550 = vmatprep.subr.bf16.mxu0 0
        %6551 = vmatpush1.bf16.msra.mxu0 0
        %6552 = vmatprep.subr.bf16.mxu0 0
        %6553 = vmatpush1.bf16.msra.mxu0 0
        %6554 = vmatprep.subr.bf16.mxu0 0
        %6555 = vmatpush1.bf16.msra.mxu0 0
        %6556 = vmatprep.subr.bf16.mxu0 0
        %6557 = vmatpush1.bf16.msra.mxu0 0
        %6558 = vmatprep.subr.bf16.mxu0 0
        %6559 = vmatpush1.bf16.msra.mxu0 0
        %6560 = vmatprep.subr.bf16.mxu0 0
        %6561 = vmatpush1.bf16.msra.mxu0 0
        %6562 = vmatprep.subr.bf16.mxu0 0
        %6563 = vmatpush1.bf16.msra.mxu0 0
        %6564 = vmatprep.subr.bf16.mxu0 0
        %6565 = vmatpush1.bf16.msra.mxu0 0
        %6566 = vmatprep.subr.bf16.mxu0 0
        %6567 = vmatpush1.bf16.msra.mxu0 0
        %6568 = vmatprep.mubr.bf16.mxu0 0
        %6569 = vmatmul.mubr.bf16.gmra.mrb[0].mxu0 %v6522
        %v6570 = vpop.f32.mrb[0].mxu0
        %v6571 = vadd.f32 0.0, %v6570
        %v6572 = vpop.f32.mrb[0].mxu0
        %v6573 = vpop.f32.mrb[0].mxu0
        %v6574 = vadd.f32 0.0, %v6573
        %v6575 = vpop.f32.mrb[0].mxu0
        %6576 = vmatprep.mubr.bf16.mxu0 0
        %6577 = vmatmul.mubr.bf16.gmra.mrb[0].mxu0 %v6525
        %v6578 = vpop.f32.mrb[0].mxu0
        %v6579 = vadd.f32 0.0, %v6578
        %v6580 = vpop.f32.mrb[0].mxu0
        %v6581 = vpop.f32.mrb[0].mxu0
        %v6582 = vadd.f32 0.0, %v6581
        %v6583 = vpop.f32.mrb[0].mxu0
        %6584 = vmatprep.mubr.bf16.mxu0 0
        %6585 = vmatmul.mubr.bf16.gmra.mrb[0].mxu0 %v6528
        %v6586 = vpop.f32.mrb[0].mxu0
        %v6587 = vadd.f32 0.0, %v6586
        %v6588 = vpop.f32.mrb[0].mxu0
        %v6589 = vpop.f32.mrb[0].mxu0
        %v6590 = vadd.f32 0.0, %v6589
        %v6591 = vpop.f32.mrb[0].mxu0
        %6592 = vmatprep.mubr.bf16.mxu0 0
        %6593 = vmatmul.mubr.bf16.gmra.mrb[0].mxu0 %v6531
        %v6594 = vpop.f32.mrb[0].mxu0
        %v6595 = vadd.f32 0.0, %v6594
        %v6596 = vpop.f32.mrb[0].mxu0
        %v6597 = vpop.f32.mrb[0].mxu0
        %v6598 = vadd.f32 0.0, %v6597
        %v6599 = vpop.f32.mrb[0].mxu0
        %6600 = vdwg.mxu0
        %v6601 = vadd.f32 %v6464, %v6571
        %v6602 = vadd.f32 %v6465, %v6574
        %v6603 = vadd.f32 %v6466, %v6579
        %v6604 = vadd.f32 %v6467, %v6582
        %v6605 = vadd.f32 %v6468, %v6587
        %v6606 = vadd.f32 %v6469, %v6590
        %v6607 = vadd.f32 %v6470, %v6595
        %v6608 = vadd.f32 %v6471, %v6598
        %6609 = vst.msk [vmem:[#allocation2] sm:$0xff] %vm232, %v6601
        %6610 = vst.msk [vmem:[#allocation2 + $0x8] sm:$0xff] %vm232, %v6602
        %6611 = vst.msk [vmem:[#allocation2 + $0x10] sm:$0xff] %vm232, %v6603
        %6612 = vst.msk [vmem:[#allocation2 + $0x18] sm:$0xff] %vm232, %v6604
        %6613 = vst.msk [vmem:[#allocation2 + $0x20] sm:$0xff] %vm232, %v6605
        %6614 = vst.msk [vmem:[#allocation2 + $0x28] sm:$0xff] %vm232, %v6606
        %6615 = vst.msk [vmem:[#allocation2 + $0x30] sm:$0xff] %vm232, %v6607
        %6616 = vst.msk [vmem:[#allocation2 + $0x38] sm:$0xff] %vm232, %v6608
        %v6617 = vld [vmem:[%s6455] sm:$0xe]
        %v6618 = vld [vmem:[%s6455 + $0x4] sm:$0x3]
        %v6619 = vld [vmem:[%s6455 + $0x8] sm:$0xe]
        %v6620 = vld [vmem:[%s6455 + $0xc] sm:$0x3]
        %v6621 = vld [vmem:[%s6455 + $0x10] sm:$0xe]
        %v6622 = vld [vmem:[%s6455 + $0x14] sm:$0x3]
        %v6623 = vld [vmem:[%s6455 + $0x18] sm:$0xe]
        %v6624 = vld [vmem:[%s6455 + $0x1c] sm:$0x3]
        %v6625 = vld [vmem:[%s6455 + $0x20] sm:$0xe]
        %v6626 = vld [vmem:[%s6455 + $0x24] sm:$0x3]
        %v6627 = vld [vmem:[%s6455 + $0x28] sm:$0xe]
        %v6628 = vld [vmem:[%s6455 + $0x2c] sm:$0x3]
        %v6629 = vld [vmem:[%s6455 + $0x30] sm:$0xe]
        %v6630 = vld [vmem:[%s6455 + $0x34] sm:$0x3]
        %v6631 = vld [vmem:[%s6455 + $0x38] sm:$0xe]
        %v6632 = vld [vmem:[%s6455 + $0x3c] sm:$0x3]
        %v6634 = vshrl.u32 %v6617, 16
        %v6636 = vrot.slane %v6634, 5
        %v6637 = vshll.u32 %v6617, 16
        %v6639 = vrot.slane %v6637, 6
        %v6640 = vor.u32 %v6636, %v6639
        %v6641 = vrot.slane %v6640, 4
        %v6643 = vshrl.u32 %v6618, 16
        %v6645 = vrot.slane %v6643, 5
        %v6646 = vshll.u32 %v6618, 16
        %v6648 = vrot.slane %v6646, 6
        %v6649 = vor.u32 %v6645, %v6648
        %v6650 = vsel %vm477, %v6641, %v6649
        %v6652 = vshrl.u32 %v6619, 16
        %v6654 = vrot.slane %v6652, 5
        %v6655 = vshll.u32 %v6619, 16
        %v6657 = vrot.slane %v6655, 6
        %v6658 = vor.u32 %v6654, %v6657
        %v6659 = vrot.slane %v6658, 4
        %v6661 = vshrl.u32 %v6620, 16
        %v6663 = vrot.slane %v6661, 5
        %v6664 = vshll.u32 %v6620, 16
        %v6666 = vrot.slane %v6664, 6
        %v6667 = vor.u32 %v6663, %v6666
        %v6668 = vsel %vm477, %v6659, %v6667
        %v6670 = vshrl.u32 %v6621, 16
        %v6672 = vrot.slane %v6670, 5
        %v6673 = vshll.u32 %v6621, 16
        %v6675 = vrot.slane %v6673, 6
        %v6676 = vor.u32 %v6672, %v6675
        %v6677 = vrot.slane %v6676, 4
        %v6679 = vshrl.u32 %v6622, 16
        %v6681 = vrot.slane %v6679, 5
        %v6682 = vshll.u32 %v6622, 16
        %v6684 = vrot.slane %v6682, 6
        %v6685 = vor.u32 %v6681, %v6684
        %v6686 = vsel %vm477, %v6677, %v6685
        %v6688 = vshrl.u32 %v6623, 16
        %v6690 = vrot.slane %v6688, 5
        %v6691 = vshll.u32 %v6623, 16
        %v6693 = vrot.slane %v6691, 6
        %v6694 = vor.u32 %v6690, %v6693
        %v6695 = vrot.slane %v6694, 4
        %v6697 = vshrl.u32 %v6624, 16
        %v6699 = vrot.slane %v6697, 5
        %v6700 = vshll.u32 %v6624, 16
        %v6702 = vrot.slane %v6700, 6
        %v6703 = vor.u32 %v6699, %v6702
        %v6704 = vsel %vm477, %v6695, %v6703
        %v6706 = vshrl.u32 %v6625, 16
        %v6708 = vrot.slane %v6706, 5
        %v6709 = vshll.u32 %v6625, 16
        %v6711 = vrot.slane %v6709, 6
        %v6712 = vor.u32 %v6708, %v6711
        %v6713 = vrot.slane %v6712, 4
        %v6715 = vshrl.u32 %v6626, 16
        %v6717 = vrot.slane %v6715, 5
        %v6718 = vshll.u32 %v6626, 16
        %v6720 = vrot.slane %v6718, 6
        %v6721 = vor.u32 %v6717, %v6720
        %v6722 = vsel %vm477, %v6713, %v6721
        %v6724 = vshrl.u32 %v6627, 16
        %v6726 = vrot.slane %v6724, 5
        %v6727 = vshll.u32 %v6627, 16
        %v6729 = vrot.slane %v6727, 6
        %v6730 = vor.u32 %v6726, %v6729
        %v6731 = vrot.slane %v6730, 4
        %v6733 = vshrl.u32 %v6628, 16
        %v6735 = vrot.slane %v6733, 5
        %v6736 = vshll.u32 %v6628, 16
        %v6738 = vrot.slane %v6736, 6
        %v6739 = vor.u32 %v6735, %v6738
        %v6740 = vsel %vm477, %v6731, %v6739
        %v6742 = vshrl.u32 %v6629, 16
        %v6744 = vrot.slane %v6742, 5
        %v6745 = vshll.u32 %v6629, 16
        %v6747 = vrot.slane %v6745, 6
        %v6748 = vor.u32 %v6744, %v6747
        %v6749 = vrot.slane %v6748, 4
        %v6751 = vshrl.u32 %v6630, 16
        %v6753 = vrot.slane %v6751, 5
        %v6754 = vshll.u32 %v6630, 16
        %v6756 = vrot.slane %v6754, 6
        %v6757 = vor.u32 %v6753, %v6756
        %v6758 = vsel %vm477, %v6749, %v6757
        %v6760 = vshrl.u32 %v6631, 16
        %v6762 = vrot.slane %v6760, 5
        %v6763 = vshll.u32 %v6631, 16
        %v6765 = vrot.slane %v6763, 6
        %v6766 = vor.u32 %v6762, %v6765
        %v6767 = vrot.slane %v6766, 4
        %v6769 = vshrl.u32 %v6632, 16
        %v6771 = vrot.slane %v6769, 5
        %v6772 = vshll.u32 %v6632, 16
        %v6774 = vrot.slane %v6772, 6
        %v6775 = vor.u32 %v6771, %v6774
        %v6776 = vsel %vm477, %v6767, %v6775
        %v6777 = vld [vmem:[#allocation2] sm:$0xff]
        %v6778 = vld [vmem:[#allocation2 + $0x8] sm:$0xff]
        %v6779 = vld [vmem:[#allocation2 + $0x10] sm:$0xff]
        %v6780 = vld [vmem:[#allocation2 + $0x18] sm:$0xff]
        %v6781 = vld [vmem:[#allocation2 + $0x20] sm:$0xff]
        %v6782 = vld [vmem:[#allocation2 + $0x28] sm:$0xff]
        %v6783 = vld [vmem:[#allocation2 + $0x30] sm:$0xff]
        %v6784 = vld [vmem:[#allocation2 + $0x38] sm:$0xff]
        %s6785 = scalar_lea.vmem [#allocation6], 700
        %v6786 = vld [vmem:[%s6785] sm:$0xf]
        %v6787 = vld [vmem:[%s6785 + $0x4] sm:$0xf]
        %v6788 = vld [vmem:[%s6785 + $0x8] sm:$0xf]
        %v6789 = vld [vmem:[%s6785 + $0xc] sm:$0xf]
        %v6790 = vld [vmem:[%s6785 + $0x10] sm:$0xf]
        %v6791 = vld [vmem:[%s6785 + $0x14] sm:$0xf]
        %v6792 = vld [vmem:[%s6785 + $0x18] sm:$0xf]
        %v6793 = vunpack.c.l.b16 %v6650
        %v6794 = vunpack.c.l.b16 %v6668
        %v6795 = vunpack.c.l.b16 %v6686
        %v6796 = vunpack.c.l.b16 %v6704
        %v6797 = vunpack.c.l.b16 %v6722
        %v6798 = vunpack.c.l.b16 %v6740
        %v6799 = vunpack.c.l.b16 %v6758
        %v6800 = vunpack.c.l.b16 %v6776
        %v6801 = vpack.c.b16 %v6794, %v6793
        %v6802 = vpack.c.b16 %v6796, %v6795
        %v6803 = vpack.c.b16 %v6798, %v6797
        %v6804 = vpack.c.b16 %v6800, %v6799
        %v6812 = vunpack.c.l.b16 %v6786
        %v6813 = vunpack.c.l.b16 %v6787
        %v6814 = vunpack.c.l.b16 %v6788
        %v6815 = vunpack.c.l.b16 %v6789
        %v6816 = vunpack.c.l.b16 %v6790
        %v6817 = vunpack.c.l.b16 %v6791
        %v6818 = vunpack.c.l.b16 %v6792
        %v6819 = vpack.c.b16 %v6813, %v6812
        %v6820 = vpack.c.b16 %v6815, %v6814
        %v6821 = vpack.c.b16 %v6817, %v6816
        %v6822 = vpack.c.b16 %v6818, %v6818
        %v6827 = vsel %vm361, %v6801, 0
        %v6830 = vsel %vm361, %v6802, 0
        %v6833 = vsel %vm361, %v6803, 0
        %v6836 = vsel %vm361, %v6804, 0
        %v6839 = vsel %vm374, %v6822, 0
        %6841 = vmatprep.subr.bf16.mxu0 0
        %6842 = vmatpush1.bf16.msra.mxu0 %v6819
        %6843 = vmatprep.subr.bf16.mxu0 0
        %6844 = vmatpush1.bf16.msra.mxu0 %v6820
        %6845 = vmatprep.subr.bf16.mxu0 0
        %6846 = vmatpush1.bf16.msra.mxu0 %v6821
        %6847 = vmatprep.subr.bf16.mxu0 0
        %6848 = vmatpush1.bf16.msra.mxu0 %v6839
        %6849 = vmatprep.subr.bf16.mxu0 0
        %6850 = vmatpush1.bf16.msra.mxu0 0
        %6851 = vmatprep.subr.bf16.mxu0 0
        %6852 = vmatpush1.bf16.msra.mxu0 0
        %6853 = vmatprep.subr.bf16.mxu0 0
        %6854 = vmatpush1.bf16.msra.mxu0 0
        %6855 = vmatprep.subr.bf16.mxu0 0
        %6856 = vmatpush1.bf16.msra.mxu0 0
        %6857 = vmatprep.subr.bf16.mxu0 0
        %6858 = vmatpush1.bf16.msra.mxu0 0
        %6859 = vmatprep.subr.bf16.mxu0 0
        %6860 = vmatpush1.bf16.msra.mxu0 0
        %6861 = vmatprep.subr.bf16.mxu0 0
        %6862 = vmatpush1.bf16.msra.mxu0 0
        %6863 = vmatprep.subr.bf16.mxu0 0
        %6864 = vmatpush1.bf16.msra.mxu0 0
        %6865 = vmatprep.subr.bf16.mxu0 0
        %6866 = vmatpush1.bf16.msra.mxu0 0
        %6867 = vmatprep.subr.bf16.mxu0 0
        %6868 = vmatpush1.bf16.msra.mxu0 0
        %6869 = vmatprep.subr.bf16.mxu0 0
        %6870 = vmatpush1.bf16.msra.mxu0 0
        %6871 = vmatprep.subr.bf16.mxu0 0
        %6872 = vmatpush1.bf16.msra.mxu0 0
        %6873 = vmatprep.mubr.bf16.mxu0 0
        %6874 = vmatmul.mubr.bf16.gmra.mrb[0].mxu0 %v6827
        %v6875 = vpop.f32.mrb[0].mxu0
        %v6876 = vadd.f32 0.0, %v6875
        %v6877 = vpop.f32.mrb[0].mxu0
        %v6878 = vpop.f32.mrb[0].mxu0
        %v6879 = vadd.f32 0.0, %v6878
        %v6880 = vpop.f32.mrb[0].mxu0
        %6881 = vmatprep.mubr.bf16.mxu0 0
        %6882 = vmatmul.mubr.bf16.gmra.mrb[0].mxu0 %v6830
        %v6883 = vpop.f32.mrb[0].mxu0
        %v6884 = vadd.f32 0.0, %v6883
        %v6885 = vpop.f32.mrb[0].mxu0
        %v6886 = vpop.f32.mrb[0].mxu0
        %v6887 = vadd.f32 0.0, %v6886
        %v6888 = vpop.f32.mrb[0].mxu0
        %6889 = vmatprep.mubr.bf16.mxu0 0
        %6890 = vmatmul.mubr.bf16.gmra.mrb[0].mxu0 %v6833
        %v6891 = vpop.f32.mrb[0].mxu0
        %v6892 = vadd.f32 0.0, %v6891
        %v6893 = vpop.f32.mrb[0].mxu0
        %v6894 = vpop.f32.mrb[0].mxu0
        %v6895 = vadd.f32 0.0, %v6894
        %v6896 = vpop.f32.mrb[0].mxu0
        %6897 = vmatprep.mubr.bf16.mxu0 0
        %6898 = vmatmul.mubr.bf16.gmra.mrb[0].mxu0 %v6836
        %v6899 = vpop.f32.mrb[0].mxu0
        %v6900 = vadd.f32 0.0, %v6899
        %v6901 = vpop.f32.mrb[0].mxu0
        %v6902 = vpop.f32.mrb[0].mxu0
        %v6903 = vadd.f32 0.0, %v6902
        %v6904 = vpop.f32.mrb[0].mxu0
        %6905 = vdwg.mxu0
        %v6906 = vadd.f32 %v6777, %v6876
        %v6907 = vadd.f32 %v6778, %v6879
        %v6908 = vadd.f32 %v6779, %v6884
        %v6909 = vadd.f32 %v6780, %v6887
        %v6910 = vadd.f32 %v6781, %v6892
        %v6911 = vadd.f32 %v6782, %v6895
        %v6912 = vadd.f32 %v6783, %v6900
        %v6913 = vadd.f32 %v6784, %v6903
        %6914 = vst.msk [vmem:[#allocation2] sm:$0xff] %vm232, %v6906
        %6915 = vst.msk [vmem:[#allocation2 + $0x8] sm:$0xff] %vm232, %v6907
        %6916 = vst.msk [vmem:[#allocation2 + $0x10] sm:$0xff] %vm232, %v6908
        %6917 = vst.msk [vmem:[#allocation2 + $0x18] sm:$0xff] %vm232, %v6909
        %6918 = vst.msk [vmem:[#allocation2 + $0x20] sm:$0xff] %vm232, %v6910
        %6919 = vst.msk [vmem:[#allocation2 + $0x28] sm:$0xff] %vm232, %v6911
        %6920 = vst.msk [vmem:[#allocation2 + $0x30] sm:$0xff] %vm232, %v6912
        %6921 = vst.msk [vmem:[#allocation2 + $0x38] sm:$0xff] %vm232, %v6913
        %v6922 = vld [vmem:[%s6455] sm:$0x8]
        %v6923 = vld [vmem:[%s6455 + $0x4] sm:$0x7]
        %v6924 = vld [vmem:[%s6455 + $0x8] sm:$0x8]
        %v6925 = vld [vmem:[%s6455 + $0xc] sm:$0x7]
        %v6926 = vld [vmem:[%s6455 + $0x10] sm:$0x8]
        %v6927 = vld [vmem:[%s6455 + $0x14] sm:$0x7]
        %v6928 = vld [vmem:[%s6455 + $0x18] sm:$0x8]
        %v6929 = vld [vmem:[%s6455 + $0x1c] sm:$0x7]
        %v6930 = vld [vmem:[%s6455 + $0x20] sm:$0x8]
        %v6931 = vld [vmem:[%s6455 + $0x24] sm:$0x7]
        %v6932 = vld [vmem:[%s6455 + $0x28] sm:$0x8]
        %v6933 = vld [vmem:[%s6455 + $0x2c] sm:$0x7]
        %v6934 = vld [vmem:[%s6455 + $0x30] sm:$0x8]
        %v6935 = vld [vmem:[%s6455 + $0x34] sm:$0x7]
        %v6936 = vld [vmem:[%s6455 + $0x38] sm:$0x8]
        %v6937 = vld [vmem:[%s6455 + $0x3c] sm:$0x7]
        %v6954 = vrot.slane %v6922, 7
        %v6955 = vrot.slane %v6954, 4
        %v6956 = vrot.slane %v6923, 7
        %v6957 = vsel %vm5599, %v6955, %v6956
        %v6958 = vrot.slane %v6924, 7
        %v6959 = vrot.slane %v6958, 4
        %v6960 = vrot.slane %v6925, 7
        %v6961 = vsel %vm5599, %v6959, %v6960
        %v6962 = vrot.slane %v6926, 7
        %v6963 = vrot.slane %v6962, 4
        %v6964 = vrot.slane %v6927, 7
        %v6965 = vsel %vm5599, %v6963, %v6964
        %v6966 = vrot.slane %v6928, 7
        %v6967 = vrot.slane %v6966, 4
        %v6968 = vrot.slane %v6929, 7
        %v6969 = vsel %vm5599, %v6967, %v6968
        %v6970 = vrot.slane %v6930, 7
        %v6971 = vrot.slane %v6970, 4
        %v6972 = vrot.slane %v6931, 7
        %v6973 = vsel %vm5599, %v6971, %v6972
        %v6974 = vrot.slane %v6932, 7
        %v6975 = vrot.slane %v6974, 4
        %v6976 = vrot.slane %v6933, 7
        %v6977 = vsel %vm5599, %v6975, %v6976
        %v6978 = vrot.slane %v6934, 7
        %v6979 = vrot.slane %v6978, 4
        %v6980 = vrot.slane %v6935, 7
        %v6981 = vsel %vm5599, %v6979, %v6980
        %v6982 = vrot.slane %v6936, 7
        %v6983 = vrot.slane %v6982, 4
        %v6984 = vrot.slane %v6937, 7
        %v6985 = vsel %vm5599, %v6983, %v6984
        %v6986 = vld [vmem:[#allocation2] sm:$0xff]
        %v6987 = vld [vmem:[#allocation2 + $0x8] sm:$0xff]
        %v6988 = vld [vmem:[#allocation2 + $0x10] sm:$0xff]
        %v6989 = vld [vmem:[#allocation2 + $0x18] sm:$0xff]
        %v6990 = vld [vmem:[#allocation2 + $0x20] sm:$0xff]
        %v6991 = vld [vmem:[#allocation2 + $0x28] sm:$0xff]
        %v6992 = vld [vmem:[#allocation2 + $0x30] sm:$0xff]
        %v6993 = vld [vmem:[#allocation2 + $0x38] sm:$0xff]
        %s6994 = scalar_lea.vmem [#allocation6], 728
        %v6995 = vld [vmem:[%s6994] sm:$0xf]
        %v6996 = vld [vmem:[%s6994 + $0x4] sm:$0xf]
        %v6997 = vld [vmem:[%s6994 + $0x8] sm:$0xf]
        %v6998 = vld [vmem:[%s6994 + $0xc] sm:$0xf]
        %v6999 = vld [vmem:[%s6994 + $0x10] sm:$0xf]
        %v7000 = vld [vmem:[%s6994 + $0x14] sm:$0xf]
        %v7001 = vld [vmem:[%s6994 + $0x18] sm:$0xf]
        %v7002 = vunpack.c.l.b16 %v6957
        %v7003 = vunpack.c.l.b16 %v6961
        %v7004 = vunpack.c.l.b16 %v6965
        %v7005 = vunpack.c.l.b16 %v6969
        %v7006 = vunpack.c.l.b16 %v6973
        %v7007 = vunpack.c.l.b16 %v6977
        %v7008 = vunpack.c.l.b16 %v6981
        %v7009 = vunpack.c.l.b16 %v6985
        %v7010 = vpack.c.b16 %v7003, %v7002
        %v7011 = vpack.c.b16 %v7005, %v7004
        %v7012 = vpack.c.b16 %v7007, %v7006
        %v7013 = vpack.c.b16 %v7009, %v7008
        %v7021 = vunpack.c.l.b16 %v6995
        %v7022 = vunpack.c.l.b16 %v6996
        %v7023 = vunpack.c.l.b16 %v6997
        %v7024 = vunpack.c.l.b16 %v6998
        %v7025 = vunpack.c.l.b16 %v6999
        %v7026 = vunpack.c.l.b16 %v7000
        %v7027 = vunpack.c.l.b16 %v7001
        %v7028 = vpack.c.b16 %v7022, %v7021
        %v7029 = vpack.c.b16 %v7024, %v7023
        %v7030 = vpack.c.b16 %v7026, %v7025
        %v7031 = vpack.c.b16 %v7027, %v7027
        %v7036 = vsel %vm361, %v7010, 0
        %v7039 = vsel %vm361, %v7011, 0
        %v7042 = vsel %vm361, %v7012, 0
        %v7045 = vsel %vm361, %v7013, 0
        %v7048 = vsel %vm374, %v7031, 0
        %7050 = vmatprep.subr.bf16.mxu0 0
        %7051 = vmatpush1.bf16.msra.mxu0 %v7028
        %7052 = vmatprep.subr.bf16.mxu0 0
        %7053 = vmatpush1.bf16.msra.mxu0 %v7029
        %7054 = vmatprep.subr.bf16.mxu0 0
        %7055 = vmatpush1.bf16.msra.mxu0 %v7030
        %7056 = vmatprep.subr.bf16.mxu0 0
        %7057 = vmatpush1.bf16.msra.mxu0 %v7048
        %7058 = vmatprep.subr.bf16.mxu0 0
        %7059 = vmatpush1.bf16.msra.mxu0 0
        %7060 = vmatprep.subr.bf16.mxu0 0
        %7061 = vmatpush1.bf16.msra.mxu0 0
        %7062 = vmatprep.subr.bf16.mxu0 0
        %7063 = vmatpush1.bf16.msra.mxu0 0
        %7064 = vmatprep.subr.bf16.mxu0 0
        %7065 = vmatpush1.bf16.msra.mxu0 0
        %7066 = vmatprep.subr.bf16.mxu0 0
        %7067 = vmatpush1.bf16.msra.mxu0 0
        %7068 = vmatprep.subr.bf16.mxu0 0
        %7069 = vmatpush1.bf16.msra.mxu0 0
        %7070 = vmatprep.subr.bf16.mxu0 0
        %7071 = vmatpush1.bf16.msra.mxu0 0
        %7072 = vmatprep.subr.bf16.mxu0 0
        %7073 = vmatpush1.bf16.msra.mxu0 0
        %7074 = vmatprep.subr.bf16.mxu0 0
        %7075 = vmatpush1.bf16.msra.mxu0 0
        %7076 = vmatprep.subr.bf16.mxu0 0
        %7077 = vmatpush1.bf16.msra.mxu0 0
        %7078 = vmatprep.subr.bf16.mxu0 0
        %7079 = vmatpush1.bf16.msra.mxu0 0
        %7080 = vmatprep.subr.bf16.mxu0 0
        %7081 = vmatpush1.bf16.msra.mxu0 0
        %7082 = vmatprep.mubr.bf16.mxu0 0
        %7083 = vmatmul.mubr.bf16.gmra.mrb[0].mxu0 %v7036
        %v7084 = vpop.f32.mrb[0].mxu0
        %v7085 = vadd.f32 0.0, %v7084
        %v7086 = vpop.f32.mrb[0].mxu0
        %v7087 = vpop.f32.mrb[0].mxu0
        %v7088 = vadd.f32 0.0, %v7087
        %v7089 = vpop.f32.mrb[0].mxu0
        %7090 = vmatprep.mubr.bf16.mxu0 0
        %7091 = vmatmul.mubr.bf16.gmra.mrb[0].mxu0 %v7039
        %v7092 = vpop.f32.mrb[0].mxu0
        %v7093 = vadd.f32 0.0, %v7092
        %v7094 = vpop.f32.mrb[0].mxu0
        %v7095 = vpop.f32.mrb[0].mxu0
        %v7096 = vadd.f32 0.0, %v7095
        %v7097 = vpop.f32.mrb[0].mxu0
        %7098 = vmatprep.mubr.bf16.mxu0 0
        %7099 = vmatmul.mubr.bf16.gmra.mrb[0].mxu0 %v7042
        %v7100 = vpop.f32.mrb[0].mxu0
        %v7101 = vadd.f32 0.0, %v7100
        %v7102 = vpop.f32.mrb[0].mxu0
        %v7103 = vpop.f32.mrb[0].mxu0
        %v7104 = vadd.f32 0.0, %v7103
        %v7105 = vpop.f32.mrb[0].mxu0
        %7106 = vmatprep.mubr.bf16.mxu0 0
        %7107 = vmatmul.mubr.bf16.gmra.mrb[0].mxu0 %v7045
        %v7108 = vpop.f32.mrb[0].mxu0
        %v7109 = vadd.f32 0.0, %v7108
        %v7110 = vpop.f32.mrb[0].mxu0
        %v7111 = vpop.f32.mrb[0].mxu0
        %v7112 = vadd.f32 0.0, %v7111
        %v7113 = vpop.f32.mrb[0].mxu0
        %7114 = vdwg.mxu0
        %v7115 = vadd.f32 %v6986, %v7085
        %v7116 = vadd.f32 %v6987, %v7088
        %v7117 = vadd.f32 %v6988, %v7093
        %v7118 = vadd.f32 %v6989, %v7096
        %v7119 = vadd.f32 %v6990, %v7101
        %v7120 = vadd.f32 %v6991, %v7104
        %v7121 = vadd.f32 %v6992, %v7109
        %v7122 = vadd.f32 %v6993, %v7112
        %7123 = vst.msk [vmem:[#allocation2] sm:$0xff] %vm232, %v7115
        %7124 = vst.msk [vmem:[#allocation2 + $0x8] sm:$0xff] %vm232, %v7116
        %7125 = vst.msk [vmem:[#allocation2 + $0x10] sm:$0xff] %vm232, %v7117
        %7126 = vst.msk [vmem:[#allocation2 + $0x18] sm:$0xff] %vm232, %v7118
        %7127 = vst.msk [vmem:[#allocation2 + $0x20] sm:$0xff] %vm232, %v7119
        %7128 = vst.msk [vmem:[#allocation2 + $0x28] sm:$0xff] %vm232, %v7120
        %7129 = vst.msk [vmem:[#allocation2 + $0x30] sm:$0xff] %vm232, %v7121
        %7130 = vst.msk [vmem:[#allocation2 + $0x38] sm:$0xff] %vm232, %v7122
        %v7131 = vld [vmem:[#allocation2] sm:$0xff]
        %v7132 = vld [vmem:[#allocation2 + $0x8] sm:$0xff]
        %v7133 = vld [vmem:[#allocation2 + $0x10] sm:$0xff]
        %v7134 = vld [vmem:[#allocation2 + $0x18] sm:$0xff]
        %v7135 = vld [vmem:[#allocation2 + $0x20] sm:$0xff]
        %v7136 = vld [vmem:[#allocation2 + $0x28] sm:$0xff]
        %v7137 = vld [vmem:[#allocation2 + $0x30] sm:$0xff]
        %v7138 = vld [vmem:[#allocation2 + $0x38] sm:$0xff]
        %v7139 = vld [vmem:[#allocation8] sm:$0x1]
        %v7141 = vlaneseq
        %v7142 = vshrl.u32 %v7141, 7
        %v7143 = vsub.s32 0, %v7142
        %v7144 = vrot.slane %v7139, %v7143
        %v7146 = vadd.f32 %v7131, %v7144
        %v7147 = vadd.f32 %v7132, %v7144
        %v7148 = vadd.f32 %v7133, %v7144
        %v7149 = vadd.f32 %v7134, %v7144
        %v7150 = vadd.f32 %v7135, %v7144
        %v7151 = vadd.f32 %v7136, %v7144
        %v7152 = vadd.f32 %v7137, %v7144
        %v7153 = vadd.f32 %v7138, %v7144
        %7154 = vst.msk [vmem:[%s229] sm:$0xff] %vm232, %v7146
        %7155 = vst.msk [vmem:[%s229 + $0x8] sm:$0xff] %vm232, %v7147
        %7156 = vst.msk [vmem:[%s229 + $0x10] sm:$0xff] %vm232, %v7148
        %7157 = vst.msk [vmem:[%s229 + $0x18] sm:$0xff] %vm232, %v7149
        %7158 = vst.msk [vmem:[%s229 + $0x20] sm:$0xff] %vm232, %v7150
        %7159 = vst.msk [vmem:[%s229 + $0x28] sm:$0xff] %vm232, %v7151
        %7160 = vst.msk [vmem:[%s229 + $0x30] sm:$0xff] %vm232, %v7152
        %7161 = vst.msk [vmem:[%s229 + $0x38] sm:$0xff] %vm232, %v7153
        %s7162 = sand.u32 %s111, 1
        %s7163 = scalar_lea.sflag [#allocation5], %s7162
        %s7164 = sand.u32 %s111, 1
        %s7165 = smul.addr %s7164, 64
        %s7166 = scalar_lea.vmem [#allocation9], %s7165
        // Predicated region
        $region45: #{tpu_custom_call.1} parent=31 // pred_check
          %p7167 = pneg %p121
        $region46: #{tpu_custom_call.1} parent=31 // pred_check_branch
          %7169 = sbr.rel (%p7167) target = $region48
        $region47: #{tpu_custom_call.1} parent=31 // pred_region
          %s7170 = smul.u32 8, %s26
          %s7172 = ssub.s32 1024, 1024
          %7173 = vsyncadd %s7163, %s7172
          %s7174 = smul.addr %s25, 8
          %s7175 = sadd.s32 %s7170, %s7174
          %s7176 = smul.addr %s7175, 128
          %s7177 = scalar_lea.hbm %s3, %s7176
          %s7178 = sshll.u32 %s7166, 4
          %s7179 = int_to_ptr.vmem [resolvable:$true] %s7178
          %7184 = dma.vmem_to_hbm [thread:$0]  %s7179, 1024, %s7177, %s7163, 128, 128, 8
        $region48: #{tpu_custom_call.1} parent=31 // pred_fallthru
          _
      $region32: #{tpu_custom_call.1} parent=5 // pred_fallthru
        _
      %p7185 = scmp.le.s32.totalorder 2, %s16
      // Predicated region
      $region49: #{tpu_custom_call.1} parent=5 // pred_check
        %p7186 = pneg %p7185
      $region50: #{tpu_custom_call.1} parent=5 // pred_check_branch
        %7188 = sbr.rel (%p7186) target = $region52
      $region51: #{tpu_custom_call.1} parent=5 // pred_region
        %s7189 = ssub.s32 %s16, 2
        // Predicated region
        $region53: #{tpu_custom_call.1} parent=51 // pred_check
          %p7190 = pneg %p127
        $region54: #{tpu_custom_call.1} parent=51 // pred_check_branch
          %7192 = sbr.rel (%p7190) target = $region56
        $region55: #{tpu_custom_call.1} parent=51 // pred_region
          %s7193 = sand.u32 %s112, 1
          %s7194 = scalar_lea.sflag [#allocation5], %s7193
          %s7195 = sand.u32 %s112, 1
          %s7196 = smul.addr %s7195, 64
          %s7197 = scalar_lea.vmem [#allocation9], %s7196
          %7198 = dma.done %s7194, 1024
        $region56: #{tpu_custom_call.1} parent=51 // pred_fallthru
          _
      $region52: #{tpu_custom_call.1} parent=5 // pred_fallthru
        _
    $region6: #{tpu_custom_call.1} parent=1 // loop_footer
      %s20 = sadd.s32 1, %s16
    $region7: #{tpu_custom_call.1} parent=1 // loop_footer_branch
      %15 = sbr.rel target = $region3
    $region8: #{tpu_custom_call.1} parent=1 // loop_exit
      _
    %7199 = vsyncpa [#allocation4], 1
    %s7200 = scalar_lea.sflag [#allocation4], 1
    %7201 = vsyncpa %s7200, 1
    %7202 = vsyncpa [#allocation7], 1
    %7203 = vsyncpa [#allocation5], 1
    %s7204 = scalar_lea.sflag [#allocation5], 1
    %7205 = vsyncpa %s7204, 1

</llo_original>
